<compile_context>
chip_gen: v6e
topology: v6e:2x2x1
jax: 0.10.0
libtpu: 0.0.40
codegen_flags: <defaults>
</compile_context>

<pallas_src>
import functools

import jax
import jax.numpy as jnp
from jax import lax
from jax.experimental import pallas as pl
from jax.experimental.pallas import tpu as pltpu

EPS = 1e-5            # torch.nn.BatchNorm1d default eps
MAXPAD = 4            # per-sample zero margin (>= max one-sided 'same' pad: k=8 -> 4)
MATMUL_DTYPE = jnp.float32   # set to jnp.bfloat16 for ~2x MXU rate at production sizes


# ----------------------------- Pallas kernel --------------------------------

def _conv_bn(h, mask, w_ref, b_ref, g_ref, bt_ref, *, relu, inv_m):
    """'same' Conv1d + BatchNorm1d(batch stats) + optional ReLU on a VMEM-resident
    (P, Cin) activation slab with per-sample zero margins (mask marks valid rows)."""
    k = w_ref.shape[0]
    left = (k - 1) // 2                    # torch padding='same' convention
    p_rows, cin = h.shape
    cout = w_ref.shape[2]

    zpad = jnp.zeros((MAXPAD, cin), jnp.float32)
    h_ext = jnp.concatenate([zpad, h, zpad], axis=0)          # (P + 2*MAXPAD, Cin)

    acc = jnp.zeros((p_rows, cout), jnp.float32)
    for t in range(k):                                        # K shifted matmul-accumulates
        d = t - left
        sl = h_ext[MAXPAD + d: MAXPAD + d + p_rows, :]
        acc = acc + jnp.dot(sl.astype(MATMUL_DTYPE),
                            w_ref[t].astype(MATMUL_DTYPE),
                            preferred_element_type=jnp.float32)

    y = acc + b_ref[...]                                      # margin rows hold garbage; masked
    # fp32 batch statistics over valid rows only
    mean = jnp.sum(y * mask, axis=0, keepdims=True) * inv_m
    cen = (y - mean) * mask
    var = jnp.sum(cen * cen, axis=0, keepdims=True) * inv_m
    # fold conv-bias + BN into a single per-channel scale/shift FMA
    scale = g_ref[...] * lax.rsqrt(var + EPS)
    shift = bt_ref[...] - mean * scale
    out = (y * scale + shift) * mask                          # re-zero margins -> next conv input
    if relu:
        out = jnp.maximum(out, 0.0)
    return out


def resnet_kernel(*refs, inv_m, n_blocks):
    """Fused 3-block ResNet + GAP + Linear. refs = [x, mask, gmat,
    3 x (w8cat, b8cat, g8cat, bt8cat, w5, b5, g5, bt5, w3, b3, g3, bt3),
    w_lin, b_lin, out]."""
    x_ref, mask_ref, gmat_ref = refs[0], refs[1], refs[2]
    wlin_ref, blin_ref = refs[3 + 12 * n_blocks], refs[4 + 12 * n_blocks]
    o_ref = refs[-1]

    mask = mask_ref[...]                  # (P, 1) valid-row mask
    h = x_ref[...]                        # (P, Cin0) zero-margined input slab

    for b in range(n_blocks):
        (w8, b8, g8, bt8, w5, b5, g5, bt5, w3, b3, g3, bt3) = refs[3 + 12 * b: 15 + 12 * b]
        cout = w5.shape[2]
        # conv_8 and the 1x1 shortcut share one LHS read / one matmul (weights concatenated
        # along Cout). bn_8 is applied to both with fresh batch stats (as torch does); BN is
        # per-channel so the concatenated stats are exact.
        ycat = _conv_bn(h, mask, w8, b8, g8, bt8, relu=False, inv_m=inv_m)
        a = jnp.maximum(ycat[:, :cout], 0.0)      # conv_8 -> bn_8 -> ReLU branch
        sc = ycat[:, cout:]                       # shortcut -> bn_8 branch (no ReLU)
        y5 = _conv_bn(a, mask, w5, b5, g5, bt5, relu=True, inv_m=inv_m)
        # conv_3 uses kernel_size=8 in the source module
        z3 = _conv_bn(y5, mask, w3, b3, g3, bt3, relu=False, inv_m=inv_m)
        h = jnp.maximum(sc + z3, 0.0)             # residual add + activation

    # GAP over L (per-sample mean of valid rows via a tiny pooling matmul) + Linear head.
    gap = jnp.dot(gmat_ref[...], h, preferred_element_type=jnp.float32)       # (N, C2)
    o_ref[...] = jnp.dot(gap, wlin_ref[...],
                         preferred_element_type=jnp.float32) + blin_ref[...]


# ------------------------------ JAX wrapper ----------------------------------

def resnet_forward(x_ncl, ops):
    n, cin, l = x_ncl.shape
    l_pad = l + 2 * MAXPAD
    p_rows = n * l_pad
    out_size = ops[-1].shape[1]

    # One-time layout glue: channel-last, per-sample zero margins, flat (P, Cin) slab.
    x_nlc = jnp.transpose(x_ncl, (0, 2, 1))
    x_pad = jnp.pad(x_nlc, ((0, 0), (MAXPAD, MAXPAD), (0, 0))).reshape(p_rows, cin)

    # Compile-time constants: valid-row mask and per-sample GAP pooling matrix.
    row = jnp.arange(l_pad)
    valid = ((row >= MAXPAD) & (row < MAXPAD + l)).astype(jnp.float32)        # (l_pad,)
    mask = jnp.tile(valid, n)[:, None]                                         # (P, 1)
    gmat = (jnp.eye(n, dtype=jnp.float32)[:, :, None]
            * valid[None, None, :] / l).reshape(n, p_rows)                     # (N, P)

    inputs = [x_pad, mask, gmat] + list(ops)
    kern = functools.partial(resnet_kernel, inv_m=1.0 / (n * l), n_blocks=3)

    # TODO(synk): for production-size N*L, add an M-grid (>=512-row tiles) with a two-pass
    # (sum / sum-of-squares) BatchNorm reduction and shard across v7x's 2 TensorCores; at
    # these demo sizes the whole net fits a single VMEM-resident call.
    return pl.pallas_call(
        kern,
        out_shape=jax.ShapeDtypeStruct((n, out_size), jnp.float32),
        in_specs=[pl.BlockSpec(memory_space=pltpu.MemorySpace.VMEM)] * len(inputs),
        out_specs=pl.BlockSpec(memory_space=pltpu.MemorySpace.VMEM),
        compiler_params=pltpu.CompilerParams(vmem_limit_bytes=32 * 1024 * 1024),
    )(*inputs)


# --------------------------- Parameter handling ------------------------------

def _conv_init(key, cout, cin, k):
    kw, kb = jax.random.split(key)
    scale = 1.0 / jnp.sqrt(cin * k)
    w = jax.random.normal(kw, (cout, cin, k), jnp.float32) * scale
    b = jax.random.normal(kb, (cout,), jnp.float32) * scale
    return w, b


def _block_init(key, cin, cout):
    ks = jax.random.split(key, 8)
    w8, b8 = _conv_init(ks[0], cout, cin, 8)
    w5, b5 = _conv_init(ks[1], cout, cout, 5)
    w3, b3 = _conv_init(ks[2], cout, cout, 8)   # conv_3 has kernel_size=8 in the source
    wsc, bsc = _conv_init(ks[3], cout, cin, 1)
    g8 = 1.0 + 0.1 * jax.random.normal(ks[4], (cout,), jnp.float32)
    bt8 = 0.1 * jax.random.normal(ks[5], (cout,), jnp.float32)
    g5 = 1.0 + 0.1 * jax.random.normal(ks[6], (cout,), jnp.float32)
    bt5 = 0.1 * jax.random.normal(ks[7], (cout,), jnp.float32)
    k2 = jax.random.split(ks[7], 2)
    g3 = 1.0 + 0.1 * jax.random.normal(k2[0], (cout,), jnp.float32)
    bt3 = 0.1 * jax.random.normal(k2[1], (cout,), jnp.float32)
    return dict(w8=w8, b8=b8, w5=w5, b5=b5, w3=w3, b3=b3, wsc=wsc, bsc=bsc,
                g8=g8, bt8=bt8, g5=g5, bt5=bt5, g3=g3, bt3=bt3)


def init_params(key, dimension_num, out_channels, output_size=1):
    k1, k2, k3, k4, k5 = jax.random.split(key, 5)
    c, c2 = out_channels, out_channels * 2
    return dict(
        block1=_block_init(k1, dimension_num, c),
        block2=_block_init(k2, c, c2),
        block3=_block_init(k3, c2, c2),
        w_lin=jax.random.normal(k4, (output_size, c2), jnp.float32) / jnp.sqrt(c2),
        b_lin=jax.random.normal(k5, (output_size,), jnp.float32) * 0.01,
    )


def _prep_block(p):
    cout, cin, _ = p["w8"].shape
    w8 = jnp.transpose(p["w8"], (2, 1, 0))                    # (8, cin, cout) per-tap matrices
    wsc = jnp.transpose(p["wsc"], (2, 1, 0))[0]               # (cin, cout)
    sc_taps = jnp.zeros((8, cin, cout), jnp.float32).at[3].set(wsc)   # 1x1 conv == centre tap
    r1 = lambda v: v[None, :]
    return [jnp.concatenate([w8, sc_taps], axis=-1),          # (8, cin, 2*cout)
            r1(jnp.concatenate([p["b8"], p["bsc"]])),
            r1(jnp.concatenate([p["g8"], p["g8"]])),
            r1(jnp.concatenate([p["bt8"], p["bt8"]])),
            jnp.transpose(p["w5"], (2, 1, 0)), r1(p["b5"]), r1(p["g5"]), r1(p["bt5"]),
            jnp.transpose(p["w3"], (2, 1, 0)), r1(p["b3"]), r1(p["g3"]), r1(p["bt3"])]


def prepare_operands(params):
    """One-time weight layout prep (no per-call reshapes/transposes)."""
    ops = []
    for name in ("block1", "block2", "block3"):
        ops += _prep_block(params[name])
    ops += [params["w_lin"].T, params["b_lin"][None, :]]
    return ops


# --------------------------- Pure-JAX reference ------------------------------

def _ref_conv(x, w, b):
    k = w.shape[-1]
    left = (k - 1) // 2
    y = lax.conv_general_dilated(x, w, window_strides=(1,),
                                 padding=[(left, (k - 1) - left)],
                                 dimension_numbers=("NCH", "OIH", "NCH"))
    return y + b[None, :, None]


def _ref_bn(y, g, bt):
    mean = jnp.mean(y, axis=(0, 2), keepdims=True)
    var = jnp.mean(jnp.square(y - mean), axis=(0, 2), keepdims=True)
    return (y - mean) * lax.rsqrt(var + EPS) * g[None, :, None] + bt[None, :, None]


def _ref_block(x, p):
    a = jnp.maximum(_ref_bn(_ref_conv(x, p["w8"], p["b8"]), p["g8"], p["bt8"]), 0.0)
    y = jnp.maximum(_ref_bn(_ref_conv(a, p["w5"], p["b5"]), p["g5"], p["bt5"]), 0.0)
    z = _ref_bn(_ref_conv(y, p["w3"], p["b3"]), p["g3"], p["bt3"])
    s = _ref_bn(_ref_conv(x, p["wsc"], p["bsc"]), p["g8"], p["bt8"])
    return jnp.maximum(s + z, 0.0)


def ref_forward(x, params):
    h = _ref_block(x, params["block1"])
    h = _ref_block(h, params["block2"])
    h = _ref_block(h, params["block3"])
    gap = jnp.mean(h, axis=-1)
    return gap @ params["w_lin"].T + params["b_lin"][None, :]


# --------------------------------- main ---------------------------------------

if __name__ == "__main__":
    key = jax.random.PRNGKey(0)
    k_x, k_p = jax.random.split(key)

    N, DIM_NUM, L = 2, 4, 16           # input: (batch, channels, length) = NCL
    OUT_CHANNELS = 8                   # block widths: 8 -> 16 -> 16
    params = init_params(k_p, DIM_NUM, OUT_CHANNELS, output_size=1)
    x = jax.random.normal(k_x, (N, DIM_NUM, L), jnp.float32)

    ops = prepare_operands(params)     # one-time weight layout prep
    fwd = jax.jit(resnet_forward)
    out = jax.block_until_ready(fwd(x, ops))

    expected = jax.block_until_ready(ref_forward(x, params))
    assert out.shape == (N, 1), out.shape
    assert jnp.allclose(out, expected, rtol=1e-4, atol=1e-4), (out, expected)
    print("KERNEL_OK")
</pallas_src>

<mosaic_0001>
module attributes {stable_mosaic.version = 11 : i64} {
  func.func @resnet_kernel(%arg0: memref<48x4xf32, #tpu.memory_space<vmem>>, %arg1: memref<48x1xf32, #tpu.memory_space<vmem>>, %arg2: memref<2x48xf32, #tpu.memory_space<vmem>>, %arg3: memref<8x4x16xf32, #tpu.memory_space<vmem>>, %arg4: memref<1x16xf32, #tpu.memory_space<vmem>>, %arg5: memref<1x16xf32, #tpu.memory_space<vmem>>, %arg6: memref<1x16xf32, #tpu.memory_space<vmem>>, %arg7: memref<5x8x8xf32, #tpu.memory_space<vmem>>, %arg8: memref<1x8xf32, #tpu.memory_space<vmem>>, %arg9: memref<1x8xf32, #tpu.memory_space<vmem>>, %arg10: memref<1x8xf32, #tpu.memory_space<vmem>>, %arg11: memref<8x8x8xf32, #tpu.memory_space<vmem>>, %arg12: memref<1x8xf32, #tpu.memory_space<vmem>>, %arg13: memref<1x8xf32, #tpu.memory_space<vmem>>, %arg14: memref<1x8xf32, #tpu.memory_space<vmem>>, %arg15: memref<8x8x32xf32, #tpu.memory_space<vmem>>, %arg16: memref<1x32xf32, #tpu.memory_space<vmem>>, %arg17: memref<1x32xf32, #tpu.memory_space<vmem>>, %arg18: memref<1x32xf32, #tpu.memory_space<vmem>>, %arg19: memref<5x16x16xf32, #tpu.memory_space<vmem>>, %arg20: memref<1x16xf32, #tpu.memory_space<vmem>>, %arg21: memref<1x16xf32, #tpu.memory_space<vmem>>, %arg22: memref<1x16xf32, #tpu.memory_space<vmem>>, %arg23: memref<8x16x16xf32, #tpu.memory_space<vmem>>, %arg24: memref<1x16xf32, #tpu.memory_space<vmem>>, %arg25: memref<1x16xf32, #tpu.memory_space<vmem>>, %arg26: memref<1x16xf32, #tpu.memory_space<vmem>>, %arg27: memref<8x16x32xf32, #tpu.memory_space<vmem>>, %arg28: memref<1x32xf32, #tpu.memory_space<vmem>>, %arg29: memref<1x32xf32, #tpu.memory_space<vmem>>, %arg30: memref<1x32xf32, #tpu.memory_space<vmem>>, %arg31: memref<5x16x16xf32, #tpu.memory_space<vmem>>, %arg32: memref<1x16xf32, #tpu.memory_space<vmem>>, %arg33: memref<1x16xf32, #tpu.memory_space<vmem>>, %arg34: memref<1x16xf32, #tpu.memory_space<vmem>>, %arg35: memref<8x16x16xf32, #tpu.memory_space<vmem>>, %arg36: memref<1x16xf32, #tpu.memory_space<vmem>>, %arg37: memref<1x16xf32, #tpu.memory_space<vmem>>, %arg38: memref<1x16xf32, #tpu.memory_space<vmem>>, %arg39: memref<16x1xf32, #tpu.memory_space<vmem>>, %arg40: memref<1x1xf32, #tpu.memory_space<vmem>>, %arg41: memref<2x1xf32, #tpu.memory_space<vmem>>) attributes {dimension_semantics = [], scalar_prefetch = 0 : i64, scratch_operands = 0 : i64, tpu.core_type = #tpu.core_type<tc>} {
    %c0 = arith.constant 0 : index
    %c0_0 = arith.constant 0 : index
    %0 = vector.load %arg1[%c0, %c0_0] : memref<48x1xf32, #tpu.memory_space<vmem>>, vector<48x1xf32>
    %c0_1 = arith.constant 0 : index
    %c0_2 = arith.constant 0 : index
    %1 = vector.load %arg0[%c0_1, %c0_2] : memref<48x4xf32, #tpu.memory_space<vmem>>, vector<48x4xf32>
    %cst = arith.constant 0.000000e+00 : f32
    %2 = vector.broadcast %cst : f32 to vector<4x4xf32>
    %3 = tpu.concatenate %2, %1, %2 in 0 : vector<4x4xf32>, vector<48x4xf32>, vector<4x4xf32> -> vector<56x4xf32>
    %cst_3 = arith.constant 0.000000e+00 : f32
    %4 = vector.broadcast %cst_3 : f32 to vector<48x16xf32>
    %5 = vector.extract_strided_slice %3 {offsets = [1, 0], sizes = [48, 4], strides = [1, 1]} : vector<56x4xf32> to vector<48x4xf32>
    %c0_4 = arith.constant 0 : index
    %c0_5 = arith.constant 0 : index
    %c0_6 = arith.constant 0 : index
    %6 = vector.load %arg3[%c0_4, %c0_5, %c0_6] : memref<8x4x16xf32, #tpu.memory_space<vmem>>, vector<1x4x16xf32>
    %7 = vector.shape_cast %6 : vector<1x4x16xf32> to vector<4x16xf32>
    %cst_7 = arith.constant dense<0.000000e+00> : vector<48x16xf32>
    %8 = tpu.matmul %5, %7, %cst_7 {dimension_numbers = #tpu.dot_dimension_numbers<[1], [0], [0], [1], [0, 0, 1, 1], [], []>} : vector<48x4xf32>, vector<4x16xf32>, vector<48x16xf32> -> vector<48x16xf32>
    %9 = arith.addf %4, %8 : vector<48x16xf32>
    %10 = vector.extract_strided_slice %3 {offsets = [2, 0], sizes = [48, 4], strides = [1, 1]} : vector<56x4xf32> to vector<48x4xf32>
    %c1 = arith.constant 1 : index
    %c0_8 = arith.constant 0 : index
    %c0_9 = arith.constant 0 : index
    %11 = vector.load %arg3[%c1, %c0_8, %c0_9] : memref<8x4x16xf32, #tpu.memory_space<vmem>>, vector<1x4x16xf32>
    %12 = vector.shape_cast %11 : vector<1x4x16xf32> to vector<4x16xf32>
    %cst_10 = arith.constant dense<0.000000e+00> : vector<48x16xf32>
    %13 = tpu.matmul %10, %12, %cst_10 {dimension_numbers = #tpu.dot_dimension_numbers<[1], [0], [0], [1], [0, 0, 1, 1], [], []>} : vector<48x4xf32>, vector<4x16xf32>, vector<48x16xf32> -> vector<48x16xf32>
    %14 = arith.addf %9, %13 : vector<48x16xf32>
    %15 = vector.extract_strided_slice %3 {offsets = [3, 0], sizes = [48, 4], strides = [1, 1]} : vector<56x4xf32> to vector<48x4xf32>
    %c2 = arith.constant 2 : index
    %c0_11 = arith.constant 0 : index
    %c0_12 = arith.constant 0 : index
    %16 = vector.load %arg3[%c2, %c0_11, %c0_12] : memref<8x4x16xf32, #tpu.memory_space<vmem>>, vector<1x4x16xf32>
    %17 = vector.shape_cast %16 : vector<1x4x16xf32> to vector<4x16xf32>
    %cst_13 = arith.constant dense<0.000000e+00> : vector<48x16xf32>
    %18 = tpu.matmul %15, %17, %cst_13 {dimension_numbers = #tpu.dot_dimension_numbers<[1], [0], [0], [1], [0, 0, 1, 1], [], []>} : vector<48x4xf32>, vector<4x16xf32>, vector<48x16xf32> -> vector<48x16xf32>
    %19 = arith.addf %14, %18 : vector<48x16xf32>
    %20 = vector.extract_strided_slice %3 {offsets = [4, 0], sizes = [48, 4], strides = [1, 1]} : vector<56x4xf32> to vector<48x4xf32>
    %c3 = arith.constant 3 : index
    %c0_14 = arith.constant 0 : index
    %c0_15 = arith.constant 0 : index
    %21 = vector.load %arg3[%c3, %c0_14, %c0_15] : memref<8x4x16xf32, #tpu.memory_space<vmem>>, vector<1x4x16xf32>
    %22 = vector.shape_cast %21 : vector<1x4x16xf32> to vector<4x16xf32>
    %cst_16 = arith.constant dense<0.000000e+00> : vector<48x16xf32>
    %23 = tpu.matmul %20, %22, %cst_16 {dimension_numbers = #tpu.dot_dimension_numbers<[1], [0], [0], [1], [0, 0, 1, 1], [], []>} : vector<48x4xf32>, vector<4x16xf32>, vector<48x16xf32> -> vector<48x16xf32>
    %24 = arith.addf %19, %23 : vector<48x16xf32>
    %25 = vector.extract_strided_slice %3 {offsets = [5, 0], sizes = [48, 4], strides = [1, 1]} : vector<56x4xf32> to vector<48x4xf32>
    %c4 = arith.constant 4 : index
    %c0_17 = arith.constant 0 : index
    %c0_18 = arith.constant 0 : index
    %26 = vector.load %arg3[%c4, %c0_17, %c0_18] : memref<8x4x16xf32, #tpu.memory_space<vmem>>, vector<1x4x16xf32>
    %27 = vector.shape_cast %26 : vector<1x4x16xf32> to vector<4x16xf32>
    %cst_19 = arith.constant dense<0.000000e+00> : vector<48x16xf32>
    %28 = tpu.matmul %25, %27, %cst_19 {dimension_numbers = #tpu.dot_dimension_numbers<[1], [0], [0], [1], [0, 0, 1, 1], [], []>} : vector<48x4xf32>, vector<4x16xf32>, vector<48x16xf32> -> vector<48x16xf32>
    %29 = arith.addf %24, %28 : vector<48x16xf32>
    %30 = vector.extract_strided_slice %3 {offsets = [6, 0], sizes = [48, 4], strides = [1, 1]} : vector<56x4xf32> to vector<48x4xf32>
    %c5 = arith.constant 5 : index
    %c0_20 = arith.constant 0 : index
    %c0_21 = arith.constant 0 : index
    %31 = vector.load %arg3[%c5, %c0_20, %c0_21] : memref<8x4x16xf32, #tpu.memory_space<vmem>>, vector<1x4x16xf32>
    %32 = vector.shape_cast %31 : vector<1x4x16xf32> to vector<4x16xf32>
    %cst_22 = arith.constant dense<0.000000e+00> : vector<48x16xf32>
    %33 = tpu.matmul %30, %32, %cst_22 {dimension_numbers = #tpu.dot_dimension_numbers<[1], [0], [0], [1], [0, 0, 1, 1], [], []>} : vector<48x4xf32>, vector<4x16xf32>, vector<48x16xf32> -> vector<48x16xf32>
    %34 = arith.addf %29, %33 : vector<48x16xf32>
    %35 = vector.extract_strided_slice %3 {offsets = [7, 0], sizes = [48, 4], strides = [1, 1]} : vector<56x4xf32> to vector<48x4xf32>
    %c6 = arith.constant 6 : index
    %c0_23 = arith.constant 0 : index
    %c0_24 = arith.constant 0 : index
    %36 = vector.load %arg3[%c6, %c0_23, %c0_24] : memref<8x4x16xf32, #tpu.memory_space<vmem>>, vector<1x4x16xf32>
    %37 = vector.shape_cast %36 : vector<1x4x16xf32> to vector<4x16xf32>
    %cst_25 = arith.constant dense<0.000000e+00> : vector<48x16xf32>
    %38 = tpu.matmul %35, %37, %cst_25 {dimension_numbers = #tpu.dot_dimension_numbers<[1], [0], [0], [1], [0, 0, 1, 1], [], []>} : vector<48x4xf32>, vector<4x16xf32>, vector<48x16xf32> -> vector<48x16xf32>
    %39 = arith.addf %34, %38 : vector<48x16xf32>
    %40 = vector.extract_strided_slice %3 {offsets = [8, 0], sizes = [48, 4], strides = [1, 1]} : vector<56x4xf32> to vector<48x4xf32>
    %c7 = arith.constant 7 : index
    %c0_26 = arith.constant 0 : index
    %c0_27 = arith.constant 0 : index
    %41 = vector.load %arg3[%c7, %c0_26, %c0_27] : memref<8x4x16xf32, #tpu.memory_space<vmem>>, vector<1x4x16xf32>
    %42 = vector.shape_cast %41 : vector<1x4x16xf32> to vector<4x16xf32>
    %cst_28 = arith.constant dense<0.000000e+00> : vector<48x16xf32>
    %43 = tpu.matmul %40, %42, %cst_28 {dimension_numbers = #tpu.dot_dimension_numbers<[1], [0], [0], [1], [0, 0, 1, 1], [], []>} : vector<48x4xf32>, vector<4x16xf32>, vector<48x16xf32> -> vector<48x16xf32>
    %44 = arith.addf %39, %43 : vector<48x16xf32>
    %c0_29 = arith.constant 0 : index
    %c0_30 = arith.constant 0 : index
    %45 = vector.load %arg4[%c0_29, %c0_30] : memref<1x16xf32, #tpu.memory_space<vmem>>, vector<1x16xf32>
    %46 = vector.broadcast %45 : vector<1x16xf32> to vector<48x16xf32>
    %47 = arith.addf %44, %46 : vector<48x16xf32>
    %48 = vector.broadcast %0 : vector<48x1xf32> to vector<48x16xf32>
    %49 = arith.mulf %47, %48 : vector<48x16xf32>
    %cst_31 = arith.constant dense<0.000000e+00> : vector<16xf32>
    %50 = vector.multi_reduction <add>, %49, %cst_31 [0] : vector<48x16xf32> to vector<16xf32>
    %51 = vector.shape_cast %50 : vector<16xf32> to vector<1x16xf32>
    %cst_32 = arith.constant 3.125000e-02 : f32
    %52 = vector.broadcast %cst_32 : f32 to vector<1x16xf32>
    %53 = arith.mulf %51, %52 : vector<1x16xf32>
    %54 = vector.broadcast %53 : vector<1x16xf32> to vector<48x16xf32>
    %55 = arith.subf %47, %54 : vector<48x16xf32>
    %56 = vector.broadcast %0 : vector<48x1xf32> to vector<48x16xf32>
    %57 = arith.mulf %55, %56 : vector<48x16xf32>
    %58 = arith.mulf %57, %57 : vector<48x16xf32>
    %cst_33 = arith.constant dense<0.000000e+00> : vector<16xf32>
    %59 = vector.multi_reduction <add>, %58, %cst_33 [0] : vector<48x16xf32> to vector<16xf32>
    %60 = vector.shape_cast %59 : vector<16xf32> to vector<1x16xf32>
    %cst_34 = arith.constant 3.125000e-02 : f32
    %61 = vector.broadcast %cst_34 : f32 to vector<1x16xf32>
    %62 = arith.mulf %60, %61 : vector<1x16xf32>
    %c0_35 = arith.constant 0 : index
    %c0_36 = arith.constant 0 : index
    %63 = vector.load %arg5[%c0_35, %c0_36] : memref<1x16xf32, #tpu.memory_space<vmem>>, vector<1x16xf32>
    %cst_37 = arith.constant 9.99999974E-6 : f32
    %64 = vector.broadcast %cst_37 : f32 to vector<1x16xf32>
    %65 = arith.addf %62, %64 : vector<1x16xf32>
    %66 = math.rsqrt %65 : vector<1x16xf32>
    %67 = arith.mulf %63, %66 : vector<1x16xf32>
    %c0_38 = arith.constant 0 : index
    %c0_39 = arith.constant 0 : index
    %68 = vector.load %arg6[%c0_38, %c0_39] : memref<1x16xf32, #tpu.memory_space<vmem>>, vector<1x16xf32>
    %69 = arith.mulf %53, %67 : vector<1x16xf32>
    %70 = arith.subf %68, %69 : vector<1x16xf32>
    %71 = vector.broadcast %67 : vector<1x16xf32> to vector<48x16xf32>
    %72 = arith.mulf %47, %71 : vector<48x16xf32>
    %73 = vector.broadcast %70 : vector<1x16xf32> to vector<48x16xf32>
    %74 = arith.addf %72, %73 : vector<48x16xf32>
    %75 = vector.broadcast %0 : vector<48x1xf32> to vector<48x16xf32>
    %76 = arith.mulf %74, %75 : vector<48x16xf32>
    %77 = vector.extract_strided_slice %76 {offsets = [0, 0], sizes = [48, 8], strides = [1, 1]} : vector<48x16xf32> to vector<48x8xf32>
    %cst_40 = arith.constant 0.000000e+00 : f32
    %78 = vector.broadcast %cst_40 : f32 to vector<48x8xf32>
    %79 = arith.maximumf %77, %78 : vector<48x8xf32>
    %80 = vector.extract_strided_slice %76 {offsets = [0, 8], sizes = [48, 8], strides = [1, 1]} : vector<48x16xf32> to vector<48x8xf32>
    %cst_41 = arith.constant 0.000000e+00 : f32
    %81 = vector.broadcast %cst_41 : f32 to vector<4x8xf32>
    %82 = tpu.concatenate %81, %79, %81 in 0 : vector<4x8xf32>, vector<48x8xf32>, vector<4x8xf32> -> vector<56x8xf32>
    %cst_42 = arith.constant 0.000000e+00 : f32
    %83 = vector.broadcast %cst_42 : f32 to vector<48x8xf32>
    %84 = vector.extract_strided_slice %82 {offsets = [2, 0], sizes = [48, 8], strides = [1, 1]} : vector<56x8xf32> to vector<48x8xf32>
    %c0_43 = arith.constant 0 : index
    %c0_44 = arith.constant 0 : index
    %c0_45 = arith.constant 0 : index
    %85 = vector.load %arg7[%c0_43, %c0_44, %c0_45] : memref<5x8x8xf32, #tpu.memory_space<vmem>>, vector<1x8x8xf32>
    %86 = vector.shape_cast %85 : vector<1x8x8xf32> to vector<8x8xf32>
    %cst_46 = arith.constant dense<0.000000e+00> : vector<48x8xf32>
    %87 = tpu.matmul %84, %86, %cst_46 {dimension_numbers = #tpu.dot_dimension_numbers<[1], [0], [0], [1], [0, 0, 1, 1], [], []>} : vector<48x8xf32>, vector<8x8xf32>, vector<48x8xf32> -> vector<48x8xf32>
    %88 = arith.addf %83, %87 : vector<48x8xf32>
    %89 = vector.extract_strided_slice %82 {offsets = [3, 0], sizes = [48, 8], strides = [1, 1]} : vector<56x8xf32> to vector<48x8xf32>
    %c1_47 = arith.constant 1 : index
    %c0_48 = arith.constant 0 : index
    %c0_49 = arith.constant 0 : index
    %90 = vector.load %arg7[%c1_47, %c0_48, %c0_49] : memref<5x8x8xf32, #tpu.memory_space<vmem>>, vector<1x8x8xf32>
    %91 = vector.shape_cast %90 : vector<1x8x8xf32> to vector<8x8xf32>
    %cst_50 = arith.constant dense<0.000000e+00> : vector<48x8xf32>
    %92 = tpu.matmul %89, %91, %cst_50 {dimension_numbers = #tpu.dot_dimension_numbers<[1], [0], [0], [1], [0, 0, 1, 1], [], []>} : vector<48x8xf32>, vector<8x8xf32>, vector<48x8xf32> -> vector<48x8xf32>
    %93 = arith.addf %88, %92 : vector<48x8xf32>
    %94 = vector.extract_strided_slice %82 {offsets = [4, 0], sizes = [48, 8], strides = [1, 1]} : vector<56x8xf32> to vector<48x8xf32>
    %c2_51 = arith.constant 2 : index
    %c0_52 = arith.constant 0 : index
    %c0_53 = arith.constant 0 : index
    %95 = vector.load %arg7[%c2_51, %c0_52, %c0_53] : memref<5x8x8xf32, #tpu.memory_space<vmem>>, vector<1x8x8xf32>
    %96 = vector.shape_cast %95 : vector<1x8x8xf32> to vector<8x8xf32>
    %cst_54 = arith.constant dense<0.000000e+00> : vector<48x8xf32>
    %97 = tpu.matmul %94, %96, %cst_54 {dimension_numbers = #tpu.dot_dimension_numbers<[1], [0], [0], [1], [0, 0, 1, 1], [], []>} : vector<48x8xf32>, vector<8x8xf32>, vector<48x8xf32> -> vector<48x8xf32>
    %98 = arith.addf %93, %97 : vector<48x8xf32>
    %99 = vector.extract_strided_slice %82 {offsets = [5, 0], sizes = [48, 8], strides = [1, 1]} : vector<56x8xf32> to vector<48x8xf32>
    %c3_55 = arith.constant 3 : index
    %c0_56 = arith.constant 0 : index
    %c0_57 = arith.constant 0 : index
    %100 = vector.load %arg7[%c3_55, %c0_56, %c0_57] : memref<5x8x8xf32, #tpu.memory_space<vmem>>, vector<1x8x8xf32>
    %101 = vector.shape_cast %100 : vector<1x8x8xf32> to vector<8x8xf32>
    %cst_58 = arith.constant dense<0.000000e+00> : vector<48x8xf32>
    %102 = tpu.matmul %99, %101, %cst_58 {dimension_numbers = #tpu.dot_dimension_numbers<[1], [0], [0], [1], [0, 0, 1, 1], [], []>} : vector<48x8xf32>, vector<8x8xf32>, vector<48x8xf32> -> vector<48x8xf32>
    %103 = arith.addf %98, %102 : vector<48x8xf32>
    %104 = vector.extract_strided_slice %82 {offsets = [6, 0], sizes = [48, 8], strides = [1, 1]} : vector<56x8xf32> to vector<48x8xf32>
    %c4_59 = arith.constant 4 : index
    %c0_60 = arith.constant 0 : index
    %c0_61 = arith.constant 0 : index
    %105 = vector.load %arg7[%c4_59, %c0_60, %c0_61] : memref<5x8x8xf32, #tpu.memory_space<vmem>>, vector<1x8x8xf32>
    %106 = vector.shape_cast %105 : vector<1x8x8xf32> to vector<8x8xf32>
    %cst_62 = arith.constant dense<0.000000e+00> : vector<48x8xf32>
    %107 = tpu.matmul %104, %106, %cst_62 {dimension_numbers = #tpu.dot_dimension_numbers<[1], [0], [0], [1], [0, 0, 1, 1], [], []>} : vector<48x8xf32>, vector<8x8xf32>, vector<48x8xf32> -> vector<48x8xf32>
    %108 = arith.addf %103, %107 : vector<48x8xf32>
    %c0_63 = arith.constant 0 : index
    %c0_64 = arith.constant 0 : index
    %109 = vector.load %arg8[%c0_63, %c0_64] : memref<1x8xf32, #tpu.memory_space<vmem>>, vector<1x8xf32>
    %110 = vector.broadcast %109 : vector<1x8xf32> to vector<48x8xf32>
    %111 = arith.addf %108, %110 : vector<48x8xf32>
    %112 = vector.broadcast %0 : vector<48x1xf32> to vector<48x8xf32>
    %113 = arith.mulf %111, %112 : vector<48x8xf32>
    %cst_65 = arith.constant dense<0.000000e+00> : vector<8xf32>
    %114 = vector.multi_reduction <add>, %113, %cst_65 [0] : vector<48x8xf32> to vector<8xf32>
    %115 = vector.shape_cast %114 : vector<8xf32> to vector<1x8xf32>
    %cst_66 = arith.constant 3.125000e-02 : f32
    %116 = vector.broadcast %cst_66 : f32 to vector<1x8xf32>
    %117 = arith.mulf %115, %116 : vector<1x8xf32>
    %118 = vector.broadcast %117 : vector<1x8xf32> to vector<48x8xf32>
    %119 = arith.subf %111, %118 : vector<48x8xf32>
    %120 = vector.broadcast %0 : vector<48x1xf32> to vector<48x8xf32>
    %121 = arith.mulf %119, %120 : vector<48x8xf32>
    %122 = arith.mulf %121, %121 : vector<48x8xf32>
    %cst_67 = arith.constant dense<0.000000e+00> : vector<8xf32>
    %123 = vector.multi_reduction <add>, %122, %cst_67 [0] : vector<48x8xf32> to vector<8xf32>
    %124 = vector.shape_cast %123 : vector<8xf32> to vector<1x8xf32>
    %cst_68 = arith.constant 3.125000e-02 : f32
    %125 = vector.broadcast %cst_68 : f32 to vector<1x8xf32>
    %126 = arith.mulf %124, %125 : vector<1x8xf32>
    %c0_69 = arith.constant 0 : index
    %c0_70 = arith.constant 0 : index
    %127 = vector.load %arg9[%c0_69, %c0_70] : memref<1x8xf32, #tpu.memory_space<vmem>>, vector<1x8xf32>
    %cst_71 = arith.constant 9.99999974E-6 : f32
    %128 = vector.broadcast %cst_71 : f32 to vector<1x8xf32>
    %129 = arith.addf %126, %128 : vector<1x8xf32>
    %130 = math.rsqrt %129 : vector<1x8xf32>
    %131 = arith.mulf %127, %130 : vector<1x8xf32>
    %c0_72 = arith.constant 0 : index
    %c0_73 = arith.constant 0 : index
    %132 = vector.load %arg10[%c0_72, %c0_73] : memref<1x8xf32, #tpu.memory_space<vmem>>, vector<1x8xf32>
    %133 = arith.mulf %117, %131 : vector<1x8xf32>
    %134 = arith.subf %132, %133 : vector<1x8xf32>
    %135 = vector.broadcast %131 : vector<1x8xf32> to vector<48x8xf32>
    %136 = arith.mulf %111, %135 : vector<48x8xf32>
    %137 = vector.broadcast %134 : vector<1x8xf32> to vector<48x8xf32>
    %138 = arith.addf %136, %137 : vector<48x8xf32>
    %139 = vector.broadcast %0 : vector<48x1xf32> to vector<48x8xf32>
    %140 = arith.mulf %138, %139 : vector<48x8xf32>
    %cst_74 = arith.constant 0.000000e+00 : f32
    %141 = vector.broadcast %cst_74 : f32 to vector<48x8xf32>
    %142 = arith.maximumf %140, %141 : vector<48x8xf32>
    %cst_75 = arith.constant 0.000000e+00 : f32
    %143 = vector.broadcast %cst_75 : f32 to vector<4x8xf32>
    %144 = tpu.concatenate %143, %142, %143 in 0 : vector<4x8xf32>, vector<48x8xf32>, vector<4x8xf32> -> vector<56x8xf32>
    %cst_76 = arith.constant 0.000000e+00 : f32
    %145 = vector.broadcast %cst_76 : f32 to vector<48x8xf32>
    %146 = vector.extract_strided_slice %144 {offsets = [1, 0], sizes = [48, 8], strides = [1, 1]} : vector<56x8xf32> to vector<48x8xf32>
    %c0_77 = arith.constant 0 : index
    %c0_78 = arith.constant 0 : index
    %c0_79 = arith.constant 0 : index
    %147 = vector.load %arg11[%c0_77, %c0_78, %c0_79] : memref<8x8x8xf32, #tpu.memory_space<vmem>>, vector<1x8x8xf32>
    %148 = vector.shape_cast %147 : vector<1x8x8xf32> to vector<8x8xf32>
    %cst_80 = arith.constant dense<0.000000e+00> : vector<48x8xf32>
    %149 = tpu.matmul %146, %148, %cst_80 {dimension_numbers = #tpu.dot_dimension_numbers<[1], [0], [0], [1], [0, 0, 1, 1], [], []>} : vector<48x8xf32>, vector<8x8xf32>, vector<48x8xf32> -> vector<48x8xf32>
    %150 = arith.addf %145, %149 : vector<48x8xf32>
    %151 = vector.extract_strided_slice %144 {offsets = [2, 0], sizes = [48, 8], strides = [1, 1]} : vector<56x8xf32> to vector<48x8xf32>
    %c1_81 = arith.constant 1 : index
    %c0_82 = arith.constant 0 : index
    %c0_83 = arith.constant 0 : index
    %152 = vector.load %arg11[%c1_81, %c0_82, %c0_83] : memref<8x8x8xf32, #tpu.memory_space<vmem>>, vector<1x8x8xf32>
    %153 = vector.shape_cast %152 : vector<1x8x8xf32> to vector<8x8xf32>
    %cst_84 = arith.constant dense<0.000000e+00> : vector<48x8xf32>
    %154 = tpu.matmul %151, %153, %cst_84 {dimension_numbers = #tpu.dot_dimension_numbers<[1], [0], [0], [1], [0, 0, 1, 1], [], []>} : vector<48x8xf32>, vector<8x8xf32>, vector<48x8xf32> -> vector<48x8xf32>
    %155 = arith.addf %150, %154 : vector<48x8xf32>
    %156 = vector.extract_strided_slice %144 {offsets = [3, 0], sizes = [48, 8], strides = [1, 1]} : vector<56x8xf32> to vector<48x8xf32>
    %c2_85 = arith.constant 2 : index
    %c0_86 = arith.constant 0 : index
    %c0_87 = arith.constant 0 : index
    %157 = vector.load %arg11[%c2_85, %c0_86, %c0_87] : memref<8x8x8xf32, #tpu.memory_space<vmem>>, vector<1x8x8xf32>
    %158 = vector.shape_cast %157 : vector<1x8x8xf32> to vector<8x8xf32>
    %cst_88 = arith.constant dense<0.000000e+00> : vector<48x8xf32>
    %159 = tpu.matmul %156, %158, %cst_88 {dimension_numbers = #tpu.dot_dimension_numbers<[1], [0], [0], [1], [0, 0, 1, 1], [], []>} : vector<48x8xf32>, vector<8x8xf32>, vector<48x8xf32> -> vector<48x8xf32>
    %160 = arith.addf %155, %159 : vector<48x8xf32>
    %161 = vector.extract_strided_slice %144 {offsets = [4, 0], sizes = [48, 8], strides = [1, 1]} : vector<56x8xf32> to vector<48x8xf32>
    %c3_89 = arith.constant 3 : index
    %c0_90 = arith.constant 0 : index
    %c0_91 = arith.constant 0 : index
    %162 = vector.load %arg11[%c3_89, %c0_90, %c0_91] : memref<8x8x8xf32, #tpu.memory_space<vmem>>, vector<1x8x8xf32>
    %163 = vector.shape_cast %162 : vector<1x8x8xf32> to vector<8x8xf32>
    %cst_92 = arith.constant dense<0.000000e+00> : vector<48x8xf32>
    %164 = tpu.matmul %161, %163, %cst_92 {dimension_numbers = #tpu.dot_dimension_numbers<[1], [0], [0], [1], [0, 0, 1, 1], [], []>} : vector<48x8xf32>, vector<8x8xf32>, vector<48x8xf32> -> vector<48x8xf32>
    %165 = arith.addf %160, %164 : vector<48x8xf32>
    %166 = vector.extract_strided_slice %144 {offsets = [5, 0], sizes = [48, 8], strides = [1, 1]} : vector<56x8xf32> to vector<48x8xf32>
    %c4_93 = arith.constant 4 : index
    %c0_94 = arith.constant 0 : index
    %c0_95 = arith.constant 0 : index
    %167 = vector.load %arg11[%c4_93, %c0_94, %c0_95] : memref<8x8x8xf32, #tpu.memory_space<vmem>>, vector<1x8x8xf32>
    %168 = vector.shape_cast %167 : vector<1x8x8xf32> to vector<8x8xf32>
    %cst_96 = arith.constant dense<0.000000e+00> : vector<48x8xf32>
    %169 = tpu.matmul %166, %168, %cst_96 {dimension_numbers = #tpu.dot_dimension_numbers<[1], [0], [0], [1], [0, 0, 1, 1], [], []>} : vector<48x8xf32>, vector<8x8xf32>, vector<48x8xf32> -> vector<48x8xf32>
    %170 = arith.addf %165, %169 : vector<48x8xf32>
    %171 = vector.extract_strided_slice %144 {offsets = [6, 0], sizes = [48, 8], strides = [1, 1]} : vector<56x8xf32> to vector<48x8xf32>
    %c5_97 = arith.constant 5 : index
    %c0_98 = arith.constant 0 : index
    %c0_99 = arith.constant 0 : index
    %172 = vector.load %arg11[%c5_97, %c0_98, %c0_99] : memref<8x8x8xf32, #tpu.memory_space<vmem>>, vector<1x8x8xf32>
    %173 = vector.shape_cast %172 : vector<1x8x8xf32> to vector<8x8xf32>
    %cst_100 = arith.constant dense<0.000000e+00> : vector<48x8xf32>
    %174 = tpu.matmul %171, %173, %cst_100 {dimension_numbers = #tpu.dot_dimension_numbers<[1], [0], [0], [1], [0, 0, 1, 1], [], []>} : vector<48x8xf32>, vector<8x8xf32>, vector<48x8xf32> -> vector<48x8xf32>
    %175 = arith.addf %170, %174 : vector<48x8xf32>
    %176 = vector.extract_strided_slice %144 {offsets = [7, 0], sizes = [48, 8], strides = [1, 1]} : vector<56x8xf32> to vector<48x8xf32>
    %c6_101 = arith.constant 6 : index
    %c0_102 = arith.constant 0 : index
    %c0_103 = arith.constant 0 : index
    %177 = vector.load %arg11[%c6_101, %c0_102, %c0_103] : memref<8x8x8xf32, #tpu.memory_space<vmem>>, vector<1x8x8xf32>
    %178 = vector.shape_cast %177 : vector<1x8x8xf32> to vector<8x8xf32>
    %cst_104 = arith.constant dense<0.000000e+00> : vector<48x8xf32>
    %179 = tpu.matmul %176, %178, %cst_104 {dimension_numbers = #tpu.dot_dimension_numbers<[1], [0], [0], [1], [0, 0, 1, 1], [], []>} : vector<48x8xf32>, vector<8x8xf32>, vector<48x8xf32> -> vector<48x8xf32>
    %180 = arith.addf %175, %179 : vector<48x8xf32>
    %181 = vector.extract_strided_slice %144 {offsets = [8, 0], sizes = [48, 8], strides = [1, 1]} : vector<56x8xf32> to vector<48x8xf32>
    %c7_105 = arith.constant 7 : index
    %c0_106 = arith.constant 0 : index
    %c0_107 = arith.constant 0 : index
    %182 = vector.load %arg11[%c7_105, %c0_106, %c0_107] : memref<8x8x8xf32, #tpu.memory_space<vmem>>, vector<1x8x8xf32>
    %183 = vector.shape_cast %182 : vector<1x8x8xf32> to vector<8x8xf32>
    %cst_108 = arith.constant dense<0.000000e+00> : vector<48x8xf32>
    %184 = tpu.matmul %181, %183, %cst_108 {dimension_numbers = #tpu.dot_dimension_numbers<[1], [0], [0], [1], [0, 0, 1, 1], [], []>} : vector<48x8xf32>, vector<8x8xf32>, vector<48x8xf32> -> vector<48x8xf32>
    %185 = arith.addf %180, %184 : vector<48x8xf32>
    %c0_109 = arith.constant 0 : index
    %c0_110 = arith.constant 0 : index
    %186 = vector.load %arg12[%c0_109, %c0_110] : memref<1x8xf32, #tpu.memory_space<vmem>>, vector<1x8xf32>
    %187 = vector.broadcast %186 : vector<1x8xf32> to vector<48x8xf32>
    %188 = arith.addf %185, %187 : vector<48x8xf32>
    %189 = vector.broadcast %0 : vector<48x1xf32> to vector<48x8xf32>
    %190 = arith.mulf %188, %189 : vector<48x8xf32>
    %cst_111 = arith.constant dense<0.000000e+00> : vector<8xf32>
    %191 = vector.multi_reduction <add>, %190, %cst_111 [0] : vector<48x8xf32> to vector<8xf32>
    %192 = vector.shape_cast %191 : vector<8xf32> to vector<1x8xf32>
    %cst_112 = arith.constant 3.125000e-02 : f32
    %193 = vector.broadcast %cst_112 : f32 to vector<1x8xf32>
    %194 = arith.mulf %192, %193 : vector<1x8xf32>
    %195 = vector.broadcast %194 : vector<1x8xf32> to vector<48x8xf32>
    %196 = arith.subf %188, %195 : vector<48x8xf32>
    %197 = vector.broadcast %0 : vector<48x1xf32> to vector<48x8xf32>
    %198 = arith.mulf %196, %197 : vector<48x8xf32>
    %199 = arith.mulf %198, %198 : vector<48x8xf32>
    %cst_113 = arith.constant dense<0.000000e+00> : vector<8xf32>
    %200 = vector.multi_reduction <add>, %199, %cst_113 [0] : vector<48x8xf32> to vector<8xf32>
    %201 = vector.shape_cast %200 : vector<8xf32> to vector<1x8xf32>
    %cst_114 = arith.constant 3.125000e-02 : f32
    %202 = vector.broadcast %cst_114 : f32 to vector<1x8xf32>
    %203 = arith.mulf %201, %202 : vector<1x8xf32>
    %c0_115 = arith.constant 0 : index
    %c0_116 = arith.constant 0 : index
    %204 = vector.load %arg13[%c0_115, %c0_116] : memref<1x8xf32, #tpu.memory_space<vmem>>, vector<1x8xf32>
    %cst_117 = arith.constant 9.99999974E-6 : f32
    %205 = vector.broadcast %cst_117 : f32 to vector<1x8xf32>
    %206 = arith.addf %203, %205 : vector<1x8xf32>
    %207 = math.rsqrt %206 : vector<1x8xf32>
    %208 = arith.mulf %204, %207 : vector<1x8xf32>
    %c0_118 = arith.constant 0 : index
    %c0_119 = arith.constant 0 : index
    %209 = vector.load %arg14[%c0_118, %c0_119] : memref<1x8xf32, #tpu.memory_space<vmem>>, vector<1x8xf32>
    %210 = arith.mulf %194, %208 : vector<1x8xf32>
    %211 = arith.subf %209, %210 : vector<1x8xf32>
    %212 = vector.broadcast %208 : vector<1x8xf32> to vector<48x8xf32>
    %213 = arith.mulf %188, %212 : vector<48x8xf32>
    %214 = vector.broadcast %211 : vector<1x8xf32> to vector<48x8xf32>
    %215 = arith.addf %213, %214 : vector<48x8xf32>
    %216 = vector.broadcast %0 : vector<48x1xf32> to vector<48x8xf32>
    %217 = arith.mulf %215, %216 : vector<48x8xf32>
    %218 = arith.addf %80, %217 : vector<48x8xf32>
    %cst_120 = arith.constant 0.000000e+00 : f32
    %219 = vector.broadcast %cst_120 : f32 to vector<48x8xf32>
    %220 = arith.maximumf %218, %219 : vector<48x8xf32>
    %cst_121 = arith.constant 0.000000e+00 : f32
    %221 = vector.broadcast %cst_121 : f32 to vector<4x8xf32>
    %222 = tpu.concatenate %221, %220, %221 in 0 : vector<4x8xf32>, vector<48x8xf32>, vector<4x8xf32> -> vector<56x8xf32>
    %cst_122 = arith.constant 0.000000e+00 : f32
    %223 = vector.broadcast %cst_122 : f32 to vector<48x32xf32>
    %224 = vector.extract_strided_slice %222 {offsets = [1, 0], sizes = [48, 8], strides = [1, 1]} : vector<56x8xf32> to vector<48x8xf32>
    %c0_123 = arith.constant 0 : index
    %c0_124 = arith.constant 0 : index
    %c0_125 = arith.constant 0 : index
    %225 = vector.load %arg15[%c0_123, %c0_124, %c0_125] : memref<8x8x32xf32, #tpu.memory_space<vmem>>, vector<1x8x32xf32>
    %226 = vector.shape_cast %225 : vector<1x8x32xf32> to vector<8x32xf32>
    %cst_126 = arith.constant dense<0.000000e+00> : vector<48x32xf32>
    %227 = tpu.matmul %224, %226, %cst_126 {dimension_numbers = #tpu.dot_dimension_numbers<[1], [0], [0], [1], [0, 0, 1, 1], [], []>} : vector<48x8xf32>, vector<8x32xf32>, vector<48x32xf32> -> vector<48x32xf32>
    %228 = arith.addf %223, %227 : vector<48x32xf32>
    %229 = vector.extract_strided_slice %222 {offsets = [2, 0], sizes = [48, 8], strides = [1, 1]} : vector<56x8xf32> to vector<48x8xf32>
    %c1_127 = arith.constant 1 : index
    %c0_128 = arith.constant 0 : index
    %c0_129 = arith.constant 0 : index
    %230 = vector.load %arg15[%c1_127, %c0_128, %c0_129] : memref<8x8x32xf32, #tpu.memory_space<vmem>>, vector<1x8x32xf32>
    %231 = vector.shape_cast %230 : vector<1x8x32xf32> to vector<8x32xf32>
    %cst_130 = arith.constant dense<0.000000e+00> : vector<48x32xf32>
    %232 = tpu.matmul %229, %231, %cst_130 {dimension_numbers = #tpu.dot_dimension_numbers<[1], [0], [0], [1], [0, 0, 1, 1], [], []>} : vector<48x8xf32>, vector<8x32xf32>, vector<48x32xf32> -> vector<48x32xf32>
    %233 = arith.addf %228, %232 : vector<48x32xf32>
    %234 = vector.extract_strided_slice %222 {offsets = [3, 0], sizes = [48, 8], strides = [1, 1]} : vector<56x8xf32> to vector<48x8xf32>
    %c2_131 = arith.constant 2 : index
    %c0_132 = arith.constant 0 : index
    %c0_133 = arith.constant 0 : index
    %235 = vector.load %arg15[%c2_131, %c0_132, %c0_133] : memref<8x8x32xf32, #tpu.memory_space<vmem>>, vector<1x8x32xf32>
    %236 = vector.shape_cast %235 : vector<1x8x32xf32> to vector<8x32xf32>
    %cst_134 = arith.constant dense<0.000000e+00> : vector<48x32xf32>
    %237 = tpu.matmul %234, %236, %cst_134 {dimension_numbers = #tpu.dot_dimension_numbers<[1], [0], [0], [1], [0, 0, 1, 1], [], []>} : vector<48x8xf32>, vector<8x32xf32>, vector<48x32xf32> -> vector<48x32xf32>
    %238 = arith.addf %233, %237 : vector<48x32xf32>
    %239 = vector.extract_strided_slice %222 {offsets = [4, 0], sizes = [48, 8], strides = [1, 1]} : vector<56x8xf32> to vector<48x8xf32>
    %c3_135 = arith.constant 3 : index
    %c0_136 = arith.constant 0 : index
    %c0_137 = arith.constant 0 : index
    %240 = vector.load %arg15[%c3_135, %c0_136, %c0_137] : memref<8x8x32xf32, #tpu.memory_space<vmem>>, vector<1x8x32xf32>
    %241 = vector.shape_cast %240 : vector<1x8x32xf32> to vector<8x32xf32>
    %cst_138 = arith.constant dense<0.000000e+00> : vector<48x32xf32>
    %242 = tpu.matmul %239, %241, %cst_138 {dimension_numbers = #tpu.dot_dimension_numbers<[1], [0], [0], [1], [0, 0, 1, 1], [], []>} : vector<48x8xf32>, vector<8x32xf32>, vector<48x32xf32> -> vector<48x32xf32>
    %243 = arith.addf %238, %242 : vector<48x32xf32>
    %244 = vector.extract_strided_slice %222 {offsets = [5, 0], sizes = [48, 8], strides = [1, 1]} : vector<56x8xf32> to vector<48x8xf32>
    %c4_139 = arith.constant 4 : index
    %c0_140 = arith.constant 0 : index
    %c0_141 = arith.constant 0 : index
    %245 = vector.load %arg15[%c4_139, %c0_140, %c0_141] : memref<8x8x32xf32, #tpu.memory_space<vmem>>, vector<1x8x32xf32>
    %246 = vector.shape_cast %245 : vector<1x8x32xf32> to vector<8x32xf32>
    %cst_142 = arith.constant dense<0.000000e+00> : vector<48x32xf32>
    %247 = tpu.matmul %244, %246, %cst_142 {dimension_numbers = #tpu.dot_dimension_numbers<[1], [0], [0], [1], [0, 0, 1, 1], [], []>} : vector<48x8xf32>, vector<8x32xf32>, vector<48x32xf32> -> vector<48x32xf32>
    %248 = arith.addf %243, %247 : vector<48x32xf32>
    %249 = vector.extract_strided_slice %222 {offsets = [6, 0], sizes = [48, 8], strides = [1, 1]} : vector<56x8xf32> to vector<48x8xf32>
    %c5_143 = arith.constant 5 : index
    %c0_144 = arith.constant 0 : index
    %c0_145 = arith.constant 0 : index
    %250 = vector.load %arg15[%c5_143, %c0_144, %c0_145] : memref<8x8x32xf32, #tpu.memory_space<vmem>>, vector<1x8x32xf32>
    %251 = vector.shape_cast %250 : vector<1x8x32xf32> to vector<8x32xf32>
    %cst_146 = arith.constant dense<0.000000e+00> : vector<48x32xf32>
    %252 = tpu.matmul %249, %251, %cst_146 {dimension_numbers = #tpu.dot_dimension_numbers<[1], [0], [0], [1], [0, 0, 1, 1], [], []>} : vector<48x8xf32>, vector<8x32xf32>, vector<48x32xf32> -> vector<48x32xf32>
    %253 = arith.addf %248, %252 : vector<48x32xf32>
    %254 = vector.extract_strided_slice %222 {offsets = [7, 0], sizes = [48, 8], strides = [1, 1]} : vector<56x8xf32> to vector<48x8xf32>
    %c6_147 = arith.constant 6 : index
    %c0_148 = arith.constant 0 : index
    %c0_149 = arith.constant 0 : index
    %255 = vector.load %arg15[%c6_147, %c0_148, %c0_149] : memref<8x8x32xf32, #tpu.memory_space<vmem>>, vector<1x8x32xf32>
    %256 = vector.shape_cast %255 : vector<1x8x32xf32> to vector<8x32xf32>
    %cst_150 = arith.constant dense<0.000000e+00> : vector<48x32xf32>
    %257 = tpu.matmul %254, %256, %cst_150 {dimension_numbers = #tpu.dot_dimension_numbers<[1], [0], [0], [1], [0, 0, 1, 1], [], []>} : vector<48x8xf32>, vector<8x32xf32>, vector<48x32xf32> -> vector<48x32xf32>
    %258 = arith.addf %253, %257 : vector<48x32xf32>
    %259 = vector.extract_strided_slice %222 {offsets = [8, 0], sizes = [48, 8], strides = [1, 1]} : vector<56x8xf32> to vector<48x8xf32>
    %c7_151 = arith.constant 7 : index
    %c0_152 = arith.constant 0 : index
    %c0_153 = arith.constant 0 : index
    %260 = vector.load %arg15[%c7_151, %c0_152, %c0_153] : memref<8x8x32xf32, #tpu.memory_space<vmem>>, vector<1x8x32xf32>
    %261 = vector.shape_cast %260 : vector<1x8x32xf32> to vector<8x32xf32>
    %cst_154 = arith.constant dense<0.000000e+00> : vector<48x32xf32>
    %262 = tpu.matmul %259, %261, %cst_154 {dimension_numbers = #tpu.dot_dimension_numbers<[1], [0], [0], [1], [0, 0, 1, 1], [], []>} : vector<48x8xf32>, vector<8x32xf32>, vector<48x32xf32> -> vector<48x32xf32>
    %263 = arith.addf %258, %262 : vector<48x32xf32>
    %c0_155 = arith.constant 0 : index
    %c0_156 = arith.constant 0 : index
    %264 = vector.load %arg16[%c0_155, %c0_156] : memref<1x32xf32, #tpu.memory_space<vmem>>, vector<1x32xf32>
    %265 = vector.broadcast %264 : vector<1x32xf32> to vector<48x32xf32>
    %266 = arith.addf %263, %265 : vector<48x32xf32>
    %267 = vector.broadcast %0 : vector<48x1xf32> to vector<48x32xf32>
    %268 = arith.mulf %266, %267 : vector<48x32xf32>
    %cst_157 = arith.constant dense<0.000000e+00> : vector<32xf32>
    %269 = vector.multi_reduction <add>, %268, %cst_157 [0] : vector<48x32xf32> to vector<32xf32>
    %270 = vector.shape_cast %269 : vector<32xf32> to vector<1x32xf32>
    %cst_158 = arith.constant 3.125000e-02 : f32
    %271 = vector.broadcast %cst_158 : f32 to vector<1x32xf32>
    %272 = arith.mulf %270, %271 : vector<1x32xf32>
    %273 = vector.broadcast %272 : vector<1x32xf32> to vector<48x32xf32>
    %274 = arith.subf %266, %273 : vector<48x32xf32>
    %275 = vector.broadcast %0 : vector<48x1xf32> to vector<48x32xf32>
    %276 = arith.mulf %274, %275 : vector<48x32xf32>
    %277 = arith.mulf %276, %276 : vector<48x32xf32>
    %cst_159 = arith.constant dense<0.000000e+00> : vector<32xf32>
    %278 = vector.multi_reduction <add>, %277, %cst_159 [0] : vector<48x32xf32> to vector<32xf32>
    %279 = vector.shape_cast %278 : vector<32xf32> to vector<1x32xf32>
    %cst_160 = arith.constant 3.125000e-02 : f32
    %280 = vector.broadcast %cst_160 : f32 to vector<1x32xf32>
    %281 = arith.mulf %279, %280 : vector<1x32xf32>
    %c0_161 = arith.constant 0 : index
    %c0_162 = arith.constant 0 : index
    %282 = vector.load %arg17[%c0_161, %c0_162] : memref<1x32xf32, #tpu.memory_space<vmem>>, vector<1x32xf32>
    %cst_163 = arith.constant 9.99999974E-6 : f32
    %283 = vector.broadcast %cst_163 : f32 to vector<1x32xf32>
    %284 = arith.addf %281, %283 : vector<1x32xf32>
    %285 = math.rsqrt %284 : vector<1x32xf32>
    %286 = arith.mulf %282, %285 : vector<1x32xf32>
    %c0_164 = arith.constant 0 : index
    %c0_165 = arith.constant 0 : index
    %287 = vector.load %arg18[%c0_164, %c0_165] : memref<1x32xf32, #tpu.memory_space<vmem>>, vector<1x32xf32>
    %288 = arith.mulf %272, %286 : vector<1x32xf32>
    %289 = arith.subf %287, %288 : vector<1x32xf32>
    %290 = vector.broadcast %286 : vector<1x32xf32> to vector<48x32xf32>
    %291 = arith.mulf %266, %290 : vector<48x32xf32>
    %292 = vector.broadcast %289 : vector<1x32xf32> to vector<48x32xf32>
    %293 = arith.addf %291, %292 : vector<48x32xf32>
    %294 = vector.broadcast %0 : vector<48x1xf32> to vector<48x32xf32>
    %295 = arith.mulf %293, %294 : vector<48x32xf32>
    %296 = vector.extract_strided_slice %295 {offsets = [0, 0], sizes = [48, 16], strides = [1, 1]} : vector<48x32xf32> to vector<48x16xf32>
    %cst_166 = arith.constant 0.000000e+00 : f32
    %297 = vector.broadcast %cst_166 : f32 to vector<48x16xf32>
    %298 = arith.maximumf %296, %297 : vector<48x16xf32>
    %299 = vector.extract_strided_slice %295 {offsets = [0, 16], sizes = [48, 16], strides = [1, 1]} : vector<48x32xf32> to vector<48x16xf32>
    %cst_167 = arith.constant 0.000000e+00 : f32
    %300 = vector.broadcast %cst_167 : f32 to vector<4x16xf32>
    %301 = tpu.concatenate %300, %298, %300 in 0 : vector<4x16xf32>, vector<48x16xf32>, vector<4x16xf32> -> vector<56x16xf32>
    %cst_168 = arith.constant 0.000000e+00 : f32
    %302 = vector.broadcast %cst_168 : f32 to vector<48x16xf32>
    %303 = vector.extract_strided_slice %301 {offsets = [2, 0], sizes = [48, 16], strides = [1, 1]} : vector<56x16xf32> to vector<48x16xf32>
    %c0_169 = arith.constant 0 : index
    %c0_170 = arith.constant 0 : index
    %c0_171 = arith.constant 0 : index
    %304 = vector.load %arg19[%c0_169, %c0_170, %c0_171] : memref<5x16x16xf32, #tpu.memory_space<vmem>>, vector<1x16x16xf32>
    %305 = vector.shape_cast %304 : vector<1x16x16xf32> to vector<16x16xf32>
    %cst_172 = arith.constant dense<0.000000e+00> : vector<48x16xf32>
    %306 = tpu.matmul %303, %305, %cst_172 {dimension_numbers = #tpu.dot_dimension_numbers<[1], [0], [0], [1], [0, 0, 1, 1], [], []>} : vector<48x16xf32>, vector<16x16xf32>, vector<48x16xf32> -> vector<48x16xf32>
    %307 = arith.addf %302, %306 : vector<48x16xf32>
    %308 = vector.extract_strided_slice %301 {offsets = [3, 0], sizes = [48, 16], strides = [1, 1]} : vector<56x16xf32> to vector<48x16xf32>
    %c1_173 = arith.constant 1 : index
    %c0_174 = arith.constant 0 : index
    %c0_175 = arith.constant 0 : index
    %309 = vector.load %arg19[%c1_173, %c0_174, %c0_175] : memref<5x16x16xf32, #tpu.memory_space<vmem>>, vector<1x16x16xf32>
    %310 = vector.shape_cast %309 : vector<1x16x16xf32> to vector<16x16xf32>
    %cst_176 = arith.constant dense<0.000000e+00> : vector<48x16xf32>
    %311 = tpu.matmul %308, %310, %cst_176 {dimension_numbers = #tpu.dot_dimension_numbers<[1], [0], [0], [1], [0, 0, 1, 1], [], []>} : vector<48x16xf32>, vector<16x16xf32>, vector<48x16xf32> -> vector<48x16xf32>
    %312 = arith.addf %307, %311 : vector<48x16xf32>
    %313 = vector.extract_strided_slice %301 {offsets = [4, 0], sizes = [48, 16], strides = [1, 1]} : vector<56x16xf32> to vector<48x16xf32>
    %c2_177 = arith.constant 2 : index
    %c0_178 = arith.constant 0 : index
    %c0_179 = arith.constant 0 : index
    %314 = vector.load %arg19[%c2_177, %c0_178, %c0_179] : memref<5x16x16xf32, #tpu.memory_space<vmem>>, vector<1x16x16xf32>
    %315 = vector.shape_cast %314 : vector<1x16x16xf32> to vector<16x16xf32>
    %cst_180 = arith.constant dense<0.000000e+00> : vector<48x16xf32>
    %316 = tpu.matmul %313, %315, %cst_180 {dimension_numbers = #tpu.dot_dimension_numbers<[1], [0], [0], [1], [0, 0, 1, 1], [], []>} : vector<48x16xf32>, vector<16x16xf32>, vector<48x16xf32> -> vector<48x16xf32>
    %317 = arith.addf %312, %316 : vector<48x16xf32>
    %318 = vector.extract_strided_slice %301 {offsets = [5, 0], sizes = [48, 16], strides = [1, 1]} : vector<56x16xf32> to vector<48x16xf32>
    %c3_181 = arith.constant 3 : index
    %c0_182 = arith.constant 0 : index
    %c0_183 = arith.constant 0 : index
    %319 = vector.load %arg19[%c3_181, %c0_182, %c0_183] : memref<5x16x16xf32, #tpu.memory_space<vmem>>, vector<1x16x16xf32>
    %320 = vector.shape_cast %319 : vector<1x16x16xf32> to vector<16x16xf32>
    %cst_184 = arith.constant dense<0.000000e+00> : vector<48x16xf32>
    %321 = tpu.matmul %318, %320, %cst_184 {dimension_numbers = #tpu.dot_dimension_numbers<[1], [0], [0], [1], [0, 0, 1, 1], [], []>} : vector<48x16xf32>, vector<16x16xf32>, vector<48x16xf32> -> vector<48x16xf32>
    %322 = arith.addf %317, %321 : vector<48x16xf32>
    %323 = vector.extract_strided_slice %301 {offsets = [6, 0], sizes = [48, 16], strides = [1, 1]} : vector<56x16xf32> to vector<48x16xf32>
    %c4_185 = arith.constant 4 : index
    %c0_186 = arith.constant 0 : index
    %c0_187 = arith.constant 0 : index
    %324 = vector.load %arg19[%c4_185, %c0_186, %c0_187] : memref<5x16x16xf32, #tpu.memory_space<vmem>>, vector<1x16x16xf32>
    %325 = vector.shape_cast %324 : vector<1x16x16xf32> to vector<16x16xf32>
    %cst_188 = arith.constant dense<0.000000e+00> : vector<48x16xf32>
    %326 = tpu.matmul %323, %325, %cst_188 {dimension_numbers = #tpu.dot_dimension_numbers<[1], [0], [0], [1], [0, 0, 1, 1], [], []>} : vector<48x16xf32>, vector<16x16xf32>, vector<48x16xf32> -> vector<48x16xf32>
    %327 = arith.addf %322, %326 : vector<48x16xf32>
    %c0_189 = arith.constant 0 : index
    %c0_190 = arith.constant 0 : index
    %328 = vector.load %arg20[%c0_189, %c0_190] : memref<1x16xf32, #tpu.memory_space<vmem>>, vector<1x16xf32>
    %329 = vector.broadcast %328 : vector<1x16xf32> to vector<48x16xf32>
    %330 = arith.addf %327, %329 : vector<48x16xf32>
    %331 = vector.broadcast %0 : vector<48x1xf32> to vector<48x16xf32>
    %332 = arith.mulf %330, %331 : vector<48x16xf32>
    %cst_191 = arith.constant dense<0.000000e+00> : vector<16xf32>
    %333 = vector.multi_reduction <add>, %332, %cst_191 [0] : vector<48x16xf32> to vector<16xf32>
    %334 = vector.shape_cast %333 : vector<16xf32> to vector<1x16xf32>
    %cst_192 = arith.constant 3.125000e-02 : f32
    %335 = vector.broadcast %cst_192 : f32 to vector<1x16xf32>
    %336 = arith.mulf %334, %335 : vector<1x16xf32>
    %337 = vector.broadcast %336 : vector<1x16xf32> to vector<48x16xf32>
    %338 = arith.subf %330, %337 : vector<48x16xf32>
    %339 = vector.broadcast %0 : vector<48x1xf32> to vector<48x16xf32>
    %340 = arith.mulf %338, %339 : vector<48x16xf32>
    %341 = arith.mulf %340, %340 : vector<48x16xf32>
    %cst_193 = arith.constant dense<0.000000e+00> : vector<16xf32>
    %342 = vector.multi_reduction <add>, %341, %cst_193 [0] : vector<48x16xf32> to vector<16xf32>
    %343 = vector.shape_cast %342 : vector<16xf32> to vector<1x16xf32>
    %cst_194 = arith.constant 3.125000e-02 : f32
    %344 = vector.broadcast %cst_194 : f32 to vector<1x16xf32>
    %345 = arith.mulf %343, %344 : vector<1x16xf32>
    %c0_195 = arith.constant 0 : index
    %c0_196 = arith.constant 0 : index
    %346 = vector.load %arg21[%c0_195, %c0_196] : memref<1x16xf32, #tpu.memory_space<vmem>>, vector<1x16xf32>
    %cst_197 = arith.constant 9.99999974E-6 : f32
    %347 = vector.broadcast %cst_197 : f32 to vector<1x16xf32>
    %348 = arith.addf %345, %347 : vector<1x16xf32>
    %349 = math.rsqrt %348 : vector<1x16xf32>
    %350 = arith.mulf %346, %349 : vector<1x16xf32>
    %c0_198 = arith.constant 0 : index
    %c0_199 = arith.constant 0 : index
    %351 = vector.load %arg22[%c0_198, %c0_199] : memref<1x16xf32, #tpu.memory_space<vmem>>, vector<1x16xf32>
    %352 = arith.mulf %336, %350 : vector<1x16xf32>
    %353 = arith.subf %351, %352 : vector<1x16xf32>
    %354 = vector.broadcast %350 : vector<1x16xf32> to vector<48x16xf32>
    %355 = arith.mulf %330, %354 : vector<48x16xf32>
    %356 = vector.broadcast %353 : vector<1x16xf32> to vector<48x16xf32>
    %357 = arith.addf %355, %356 : vector<48x16xf32>
    %358 = vector.broadcast %0 : vector<48x1xf32> to vector<48x16xf32>
    %359 = arith.mulf %357, %358 : vector<48x16xf32>
    %cst_200 = arith.constant 0.000000e+00 : f32
    %360 = vector.broadcast %cst_200 : f32 to vector<48x16xf32>
    %361 = arith.maximumf %359, %360 : vector<48x16xf32>
    %cst_201 = arith.constant 0.000000e+00 : f32
    %362 = vector.broadcast %cst_201 : f32 to vector<4x16xf32>
    %363 = tpu.concatenate %362, %361, %362 in 0 : vector<4x16xf32>, vector<48x16xf32>, vector<4x16xf32> -> vector<56x16xf32>
    %cst_202 = arith.constant 0.000000e+00 : f32
    %364 = vector.broadcast %cst_202 : f32 to vector<48x16xf32>
    %365 = vector.extract_strided_slice %363 {offsets = [1, 0], sizes = [48, 16], strides = [1, 1]} : vector<56x16xf32> to vector<48x16xf32>
    %c0_203 = arith.constant 0 : index
    %c0_204 = arith.constant 0 : index
    %c0_205 = arith.constant 0 : index
    %366 = vector.load %arg23[%c0_203, %c0_204, %c0_205] : memref<8x16x16xf32, #tpu.memory_space<vmem>>, vector<1x16x16xf32>
    %367 = vector.shape_cast %366 : vector<1x16x16xf32> to vector<16x16xf32>
    %cst_206 = arith.constant dense<0.000000e+00> : vector<48x16xf32>
    %368 = tpu.matmul %365, %367, %cst_206 {dimension_numbers = #tpu.dot_dimension_numbers<[1], [0], [0], [1], [0, 0, 1, 1], [], []>} : vector<48x16xf32>, vector<16x16xf32>, vector<48x16xf32> -> vector<48x16xf32>
    %369 = arith.addf %364, %368 : vector<48x16xf32>
    %370 = vector.extract_strided_slice %363 {offsets = [2, 0], sizes = [48, 16], strides = [1, 1]} : vector<56x16xf32> to vector<48x16xf32>
    %c1_207 = arith.constant 1 : index
    %c0_208 = arith.constant 0 : index
    %c0_209 = arith.constant 0 : index
    %371 = vector.load %arg23[%c1_207, %c0_208, %c0_209] : memref<8x16x16xf32, #tpu.memory_space<vmem>>, vector<1x16x16xf32>
    %372 = vector.shape_cast %371 : vector<1x16x16xf32> to vector<16x16xf32>
    %cst_210 = arith.constant dense<0.000000e+00> : vector<48x16xf32>
    %373 = tpu.matmul %370, %372, %cst_210 {dimension_numbers = #tpu.dot_dimension_numbers<[1], [0], [0], [1], [0, 0, 1, 1], [], []>} : vector<48x16xf32>, vector<16x16xf32>, vector<48x16xf32> -> vector<48x16xf32>
    %374 = arith.addf %369, %373 : vector<48x16xf32>
    %375 = vector.extract_strided_slice %363 {offsets = [3, 0], sizes = [48, 16], strides = [1, 1]} : vector<56x16xf32> to vector<48x16xf32>
    %c2_211 = arith.constant 2 : index
    %c0_212 = arith.constant 0 : index
    %c0_213 = arith.constant 0 : index
    %376 = vector.load %arg23[%c2_211, %c0_212, %c0_213] : memref<8x16x16xf32, #tpu.memory_space<vmem>>, vector<1x16x16xf32>
    %377 = vector.shape_cast %376 : vector<1x16x16xf32> to vector<16x16xf32>
    %cst_214 = arith.constant dense<0.000000e+00> : vector<48x16xf32>
    %378 = tpu.matmul %375, %377, %cst_214 {dimension_numbers = #tpu.dot_dimension_numbers<[1], [0], [0], [1], [0, 0, 1, 1], [], []>} : vector<48x16xf32>, vector<16x16xf32>, vector<48x16xf32> -> vector<48x16xf32>
    %379 = arith.addf %374, %378 : vector<48x16xf32>
    %380 = vector.extract_strided_slice %363 {offsets = [4, 0], sizes = [48, 16], strides = [1, 1]} : vector<56x16xf32> to vector<48x16xf32>
    %c3_215 = arith.constant 3 : index
    %c0_216 = arith.constant 0 : index
    %c0_217 = arith.constant 0 : index
    %381 = vector.load %arg23[%c3_215, %c0_216, %c0_217] : memref<8x16x16xf32, #tpu.memory_space<vmem>>, vector<1x16x16xf32>
    %382 = vector.shape_cast %381 : vector<1x16x16xf32> to vector<16x16xf32>
    %cst_218 = arith.constant dense<0.000000e+00> : vector<48x16xf32>
    %383 = tpu.matmul %380, %382, %cst_218 {dimension_numbers = #tpu.dot_dimension_numbers<[1], [0], [0], [1], [0, 0, 1, 1], [], []>} : vector<48x16xf32>, vector<16x16xf32>, vector<48x16xf32> -> vector<48x16xf32>
    %384 = arith.addf %379, %383 : vector<48x16xf32>
    %385 = vector.extract_strided_slice %363 {offsets = [5, 0], sizes = [48, 16], strides = [1, 1]} : vector<56x16xf32> to vector<48x16xf32>
    %c4_219 = arith.constant 4 : index
    %c0_220 = arith.constant 0 : index
    %c0_221 = arith.constant 0 : index
    %386 = vector.load %arg23[%c4_219, %c0_220, %c0_221] : memref<8x16x16xf32, #tpu.memory_space<vmem>>, vector<1x16x16xf32>
    %387 = vector.shape_cast %386 : vector<1x16x16xf32> to vector<16x16xf32>
    %cst_222 = arith.constant dense<0.000000e+00> : vector<48x16xf32>
    %388 = tpu.matmul %385, %387, %cst_222 {dimension_numbers = #tpu.dot_dimension_numbers<[1], [0], [0], [1], [0, 0, 1, 1], [], []>} : vector<48x16xf32>, vector<16x16xf32>, vector<48x16xf32> -> vector<48x16xf32>
    %389 = arith.addf %384, %388 : vector<48x16xf32>
    %390 = vector.extract_strided_slice %363 {offsets = [6, 0], sizes = [48, 16], strides = [1, 1]} : vector<56x16xf32> to vector<48x16xf32>
    %c5_223 = arith.constant 5 : index
    %c0_224 = arith.constant 0 : index
    %c0_225 = arith.constant 0 : index
    %391 = vector.load %arg23[%c5_223, %c0_224, %c0_225] : memref<8x16x16xf32, #tpu.memory_space<vmem>>, vector<1x16x16xf32>
    %392 = vector.shape_cast %391 : vector<1x16x16xf32> to vector<16x16xf32>
    %cst_226 = arith.constant dense<0.000000e+00> : vector<48x16xf32>
    %393 = tpu.matmul %390, %392, %cst_226 {dimension_numbers = #tpu.dot_dimension_numbers<[1], [0], [0], [1], [0, 0, 1, 1], [], []>} : vector<48x16xf32>, vector<16x16xf32>, vector<48x16xf32> -> vector<48x16xf32>
    %394 = arith.addf %389, %393 : vector<48x16xf32>
    %395 = vector.extract_strided_slice %363 {offsets = [7, 0], sizes = [48, 16], strides = [1, 1]} : vector<56x16xf32> to vector<48x16xf32>
    %c6_227 = arith.constant 6 : index
    %c0_228 = arith.constant 0 : index
    %c0_229 = arith.constant 0 : index
    %396 = vector.load %arg23[%c6_227, %c0_228, %c0_229] : memref<8x16x16xf32, #tpu.memory_space<vmem>>, vector<1x16x16xf32>
    %397 = vector.shape_cast %396 : vector<1x16x16xf32> to vector<16x16xf32>
    %cst_230 = arith.constant dense<0.000000e+00> : vector<48x16xf32>
    %398 = tpu.matmul %395, %397, %cst_230 {dimension_numbers = #tpu.dot_dimension_numbers<[1], [0], [0], [1], [0, 0, 1, 1], [], []>} : vector<48x16xf32>, vector<16x16xf32>, vector<48x16xf32> -> vector<48x16xf32>
    %399 = arith.addf %394, %398 : vector<48x16xf32>
    %400 = vector.extract_strided_slice %363 {offsets = [8, 0], sizes = [48, 16], strides = [1, 1]} : vector<56x16xf32> to vector<48x16xf32>
    %c7_231 = arith.constant 7 : index
    %c0_232 = arith.constant 0 : index
    %c0_233 = arith.constant 0 : index
    %401 = vector.load %arg23[%c7_231, %c0_232, %c0_233] : memref<8x16x16xf32, #tpu.memory_space<vmem>>, vector<1x16x16xf32>
    %402 = vector.shape_cast %401 : vector<1x16x16xf32> to vector<16x16xf32>
    %cst_234 = arith.constant dense<0.000000e+00> : vector<48x16xf32>
    %403 = tpu.matmul %400, %402, %cst_234 {dimension_numbers = #tpu.dot_dimension_numbers<[1], [0], [0], [1], [0, 0, 1, 1], [], []>} : vector<48x16xf32>, vector<16x16xf32>, vector<48x16xf32> -> vector<48x16xf32>
    %404 = arith.addf %399, %403 : vector<48x16xf32>
    %c0_235 = arith.constant 0 : index
    %c0_236 = arith.constant 0 : index
    %405 = vector.load %arg24[%c0_235, %c0_236] : memref<1x16xf32, #tpu.memory_space<vmem>>, vector<1x16xf32>
    %406 = vector.broadcast %405 : vector<1x16xf32> to vector<48x16xf32>
    %407 = arith.addf %404, %406 : vector<48x16xf32>
    %408 = vector.broadcast %0 : vector<48x1xf32> to vector<48x16xf32>
    %409 = arith.mulf %407, %408 : vector<48x16xf32>
    %cst_237 = arith.constant dense<0.000000e+00> : vector<16xf32>
    %410 = vector.multi_reduction <add>, %409, %cst_237 [0] : vector<48x16xf32> to vector<16xf32>
    %411 = vector.shape_cast %410 : vector<16xf32> to vector<1x16xf32>
    %cst_238 = arith.constant 3.125000e-02 : f32
    %412 = vector.broadcast %cst_238 : f32 to vector<1x16xf32>
    %413 = arith.mulf %411, %412 : vector<1x16xf32>
    %414 = vector.broadcast %413 : vector<1x16xf32> to vector<48x16xf32>
    %415 = arith.subf %407, %414 : vector<48x16xf32>
    %416 = vector.broadcast %0 : vector<48x1xf32> to vector<48x16xf32>
    %417 = arith.mulf %415, %416 : vector<48x16xf32>
    %418 = arith.mulf %417, %417 : vector<48x16xf32>
    %cst_239 = arith.constant dense<0.000000e+00> : vector<16xf32>
    %419 = vector.multi_reduction <add>, %418, %cst_239 [0] : vector<48x16xf32> to vector<16xf32>
    %420 = vector.shape_cast %419 : vector<16xf32> to vector<1x16xf32>
    %cst_240 = arith.constant 3.125000e-02 : f32
    %421 = vector.broadcast %cst_240 : f32 to vector<1x16xf32>
    %422 = arith.mulf %420, %421 : vector<1x16xf32>
    %c0_241 = arith.constant 0 : index
    %c0_242 = arith.constant 0 : index
    %423 = vector.load %arg25[%c0_241, %c0_242] : memref<1x16xf32, #tpu.memory_space<vmem>>, vector<1x16xf32>
    %cst_243 = arith.constant 9.99999974E-6 : f32
    %424 = vector.broadcast %cst_243 : f32 to vector<1x16xf32>
    %425 = arith.addf %422, %424 : vector<1x16xf32>
    %426 = math.rsqrt %425 : vector<1x16xf32>
    %427 = arith.mulf %423, %426 : vector<1x16xf32>
    %c0_244 = arith.constant 0 : index
    %c0_245 = arith.constant 0 : index
    %428 = vector.load %arg26[%c0_244, %c0_245] : memref<1x16xf32, #tpu.memory_space<vmem>>, vector<1x16xf32>
    %429 = arith.mulf %413, %427 : vector<1x16xf32>
    %430 = arith.subf %428, %429 : vector<1x16xf32>
    %431 = vector.broadcast %427 : vector<1x16xf32> to vector<48x16xf32>
    %432 = arith.mulf %407, %431 : vector<48x16xf32>
    %433 = vector.broadcast %430 : vector<1x16xf32> to vector<48x16xf32>
    %434 = arith.addf %432, %433 : vector<48x16xf32>
    %435 = vector.broadcast %0 : vector<48x1xf32> to vector<48x16xf32>
    %436 = arith.mulf %434, %435 : vector<48x16xf32>
    %437 = arith.addf %299, %436 : vector<48x16xf32>
    %cst_246 = arith.constant 0.000000e+00 : f32
    %438 = vector.broadcast %cst_246 : f32 to vector<48x16xf32>
    %439 = arith.maximumf %437, %438 : vector<48x16xf32>
    %cst_247 = arith.constant 0.000000e+00 : f32
    %440 = vector.broadcast %cst_247 : f32 to vector<4x16xf32>
    %441 = tpu.concatenate %440, %439, %440 in 0 : vector<4x16xf32>, vector<48x16xf32>, vector<4x16xf32> -> vector<56x16xf32>
    %cst_248 = arith.constant 0.000000e+00 : f32
    %442 = vector.broadcast %cst_248 : f32 to vector<48x32xf32>
    %443 = vector.extract_strided_slice %441 {offsets = [1, 0], sizes = [48, 16], strides = [1, 1]} : vector<56x16xf32> to vector<48x16xf32>
    %c0_249 = arith.constant 0 : index
    %c0_250 = arith.constant 0 : index
    %c0_251 = arith.constant 0 : index
    %444 = vector.load %arg27[%c0_249, %c0_250, %c0_251] : memref<8x16x32xf32, #tpu.memory_space<vmem>>, vector<1x16x32xf32>
    %445 = vector.shape_cast %444 : vector<1x16x32xf32> to vector<16x32xf32>
    %cst_252 = arith.constant dense<0.000000e+00> : vector<48x32xf32>
    %446 = tpu.matmul %443, %445, %cst_252 {dimension_numbers = #tpu.dot_dimension_numbers<[1], [0], [0], [1], [0, 0, 1, 1], [], []>} : vector<48x16xf32>, vector<16x32xf32>, vector<48x32xf32> -> vector<48x32xf32>
    %447 = arith.addf %442, %446 : vector<48x32xf32>
    %448 = vector.extract_strided_slice %441 {offsets = [2, 0], sizes = [48, 16], strides = [1, 1]} : vector<56x16xf32> to vector<48x16xf32>
    %c1_253 = arith.constant 1 : index
    %c0_254 = arith.constant 0 : index
    %c0_255 = arith.constant 0 : index
    %449 = vector.load %arg27[%c1_253, %c0_254, %c0_255] : memref<8x16x32xf32, #tpu.memory_space<vmem>>, vector<1x16x32xf32>
    %450 = vector.shape_cast %449 : vector<1x16x32xf32> to vector<16x32xf32>
    %cst_256 = arith.constant dense<0.000000e+00> : vector<48x32xf32>
    %451 = tpu.matmul %448, %450, %cst_256 {dimension_numbers = #tpu.dot_dimension_numbers<[1], [0], [0], [1], [0, 0, 1, 1], [], []>} : vector<48x16xf32>, vector<16x32xf32>, vector<48x32xf32> -> vector<48x32xf32>
    %452 = arith.addf %447, %451 : vector<48x32xf32>
    %453 = vector.extract_strided_slice %441 {offsets = [3, 0], sizes = [48, 16], strides = [1, 1]} : vector<56x16xf32> to vector<48x16xf32>
    %c2_257 = arith.constant 2 : index
    %c0_258 = arith.constant 0 : index
    %c0_259 = arith.constant 0 : index
    %454 = vector.load %arg27[%c2_257, %c0_258, %c0_259] : memref<8x16x32xf32, #tpu.memory_space<vmem>>, vector<1x16x32xf32>
    %455 = vector.shape_cast %454 : vector<1x16x32xf32> to vector<16x32xf32>
    %cst_260 = arith.constant dense<0.000000e+00> : vector<48x32xf32>
    %456 = tpu.matmul %453, %455, %cst_260 {dimension_numbers = #tpu.dot_dimension_numbers<[1], [0], [0], [1], [0, 0, 1, 1], [], []>} : vector<48x16xf32>, vector<16x32xf32>, vector<48x32xf32> -> vector<48x32xf32>
    %457 = arith.addf %452, %456 : vector<48x32xf32>
    %458 = vector.extract_strided_slice %441 {offsets = [4, 0], sizes = [48, 16], strides = [1, 1]} : vector<56x16xf32> to vector<48x16xf32>
    %c3_261 = arith.constant 3 : index
    %c0_262 = arith.constant 0 : index
    %c0_263 = arith.constant 0 : index
    %459 = vector.load %arg27[%c3_261, %c0_262, %c0_263] : memref<8x16x32xf32, #tpu.memory_space<vmem>>, vector<1x16x32xf32>
    %460 = vector.shape_cast %459 : vector<1x16x32xf32> to vector<16x32xf32>
    %cst_264 = arith.constant dense<0.000000e+00> : vector<48x32xf32>
    %461 = tpu.matmul %458, %460, %cst_264 {dimension_numbers = #tpu.dot_dimension_numbers<[1], [0], [0], [1], [0, 0, 1, 1], [], []>} : vector<48x16xf32>, vector<16x32xf32>, vector<48x32xf32> -> vector<48x32xf32>
    %462 = arith.addf %457, %461 : vector<48x32xf32>
    %463 = vector.extract_strided_slice %441 {offsets = [5, 0], sizes = [48, 16], strides = [1, 1]} : vector<56x16xf32> to vector<48x16xf32>
    %c4_265 = arith.constant 4 : index
    %c0_266 = arith.constant 0 : index
    %c0_267 = arith.constant 0 : index
    %464 = vector.load %arg27[%c4_265, %c0_266, %c0_267] : memref<8x16x32xf32, #tpu.memory_space<vmem>>, vector<1x16x32xf32>
    %465 = vector.shape_cast %464 : vector<1x16x32xf32> to vector<16x32xf32>
    %cst_268 = arith.constant dense<0.000000e+00> : vector<48x32xf32>
    %466 = tpu.matmul %463, %465, %cst_268 {dimension_numbers = #tpu.dot_dimension_numbers<[1], [0], [0], [1], [0, 0, 1, 1], [], []>} : vector<48x16xf32>, vector<16x32xf32>, vector<48x32xf32> -> vector<48x32xf32>
    %467 = arith.addf %462, %466 : vector<48x32xf32>
    %468 = vector.extract_strided_slice %441 {offsets = [6, 0], sizes = [48, 16], strides = [1, 1]} : vector<56x16xf32> to vector<48x16xf32>
    %c5_269 = arith.constant 5 : index
    %c0_270 = arith.constant 0 : index
    %c0_271 = arith.constant 0 : index
    %469 = vector.load %arg27[%c5_269, %c0_270, %c0_271] : memref<8x16x32xf32, #tpu.memory_space<vmem>>, vector<1x16x32xf32>
    %470 = vector.shape_cast %469 : vector<1x16x32xf32> to vector<16x32xf32>
    %cst_272 = arith.constant dense<0.000000e+00> : vector<48x32xf32>
    %471 = tpu.matmul %468, %470, %cst_272 {dimension_numbers = #tpu.dot_dimension_numbers<[1], [0], [0], [1], [0, 0, 1, 1], [], []>} : vector<48x16xf32>, vector<16x32xf32>, vector<48x32xf32> -> vector<48x32xf32>
    %472 = arith.addf %467, %471 : vector<48x32xf32>
    %473 = vector.extract_strided_slice %441 {offsets = [7, 0], sizes = [48, 16], strides = [1, 1]} : vector<56x16xf32> to vector<48x16xf32>
    %c6_273 = arith.constant 6 : index
    %c0_274 = arith.constant 0 : index
    %c0_275 = arith.constant 0 : index
    %474 = vector.load %arg27[%c6_273, %c0_274, %c0_275] : memref<8x16x32xf32, #tpu.memory_space<vmem>>, vector<1x16x32xf32>
    %475 = vector.shape_cast %474 : vector<1x16x32xf32> to vector<16x32xf32>
    %cst_276 = arith.constant dense<0.000000e+00> : vector<48x32xf32>
    %476 = tpu.matmul %473, %475, %cst_276 {dimension_numbers = #tpu.dot_dimension_numbers<[1], [0], [0], [1], [0, 0, 1, 1], [], []>} : vector<48x16xf32>, vector<16x32xf32>, vector<48x32xf32> -> vector<48x32xf32>
    %477 = arith.addf %472, %476 : vector<48x32xf32>
    %478 = vector.extract_strided_slice %441 {offsets = [8, 0], sizes = [48, 16], strides = [1, 1]} : vector<56x16xf32> to vector<48x16xf32>
    %c7_277 = arith.constant 7 : index
    %c0_278 = arith.constant 0 : index
    %c0_279 = arith.constant 0 : index
    %479 = vector.load %arg27[%c7_277, %c0_278, %c0_279] : memref<8x16x32xf32, #tpu.memory_space<vmem>>, vector<1x16x32xf32>
    %480 = vector.shape_cast %479 : vector<1x16x32xf32> to vector<16x32xf32>
    %cst_280 = arith.constant dense<0.000000e+00> : vector<48x32xf32>
    %481 = tpu.matmul %478, %480, %cst_280 {dimension_numbers = #tpu.dot_dimension_numbers<[1], [0], [0], [1], [0, 0, 1, 1], [], []>} : vector<48x16xf32>, vector<16x32xf32>, vector<48x32xf32> -> vector<48x32xf32>
    %482 = arith.addf %477, %481 : vector<48x32xf32>
    %c0_281 = arith.constant 0 : index
    %c0_282 = arith.constant 0 : index
    %483 = vector.load %arg28[%c0_281, %c0_282] : memref<1x32xf32, #tpu.memory_space<vmem>>, vector<1x32xf32>
    %484 = vector.broadcast %483 : vector<1x32xf32> to vector<48x32xf32>
    %485 = arith.addf %482, %484 : vector<48x32xf32>
    %486 = vector.broadcast %0 : vector<48x1xf32> to vector<48x32xf32>
    %487 = arith.mulf %485, %486 : vector<48x32xf32>
    %cst_283 = arith.constant dense<0.000000e+00> : vector<32xf32>
    %488 = vector.multi_reduction <add>, %487, %cst_283 [0] : vector<48x32xf32> to vector<32xf32>
    %489 = vector.shape_cast %488 : vector<32xf32> to vector<1x32xf32>
    %cst_284 = arith.constant 3.125000e-02 : f32
    %490 = vector.broadcast %cst_284 : f32 to vector<1x32xf32>
    %491 = arith.mulf %489, %490 : vector<1x32xf32>
    %492 = vector.broadcast %491 : vector<1x32xf32> to vector<48x32xf32>
    %493 = arith.subf %485, %492 : vector<48x32xf32>
    %494 = vector.broadcast %0 : vector<48x1xf32> to vector<48x32xf32>
    %495 = arith.mulf %493, %494 : vector<48x32xf32>
    %496 = arith.mulf %495, %495 : vector<48x32xf32>
    %cst_285 = arith.constant dense<0.000000e+00> : vector<32xf32>
    %497 = vector.multi_reduction <add>, %496, %cst_285 [0] : vector<48x32xf32> to vector<32xf32>
    %498 = vector.shape_cast %497 : vector<32xf32> to vector<1x32xf32>
    %cst_286 = arith.constant 3.125000e-02 : f32
    %499 = vector.broadcast %cst_286 : f32 to vector<1x32xf32>
    %500 = arith.mulf %498, %499 : vector<1x32xf32>
    %c0_287 = arith.constant 0 : index
    %c0_288 = arith.constant 0 : index
    %501 = vector.load %arg29[%c0_287, %c0_288] : memref<1x32xf32, #tpu.memory_space<vmem>>, vector<1x32xf32>
    %cst_289 = arith.constant 9.99999974E-6 : f32
    %502 = vector.broadcast %cst_289 : f32 to vector<1x32xf32>
    %503 = arith.addf %500, %502 : vector<1x32xf32>
    %504 = math.rsqrt %503 : vector<1x32xf32>
    %505 = arith.mulf %501, %504 : vector<1x32xf32>
    %c0_290 = arith.constant 0 : index
    %c0_291 = arith.constant 0 : index
    %506 = vector.load %arg30[%c0_290, %c0_291] : memref<1x32xf32, #tpu.memory_space<vmem>>, vector<1x32xf32>
    %507 = arith.mulf %491, %505 : vector<1x32xf32>
    %508 = arith.subf %506, %507 : vector<1x32xf32>
    %509 = vector.broadcast %505 : vector<1x32xf32> to vector<48x32xf32>
    %510 = arith.mulf %485, %509 : vector<48x32xf32>
    %511 = vector.broadcast %508 : vector<1x32xf32> to vector<48x32xf32>
    %512 = arith.addf %510, %511 : vector<48x32xf32>
    %513 = vector.broadcast %0 : vector<48x1xf32> to vector<48x32xf32>
    %514 = arith.mulf %512, %513 : vector<48x32xf32>
    %515 = vector.extract_strided_slice %514 {offsets = [0, 0], sizes = [48, 16], strides = [1, 1]} : vector<48x32xf32> to vector<48x16xf32>
    %cst_292 = arith.constant 0.000000e+00 : f32
    %516 = vector.broadcast %cst_292 : f32 to vector<48x16xf32>
    %517 = arith.maximumf %515, %516 : vector<48x16xf32>
    %518 = vector.extract_strided_slice %514 {offsets = [0, 16], sizes = [48, 16], strides = [1, 1]} : vector<48x32xf32> to vector<48x16xf32>
    %cst_293 = arith.constant 0.000000e+00 : f32
    %519 = vector.broadcast %cst_293 : f32 to vector<4x16xf32>
    %520 = tpu.concatenate %519, %517, %519 in 0 : vector<4x16xf32>, vector<48x16xf32>, vector<4x16xf32> -> vector<56x16xf32>
    %cst_294 = arith.constant 0.000000e+00 : f32
    %521 = vector.broadcast %cst_294 : f32 to vector<48x16xf32>
    %522 = vector.extract_strided_slice %520 {offsets = [2, 0], sizes = [48, 16], strides = [1, 1]} : vector<56x16xf32> to vector<48x16xf32>
    %c0_295 = arith.constant 0 : index
    %c0_296 = arith.constant 0 : index
    %c0_297 = arith.constant 0 : index
    %523 = vector.load %arg31[%c0_295, %c0_296, %c0_297] : memref<5x16x16xf32, #tpu.memory_space<vmem>>, vector<1x16x16xf32>
    %524 = vector.shape_cast %523 : vector<1x16x16xf32> to vector<16x16xf32>
    %cst_298 = arith.constant dense<0.000000e+00> : vector<48x16xf32>
    %525 = tpu.matmul %522, %524, %cst_298 {dimension_numbers = #tpu.dot_dimension_numbers<[1], [0], [0], [1], [0, 0, 1, 1], [], []>} : vector<48x16xf32>, vector<16x16xf32>, vector<48x16xf32> -> vector<48x16xf32>
    %526 = arith.addf %521, %525 : vector<48x16xf32>
    %527 = vector.extract_strided_slice %520 {offsets = [3, 0], sizes = [48, 16], strides = [1, 1]} : vector<56x16xf32> to vector<48x16xf32>
    %c1_299 = arith.constant 1 : index
    %c0_300 = arith.constant 0 : index
    %c0_301 = arith.constant 0 : index
    %528 = vector.load %arg31[%c1_299, %c0_300, %c0_301] : memref<5x16x16xf32, #tpu.memory_space<vmem>>, vector<1x16x16xf32>
    %529 = vector.shape_cast %528 : vector<1x16x16xf32> to vector<16x16xf32>
    %cst_302 = arith.constant dense<0.000000e+00> : vector<48x16xf32>
    %530 = tpu.matmul %527, %529, %cst_302 {dimension_numbers = #tpu.dot_dimension_numbers<[1], [0], [0], [1], [0, 0, 1, 1], [], []>} : vector<48x16xf32>, vector<16x16xf32>, vector<48x16xf32> -> vector<48x16xf32>
    %531 = arith.addf %526, %530 : vector<48x16xf32>
    %532 = vector.extract_strided_slice %520 {offsets = [4, 0], sizes = [48, 16], strides = [1, 1]} : vector<56x16xf32> to vector<48x16xf32>
    %c2_303 = arith.constant 2 : index
    %c0_304 = arith.constant 0 : index
    %c0_305 = arith.constant 0 : index
    %533 = vector.load %arg31[%c2_303, %c0_304, %c0_305] : memref<5x16x16xf32, #tpu.memory_space<vmem>>, vector<1x16x16xf32>
    %534 = vector.shape_cast %533 : vector<1x16x16xf32> to vector<16x16xf32>
    %cst_306 = arith.constant dense<0.000000e+00> : vector<48x16xf32>
    %535 = tpu.matmul %532, %534, %cst_306 {dimension_numbers = #tpu.dot_dimension_numbers<[1], [0], [0], [1], [0, 0, 1, 1], [], []>} : vector<48x16xf32>, vector<16x16xf32>, vector<48x16xf32> -> vector<48x16xf32>
    %536 = arith.addf %531, %535 : vector<48x16xf32>
    %537 = vector.extract_strided_slice %520 {offsets = [5, 0], sizes = [48, 16], strides = [1, 1]} : vector<56x16xf32> to vector<48x16xf32>
    %c3_307 = arith.constant 3 : index
    %c0_308 = arith.constant 0 : index
    %c0_309 = arith.constant 0 : index
    %538 = vector.load %arg31[%c3_307, %c0_308, %c0_309] : memref<5x16x16xf32, #tpu.memory_space<vmem>>, vector<1x16x16xf32>
    %539 = vector.shape_cast %538 : vector<1x16x16xf32> to vector<16x16xf32>
    %cst_310 = arith.constant dense<0.000000e+00> : vector<48x16xf32>
    %540 = tpu.matmul %537, %539, %cst_310 {dimension_numbers = #tpu.dot_dimension_numbers<[1], [0], [0], [1], [0, 0, 1, 1], [], []>} : vector<48x16xf32>, vector<16x16xf32>, vector<48x16xf32> -> vector<48x16xf32>
    %541 = arith.addf %536, %540 : vector<48x16xf32>
    %542 = vector.extract_strided_slice %520 {offsets = [6, 0], sizes = [48, 16], strides = [1, 1]} : vector<56x16xf32> to vector<48x16xf32>
    %c4_311 = arith.constant 4 : index
    %c0_312 = arith.constant 0 : index
    %c0_313 = arith.constant 0 : index
    %543 = vector.load %arg31[%c4_311, %c0_312, %c0_313] : memref<5x16x16xf32, #tpu.memory_space<vmem>>, vector<1x16x16xf32>
    %544 = vector.shape_cast %543 : vector<1x16x16xf32> to vector<16x16xf32>
    %cst_314 = arith.constant dense<0.000000e+00> : vector<48x16xf32>
    %545 = tpu.matmul %542, %544, %cst_314 {dimension_numbers = #tpu.dot_dimension_numbers<[1], [0], [0], [1], [0, 0, 1, 1], [], []>} : vector<48x16xf32>, vector<16x16xf32>, vector<48x16xf32> -> vector<48x16xf32>
    %546 = arith.addf %541, %545 : vector<48x16xf32>
    %c0_315 = arith.constant 0 : index
    %c0_316 = arith.constant 0 : index
    %547 = vector.load %arg32[%c0_315, %c0_316] : memref<1x16xf32, #tpu.memory_space<vmem>>, vector<1x16xf32>
    %548 = vector.broadcast %547 : vector<1x16xf32> to vector<48x16xf32>
    %549 = arith.addf %546, %548 : vector<48x16xf32>
    %550 = vector.broadcast %0 : vector<48x1xf32> to vector<48x16xf32>
    %551 = arith.mulf %549, %550 : vector<48x16xf32>
    %cst_317 = arith.constant dense<0.000000e+00> : vector<16xf32>
    %552 = vector.multi_reduction <add>, %551, %cst_317 [0] : vector<48x16xf32> to vector<16xf32>
    %553 = vector.shape_cast %552 : vector<16xf32> to vector<1x16xf32>
    %cst_318 = arith.constant 3.125000e-02 : f32
    %554 = vector.broadcast %cst_318 : f32 to vector<1x16xf32>
    %555 = arith.mulf %553, %554 : vector<1x16xf32>
    %556 = vector.broadcast %555 : vector<1x16xf32> to vector<48x16xf32>
    %557 = arith.subf %549, %556 : vector<48x16xf32>
    %558 = vector.broadcast %0 : vector<48x1xf32> to vector<48x16xf32>
    %559 = arith.mulf %557, %558 : vector<48x16xf32>
    %560 = arith.mulf %559, %559 : vector<48x16xf32>
    %cst_319 = arith.constant dense<0.000000e+00> : vector<16xf32>
    %561 = vector.multi_reduction <add>, %560, %cst_319 [0] : vector<48x16xf32> to vector<16xf32>
    %562 = vector.shape_cast %561 : vector<16xf32> to vector<1x16xf32>
    %cst_320 = arith.constant 3.125000e-02 : f32
    %563 = vector.broadcast %cst_320 : f32 to vector<1x16xf32>
    %564 = arith.mulf %562, %563 : vector<1x16xf32>
    %c0_321 = arith.constant 0 : index
    %c0_322 = arith.constant 0 : index
    %565 = vector.load %arg33[%c0_321, %c0_322] : memref<1x16xf32, #tpu.memory_space<vmem>>, vector<1x16xf32>
    %cst_323 = arith.constant 9.99999974E-6 : f32
    %566 = vector.broadcast %cst_323 : f32 to vector<1x16xf32>
    %567 = arith.addf %564, %566 : vector<1x16xf32>
    %568 = math.rsqrt %567 : vector<1x16xf32>
    %569 = arith.mulf %565, %568 : vector<1x16xf32>
    %c0_324 = arith.constant 0 : index
    %c0_325 = arith.constant 0 : index
    %570 = vector.load %arg34[%c0_324, %c0_325] : memref<1x16xf32, #tpu.memory_space<vmem>>, vector<1x16xf32>
    %571 = arith.mulf %555, %569 : vector<1x16xf32>
    %572 = arith.subf %570, %571 : vector<1x16xf32>
    %573 = vector.broadcast %569 : vector<1x16xf32> to vector<48x16xf32>
    %574 = arith.mulf %549, %573 : vector<48x16xf32>
    %575 = vector.broadcast %572 : vector<1x16xf32> to vector<48x16xf32>
    %576 = arith.addf %574, %575 : vector<48x16xf32>
    %577 = vector.broadcast %0 : vector<48x1xf32> to vector<48x16xf32>
    %578 = arith.mulf %576, %577 : vector<48x16xf32>
    %cst_326 = arith.constant 0.000000e+00 : f32
    %579 = vector.broadcast %cst_326 : f32 to vector<48x16xf32>
    %580 = arith.maximumf %578, %579 : vector<48x16xf32>
    %cst_327 = arith.constant 0.000000e+00 : f32
    %581 = vector.broadcast %cst_327 : f32 to vector<4x16xf32>
    %582 = tpu.concatenate %581, %580, %581 in 0 : vector<4x16xf32>, vector<48x16xf32>, vector<4x16xf32> -> vector<56x16xf32>
    %cst_328 = arith.constant 0.000000e+00 : f32
    %583 = vector.broadcast %cst_328 : f32 to vector<48x16xf32>
    %584 = vector.extract_strided_slice %582 {offsets = [1, 0], sizes = [48, 16], strides = [1, 1]} : vector<56x16xf32> to vector<48x16xf32>
    %c0_329 = arith.constant 0 : index
    %c0_330 = arith.constant 0 : index
    %c0_331 = arith.constant 0 : index
    %585 = vector.load %arg35[%c0_329, %c0_330, %c0_331] : memref<8x16x16xf32, #tpu.memory_space<vmem>>, vector<1x16x16xf32>
    %586 = vector.shape_cast %585 : vector<1x16x16xf32> to vector<16x16xf32>
    %cst_332 = arith.constant dense<0.000000e+00> : vector<48x16xf32>
    %587 = tpu.matmul %584, %586, %cst_332 {dimension_numbers = #tpu.dot_dimension_numbers<[1], [0], [0], [1], [0, 0, 1, 1], [], []>} : vector<48x16xf32>, vector<16x16xf32>, vector<48x16xf32> -> vector<48x16xf32>
    %588 = arith.addf %583, %587 : vector<48x16xf32>
    %589 = vector.extract_strided_slice %582 {offsets = [2, 0], sizes = [48, 16], strides = [1, 1]} : vector<56x16xf32> to vector<48x16xf32>
    %c1_333 = arith.constant 1 : index
    %c0_334 = arith.constant 0 : index
    %c0_335 = arith.constant 0 : index
    %590 = vector.load %arg35[%c1_333, %c0_334, %c0_335] : memref<8x16x16xf32, #tpu.memory_space<vmem>>, vector<1x16x16xf32>
    %591 = vector.shape_cast %590 : vector<1x16x16xf32> to vector<16x16xf32>
    %cst_336 = arith.constant dense<0.000000e+00> : vector<48x16xf32>
    %592 = tpu.matmul %589, %591, %cst_336 {dimension_numbers = #tpu.dot_dimension_numbers<[1], [0], [0], [1], [0, 0, 1, 1], [], []>} : vector<48x16xf32>, vector<16x16xf32>, vector<48x16xf32> -> vector<48x16xf32>
    %593 = arith.addf %588, %592 : vector<48x16xf32>
    %594 = vector.extract_strided_slice %582 {offsets = [3, 0], sizes = [48, 16], strides = [1, 1]} : vector<56x16xf32> to vector<48x16xf32>
    %c2_337 = arith.constant 2 : index
    %c0_338 = arith.constant 0 : index
    %c0_339 = arith.constant 0 : index
    %595 = vector.load %arg35[%c2_337, %c0_338, %c0_339] : memref<8x16x16xf32, #tpu.memory_space<vmem>>, vector<1x16x16xf32>
    %596 = vector.shape_cast %595 : vector<1x16x16xf32> to vector<16x16xf32>
    %cst_340 = arith.constant dense<0.000000e+00> : vector<48x16xf32>
    %597 = tpu.matmul %594, %596, %cst_340 {dimension_numbers = #tpu.dot_dimension_numbers<[1], [0], [0], [1], [0, 0, 1, 1], [], []>} : vector<48x16xf32>, vector<16x16xf32>, vector<48x16xf32> -> vector<48x16xf32>
    %598 = arith.addf %593, %597 : vector<48x16xf32>
    %599 = vector.extract_strided_slice %582 {offsets = [4, 0], sizes = [48, 16], strides = [1, 1]} : vector<56x16xf32> to vector<48x16xf32>
    %c3_341 = arith.constant 3 : index
    %c0_342 = arith.constant 0 : index
    %c0_343 = arith.constant 0 : index
    %600 = vector.load %arg35[%c3_341, %c0_342, %c0_343] : memref<8x16x16xf32, #tpu.memory_space<vmem>>, vector<1x16x16xf32>
    %601 = vector.shape_cast %600 : vector<1x16x16xf32> to vector<16x16xf32>
    %cst_344 = arith.constant dense<0.000000e+00> : vector<48x16xf32>
    %602 = tpu.matmul %599, %601, %cst_344 {dimension_numbers = #tpu.dot_dimension_numbers<[1], [0], [0], [1], [0, 0, 1, 1], [], []>} : vector<48x16xf32>, vector<16x16xf32>, vector<48x16xf32> -> vector<48x16xf32>
    %603 = arith.addf %598, %602 : vector<48x16xf32>
    %604 = vector.extract_strided_slice %582 {offsets = [5, 0], sizes = [48, 16], strides = [1, 1]} : vector<56x16xf32> to vector<48x16xf32>
    %c4_345 = arith.constant 4 : index
    %c0_346 = arith.constant 0 : index
    %c0_347 = arith.constant 0 : index
    %605 = vector.load %arg35[%c4_345, %c0_346, %c0_347] : memref<8x16x16xf32, #tpu.memory_space<vmem>>, vector<1x16x16xf32>
    %606 = vector.shape_cast %605 : vector<1x16x16xf32> to vector<16x16xf32>
    %cst_348 = arith.constant dense<0.000000e+00> : vector<48x16xf32>
    %607 = tpu.matmul %604, %606, %cst_348 {dimension_numbers = #tpu.dot_dimension_numbers<[1], [0], [0], [1], [0, 0, 1, 1], [], []>} : vector<48x16xf32>, vector<16x16xf32>, vector<48x16xf32> -> vector<48x16xf32>
    %608 = arith.addf %603, %607 : vector<48x16xf32>
    %609 = vector.extract_strided_slice %582 {offsets = [6, 0], sizes = [48, 16], strides = [1, 1]} : vector<56x16xf32> to vector<48x16xf32>
    %c5_349 = arith.constant 5 : index
    %c0_350 = arith.constant 0 : index
    %c0_351 = arith.constant 0 : index
    %610 = vector.load %arg35[%c5_349, %c0_350, %c0_351] : memref<8x16x16xf32, #tpu.memory_space<vmem>>, vector<1x16x16xf32>
    %611 = vector.shape_cast %610 : vector<1x16x16xf32> to vector<16x16xf32>
    %cst_352 = arith.constant dense<0.000000e+00> : vector<48x16xf32>
    %612 = tpu.matmul %609, %611, %cst_352 {dimension_numbers = #tpu.dot_dimension_numbers<[1], [0], [0], [1], [0, 0, 1, 1], [], []>} : vector<48x16xf32>, vector<16x16xf32>, vector<48x16xf32> -> vector<48x16xf32>
    %613 = arith.addf %608, %612 : vector<48x16xf32>
    %614 = vector.extract_strided_slice %582 {offsets = [7, 0], sizes = [48, 16], strides = [1, 1]} : vector<56x16xf32> to vector<48x16xf32>
    %c6_353 = arith.constant 6 : index
    %c0_354 = arith.constant 0 : index
    %c0_355 = arith.constant 0 : index
    %615 = vector.load %arg35[%c6_353, %c0_354, %c0_355] : memref<8x16x16xf32, #tpu.memory_space<vmem>>, vector<1x16x16xf32>
    %616 = vector.shape_cast %615 : vector<1x16x16xf32> to vector<16x16xf32>
    %cst_356 = arith.constant dense<0.000000e+00> : vector<48x16xf32>
    %617 = tpu.matmul %614, %616, %cst_356 {dimension_numbers = #tpu.dot_dimension_numbers<[1], [0], [0], [1], [0, 0, 1, 1], [], []>} : vector<48x16xf32>, vector<16x16xf32>, vector<48x16xf32> -> vector<48x16xf32>
    %618 = arith.addf %613, %617 : vector<48x16xf32>
    %619 = vector.extract_strided_slice %582 {offsets = [8, 0], sizes = [48, 16], strides = [1, 1]} : vector<56x16xf32> to vector<48x16xf32>
    %c7_357 = arith.constant 7 : index
    %c0_358 = arith.constant 0 : index
    %c0_359 = arith.constant 0 : index
    %620 = vector.load %arg35[%c7_357, %c0_358, %c0_359] : memref<8x16x16xf32, #tpu.memory_space<vmem>>, vector<1x16x16xf32>
    %621 = vector.shape_cast %620 : vector<1x16x16xf32> to vector<16x16xf32>
    %cst_360 = arith.constant dense<0.000000e+00> : vector<48x16xf32>
    %622 = tpu.matmul %619, %621, %cst_360 {dimension_numbers = #tpu.dot_dimension_numbers<[1], [0], [0], [1], [0, 0, 1, 1], [], []>} : vector<48x16xf32>, vector<16x16xf32>, vector<48x16xf32> -> vector<48x16xf32>
    %623 = arith.addf %618, %622 : vector<48x16xf32>
    %c0_361 = arith.constant 0 : index
    %c0_362 = arith.constant 0 : index
    %624 = vector.load %arg36[%c0_361, %c0_362] : memref<1x16xf32, #tpu.memory_space<vmem>>, vector<1x16xf32>
    %625 = vector.broadcast %624 : vector<1x16xf32> to vector<48x16xf32>
    %626 = arith.addf %623, %625 : vector<48x16xf32>
    %627 = vector.broadcast %0 : vector<48x1xf32> to vector<48x16xf32>
    %628 = arith.mulf %626, %627 : vector<48x16xf32>
    %cst_363 = arith.constant dense<0.000000e+00> : vector<16xf32>
    %629 = vector.multi_reduction <add>, %628, %cst_363 [0] : vector<48x16xf32> to vector<16xf32>
    %630 = vector.shape_cast %629 : vector<16xf32> to vector<1x16xf32>
    %cst_364 = arith.constant 3.125000e-02 : f32
    %631 = vector.broadcast %cst_364 : f32 to vector<1x16xf32>
    %632 = arith.mulf %630, %631 : vector<1x16xf32>
    %633 = vector.broadcast %632 : vector<1x16xf32> to vector<48x16xf32>
    %634 = arith.subf %626, %633 : vector<48x16xf32>
    %635 = vector.broadcast %0 : vector<48x1xf32> to vector<48x16xf32>
    %636 = arith.mulf %634, %635 : vector<48x16xf32>
    %637 = arith.mulf %636, %636 : vector<48x16xf32>
    %cst_365 = arith.constant dense<0.000000e+00> : vector<16xf32>
    %638 = vector.multi_reduction <add>, %637, %cst_365 [0] : vector<48x16xf32> to vector<16xf32>
    %639 = vector.shape_cast %638 : vector<16xf32> to vector<1x16xf32>
    %cst_366 = arith.constant 3.125000e-02 : f32
    %640 = vector.broadcast %cst_366 : f32 to vector<1x16xf32>
    %641 = arith.mulf %639, %640 : vector<1x16xf32>
    %c0_367 = arith.constant 0 : index
    %c0_368 = arith.constant 0 : index
    %642 = vector.load %arg37[%c0_367, %c0_368] : memref<1x16xf32, #tpu.memory_space<vmem>>, vector<1x16xf32>
    %cst_369 = arith.constant 9.99999974E-6 : f32
    %643 = vector.broadcast %cst_369 : f32 to vector<1x16xf32>
    %644 = arith.addf %641, %643 : vector<1x16xf32>
    %645 = math.rsqrt %644 : vector<1x16xf32>
    %646 = arith.mulf %642, %645 : vector<1x16xf32>
    %c0_370 = arith.constant 0 : index
    %c0_371 = arith.constant 0 : index
    %647 = vector.load %arg38[%c0_370, %c0_371] : memref<1x16xf32, #tpu.memory_space<vmem>>, vector<1x16xf32>
    %648 = arith.mulf %632, %646 : vector<1x16xf32>
    %649 = arith.subf %647, %648 : vector<1x16xf32>
    %650 = vector.broadcast %646 : vector<1x16xf32> to vector<48x16xf32>
    %651 = arith.mulf %626, %650 : vector<48x16xf32>
    %652 = vector.broadcast %649 : vector<1x16xf32> to vector<48x16xf32>
    %653 = arith.addf %651, %652 : vector<48x16xf32>
    %654 = vector.broadcast %0 : vector<48x1xf32> to vector<48x16xf32>
    %655 = arith.mulf %653, %654 : vector<48x16xf32>
    %656 = arith.addf %518, %655 : vector<48x16xf32>
    %cst_372 = arith.constant 0.000000e+00 : f32
    %657 = vector.broadcast %cst_372 : f32 to vector<48x16xf32>
    %658 = arith.maximumf %656, %657 : vector<48x16xf32>
    %c0_373 = arith.constant 0 : index
    %c0_374 = arith.constant 0 : index
    %659 = vector.load %arg2[%c0_373, %c0_374] : memref<2x48xf32, #tpu.memory_space<vmem>>, vector<2x48xf32>
    %cst_375 = arith.constant dense<0.000000e+00> : vector<2x16xf32>
    %660 = tpu.matmul %659, %658, %cst_375 {dimension_numbers = #tpu.dot_dimension_numbers<[1], [0], [0], [1], [0, 0, 1, 1], [], []>} : vector<2x48xf32>, vector<48x16xf32>, vector<2x16xf32> -> vector<2x16xf32>
    %c0_376 = arith.constant 0 : index
    %c0_377 = arith.constant 0 : index
    %661 = vector.load %arg39[%c0_376, %c0_377] : memref<16x1xf32, #tpu.memory_space<vmem>>, vector<16x1xf32>
    %cst_378 = arith.constant dense<0.000000e+00> : vector<2x1xf32>
    %662 = tpu.matmul %660, %661, %cst_378 {dimension_numbers = #tpu.dot_dimension_numbers<[1], [0], [0], [1], [0, 0, 1, 1], [], []>} : vector<2x16xf32>, vector<16x1xf32>, vector<2x1xf32> -> vector<2x1xf32>
    %c0_379 = arith.constant 0 : index
    %c0_380 = arith.constant 0 : index
    %663 = vector.load %arg40[%c0_379, %c0_380] : memref<1x1xf32, #tpu.memory_space<vmem>>, vector<1x1xf32>
    %664 = vector.broadcast %663 : vector<1x1xf32> to vector<2x1xf32>
    %665 = arith.addf %662, %664 : vector<2x1xf32>
    %c0_381 = arith.constant 0 : index
    %c0_382 = arith.constant 0 : index
    %666 = vector.load %arg41[%c0_381, %c0_382] : memref<2x1xf32, #tpu.memory_space<vmem>>, vector<2x1xf32>
    tpu.vector_store %arg41[%c0_381, %c0_382], %665 {strides = array<i32>} : memref<2x1xf32, #tpu.memory_space<vmem>>, vector<2x1xf32>,
    return
  }
}

</mosaic_0001>

<llo_original>
// kernel: tile.8
$region0: #{tile.8}
  #allocation0 [shape = 's32[1]{0}', space=sflag, size = 0x4, scoped, tag = 'scoped memory for tile.8']
  %s0 = inlined_call_operand.vmem [shape: f32[24], index: 0, kind: input, shape index: {}]
  %s1 = inlined_call_operand.vmem [shape: f32[2,24], index: 1, kind: output, shape index: {}]
  // Predicated region
  $region2: #{tile.8} parent=0 // pred_check
    _
  $region3: #{tile.8} parent=0 // pred_check_branch
    %3 = sbr.rel (0) target = $region5
  $region4: #{tile.8} parent=0 // pred_region
    _
  $region5: #{tile.8} parent=0 // pred_fallthru
    _
  %v4 = vld [vmem:[%s0] ss:$0 sm:$0xff]
  %5 = vst [vmem:[%s1] sm:$0x3] %v4

// kernel: tile.0
$region0: #{tile.0}
  %s0 = inlined_call_operand.vmem [shape: f32[2,24], index: 0, kind: input, shape index: {}]
  %s1 = inlined_call_operand.vmem [shape: f32[48,1], index: 1, kind: output, shape index: {}]
  $region1: #{tile.0} parent=0
    #allocation0 [shape = 'u8[4096]{0}', space=vmem, size = 0x1000, scoped, tag = 'scoped mem for input reshape']
    %s3 = sshll.u32 1, 2
    %s4 = ssub.s32 %s3, 1
    %v5 = vld [vmem:[%s0] sm:%s4]
    %6 = vst [vmem:[#allocation0] sm:%s4] %v5
    %v7 = vld [vmem:[#allocation0] sm:$0x3]
    %vm8 = vcmask 7168
    %9 = vst.msk [vmem:[%s1] ss:$24 sm:$0x3] %vm8, %v7
    %v10 = vld [vmem:[#allocation0] sm:$0x3]
    %11 = vrot.lane.b32.xlu0 %v10, 127
    %v12 = vpop.permute.xlu0 %11
    %vm13 = vcmask 7168
    %s14 = scalar_lea.vmem %s1, 1
    %15 = vst.msk [vmem:[%s14] ss:$24 sm:$0x3] %vm13, %v12
    %v16 = vld [vmem:[#allocation0] sm:$0x3]
    %17 = vrot.lane.b32.xlu0 %v16, 126
    %v18 = vpop.permute.xlu0 %17
    %vm19 = vcmask 7168
    %s20 = scalar_lea.vmem %s1, 2
    %21 = vst.msk [vmem:[%s20] ss:$24 sm:$0x3] %vm19, %v18
    %v22 = vld [vmem:[#allocation0] sm:$0x3]
    %23 = vrot.lane.b32.xlu0 %v22, 125
    %v24 = vpop.permute.xlu0 %23
    %vm25 = vcmask 7168
    %s26 = scalar_lea.vmem %s1, 3
    %27 = vst.msk [vmem:[%s26] ss:$24 sm:$0x3] %vm25, %v24
    %v28 = vld [vmem:[#allocation0] sm:$0x3]
    %29 = vrot.lane.b32.xlu0 %v28, 124
    %v30 = vpop.permute.xlu0 %29
    %vm31 = vcmask 7168
    %s32 = scalar_lea.vmem %s1, 4
    %33 = vst.msk [vmem:[%s32] ss:$24 sm:$0x3] %vm31, %v30
    %v34 = vld [vmem:[#allocation0] sm:$0x3]
    %35 = vrot.lane.b32.xlu0 %v34, 123
    %v36 = vpop.permute.xlu0 %35
    %vm37 = vcmask 7168
    %s38 = scalar_lea.vmem %s1, 5
    %39 = vst.msk [vmem:[%s38] ss:$24 sm:$0x3] %vm37, %v36
    %v40 = vld [vmem:[#allocation0] sm:$0x3]
    %41 = vrot.lane.b32.xlu0 %v40, 122
    %v42 = vpop.permute.xlu0 %41
    %vm43 = vcmask 7168
    %s44 = scalar_lea.vmem %s1, 6
    %45 = vst.msk [vmem:[%s44] ss:$24 sm:$0x3] %vm43, %v42
    %v46 = vld [vmem:[#allocation0] sm:$0x3]
    %47 = vrot.lane.b32.xlu0 %v46, 121
    %v48 = vpop.permute.xlu0 %47
    %vm49 = vcmask 7168
    %s50 = scalar_lea.vmem %s1, 7
    %51 = vst.msk [vmem:[%s50] ss:$24 sm:$0x3] %vm49, %v48
    %s52 = scalar_lea.vmem [#allocation0], 1
    %s53 = smov 3
    %v54 = vld [vmem:[%s52] ss:$-1 sm:%s53]
    %55 = vrot.lane.b32.xlu0 %v54, 120
    %v56 = vpop.permute.xlu0 %55
    %vm57 = vcmask 7168
    %s58 = scalar_lea.vmem %s1, 32
    %59 = vst.msk [vmem:[%s58] ss:$-24 sm:$0x3] %vm57, %v56
    %s60 = scalar_lea.vmem [#allocation0], 1
    %s61 = smov 3
    %v62 = vld [vmem:[%s60] ss:$-1 sm:%s61]
    %63 = vrot.lane.b32.xlu0 %v62, 119
    %v64 = vpop.permute.xlu0 %63
    %vm65 = vcmask 7168
    %s66 = scalar_lea.vmem %s1, 33
    %67 = vst.msk [vmem:[%s66] ss:$-24 sm:$0x3] %vm65, %v64
    %s68 = scalar_lea.vmem [#allocation0], 1
    %s69 = smov 3
    %v70 = vld [vmem:[%s68] ss:$-1 sm:%s69]
    %71 = vrot.lane.b32.xlu0 %v70, 118
    %v72 = vpop.permute.xlu0 %71
    %vm73 = vcmask 7168
    %s74 = scalar_lea.vmem %s1, 34
    %75 = vst.msk [vmem:[%s74] ss:$-24 sm:$0x3] %vm73, %v72
    %s76 = scalar_lea.vmem [#allocation0], 1
    %s77 = smov 3
    %v78 = vld [vmem:[%s76] ss:$-1 sm:%s77]
    %79 = vrot.lane.b32.xlu0 %v78, 117
    %v80 = vpop.permute.xlu0 %79
    %vm81 = vcmask 7168
    %s82 = scalar_lea.vmem %s1, 35
    %83 = vst.msk [vmem:[%s82] ss:$-24 sm:$0x3] %vm81, %v80
    %s84 = scalar_lea.vmem [#allocation0], 1
    %s85 = smov 3
    %v86 = vld [vmem:[%s84] ss:$-1 sm:%s85]
    %87 = vrot.lane.b32.xlu0 %v86, 116
    %v88 = vpop.permute.xlu0 %87
    %vm89 = vcmask 7168
    %s90 = scalar_lea.vmem %s1, 36
    %91 = vst.msk [vmem:[%s90] ss:$-24 sm:$0x3] %vm89, %v88
    %s92 = scalar_lea.vmem [#allocation0], 1
    %s93 = smov 3
    %v94 = vld [vmem:[%s92] ss:$-1 sm:%s93]
    %95 = vrot.lane.b32.xlu0 %v94, 115
    %v96 = vpop.permute.xlu0 %95
    %vm97 = vcmask 7168
    %s98 = scalar_lea.vmem %s1, 37
    %99 = vst.msk [vmem:[%s98] ss:$-24 sm:$0x3] %vm97, %v96
    %s100 = scalar_lea.vmem [#allocation0], 1
    %s101 = smov 3
    %v102 = vld [vmem:[%s100] ss:$-1 sm:%s101]
    %103 = vrot.lane.b32.xlu0 %v102, 114
    %v104 = vpop.permute.xlu0 %103
    %vm105 = vcmask 7168
    %s106 = scalar_lea.vmem %s1, 38
    %107 = vst.msk [vmem:[%s106] ss:$-24 sm:$0x3] %vm105, %v104
    %s108 = scalar_lea.vmem [#allocation0], 1
    %s109 = smov 3
    %v110 = vld [vmem:[%s108] ss:$-1 sm:%s109]
    %111 = vrot.lane.b32.xlu0 %v110, 113
    %v112 = vpop.permute.xlu0 %111
    %vm113 = vcmask 7168
    %s114 = scalar_lea.vmem %s1, 39
    %115 = vst.msk [vmem:[%s114] ss:$-24 sm:$0x3] %vm113, %v112
    %s116 = scalar_lea.vmem [#allocation0], 1
    %s117 = smov 3
    %v118 = vld [vmem:[%s116] ss:$-1 sm:%s117]
    %119 = vrot.lane.b32.xlu0 %v118, 112
    %v120 = vpop.permute.xlu0 %119
    %vm121 = vcmask 7168
    %s122 = scalar_lea.vmem %s1, 40
    %123 = vst.msk [vmem:[%s122] ss:$-24 sm:$0x3] %vm121, %v120
    %s124 = scalar_lea.vmem [#allocation0], 1
    %s125 = smov 3
    %v126 = vld [vmem:[%s124] ss:$-1 sm:%s125]
    %127 = vrot.lane.b32.xlu0 %v126, 111
    %v128 = vpop.permute.xlu0 %127
    %vm129 = vcmask 7168
    %s130 = scalar_lea.vmem %s1, 41
    %131 = vst.msk [vmem:[%s130] ss:$-24 sm:$0x3] %vm129, %v128
    %s132 = scalar_lea.vmem [#allocation0], 1
    %s133 = smov 3
    %v134 = vld [vmem:[%s132] ss:$-1 sm:%s133]
    %135 = vrot.lane.b32.xlu0 %v134, 110
    %v136 = vpop.permute.xlu0 %135
    %vm137 = vcmask 7168
    %s138 = scalar_lea.vmem %s1, 42
    %139 = vst.msk [vmem:[%s138] ss:$-24 sm:$0x3] %vm137, %v136
    %s140 = scalar_lea.vmem [#allocation0], 1
    %s141 = smov 3
    %v142 = vld [vmem:[%s140] ss:$-1 sm:%s141]
    %143 = vrot.lane.b32.xlu0 %v142, 109
    %v144 = vpop.permute.xlu0 %143
    %vm145 = vcmask 7168
    %s146 = scalar_lea.vmem %s1, 43
    %147 = vst.msk [vmem:[%s146] ss:$-24 sm:$0x3] %vm145, %v144
    %s148 = scalar_lea.vmem [#allocation0], 1
    %s149 = smov 3
    %v150 = vld [vmem:[%s148] ss:$-1 sm:%s149]
    %151 = vrot.lane.b32.xlu0 %v150, 108
    %v152 = vpop.permute.xlu0 %151
    %vm153 = vcmask 7168
    %s154 = scalar_lea.vmem %s1, 44
    %155 = vst.msk [vmem:[%s154] ss:$-24 sm:$0x3] %vm153, %v152
    %s156 = scalar_lea.vmem [#allocation0], 1
    %s157 = smov 3
    %v158 = vld [vmem:[%s156] ss:$-1 sm:%s157]
    %159 = vrot.lane.b32.xlu0 %v158, 107
    %v160 = vpop.permute.xlu0 %159
    %vm161 = vcmask 7168
    %s162 = scalar_lea.vmem %s1, 45
    %163 = vst.msk [vmem:[%s162] ss:$-24 sm:$0x3] %vm161, %v160
    %s164 = scalar_lea.vmem [#allocation0], 1
    %s165 = smov 3
    %v166 = vld [vmem:[%s164] ss:$-1 sm:%s165]
    %167 = vrot.lane.b32.xlu0 %v166, 106
    %v168 = vpop.permute.xlu0 %167
    %vm169 = vcmask 7168
    %s170 = scalar_lea.vmem %s1, 46
    %171 = vst.msk [vmem:[%s170] ss:$-24 sm:$0x3] %vm169, %v168
    %s172 = scalar_lea.vmem [#allocation0], 1
    %s173 = smov 3
    %v174 = vld [vmem:[%s172] ss:$-1 sm:%s173]
    %175 = vrot.lane.b32.xlu0 %v174, 105
    %v176 = vpop.permute.xlu0 %175
    %vm177 = vcmask 7168
    %s178 = scalar_lea.vmem %s1, 47
    %179 = vst.msk [vmem:[%s178] ss:$-24 sm:$0x3] %vm177, %v176

// kernel: resnet_forward.1
$region0: #{resnet_forward.1}
  #allocation0 [shape = 'u32[]', space=smem, size = 0x4, offset = 0x4, fixed_abs, tag = 'smem constant byte address 0x4 - core index']
  #allocation1 [shape = 'u32[144,128]{1,0:T(1,128)}', space=vmem, size = 0x12000, scoped, tag = 'internal scratch']
  #allocation2 [shape = 'f32[1,1]{1,0:T(1,128)S(1)}', space=vmem, size = 0x200, scoped, tag = 'scoped memory for resnet_forward.1']
  %s0 = inlined_call_operand.smem [shape: u32[42], index: -1, kind: input, shape index: {}]
  %s1 = sld [smem:[%s0]]
  %s2 = scalar_lea.smem %s0, 1
  %s3 = sld [smem:[%s2]]
  %s4 = scalar_lea.smem %s0, 2
  %s5 = sld [smem:[%s4]]
  %s6 = scalar_lea.smem %s0, 3
  %s7 = sld [smem:[%s6]]
  %s8 = scalar_lea.smem %s0, 4
  %s9 = sld [smem:[%s8]]
  %s10 = scalar_lea.smem %s0, 5
  %s11 = sld [smem:[%s10]]
  %s12 = scalar_lea.smem %s0, 6
  %s13 = sld [smem:[%s12]]
  %s14 = scalar_lea.smem %s0, 7
  %s15 = sld [smem:[%s14]]
  %s16 = scalar_lea.smem %s0, 8
  %s17 = sld [smem:[%s16]]
  %s18 = scalar_lea.smem %s0, 9
  %s19 = sld [smem:[%s18]]
  %s20 = scalar_lea.smem %s0, 10
  %s21 = sld [smem:[%s20]]
  %s22 = scalar_lea.smem %s0, 11
  %s23 = sld [smem:[%s22]]
  %s24 = scalar_lea.smem %s0, 12
  %s25 = sld [smem:[%s24]]
  %s26 = scalar_lea.smem %s0, 13
  %s27 = sld [smem:[%s26]]
  %s28 = scalar_lea.smem %s0, 14
  %s29 = sld [smem:[%s28]]
  %s30 = scalar_lea.smem %s0, 15
  %s31 = sld [smem:[%s30]]
  %s32 = scalar_lea.smem %s0, 16
  %s33 = sld [smem:[%s32]]
  %s34 = scalar_lea.smem %s0, 17
  %s35 = sld [smem:[%s34]]
  %s36 = scalar_lea.smem %s0, 18
  %s37 = sld [smem:[%s36]]
  %s38 = scalar_lea.smem %s0, 19
  %s39 = sld [smem:[%s38]]
  %s40 = scalar_lea.smem %s0, 20
  %s41 = sld [smem:[%s40]]
  %s42 = scalar_lea.smem %s0, 21
  %s43 = sld [smem:[%s42]]
  %s44 = scalar_lea.smem %s0, 22
  %s45 = sld [smem:[%s44]]
  %s46 = scalar_lea.smem %s0, 23
  %s47 = sld [smem:[%s46]]
  %s48 = scalar_lea.smem %s0, 24
  %s49 = sld [smem:[%s48]]
  %s50 = scalar_lea.smem %s0, 25
  %s51 = sld [smem:[%s50]]
  %s52 = scalar_lea.smem %s0, 26
  %s53 = sld [smem:[%s52]]
  %s54 = scalar_lea.smem %s0, 27
  %s55 = sld [smem:[%s54]]
  %s56 = scalar_lea.smem %s0, 28
  %s57 = sld [smem:[%s56]]
  %s58 = scalar_lea.smem %s0, 29
  %s59 = sld [smem:[%s58]]
  %s60 = scalar_lea.smem %s0, 30
  %s61 = sld [smem:[%s60]]
  %s62 = scalar_lea.smem %s0, 31
  %s63 = sld [smem:[%s62]]
  %s64 = scalar_lea.smem %s0, 32
  %s65 = sld [smem:[%s64]]
  %s66 = scalar_lea.smem %s0, 33
  %s67 = sld [smem:[%s66]]
  %s68 = scalar_lea.smem %s0, 34
  %s69 = sld [smem:[%s68]]
  %s70 = scalar_lea.smem %s0, 35
  %s71 = sld [smem:[%s70]]
  %s72 = scalar_lea.smem %s0, 36
  %s73 = sld [smem:[%s72]]
  %s74 = scalar_lea.smem %s0, 37
  %s75 = sld [smem:[%s74]]
  %s76 = scalar_lea.smem %s0, 38
  %s77 = sld [smem:[%s76]]
  %s78 = scalar_lea.smem %s0, 39
  %s79 = sld [smem:[%s78]]
  %s80 = scalar_lea.smem %s0, 40
  %s81 = sld [smem:[%s80]]
  %s82 = scalar_lea.smem %s0, 41
  %s83 = sld [smem:[%s82]]
  %s84 = sld [smem:[#allocation0]]
  $region258: #{resnet_forward.1} parent=0
    _
  %s86 = ssub.s32 1, %s84
  %s87 = scalar_select 0, %s86, %s84
  %v88 = vstv %s81
  %89 = vst [vmem:[#allocation2] sm:$0x1] %v88
  $region1: #{resnet_forward.1} parent=0
    #allocation3 [shape = 'u8[16384]{0}', space=vmem, size = 0x4000, scoped, tag = 'input window, operand 3, single buffered']
    #allocation4 [shape = 's32[1]{0}', space=sflag, size = 0x4, scoped, tag = 'scoped memory for resnet_forward.1']
    #allocation5 [shape = 'u8[512]{0}', space=vmem, size = 0x400, scoped, tag = 'input window, operand 5, single buffered']
    #allocation6 [shape = 's32[1]{0}', space=sflag, size = 0x4, scoped, tag = 'scoped memory for resnet_forward.1']
    #allocation7 [shape = 'u8[512]{0}', space=vmem, size = 0x400, scoped, tag = 'input window, operand 6, single buffered']
    #allocation8 [shape = 'u8[20480]{0}', space=vmem, size = 0x5000, scoped, tag = 'input window, operand 7, single buffered']
    #allocation9 [shape = 's32[1]{0}', space=sflag, size = 0x4, scoped, tag = 'scoped memory for resnet_forward.1']
    #allocation10 [shape = 'u8[512]{0}', space=vmem, size = 0x400, scoped, tag = 'input window, operand 8, single buffered']
    #allocation11 [shape = 'u8[512]{0}', space=vmem, size = 0x400, scoped, tag = 'input window, operand 9, single buffered']
    #allocation12 [shape = 's32[1]{0}', space=sflag, size = 0x4, scoped, tag = 'scoped memory for resnet_forward.1']
    #allocation13 [shape = 'u8[512]{0}', space=vmem, size = 0x400, scoped, tag = 'input window, operand 10, single buffered']
    #allocation14 [shape = 'u8[32768]{0}', space=vmem, size = 0x8000, scoped, tag = 'input window, operand 11, single buffered']
    #allocation15 [shape = 's32[1]{0}', space=sflag, size = 0x4, scoped, tag = 'scoped memory for resnet_forward.1']
    #allocation16 [shape = 'u8[512]{0}', space=vmem, size = 0x400, scoped, tag = 'input window, operand 12, single buffered']
    #allocation17 [shape = 'u8[512]{0}', space=vmem, size = 0x400, scoped, tag = 'input window, operand 13, single buffered']
    #allocation18 [shape = 's32[1]{0}', space=sflag, size = 0x4, scoped, tag = 'scoped memory for resnet_forward.1']
    #allocation19 [shape = 'u8[512]{0}', space=vmem, size = 0x400, scoped, tag = 'input window, operand 14, single buffered']
    #allocation20 [shape = 'u8[32768]{0}', space=vmem, size = 0x8000, scoped, tag = 'input window, operand 15, single buffered']
    #allocation21 [shape = 's32[1]{0}', space=sflag, size = 0x4, scoped, tag = 'scoped memory for resnet_forward.1']
    #allocation22 [shape = 'u8[512]{0}', space=vmem, size = 0x400, scoped, tag = 'input window, operand 16, single buffered']
    #allocation23 [shape = 'u8[512]{0}', space=vmem, size = 0x400, scoped, tag = 'input window, operand 17, single buffered']
    #allocation24 [shape = 's32[1]{0}', space=sflag, size = 0x4, scoped, tag = 'scoped memory for resnet_forward.1']
    #allocation25 [shape = 'u8[512]{0}', space=vmem, size = 0x400, scoped, tag = 'input window, operand 18, single buffered']
    #allocation26 [shape = 'u8[40960]{0}', space=vmem, size = 0xa000, scoped, tag = 'input window, operand 19, single buffered']
    #allocation27 [shape = 's32[1]{0}', space=sflag, size = 0x4, scoped, tag = 'scoped memory for resnet_forward.1']
    #allocation28 [shape = 'u8[512]{0}', space=vmem, size = 0x400, scoped, tag = 'input window, operand 20, single buffered']
    #allocation29 [shape = 'u8[512]{0}', space=vmem, size = 0x400, scoped, tag = 'input window, operand 21, single buffered']
    #allocation30 [shape = 's32[1]{0}', space=sflag, size = 0x4, scoped, tag = 'scoped memory for resnet_forward.1']
    #allocation31 [shape = 'u8[512]{0}', space=vmem, size = 0x400, scoped, tag = 'input window, operand 22, single buffered']
    #allocation32 [shape = 'u8[40960]{0}', space=vmem, size = 0xa000, scoped, tag = 'input window, operand 31, single buffered']
    #allocation33 [shape = 's32[1]{0}', space=sflag, size = 0x4, scoped, tag = 'scoped memory for resnet_forward.1']
    #allocation34 [shape = 'u8[65536]{0}', space=vmem, size = 0x10000, scoped, tag = 'input window, operand 35, single buffered']
    %90 = vsyncpa [#allocation4], 0
    %91 = vsyncpa [#allocation6], 0
    %92 = vsyncpa [#allocation9], 0
    %93 = vsyncpa [#allocation12], 0
    %94 = vsyncpa [#allocation15], 0
    %95 = vsyncpa [#allocation18], 0
    %96 = vsyncpa [#allocation21], 0
    %97 = vsyncpa [#allocation24], 0
    %98 = vsyncpa [#allocation27], 0
    %99 = vsyncpa [#allocation30], 0
    %100 = vsyncpa [#allocation33], 0
    // Predicated region
    $region2: #{resnet_forward.1} parent=1 // pred_check
      _
    $region3: #{resnet_forward.1} parent=1 // pred_check_branch
      %102 = sbr.rel (0) target = $region5
    $region4: #{resnet_forward.1} parent=1 // pred_region
      _
    $region5: #{resnet_forward.1} parent=1 // pred_fallthru
      _
    // Predicated region
    $region6: #{resnet_forward.1} parent=1 // pred_check
      _
    $region7: #{resnet_forward.1} parent=1 // pred_check_branch
      %104 = sbr.rel (0) target = $region9
    $region8: #{resnet_forward.1} parent=1 // pred_region
      _
    $region9: #{resnet_forward.1} parent=1 // pred_fallthru
      _
    // Predicated region
    $region10: #{resnet_forward.1} parent=1 // pred_check
      _
    $region11: #{resnet_forward.1} parent=1 // pred_check_branch
      %106 = sbr.rel (0) target = $region13
    $region12: #{resnet_forward.1} parent=1 // pred_region
      _
    $region13: #{resnet_forward.1} parent=1 // pred_fallthru
      _
    // Predicated region
    $region14: #{resnet_forward.1} parent=1 // pred_check
      _
    $region15: #{resnet_forward.1} parent=1 // pred_check_branch
      %108 = sbr.rel (0) target = $region17
    $region16: #{resnet_forward.1} parent=1 // pred_region
      %s110 = ssub.s32 512, 512
      %111 = vsyncadd [#allocation4], %s110
      %s112 = sshll.u32 [#allocation3], 4
      %s113 = int_to_ptr.vmem [resolvable:$true] %s112
      %118 = dma.hbm_to_vmem [thread:$0]  %s7, 512, %s113, [#allocation4], 64, 64, 4
    $region17: #{resnet_forward.1} parent=1 // pred_fallthru
      _
    // Predicated region
    $region18: #{resnet_forward.1} parent=1 // pred_check
      _
    $region19: #{resnet_forward.1} parent=1 // pred_check_branch
      %120 = sbr.rel (0) target = $region21
    $region20: #{resnet_forward.1} parent=1 // pred_region
      _
    $region21: #{resnet_forward.1} parent=1 // pred_fallthru
      _
    // Predicated region
    $region22: #{resnet_forward.1} parent=1 // pred_check
      _
    $region23: #{resnet_forward.1} parent=1 // pred_check_branch
      %122 = sbr.rel (0) target = $region25
    $region24: #{resnet_forward.1} parent=1 // pred_region
      %s124 = ssub.s32 16, 16
      %125 = vsyncadd [#allocation6], %s124
      %s127 = sshll.u32 [#allocation5], 4
      %s128 = int_to_ptr.vmem [resolvable:$true] %s127
      %130 = dma.hbm_to_vmem [thread:$0]  %s11, 16, %s128, [#allocation6]
    $region25: #{resnet_forward.1} parent=1 // pred_fallthru
      _
    // Predicated region
    $region26: #{resnet_forward.1} parent=1 // pred_check
      _
    $region27: #{resnet_forward.1} parent=1 // pred_check_branch
      %132 = sbr.rel (0) target = $region29
    $region28: #{resnet_forward.1} parent=1 // pred_region
      %s134 = ssub.s32 16, 16
      %135 = vsyncadd [#allocation6], %s134
      %s137 = sshll.u32 [#allocation7], 4
      %s138 = int_to_ptr.vmem [resolvable:$true] %s137
      %140 = dma.hbm_to_vmem [thread:$0]  %s13, 16, %s138, [#allocation6]
    $region29: #{resnet_forward.1} parent=1 // pred_fallthru
      _
    // Predicated region
    $region30: #{resnet_forward.1} parent=1 // pred_check
      _
    $region31: #{resnet_forward.1} parent=1 // pred_check_branch
      %142 = sbr.rel (0) target = $region33
    $region32: #{resnet_forward.1} parent=1 // pred_region
      %s144 = ssub.s32 640, 640
      %145 = vsyncadd [#allocation9], %s144
      %s146 = sshll.u32 [#allocation8], 4
      %s147 = int_to_ptr.vmem [resolvable:$true] %s146
      %152 = dma.hbm_to_vmem [thread:$0]  %s15, 640, %s147, [#allocation9], 128, 128, 8
    $region33: #{resnet_forward.1} parent=1 // pred_fallthru
      _
    // Predicated region
    $region34: #{resnet_forward.1} parent=1 // pred_check
      _
    $region35: #{resnet_forward.1} parent=1 // pred_check_branch
      %154 = sbr.rel (0) target = $region37
    $region36: #{resnet_forward.1} parent=1 // pred_region
      %s156 = ssub.s32 16, 16
      %157 = vsyncadd [#allocation9], %s156
      %s159 = sshll.u32 [#allocation10], 4
      %s160 = int_to_ptr.vmem [resolvable:$true] %s159
      %162 = dma.hbm_to_vmem [thread:$0]  %s17, 16, %s160, [#allocation9]
    $region37: #{resnet_forward.1} parent=1 // pred_fallthru
      _
    // Predicated region
    $region38: #{resnet_forward.1} parent=1 // pred_check
      _
    $region39: #{resnet_forward.1} parent=1 // pred_check_branch
      %164 = sbr.rel (0) target = $region41
    $region40: #{resnet_forward.1} parent=1 // pred_region
      %s166 = ssub.s32 16, 16
      %167 = vsyncadd [#allocation12], %s166
      %s169 = sshll.u32 [#allocation11], 4
      %s170 = int_to_ptr.vmem [resolvable:$true] %s169
      %172 = dma.hbm_to_vmem [thread:$0]  %s19, 16, %s170, [#allocation12]
    $region41: #{resnet_forward.1} parent=1 // pred_fallthru
      _
    // Predicated region
    $region42: #{resnet_forward.1} parent=1 // pred_check
      _
    $region43: #{resnet_forward.1} parent=1 // pred_check_branch
      %174 = sbr.rel (0) target = $region45
    $region44: #{resnet_forward.1} parent=1 // pred_region
      %s176 = ssub.s32 16, 16
      %177 = vsyncadd [#allocation12], %s176
      %s179 = sshll.u32 [#allocation13], 4
      %s180 = int_to_ptr.vmem [resolvable:$true] %s179
      %182 = dma.hbm_to_vmem [thread:$0]  %s21, 16, %s180, [#allocation12]
    $region45: #{resnet_forward.1} parent=1 // pred_fallthru
      _
    // Predicated region
    $region46: #{resnet_forward.1} parent=1 // pred_check
      _
    $region47: #{resnet_forward.1} parent=1 // pred_check_branch
      %184 = sbr.rel (0) target = $region49
    $region48: #{resnet_forward.1} parent=1 // pred_region
      %s186 = ssub.s32 1024, 1024
      %187 = vsyncadd [#allocation15], %s186
      %s188 = sshll.u32 [#allocation14], 4
      %s189 = int_to_ptr.vmem [resolvable:$true] %s188
      %194 = dma.hbm_to_vmem [thread:$0]  %s23, 1024, %s189, [#allocation15], 128, 128, 8
    $region49: #{resnet_forward.1} parent=1 // pred_fallthru
      _
    // Predicated region
    $region50: #{resnet_forward.1} parent=1 // pred_check
      _
    $region51: #{resnet_forward.1} parent=1 // pred_check_branch
      %196 = sbr.rel (0) target = $region53
    $region52: #{resnet_forward.1} parent=1 // pred_region
      %s198 = ssub.s32 16, 16
      %199 = vsyncadd [#allocation15], %s198
      %s201 = sshll.u32 [#allocation16], 4
      %s202 = int_to_ptr.vmem [resolvable:$true] %s201
      %204 = dma.hbm_to_vmem [thread:$0]  %s25, 16, %s202, [#allocation15]
    $region53: #{resnet_forward.1} parent=1 // pred_fallthru
      _
    // Predicated region
    $region54: #{resnet_forward.1} parent=1 // pred_check
      _
    $region55: #{resnet_forward.1} parent=1 // pred_check_branch
      %206 = sbr.rel (0) target = $region57
    $region56: #{resnet_forward.1} parent=1 // pred_region
      %s208 = ssub.s32 16, 16
      %209 = vsyncadd [#allocation18], %s208
      %s211 = sshll.u32 [#allocation17], 4
      %s212 = int_to_ptr.vmem [resolvable:$true] %s211
      %214 = dma.hbm_to_vmem [thread:$0]  %s27, 16, %s212, [#allocation18]
    $region57: #{resnet_forward.1} parent=1 // pred_fallthru
      _
    // Predicated region
    $region58: #{resnet_forward.1} parent=1 // pred_check
      _
    $region59: #{resnet_forward.1} parent=1 // pred_check_branch
      %216 = sbr.rel (0) target = $region61
    $region60: #{resnet_forward.1} parent=1 // pred_region
      %s218 = ssub.s32 16, 16
      %219 = vsyncadd [#allocation18], %s218
      %s221 = sshll.u32 [#allocation19], 4
      %s222 = int_to_ptr.vmem [resolvable:$true] %s221
      %224 = dma.hbm_to_vmem [thread:$0]  %s29, 16, %s222, [#allocation18]
    $region61: #{resnet_forward.1} parent=1 // pred_fallthru
      _
    // Predicated region
    $region62: #{resnet_forward.1} parent=1 // pred_check
      _
    $region63: #{resnet_forward.1} parent=1 // pred_check_branch
      %226 = sbr.rel (0) target = $region65
    $region64: #{resnet_forward.1} parent=1 // pred_region
      %s228 = ssub.s32 1024, 1024
      %229 = vsyncadd [#allocation21], %s228
      %s230 = sshll.u32 [#allocation20], 4
      %s231 = int_to_ptr.vmem [resolvable:$true] %s230
      %236 = dma.hbm_to_vmem [thread:$0]  %s31, 1024, %s231, [#allocation21], 128, 128, 8
    $region65: #{resnet_forward.1} parent=1 // pred_fallthru
      _
    // Predicated region
    $region66: #{resnet_forward.1} parent=1 // pred_check
      _
    $region67: #{resnet_forward.1} parent=1 // pred_check_branch
      %238 = sbr.rel (0) target = $region69
    $region68: #{resnet_forward.1} parent=1 // pred_region
      %s240 = ssub.s32 16, 16
      %241 = vsyncadd [#allocation21], %s240
      %s243 = sshll.u32 [#allocation22], 4
      %s244 = int_to_ptr.vmem [resolvable:$true] %s243
      %246 = dma.hbm_to_vmem [thread:$0]  %s33, 16, %s244, [#allocation21]
    $region69: #{resnet_forward.1} parent=1 // pred_fallthru
      _
    // Predicated region
    $region70: #{resnet_forward.1} parent=1 // pred_check
      _
    $region71: #{resnet_forward.1} parent=1 // pred_check_branch
      %248 = sbr.rel (0) target = $region73
    $region72: #{resnet_forward.1} parent=1 // pred_region
      %s250 = ssub.s32 16, 16
      %251 = vsyncadd [#allocation24], %s250
      %s253 = sshll.u32 [#allocation23], 4
      %s254 = int_to_ptr.vmem [resolvable:$true] %s253
      %256 = dma.hbm_to_vmem [thread:$0]  %s35, 16, %s254, [#allocation24]
    $region73: #{resnet_forward.1} parent=1 // pred_fallthru
      _
    // Predicated region
    $region74: #{resnet_forward.1} parent=1 // pred_check
      _
    $region75: #{resnet_forward.1} parent=1 // pred_check_branch
      %258 = sbr.rel (0) target = $region77
    $region76: #{resnet_forward.1} parent=1 // pred_region
      %s260 = ssub.s32 16, 16
      %261 = vsyncadd [#allocation24], %s260
      %s263 = sshll.u32 [#allocation25], 4
      %s264 = int_to_ptr.vmem [resolvable:$true] %s263
      %266 = dma.hbm_to_vmem [thread:$0]  %s37, 16, %s264, [#allocation24]
    $region77: #{resnet_forward.1} parent=1 // pred_fallthru
      _
    // Predicated region
    $region78: #{resnet_forward.1} parent=1 // pred_check
      _
    $region79: #{resnet_forward.1} parent=1 // pred_check_branch
      %268 = sbr.rel (0) target = $region81
    $region80: #{resnet_forward.1} parent=1 // pred_region
      %s270 = ssub.s32 1280, 1280
      %271 = vsyncadd [#allocation27], %s270
      %s272 = sshll.u32 [#allocation26], 4
      %s273 = int_to_ptr.vmem [resolvable:$true] %s272
      %278 = dma.hbm_to_vmem [thread:$0]  %s39, 1280, %s273, [#allocation27], 128, 128, 8
    $region81: #{resnet_forward.1} parent=1 // pred_fallthru
      _
    // Predicated region
    $region82: #{resnet_forward.1} parent=1 // pred_check
      _
    $region83: #{resnet_forward.1} parent=1 // pred_check_branch
      %280 = sbr.rel (0) target = $region85
    $region84: #{resnet_forward.1} parent=1 // pred_region
      %s282 = ssub.s32 16, 16
      %283 = vsyncadd [#allocation27], %s282
      %s285 = sshll.u32 [#allocation28], 4
      %s286 = int_to_ptr.vmem [resolvable:$true] %s285
      %288 = dma.hbm_to_vmem [thread:$0]  %s41, 16, %s286, [#allocation27]
    $region85: #{resnet_forward.1} parent=1 // pred_fallthru
      _
    // Predicated region
    $region86: #{resnet_forward.1} parent=1 // pred_check
      _
    $region87: #{resnet_forward.1} parent=1 // pred_check_branch
      %290 = sbr.rel (0) target = $region89
    $region88: #{resnet_forward.1} parent=1 // pred_region
      %s292 = ssub.s32 16, 16
      %293 = vsyncadd [#allocation30], %s292
      %s295 = sshll.u32 [#allocation29], 4
      %s296 = int_to_ptr.vmem [resolvable:$true] %s295
      %298 = dma.hbm_to_vmem [thread:$0]  %s43, 16, %s296, [#allocation30]
    $region89: #{resnet_forward.1} parent=1 // pred_fallthru
      _
    // Predicated region
    $region90: #{resnet_forward.1} parent=1 // pred_check
      _
    $region91: #{resnet_forward.1} parent=1 // pred_check_branch
      %300 = sbr.rel (0) target = $region93
    $region92: #{resnet_forward.1} parent=1 // pred_region
      %s302 = ssub.s32 16, 16
      %303 = vsyncadd [#allocation30], %s302
      %s305 = sshll.u32 [#allocation31], 4
      %s306 = int_to_ptr.vmem [resolvable:$true] %s305
      %308 = dma.hbm_to_vmem [thread:$0]  %s45, 16, %s306, [#allocation30]
    $region93: #{resnet_forward.1} parent=1 // pred_fallthru
      _
    // Predicated region
    $region94: #{resnet_forward.1} parent=1 // pred_check
      _
    $region95: #{resnet_forward.1} parent=1 // pred_check_branch
      %310 = sbr.rel (0) target = $region97
    $region96: #{resnet_forward.1} parent=1 // pred_region
      _
    $region97: #{resnet_forward.1} parent=1 // pred_fallthru
      _
    // Predicated region
    $region98: #{resnet_forward.1} parent=1 // pred_check
      _
    $region99: #{resnet_forward.1} parent=1 // pred_check_branch
      %312 = sbr.rel (0) target = $region101
    $region100: #{resnet_forward.1} parent=1 // pred_region
      _
    $region101: #{resnet_forward.1} parent=1 // pred_fallthru
      _
    // Predicated region
    $region102: #{resnet_forward.1} parent=1 // pred_check
      _
    $region103: #{resnet_forward.1} parent=1 // pred_check_branch
      %314 = sbr.rel (0) target = $region105
    $region104: #{resnet_forward.1} parent=1 // pred_region
      _
    $region105: #{resnet_forward.1} parent=1 // pred_fallthru
      _
    // Predicated region
    $region106: #{resnet_forward.1} parent=1 // pred_check
      _
    $region107: #{resnet_forward.1} parent=1 // pred_check_branch
      %316 = sbr.rel (0) target = $region109
    $region108: #{resnet_forward.1} parent=1 // pred_region
      _
    $region109: #{resnet_forward.1} parent=1 // pred_fallthru
      _
    // Predicated region
    $region110: #{resnet_forward.1} parent=1 // pred_check
      _
    $region111: #{resnet_forward.1} parent=1 // pred_check_branch
      %318 = sbr.rel (0) target = $region113
    $region112: #{resnet_forward.1} parent=1 // pred_region
      _
    $region113: #{resnet_forward.1} parent=1 // pred_fallthru
      _
    // Predicated region
    $region114: #{resnet_forward.1} parent=1 // pred_check
      _
    $region115: #{resnet_forward.1} parent=1 // pred_check_branch
      %320 = sbr.rel (0) target = $region117
    $region116: #{resnet_forward.1} parent=1 // pred_region
      _
    $region117: #{resnet_forward.1} parent=1 // pred_fallthru
      _
    // Predicated region
    $region118: #{resnet_forward.1} parent=1 // pred_check
      _
    $region119: #{resnet_forward.1} parent=1 // pred_check_branch
      %322 = sbr.rel (0) target = $region121
    $region120: #{resnet_forward.1} parent=1 // pred_region
      _
    $region121: #{resnet_forward.1} parent=1 // pred_fallthru
      _
    // Predicated region
    $region122: #{resnet_forward.1} parent=1 // pred_check
      _
    $region123: #{resnet_forward.1} parent=1 // pred_check_branch
      %324 = sbr.rel (0) target = $region125
    $region124: #{resnet_forward.1} parent=1 // pred_region
      _
    $region125: #{resnet_forward.1} parent=1 // pred_fallthru
      _
    // Predicated region
    $region126: #{resnet_forward.1} parent=1 // pred_check
      _
    $region127: #{resnet_forward.1} parent=1 // pred_check_branch
      %326 = sbr.rel (0) target = $region129
    $region128: #{resnet_forward.1} parent=1 // pred_region
      %s328 = ssub.s32 1280, 1280
      %329 = vsyncadd [#allocation33], %s328
      %s330 = sshll.u32 [#allocation32], 4
      %s331 = int_to_ptr.vmem [resolvable:$true] %s330
      %336 = dma.hbm_to_vmem [thread:$0]  %s63, 1280, %s331, [#allocation33], 128, 128, 8
    $region129: #{resnet_forward.1} parent=1 // pred_fallthru
      _
    // Predicated region
    $region130: #{resnet_forward.1} parent=1 // pred_check
      _
    $region131: #{resnet_forward.1} parent=1 // pred_check_branch
      %338 = sbr.rel (0) target = $region133
    $region132: #{resnet_forward.1} parent=1 // pred_region
      _
    $region133: #{resnet_forward.1} parent=1 // pred_fallthru
      _
    // Predicated region
    $region134: #{resnet_forward.1} parent=1 // pred_check
      _
    $region135: #{resnet_forward.1} parent=1 // pred_check_branch
      %340 = sbr.rel (0) target = $region137
    $region136: #{resnet_forward.1} parent=1 // pred_region
      _
    $region137: #{resnet_forward.1} parent=1 // pred_fallthru
      _
    // Predicated region
    $region138: #{resnet_forward.1} parent=1 // pred_check
      _
    $region139: #{resnet_forward.1} parent=1 // pred_check_branch
      %342 = sbr.rel (0) target = $region141
    $region140: #{resnet_forward.1} parent=1 // pred_region
      _
    $region141: #{resnet_forward.1} parent=1 // pred_fallthru
      _
    // Predicated region
    $region142: #{resnet_forward.1} parent=1 // pred_check
      _
    $region143: #{resnet_forward.1} parent=1 // pred_check_branch
      %344 = sbr.rel (0) target = $region145
    $region144: #{resnet_forward.1} parent=1 // pred_region
      %s346 = ssub.s32 2048, 2048
      %347 = vsyncadd [#allocation33], %s346
      %s348 = sshll.u32 [#allocation34], 4
      %s349 = int_to_ptr.vmem [resolvable:$true] %s348
      %354 = dma.hbm_to_vmem [thread:$0]  %s71, 2048, %s349, [#allocation33], 128, 128, 8
    $region145: #{resnet_forward.1} parent=1 // pred_fallthru
      _
    // Predicated region
    $region146: #{resnet_forward.1} parent=1 // pred_check
      _
    $region147: #{resnet_forward.1} parent=1 // pred_check_branch
      %356 = sbr.rel (0) target = $region149
    $region148: #{resnet_forward.1} parent=1 // pred_region
      _
    $region149: #{resnet_forward.1} parent=1 // pred_fallthru
      _
    // Predicated region
    $region150: #{resnet_forward.1} parent=1 // pred_check
      _
    $region151: #{resnet_forward.1} parent=1 // pred_check_branch
      %358 = sbr.rel (0) target = $region153
    $region152: #{resnet_forward.1} parent=1 // pred_region
      _
    $region153: #{resnet_forward.1} parent=1 // pred_fallthru
      _
    // Predicated region
    $region154: #{resnet_forward.1} parent=1 // pred_check
      _
    $region155: #{resnet_forward.1} parent=1 // pred_check_branch
      %360 = sbr.rel (0) target = $region157
    $region156: #{resnet_forward.1} parent=1 // pred_region
      _
    $region157: #{resnet_forward.1} parent=1 // pred_fallthru
      _
    // Predicated region
    $region158: #{resnet_forward.1} parent=1 // pred_check
      _
    $region159: #{resnet_forward.1} parent=1 // pred_check_branch
      %362 = sbr.rel (0) target = $region161
    $region160: #{resnet_forward.1} parent=1 // pred_region
      _
    $region161: #{resnet_forward.1} parent=1 // pred_fallthru
      _
    // Predicated region
    $region162: #{resnet_forward.1} parent=1 // pred_check
      _
    $region163: #{resnet_forward.1} parent=1 // pred_check_branch
      %364 = sbr.rel (0) target = $region165
    $region164: #{resnet_forward.1} parent=1 // pred_region
      _
    $region165: #{resnet_forward.1} parent=1 // pred_fallthru
      _
    // Predicated region
    $region166: #{resnet_forward.1} parent=1 // pred_check
      _
    $region167: #{resnet_forward.1} parent=1 // pred_check_branch
      %366 = sbr.rel (0) target = $region169
    $region168: #{resnet_forward.1} parent=1 // pred_region
      %367 = dma.done [#allocation4], 512
    $region169: #{resnet_forward.1} parent=1 // pred_fallthru
      _
    // Predicated region
    $region170: #{resnet_forward.1} parent=1 // pred_check
      _
    $region171: #{resnet_forward.1} parent=1 // pred_check_branch
      %369 = sbr.rel (0) target = $region173
    $region172: #{resnet_forward.1} parent=1 // pred_region
      %370 = dma.done [#allocation6], 16
    $region173: #{resnet_forward.1} parent=1 // pred_fallthru
      _
    // Predicated region
    $region174: #{resnet_forward.1} parent=1 // pred_check
      _
    $region175: #{resnet_forward.1} parent=1 // pred_check_branch
      %372 = sbr.rel (0) target = $region177
    $region176: #{resnet_forward.1} parent=1 // pred_region
      %373 = dma.done [#allocation6], 16
    $region177: #{resnet_forward.1} parent=1 // pred_fallthru
      _
    // Predicated region
    $region178: #{resnet_forward.1} parent=1 // pred_check
      _
    $region179: #{resnet_forward.1} parent=1 // pred_check_branch
      %375 = sbr.rel (0) target = $region181
    $region180: #{resnet_forward.1} parent=1 // pred_region
      %376 = dma.done [#allocation9], 640
    $region181: #{resnet_forward.1} parent=1 // pred_fallthru
      _
    // Predicated region
    $region182: #{resnet_forward.1} parent=1 // pred_check
      _
    $region183: #{resnet_forward.1} parent=1 // pred_check_branch
      %378 = sbr.rel (0) target = $region185
    $region184: #{resnet_forward.1} parent=1 // pred_region
      %379 = dma.done [#allocation9], 16
    $region185: #{resnet_forward.1} parent=1 // pred_fallthru
      _
    // Predicated region
    $region186: #{resnet_forward.1} parent=1 // pred_check
      _
    $region187: #{resnet_forward.1} parent=1 // pred_check_branch
      %381 = sbr.rel (0) target = $region189
    $region188: #{resnet_forward.1} parent=1 // pred_region
      %382 = dma.done [#allocation12], 16
    $region189: #{resnet_forward.1} parent=1 // pred_fallthru
      _
    // Predicated region
    $region190: #{resnet_forward.1} parent=1 // pred_check
      _
    $region191: #{resnet_forward.1} parent=1 // pred_check_branch
      %384 = sbr.rel (0) target = $region193
    $region192: #{resnet_forward.1} parent=1 // pred_region
      %385 = dma.done [#allocation12], 16
    $region193: #{resnet_forward.1} parent=1 // pred_fallthru
      _
    // Predicated region
    $region194: #{resnet_forward.1} parent=1 // pred_check
      _
    $region195: #{resnet_forward.1} parent=1 // pred_check_branch
      %387 = sbr.rel (0) target = $region197
    $region196: #{resnet_forward.1} parent=1 // pred_region
      %388 = dma.done [#allocation15], 1024
    $region197: #{resnet_forward.1} parent=1 // pred_fallthru
      _
    // Predicated region
    $region198: #{resnet_forward.1} parent=1 // pred_check
      _
    $region199: #{resnet_forward.1} parent=1 // pred_check_branch
      %390 = sbr.rel (0) target = $region201
    $region200: #{resnet_forward.1} parent=1 // pred_region
      %391 = dma.done [#allocation15], 16
    $region201: #{resnet_forward.1} parent=1 // pred_fallthru
      _
    // Predicated region
    $region202: #{resnet_forward.1} parent=1 // pred_check
      _
    $region203: #{resnet_forward.1} parent=1 // pred_check_branch
      %393 = sbr.rel (0) target = $region205
    $region204: #{resnet_forward.1} parent=1 // pred_region
      %394 = dma.done [#allocation18], 16
    $region205: #{resnet_forward.1} parent=1 // pred_fallthru
      _
    // Predicated region
    $region206: #{resnet_forward.1} parent=1 // pred_check
      _
    $region207: #{resnet_forward.1} parent=1 // pred_check_branch
      %396 = sbr.rel (0) target = $region209
    $region208: #{resnet_forward.1} parent=1 // pred_region
      %397 = dma.done [#allocation18], 16
    $region209: #{resnet_forward.1} parent=1 // pred_fallthru
      _
    // Predicated region
    $region210: #{resnet_forward.1} parent=1 // pred_check
      _
    $region211: #{resnet_forward.1} parent=1 // pred_check_branch
      %399 = sbr.rel (0) target = $region213
    $region212: #{resnet_forward.1} parent=1 // pred_region
      %400 = dma.done [#allocation21], 1024
    $region213: #{resnet_forward.1} parent=1 // pred_fallthru
      _
    // Predicated region
    $region214: #{resnet_forward.1} parent=1 // pred_check
      _
    $region215: #{resnet_forward.1} parent=1 // pred_check_branch
      %402 = sbr.rel (0) target = $region217
    $region216: #{resnet_forward.1} parent=1 // pred_region
      %403 = dma.done [#allocation21], 16
    $region217: #{resnet_forward.1} parent=1 // pred_fallthru
      _
    // Predicated region
    $region218: #{resnet_forward.1} parent=1 // pred_check
      _
    $region219: #{resnet_forward.1} parent=1 // pred_check_branch
      %405 = sbr.rel (0) target = $region221
    $region220: #{resnet_forward.1} parent=1 // pred_region
      %406 = dma.done [#allocation24], 16
    $region221: #{resnet_forward.1} parent=1 // pred_fallthru
      _
    // Predicated region
    $region222: #{resnet_forward.1} parent=1 // pred_check
      _
    $region223: #{resnet_forward.1} parent=1 // pred_check_branch
      %408 = sbr.rel (0) target = $region225
    $region224: #{resnet_forward.1} parent=1 // pred_region
      %409 = dma.done [#allocation24], 16
    $region225: #{resnet_forward.1} parent=1 // pred_fallthru
      _
    // Predicated region
    $region226: #{resnet_forward.1} parent=1 // pred_check
      _
    $region227: #{resnet_forward.1} parent=1 // pred_check_branch
      %411 = sbr.rel (0) target = $region229
    $region228: #{resnet_forward.1} parent=1 // pred_region
      %412 = dma.done [#allocation27], 1280
    $region229: #{resnet_forward.1} parent=1 // pred_fallthru
      _
    // Predicated region
    $region230: #{resnet_forward.1} parent=1 // pred_check
      _
    $region231: #{resnet_forward.1} parent=1 // pred_check_branch
      %414 = sbr.rel (0) target = $region233
    $region232: #{resnet_forward.1} parent=1 // pred_region
      %415 = dma.done [#allocation27], 16
    $region233: #{resnet_forward.1} parent=1 // pred_fallthru
      _
    // Predicated region
    $region234: #{resnet_forward.1} parent=1 // pred_check
      _
    $region235: #{resnet_forward.1} parent=1 // pred_check_branch
      %417 = sbr.rel (0) target = $region237
    $region236: #{resnet_forward.1} parent=1 // pred_region
      %418 = dma.done [#allocation30], 16
    $region237: #{resnet_forward.1} parent=1 // pred_fallthru
      _
    // Predicated region
    $region238: #{resnet_forward.1} parent=1 // pred_check
      _
    $region239: #{resnet_forward.1} parent=1 // pred_check_branch
      %420 = sbr.rel (0) target = $region241
    $region240: #{resnet_forward.1} parent=1 // pred_region
      %421 = dma.done [#allocation30], 16
    $region241: #{resnet_forward.1} parent=1 // pred_fallthru
      _
    // Predicated region
    $region242: #{resnet_forward.1} parent=1 // pred_check
      _
    $region243: #{resnet_forward.1} parent=1 // pred_check_branch
      %423 = sbr.rel (0) target = $region245
    $region244: #{resnet_forward.1} parent=1 // pred_region
      %424 = dma.done [#allocation33], 1280
    $region245: #{resnet_forward.1} parent=1 // pred_fallthru
      _
    // Predicated region
    $region246: #{resnet_forward.1} parent=1 // pred_check
      _
    $region247: #{resnet_forward.1} parent=1 // pred_check_branch
      %426 = sbr.rel (0) target = $region249
    $region248: #{resnet_forward.1} parent=1 // pred_region
      %427 = dma.done [#allocation33], 2048
    $region249: #{resnet_forward.1} parent=1 // pred_fallthru
      _
    %v428 = vld [vmem:[%s3] sm:$0xff]
    %v429 = vld [vmem:[%s3 + $0x8] sm:$0xff]
    %v430 = vld [vmem:[%s3 + $0x10] sm:$0xff]
    %v431 = vld [vmem:[%s3 + $0x18] sm:$0xff]
    %v432 = vld [vmem:[%s3 + $0x20] sm:$0xff]
    %v433 = vld [vmem:[%s3 + $0x28] sm:$0xff]
    %v434 = vld [vmem:[%s1] sm:$0xff]
    %v435 = vld [vmem:[%s1 + $0x8] sm:$0xff]
    %v436 = vld [vmem:[%s1 + $0x10] sm:$0xff]
    %v437 = vld [vmem:[%s1 + $0x18] sm:$0xff]
    %v438 = vld [vmem:[%s1 + $0x20] sm:$0xff]
    %v439 = vld [vmem:[%s1 + $0x28] sm:$0xff]
    %vm446 = vcmask 1043456
    %v447 = vrot.slane %v434, 4
    %v448 = vrot.slane %v435, 4
    %v449 = vsel %vm446, %v447, %v448
    %v450 = vrot.slane %v436, 4
    %v451 = vsel %vm446, %v448, %v450
    %v452 = vrot.slane %v437, 4
    %v453 = vsel %vm446, %v450, %v452
    %v454 = vrot.slane %v438, 4
    %v455 = vsel %vm446, %v452, %v454
    %v456 = vrot.slane %v439, 4
    %v457 = vsel %vm446, %v454, %v456
    %v460 = vsel %vm446, 0.0, %v447
    %v461 = vsel %vm446, %v456, 0.0
    %v462 = vld [vmem:[#allocation3] sm:$0xf]
    %s463 = scalar_lea.vmem [#allocation3], 4
    %v464 = vld [vmem:[%s463] sm:$0xf]
    %vm467 = vcmask 1045504
    %v468 = vrot.slane %v460, 2
    %v469 = vrot.slane %v449, 2
    %v470 = vsel %vm467, %v468, %v469
    %v471 = vrot.slane %v451, 2
    %v472 = vsel %vm467, %v469, %v471
    %v473 = vrot.slane %v453, 2
    %v474 = vsel %vm467, %v471, %v473
    %v475 = vrot.slane %v455, 2
    %v476 = vsel %vm467, %v473, %v475
    %v477 = vrot.slane %v457, 2
    %v478 = vsel %vm467, %v475, %v477
    %v479 = vrot.slane %v461, 2
    %v480 = vsel %vm467, %v477, %v479
    %vm481 = vcmask 31744
    %v482 = vsel %vm481, %v470, 0
    %v484 = vsel %vm481, %v472, 0
    %v486 = vsel %vm481, %v474, 0
    %v488 = vsel %vm481, %v476, 0
    %v490 = vsel %vm481, %v478, 0
    %v492 = vsel %vm481, %v480, 0
    %v495 = vsel %vm446, %v464, 0
    %497 = vmatprep.subr.mxu0 0.0
    %498 = vmatpush1.msra.mxu0 0.0
    %499 = vmatprep.subr.mxu0 0.0
    %500 = vmatpush1.msra.mxu0 0.0
    %501 = vmatprep.subr.mxu0 0.0
    %502 = vmatpush1.msra.mxu0 0.0
    %503 = vmatprep.subr.mxu0 0.0
    %504 = vmatpush1.msra.mxu0 0.0
    %505 = vmatprep.subr.mxu0 0.0
    %506 = vmatpush1.msra.mxu0 0.0
    %507 = vmatprep.subr.mxu0 0.0
    %508 = vmatpush1.msra.mxu0 0.0
    %509 = vmatprep.subr.mxu0 0.0
    %510 = vmatpush1.msra.mxu0 0.0
    %511 = vmatprep.subr.mxu0 0.0
    %512 = vmatpush1.msra.mxu0 0.0
    %513 = vmatprep.subr.mxu0 0.0
    %514 = vmatpush1.msra.mxu0 0.0
    %515 = vmatprep.subr.mxu0 0.0
    %516 = vmatpush1.msra.mxu0 0.0
    %517 = vmatprep.subr.mxu0 0.0
    %518 = vmatpush1.msra.mxu0 0.0
    %519 = vmatprep.subr.mxu0 0.0
    %520 = vmatpush1.msra.mxu0 0.0
    %521 = vmatprep.subr.mxu0 0.0
    %522 = vmatpush1.msra.mxu0 0.0
    %523 = vmatprep.subr.mxu0 0.0
    %524 = vmatpush1.msra.mxu0 0.0
    %525 = vmatprep.subr.mxu0 0.0
    %526 = vmatpush1.msra.mxu0 0.0
    %527 = vmatprep.subr.mxu0 0.0
    %528 = vmatpush1.msra.mxu0 %v495
    %529 = vmatprep.subr.mxu0 0.0
    %530 = vmatpush2.msra.mxu0 0.0
    %531 = vmatprep.subr.mxu0 0.0
    %532 = vmatpush2.msra.mxu0 0.0
    %533 = vmatprep.subr.mxu0 0.0
    %534 = vmatpush2.msra.mxu0 0.0
    %535 = vmatprep.subr.mxu0 0.0
    %536 = vmatpush2.msra.mxu0 0.0
    %537 = vmatprep.subr.mxu0 0.0
    %538 = vmatpush2.msra.mxu0 0.0
    %539 = vmatprep.subr.mxu0 0.0
    %540 = vmatpush2.msra.mxu0 0.0
    %541 = vmatprep.subr.mxu0 0.0
    %542 = vmatpush2.msra.mxu0 0.0
    %543 = vmatprep.subr.mxu0 0.0
    %544 = vmatpush2.msra.mxu0 0.0
    %545 = vmatprep.subr.mxu0 0.0
    %546 = vmatpush2.msra.mxu0 0.0
    %547 = vmatprep.subr.mxu0 0.0
    %548 = vmatpush2.msra.mxu0 0.0
    %549 = vmatprep.subr.mxu0 0.0
    %550 = vmatpush2.msra.mxu0 0.0
    %551 = vmatprep.subr.mxu0 0.0
    %552 = vmatpush2.msra.mxu0 0.0
    %553 = vmatprep.subr.mxu0 0.0
    %554 = vmatpush2.msra.mxu0 0.0
    %555 = vmatprep.subr.mxu0 0.0
    %556 = vmatpush2.msra.mxu0 0.0
    %557 = vmatprep.subr.mxu0 0.0
    %558 = vmatpush2.msra.mxu0 0.0
    %559 = vmatprep.subr.mxu0 0.0
    %560 = vmatpush2.msra.mxu0 0.0
    %561 = vmatprep.mubr.f32.mxu0 0.0
    %562 = vmatmul.mubr.f32.gmra.mxu0 %v482
    %v563 = vpop.f32.mrf.mxu0
    %v564 = vadd.f32 0.0, %v563
    %v565 = vpop.f32.mrf.mxu0
    %566 = vmatprep.mubr.f32.mxu0 0.0
    %567 = vmatmul.mubr.f32.gmra.mxu0 %v484
    %v568 = vpop.f32.mrf.mxu0
    %v569 = vadd.f32 0.0, %v568
    %v570 = vpop.f32.mrf.mxu0
    %571 = vmatprep.mubr.f32.mxu0 0.0
    %572 = vmatmul.mubr.f32.gmra.mxu0 %v486
    %v573 = vpop.f32.mrf.mxu0
    %v574 = vadd.f32 0.0, %v573
    %v575 = vpop.f32.mrf.mxu0
    %576 = vmatprep.mubr.f32.mxu0 0.0
    %577 = vmatmul.mubr.f32.gmra.mxu0 %v488
    %v578 = vpop.f32.mrf.mxu0
    %v579 = vadd.f32 0.0, %v578
    %v580 = vpop.f32.mrf.mxu0
    %581 = vmatprep.mubr.f32.mxu0 0.0
    %582 = vmatmul.mubr.f32.gmra.mxu0 %v490
    %v583 = vpop.f32.mrf.mxu0
    %v584 = vadd.f32 0.0, %v583
    %v585 = vpop.f32.mrf.mxu0
    %586 = vmatprep.mubr.f32.mxu0 0.0
    %587 = vmatmul.mubr.f32.gmra.mxu0 %v492
    %v588 = vpop.f32.mrf.mxu0
    %v589 = vadd.f32 0.0, %v588
    %v590 = vpop.f32.mrf.mxu0
    %591 = vdwg.mxu0
    %vm592 = vcmask 1046528
    %v593 = vrot.slane %v460, 1
    %v594 = vrot.slane %v449, 1
    %v595 = vsel %vm592, %v593, %v594
    %v596 = vrot.slane %v451, 1
    %v597 = vsel %vm592, %v594, %v596
    %v598 = vrot.slane %v453, 1
    %v599 = vsel %vm592, %v596, %v598
    %v600 = vrot.slane %v455, 1
    %v601 = vsel %vm592, %v598, %v600
    %v602 = vrot.slane %v457, 1
    %v603 = vsel %vm592, %v600, %v602
    %v604 = vrot.slane %v461, 1
    %v605 = vsel %vm592, %v602, %v604
    %v606 = vsel %vm481, %v595, 0
    %v608 = vsel %vm481, %v597, 0
    %v610 = vsel %vm481, %v599, 0
    %v612 = vsel %vm481, %v601, 0
    %v614 = vsel %vm481, %v603, 0
    %v616 = vsel %vm481, %v605, 0
    %v619 = vsel %vm446, %v462, 0
    %621 = vmatprep.subr.mxu0 0.0
    %622 = vmatpush1.msra.mxu0 0.0
    %623 = vmatprep.subr.mxu0 0.0
    %624 = vmatpush1.msra.mxu0 0.0
    %625 = vmatprep.subr.mxu0 0.0
    %626 = vmatpush1.msra.mxu0 0.0
    %627 = vmatprep.subr.mxu0 0.0
    %628 = vmatpush1.msra.mxu0 0.0
    %629 = vmatprep.subr.mxu0 0.0
    %630 = vmatpush1.msra.mxu0 0.0
    %631 = vmatprep.subr.mxu0 0.0
    %632 = vmatpush1.msra.mxu0 0.0
    %633 = vmatprep.subr.mxu0 0.0
    %634 = vmatpush1.msra.mxu0 0.0
    %635 = vmatprep.subr.mxu0 0.0
    %636 = vmatpush1.msra.mxu0 0.0
    %637 = vmatprep.subr.mxu0 0.0
    %638 = vmatpush1.msra.mxu0 0.0
    %639 = vmatprep.subr.mxu0 0.0
    %640 = vmatpush1.msra.mxu0 0.0
    %641 = vmatprep.subr.mxu0 0.0
    %642 = vmatpush1.msra.mxu0 0.0
    %643 = vmatprep.subr.mxu0 0.0
    %644 = vmatpush1.msra.mxu0 0.0
    %645 = vmatprep.subr.mxu0 0.0
    %646 = vmatpush1.msra.mxu0 0.0
    %647 = vmatprep.subr.mxu0 0.0
    %648 = vmatpush1.msra.mxu0 0.0
    %649 = vmatprep.subr.mxu0 0.0
    %650 = vmatpush1.msra.mxu0 0.0
    %651 = vmatprep.subr.mxu0 0.0
    %652 = vmatpush1.msra.mxu0 %v619
    %653 = vmatprep.subr.mxu0 0.0
    %654 = vmatpush2.msra.mxu0 0.0
    %655 = vmatprep.subr.mxu0 0.0
    %656 = vmatpush2.msra.mxu0 0.0
    %657 = vmatprep.subr.mxu0 0.0
    %658 = vmatpush2.msra.mxu0 0.0
    %659 = vmatprep.subr.mxu0 0.0
    %660 = vmatpush2.msra.mxu0 0.0
    %661 = vmatprep.subr.mxu0 0.0
    %662 = vmatpush2.msra.mxu0 0.0
    %663 = vmatprep.subr.mxu0 0.0
    %664 = vmatpush2.msra.mxu0 0.0
    %665 = vmatprep.subr.mxu0 0.0
    %666 = vmatpush2.msra.mxu0 0.0
    %667 = vmatprep.subr.mxu0 0.0
    %668 = vmatpush2.msra.mxu0 0.0
    %669 = vmatprep.subr.mxu0 0.0
    %670 = vmatpush2.msra.mxu0 0.0
    %671 = vmatprep.subr.mxu0 0.0
    %672 = vmatpush2.msra.mxu0 0.0
    %673 = vmatprep.subr.mxu0 0.0
    %674 = vmatpush2.msra.mxu0 0.0
    %675 = vmatprep.subr.mxu0 0.0
    %676 = vmatpush2.msra.mxu0 0.0
    %677 = vmatprep.subr.mxu0 0.0
    %678 = vmatpush2.msra.mxu0 0.0
    %679 = vmatprep.subr.mxu0 0.0
    %680 = vmatpush2.msra.mxu0 0.0
    %681 = vmatprep.subr.mxu0 0.0
    %682 = vmatpush2.msra.mxu0 0.0
    %683 = vmatprep.subr.mxu0 0.0
    %684 = vmatpush2.msra.mxu0 0.0
    %685 = vmatprep.mubr.f32.mxu0 0.0
    %686 = vmatmul.mubr.f32.gmra.mxu0 %v606
    %v687 = vpop.f32.mrf.mxu0
    %v688 = vadd.f32 %v564, %v687
    %v689 = vpop.f32.mrf.mxu0
    %690 = vmatprep.mubr.f32.mxu0 0.0
    %691 = vmatmul.mubr.f32.gmra.mxu0 %v608
    %v692 = vpop.f32.mrf.mxu0
    %v693 = vadd.f32 %v569, %v692
    %v694 = vpop.f32.mrf.mxu0
    %695 = vmatprep.mubr.f32.mxu0 0.0
    %696 = vmatmul.mubr.f32.gmra.mxu0 %v610
    %v697 = vpop.f32.mrf.mxu0
    %v698 = vadd.f32 %v574, %v697
    %v699 = vpop.f32.mrf.mxu0
    %700 = vmatprep.mubr.f32.mxu0 0.0
    %701 = vmatmul.mubr.f32.gmra.mxu0 %v612
    %v702 = vpop.f32.mrf.mxu0
    %v703 = vadd.f32 %v579, %v702
    %v704 = vpop.f32.mrf.mxu0
    %705 = vmatprep.mubr.f32.mxu0 0.0
    %706 = vmatmul.mubr.f32.gmra.mxu0 %v614
    %v707 = vpop.f32.mrf.mxu0
    %v708 = vadd.f32 %v584, %v707
    %v709 = vpop.f32.mrf.mxu0
    %710 = vmatprep.mubr.f32.mxu0 0.0
    %711 = vmatmul.mubr.f32.gmra.mxu0 %v616
    %v712 = vpop.f32.mrf.mxu0
    %v713 = vadd.f32 %v589, %v712
    %v714 = vpop.f32.mrf.mxu0
    %715 = vdwg.mxu0
    %s716 = scalar_lea.vmem [#allocation3], 8
    %v717 = vld [vmem:[%s716] sm:$0xf]
    %vm718 = vcmask 1044480
    %v719 = vrot.slane %v460, 3
    %v720 = vrot.slane %v449, 3
    %v721 = vsel %vm718, %v719, %v720
    %v722 = vrot.slane %v451, 3
    %v723 = vsel %vm718, %v720, %v722
    %v724 = vrot.slane %v453, 3
    %v725 = vsel %vm718, %v722, %v724
    %v726 = vrot.slane %v455, 3
    %v727 = vsel %vm718, %v724, %v726
    %v728 = vrot.slane %v457, 3
    %v729 = vsel %vm718, %v726, %v728
    %v730 = vrot.slane %v461, 3
    %v731 = vsel %vm718, %v728, %v730
    %v732 = vsel %vm481, %v721, 0
    %v734 = vsel %vm481, %v723, 0
    %v736 = vsel %vm481, %v725, 0
    %v738 = vsel %vm481, %v727, 0
    %v740 = vsel %vm481, %v729, 0
    %v742 = vsel %vm481, %v731, 0
    %v745 = vsel %vm446, %v717, 0
    %747 = vmatprep.subr.mxu0 0.0
    %748 = vmatpush1.msra.mxu0 0.0
    %749 = vmatprep.subr.mxu0 0.0
    %750 = vmatpush1.msra.mxu0 0.0
    %751 = vmatprep.subr.mxu0 0.0
    %752 = vmatpush1.msra.mxu0 0.0
    %753 = vmatprep.subr.mxu0 0.0
    %754 = vmatpush1.msra.mxu0 0.0
    %755 = vmatprep.subr.mxu0 0.0
    %756 = vmatpush1.msra.mxu0 0.0
    %757 = vmatprep.subr.mxu0 0.0
    %758 = vmatpush1.msra.mxu0 0.0
    %759 = vmatprep.subr.mxu0 0.0
    %760 = vmatpush1.msra.mxu0 0.0
    %761 = vmatprep.subr.mxu0 0.0
    %762 = vmatpush1.msra.mxu0 0.0
    %763 = vmatprep.subr.mxu0 0.0
    %764 = vmatpush1.msra.mxu0 0.0
    %765 = vmatprep.subr.mxu0 0.0
    %766 = vmatpush1.msra.mxu0 0.0
    %767 = vmatprep.subr.mxu0 0.0
    %768 = vmatpush1.msra.mxu0 0.0
    %769 = vmatprep.subr.mxu0 0.0
    %770 = vmatpush1.msra.mxu0 0.0
    %771 = vmatprep.subr.mxu0 0.0
    %772 = vmatpush1.msra.mxu0 0.0
    %773 = vmatprep.subr.mxu0 0.0
    %774 = vmatpush1.msra.mxu0 0.0
    %775 = vmatprep.subr.mxu0 0.0
    %776 = vmatpush1.msra.mxu0 0.0
    %777 = vmatprep.subr.mxu0 0.0
    %778 = vmatpush1.msra.mxu0 %v745
    %779 = vmatprep.subr.mxu0 0.0
    %780 = vmatpush2.msra.mxu0 0.0
    %781 = vmatprep.subr.mxu0 0.0
    %782 = vmatpush2.msra.mxu0 0.0
    %783 = vmatprep.subr.mxu0 0.0
    %784 = vmatpush2.msra.mxu0 0.0
    %785 = vmatprep.subr.mxu0 0.0
    %786 = vmatpush2.msra.mxu0 0.0
    %787 = vmatprep.subr.mxu0 0.0
    %788 = vmatpush2.msra.mxu0 0.0
    %789 = vmatprep.subr.mxu0 0.0
    %790 = vmatpush2.msra.mxu0 0.0
    %791 = vmatprep.subr.mxu0 0.0
    %792 = vmatpush2.msra.mxu0 0.0
    %793 = vmatprep.subr.mxu0 0.0
    %794 = vmatpush2.msra.mxu0 0.0
    %795 = vmatprep.subr.mxu0 0.0
    %796 = vmatpush2.msra.mxu0 0.0
    %797 = vmatprep.subr.mxu0 0.0
    %798 = vmatpush2.msra.mxu0 0.0
    %799 = vmatprep.subr.mxu0 0.0
    %800 = vmatpush2.msra.mxu0 0.0
    %801 = vmatprep.subr.mxu0 0.0
    %802 = vmatpush2.msra.mxu0 0.0
    %803 = vmatprep.subr.mxu0 0.0
    %804 = vmatpush2.msra.mxu0 0.0
    %805 = vmatprep.subr.mxu0 0.0
    %806 = vmatpush2.msra.mxu0 0.0
    %807 = vmatprep.subr.mxu0 0.0
    %808 = vmatpush2.msra.mxu0 0.0
    %809 = vmatprep.subr.mxu0 0.0
    %810 = vmatpush2.msra.mxu0 0.0
    %811 = vmatprep.mubr.f32.mxu0 0.0
    %812 = vmatmul.mubr.f32.gmra.mxu0 %v732
    %v813 = vpop.f32.mrf.mxu0
    %v814 = vadd.f32 0.0, %v813
    %v815 = vpop.f32.mrf.mxu0
    %816 = vmatprep.mubr.f32.mxu0 0.0
    %817 = vmatmul.mubr.f32.gmra.mxu0 %v734
    %v818 = vpop.f32.mrf.mxu0
    %v819 = vadd.f32 0.0, %v818
    %v820 = vpop.f32.mrf.mxu0
    %821 = vmatprep.mubr.f32.mxu0 0.0
    %822 = vmatmul.mubr.f32.gmra.mxu0 %v736
    %v823 = vpop.f32.mrf.mxu0
    %v824 = vadd.f32 0.0, %v823
    %v825 = vpop.f32.mrf.mxu0
    %826 = vmatprep.mubr.f32.mxu0 0.0
    %827 = vmatmul.mubr.f32.gmra.mxu0 %v738
    %v828 = vpop.f32.mrf.mxu0
    %v829 = vadd.f32 0.0, %v828
    %v830 = vpop.f32.mrf.mxu0
    %831 = vmatprep.mubr.f32.mxu0 0.0
    %832 = vmatmul.mubr.f32.gmra.mxu0 %v740
    %v833 = vpop.f32.mrf.mxu0
    %v834 = vadd.f32 0.0, %v833
    %v835 = vpop.f32.mrf.mxu0
    %836 = vmatprep.mubr.f32.mxu0 0.0
    %837 = vmatmul.mubr.f32.gmra.mxu0 %v742
    %v838 = vpop.f32.mrf.mxu0
    %v839 = vadd.f32 0.0, %v838
    %v840 = vpop.f32.mrf.mxu0
    %841 = vdwg.mxu0
    %v842 = vadd.f32 %v688, %v814
    %v843 = vadd.f32 %v693, %v819
    %v844 = vadd.f32 %v698, %v824
    %v845 = vadd.f32 %v703, %v829
    %v846 = vadd.f32 %v708, %v834
    %v847 = vadd.f32 %v713, %v839
    %s848 = scalar_lea.vmem [#allocation3], 12
    %v849 = vld [vmem:[%s848] sm:$0xf]
    %v850 = vrot.slane %v460, 4
    %v851 = vrot.slane %v449, 4
    %v852 = vsel %vm446, %v850, %v851
    %v853 = vrot.slane %v451, 4
    %v854 = vsel %vm446, %v851, %v853
    %v855 = vrot.slane %v453, 4
    %v856 = vsel %vm446, %v853, %v855
    %v857 = vrot.slane %v455, 4
    %v858 = vsel %vm446, %v855, %v857
    %v859 = vrot.slane %v457, 4
    %v860 = vsel %vm446, %v857, %v859
    %v861 = vrot.slane %v461, 4
    %v862 = vsel %vm446, %v859, %v861
    %v863 = vsel %vm481, %v852, 0
    %v865 = vsel %vm481, %v854, 0
    %v867 = vsel %vm481, %v856, 0
    %v869 = vsel %vm481, %v858, 0
    %v871 = vsel %vm481, %v860, 0
    %v873 = vsel %vm481, %v862, 0
    %v876 = vsel %vm446, %v849, 0
    %878 = vmatprep.subr.mxu0 0.0
    %879 = vmatpush1.msra.mxu0 0.0
    %880 = vmatprep.subr.mxu0 0.0
    %881 = vmatpush1.msra.mxu0 0.0
    %882 = vmatprep.subr.mxu0 0.0
    %883 = vmatpush1.msra.mxu0 0.0
    %884 = vmatprep.subr.mxu0 0.0
    %885 = vmatpush1.msra.mxu0 0.0
    %886 = vmatprep.subr.mxu0 0.0
    %887 = vmatpush1.msra.mxu0 0.0
    %888 = vmatprep.subr.mxu0 0.0
    %889 = vmatpush1.msra.mxu0 0.0
    %890 = vmatprep.subr.mxu0 0.0
    %891 = vmatpush1.msra.mxu0 0.0
    %892 = vmatprep.subr.mxu0 0.0
    %893 = vmatpush1.msra.mxu0 0.0
    %894 = vmatprep.subr.mxu0 0.0
    %895 = vmatpush1.msra.mxu0 0.0
    %896 = vmatprep.subr.mxu0 0.0
    %897 = vmatpush1.msra.mxu0 0.0
    %898 = vmatprep.subr.mxu0 0.0
    %899 = vmatpush1.msra.mxu0 0.0
    %900 = vmatprep.subr.mxu0 0.0
    %901 = vmatpush1.msra.mxu0 0.0
    %902 = vmatprep.subr.mxu0 0.0
    %903 = vmatpush1.msra.mxu0 0.0
    %904 = vmatprep.subr.mxu0 0.0
    %905 = vmatpush1.msra.mxu0 0.0
    %906 = vmatprep.subr.mxu0 0.0
    %907 = vmatpush1.msra.mxu0 0.0
    %908 = vmatprep.subr.mxu0 0.0
    %909 = vmatpush1.msra.mxu0 %v876
    %910 = vmatprep.subr.mxu0 0.0
    %911 = vmatpush2.msra.mxu0 0.0
    %912 = vmatprep.subr.mxu0 0.0
    %913 = vmatpush2.msra.mxu0 0.0
    %914 = vmatprep.subr.mxu0 0.0
    %915 = vmatpush2.msra.mxu0 0.0
    %916 = vmatprep.subr.mxu0 0.0
    %917 = vmatpush2.msra.mxu0 0.0
    %918 = vmatprep.subr.mxu0 0.0
    %919 = vmatpush2.msra.mxu0 0.0
    %920 = vmatprep.subr.mxu0 0.0
    %921 = vmatpush2.msra.mxu0 0.0
    %922 = vmatprep.subr.mxu0 0.0
    %923 = vmatpush2.msra.mxu0 0.0
    %924 = vmatprep.subr.mxu0 0.0
    %925 = vmatpush2.msra.mxu0 0.0
    %926 = vmatprep.subr.mxu0 0.0
    %927 = vmatpush2.msra.mxu0 0.0
    %928 = vmatprep.subr.mxu0 0.0
    %929 = vmatpush2.msra.mxu0 0.0
    %930 = vmatprep.subr.mxu0 0.0
    %931 = vmatpush2.msra.mxu0 0.0
    %932 = vmatprep.subr.mxu0 0.0
    %933 = vmatpush2.msra.mxu0 0.0
    %934 = vmatprep.subr.mxu0 0.0
    %935 = vmatpush2.msra.mxu0 0.0
    %936 = vmatprep.subr.mxu0 0.0
    %937 = vmatpush2.msra.mxu0 0.0
    %938 = vmatprep.subr.mxu0 0.0
    %939 = vmatpush2.msra.mxu0 0.0
    %940 = vmatprep.subr.mxu0 0.0
    %941 = vmatpush2.msra.mxu0 0.0
    %942 = vmatprep.mubr.f32.mxu0 0.0
    %943 = vmatmul.mubr.f32.gmra.mxu0 %v863
    %v944 = vpop.f32.mrf.mxu0
    %v945 = vadd.f32 0.0, %v944
    %v946 = vpop.f32.mrf.mxu0
    %947 = vmatprep.mubr.f32.mxu0 0.0
    %948 = vmatmul.mubr.f32.gmra.mxu0 %v865
    %v949 = vpop.f32.mrf.mxu0
    %v950 = vadd.f32 0.0, %v949
    %v951 = vpop.f32.mrf.mxu0
    %952 = vmatprep.mubr.f32.mxu0 0.0
    %953 = vmatmul.mubr.f32.gmra.mxu0 %v867
    %v954 = vpop.f32.mrf.mxu0
    %v955 = vadd.f32 0.0, %v954
    %v956 = vpop.f32.mrf.mxu0
    %957 = vmatprep.mubr.f32.mxu0 0.0
    %958 = vmatmul.mubr.f32.gmra.mxu0 %v869
    %v959 = vpop.f32.mrf.mxu0
    %v960 = vadd.f32 0.0, %v959
    %v961 = vpop.f32.mrf.mxu0
    %962 = vmatprep.mubr.f32.mxu0 0.0
    %963 = vmatmul.mubr.f32.gmra.mxu0 %v871
    %v964 = vpop.f32.mrf.mxu0
    %v965 = vadd.f32 0.0, %v964
    %v966 = vpop.f32.mrf.mxu0
    %967 = vmatprep.mubr.f32.mxu0 0.0
    %968 = vmatmul.mubr.f32.gmra.mxu0 %v873
    %v969 = vpop.f32.mrf.mxu0
    %v970 = vadd.f32 0.0, %v969
    %v971 = vpop.f32.mrf.mxu0
    %972 = vdwg.mxu0
    %v973 = vadd.f32 %v842, %v945
    %v974 = vadd.f32 %v843, %v950
    %v975 = vadd.f32 %v844, %v955
    %v976 = vadd.f32 %v845, %v960
    %v977 = vadd.f32 %v846, %v965
    %v978 = vadd.f32 %v847, %v970
    %s979 = scalar_lea.vmem [#allocation3], 16
    %v980 = vld [vmem:[%s979] sm:$0xf]
    %vm981 = vcmask 1042432
    %v982 = vrot.slane %v460, 5
    %v983 = vrot.slane %v449, 5
    %v984 = vsel %vm981, %v982, %v983
    %v985 = vrot.slane %v451, 5
    %v986 = vsel %vm981, %v983, %v985
    %v987 = vrot.slane %v453, 5
    %v988 = vsel %vm981, %v985, %v987
    %v989 = vrot.slane %v455, 5
    %v990 = vsel %vm981, %v987, %v989
    %v991 = vrot.slane %v457, 5
    %v992 = vsel %vm981, %v989, %v991
    %v993 = vrot.slane %v461, 5
    %v994 = vsel %vm981, %v991, %v993
    %v995 = vsel %vm481, %v984, 0
    %v997 = vsel %vm481, %v986, 0
    %v999 = vsel %vm481, %v988, 0
    %v1001 = vsel %vm481, %v990, 0
    %v1003 = vsel %vm481, %v992, 0
    %v1005 = vsel %vm481, %v994, 0
    %v1008 = vsel %vm446, %v980, 0
    %1010 = vmatprep.subr.mxu0 0.0
    %1011 = vmatpush1.msra.mxu0 0.0
    %1012 = vmatprep.subr.mxu0 0.0
    %1013 = vmatpush1.msra.mxu0 0.0
    %1014 = vmatprep.subr.mxu0 0.0
    %1015 = vmatpush1.msra.mxu0 0.0
    %1016 = vmatprep.subr.mxu0 0.0
    %1017 = vmatpush1.msra.mxu0 0.0
    %1018 = vmatprep.subr.mxu0 0.0
    %1019 = vmatpush1.msra.mxu0 0.0
    %1020 = vmatprep.subr.mxu0 0.0
    %1021 = vmatpush1.msra.mxu0 0.0
    %1022 = vmatprep.subr.mxu0 0.0
    %1023 = vmatpush1.msra.mxu0 0.0
    %1024 = vmatprep.subr.mxu0 0.0
    %1025 = vmatpush1.msra.mxu0 0.0
    %1026 = vmatprep.subr.mxu0 0.0
    %1027 = vmatpush1.msra.mxu0 0.0
    %1028 = vmatprep.subr.mxu0 0.0
    %1029 = vmatpush1.msra.mxu0 0.0
    %1030 = vmatprep.subr.mxu0 0.0
    %1031 = vmatpush1.msra.mxu0 0.0
    %1032 = vmatprep.subr.mxu0 0.0
    %1033 = vmatpush1.msra.mxu0 0.0
    %1034 = vmatprep.subr.mxu0 0.0
    %1035 = vmatpush1.msra.mxu0 0.0
    %1036 = vmatprep.subr.mxu0 0.0
    %1037 = vmatpush1.msra.mxu0 0.0
    %1038 = vmatprep.subr.mxu0 0.0
    %1039 = vmatpush1.msra.mxu0 0.0
    %1040 = vmatprep.subr.mxu0 0.0
    %1041 = vmatpush1.msra.mxu0 %v1008
    %1042 = vmatprep.subr.mxu0 0.0
    %1043 = vmatpush2.msra.mxu0 0.0
    %1044 = vmatprep.subr.mxu0 0.0
    %1045 = vmatpush2.msra.mxu0 0.0
    %1046 = vmatprep.subr.mxu0 0.0
    %1047 = vmatpush2.msra.mxu0 0.0
    %1048 = vmatprep.subr.mxu0 0.0
    %1049 = vmatpush2.msra.mxu0 0.0
    %1050 = vmatprep.subr.mxu0 0.0
    %1051 = vmatpush2.msra.mxu0 0.0
    %1052 = vmatprep.subr.mxu0 0.0
    %1053 = vmatpush2.msra.mxu0 0.0
    %1054 = vmatprep.subr.mxu0 0.0
    %1055 = vmatpush2.msra.mxu0 0.0
    %1056 = vmatprep.subr.mxu0 0.0
    %1057 = vmatpush2.msra.mxu0 0.0
    %1058 = vmatprep.subr.mxu0 0.0
    %1059 = vmatpush2.msra.mxu0 0.0
    %1060 = vmatprep.subr.mxu0 0.0
    %1061 = vmatpush2.msra.mxu0 0.0
    %1062 = vmatprep.subr.mxu0 0.0
    %1063 = vmatpush2.msra.mxu0 0.0
    %1064 = vmatprep.subr.mxu0 0.0
    %1065 = vmatpush2.msra.mxu0 0.0
    %1066 = vmatprep.subr.mxu0 0.0
    %1067 = vmatpush2.msra.mxu0 0.0
    %1068 = vmatprep.subr.mxu0 0.0
    %1069 = vmatpush2.msra.mxu0 0.0
    %1070 = vmatprep.subr.mxu0 0.0
    %1071 = vmatpush2.msra.mxu0 0.0
    %1072 = vmatprep.subr.mxu0 0.0
    %1073 = vmatpush2.msra.mxu0 0.0
    %1074 = vmatprep.mubr.f32.mxu0 0.0
    %1075 = vmatmul.mubr.f32.gmra.mxu0 %v995
    %v1076 = vpop.f32.mrf.mxu0
    %v1077 = vadd.f32 0.0, %v1076
    %v1078 = vpop.f32.mrf.mxu0
    %1079 = vmatprep.mubr.f32.mxu0 0.0
    %1080 = vmatmul.mubr.f32.gmra.mxu0 %v997
    %v1081 = vpop.f32.mrf.mxu0
    %v1082 = vadd.f32 0.0, %v1081
    %v1083 = vpop.f32.mrf.mxu0
    %1084 = vmatprep.mubr.f32.mxu0 0.0
    %1085 = vmatmul.mubr.f32.gmra.mxu0 %v999
    %v1086 = vpop.f32.mrf.mxu0
    %v1087 = vadd.f32 0.0, %v1086
    %v1088 = vpop.f32.mrf.mxu0
    %1089 = vmatprep.mubr.f32.mxu0 0.0
    %1090 = vmatmul.mubr.f32.gmra.mxu0 %v1001
    %v1091 = vpop.f32.mrf.mxu0
    %v1092 = vadd.f32 0.0, %v1091
    %v1093 = vpop.f32.mrf.mxu0
    %1094 = vmatprep.mubr.f32.mxu0 0.0
    %1095 = vmatmul.mubr.f32.gmra.mxu0 %v1003
    %v1096 = vpop.f32.mrf.mxu0
    %v1097 = vadd.f32 0.0, %v1096
    %v1098 = vpop.f32.mrf.mxu0
    %1099 = vmatprep.mubr.f32.mxu0 0.0
    %1100 = vmatmul.mubr.f32.gmra.mxu0 %v1005
    %v1101 = vpop.f32.mrf.mxu0
    %v1102 = vadd.f32 0.0, %v1101
    %v1103 = vpop.f32.mrf.mxu0
    %1104 = vdwg.mxu0
    %v1105 = vadd.f32 %v973, %v1077
    %v1106 = vadd.f32 %v974, %v1082
    %v1107 = vadd.f32 %v975, %v1087
    %v1108 = vadd.f32 %v976, %v1092
    %v1109 = vadd.f32 %v977, %v1097
    %v1110 = vadd.f32 %v978, %v1102
    %s1111 = scalar_lea.vmem [#allocation3], 20
    %v1112 = vld [vmem:[%s1111] sm:$0xf]
    %vm1113 = vcmask 1041408
    %v1114 = vrot.slane %v460, 6
    %v1115 = vrot.slane %v449, 6
    %v1116 = vsel %vm1113, %v1114, %v1115
    %v1117 = vrot.slane %v451, 6
    %v1118 = vsel %vm1113, %v1115, %v1117
    %v1119 = vrot.slane %v453, 6
    %v1120 = vsel %vm1113, %v1117, %v1119
    %v1121 = vrot.slane %v455, 6
    %v1122 = vsel %vm1113, %v1119, %v1121
    %v1123 = vrot.slane %v457, 6
    %v1124 = vsel %vm1113, %v1121, %v1123
    %v1125 = vrot.slane %v461, 6
    %v1126 = vsel %vm1113, %v1123, %v1125
    %v1127 = vsel %vm481, %v1116, 0
    %v1129 = vsel %vm481, %v1118, 0
    %v1131 = vsel %vm481, %v1120, 0
    %v1133 = vsel %vm481, %v1122, 0
    %v1135 = vsel %vm481, %v1124, 0
    %v1137 = vsel %vm481, %v1126, 0
    %v1140 = vsel %vm446, %v1112, 0
    %1142 = vmatprep.subr.mxu0 0.0
    %1143 = vmatpush1.msra.mxu0 0.0
    %1144 = vmatprep.subr.mxu0 0.0
    %1145 = vmatpush1.msra.mxu0 0.0
    %1146 = vmatprep.subr.mxu0 0.0
    %1147 = vmatpush1.msra.mxu0 0.0
    %1148 = vmatprep.subr.mxu0 0.0
    %1149 = vmatpush1.msra.mxu0 0.0
    %1150 = vmatprep.subr.mxu0 0.0
    %1151 = vmatpush1.msra.mxu0 0.0
    %1152 = vmatprep.subr.mxu0 0.0
    %1153 = vmatpush1.msra.mxu0 0.0
    %1154 = vmatprep.subr.mxu0 0.0
    %1155 = vmatpush1.msra.mxu0 0.0
    %1156 = vmatprep.subr.mxu0 0.0
    %1157 = vmatpush1.msra.mxu0 0.0
    %1158 = vmatprep.subr.mxu0 0.0
    %1159 = vmatpush1.msra.mxu0 0.0
    %1160 = vmatprep.subr.mxu0 0.0
    %1161 = vmatpush1.msra.mxu0 0.0
    %1162 = vmatprep.subr.mxu0 0.0
    %1163 = vmatpush1.msra.mxu0 0.0
    %1164 = vmatprep.subr.mxu0 0.0
    %1165 = vmatpush1.msra.mxu0 0.0
    %1166 = vmatprep.subr.mxu0 0.0
    %1167 = vmatpush1.msra.mxu0 0.0
    %1168 = vmatprep.subr.mxu0 0.0
    %1169 = vmatpush1.msra.mxu0 0.0
    %1170 = vmatprep.subr.mxu0 0.0
    %1171 = vmatpush1.msra.mxu0 0.0
    %1172 = vmatprep.subr.mxu0 0.0
    %1173 = vmatpush1.msra.mxu0 %v1140
    %1174 = vmatprep.subr.mxu0 0.0
    %1175 = vmatpush2.msra.mxu0 0.0
    %1176 = vmatprep.subr.mxu0 0.0
    %1177 = vmatpush2.msra.mxu0 0.0
    %1178 = vmatprep.subr.mxu0 0.0
    %1179 = vmatpush2.msra.mxu0 0.0
    %1180 = vmatprep.subr.mxu0 0.0
    %1181 = vmatpush2.msra.mxu0 0.0
    %1182 = vmatprep.subr.mxu0 0.0
    %1183 = vmatpush2.msra.mxu0 0.0
    %1184 = vmatprep.subr.mxu0 0.0
    %1185 = vmatpush2.msra.mxu0 0.0
    %1186 = vmatprep.subr.mxu0 0.0
    %1187 = vmatpush2.msra.mxu0 0.0
    %1188 = vmatprep.subr.mxu0 0.0
    %1189 = vmatpush2.msra.mxu0 0.0
    %1190 = vmatprep.subr.mxu0 0.0
    %1191 = vmatpush2.msra.mxu0 0.0
    %1192 = vmatprep.subr.mxu0 0.0
    %1193 = vmatpush2.msra.mxu0 0.0
    %1194 = vmatprep.subr.mxu0 0.0
    %1195 = vmatpush2.msra.mxu0 0.0
    %1196 = vmatprep.subr.mxu0 0.0
    %1197 = vmatpush2.msra.mxu0 0.0
    %1198 = vmatprep.subr.mxu0 0.0
    %1199 = vmatpush2.msra.mxu0 0.0
    %1200 = vmatprep.subr.mxu0 0.0
    %1201 = vmatpush2.msra.mxu0 0.0
    %1202 = vmatprep.subr.mxu0 0.0
    %1203 = vmatpush2.msra.mxu0 0.0
    %1204 = vmatprep.subr.mxu0 0.0
    %1205 = vmatpush2.msra.mxu0 0.0
    %1206 = vmatprep.mubr.f32.mxu0 0.0
    %1207 = vmatmul.mubr.f32.gmra.mxu0 %v1127
    %v1208 = vpop.f32.mrf.mxu0
    %v1209 = vadd.f32 0.0, %v1208
    %v1210 = vpop.f32.mrf.mxu0
    %1211 = vmatprep.mubr.f32.mxu0 0.0
    %1212 = vmatmul.mubr.f32.gmra.mxu0 %v1129
    %v1213 = vpop.f32.mrf.mxu0
    %v1214 = vadd.f32 0.0, %v1213
    %v1215 = vpop.f32.mrf.mxu0
    %1216 = vmatprep.mubr.f32.mxu0 0.0
    %1217 = vmatmul.mubr.f32.gmra.mxu0 %v1131
    %v1218 = vpop.f32.mrf.mxu0
    %v1219 = vadd.f32 0.0, %v1218
    %v1220 = vpop.f32.mrf.mxu0
    %1221 = vmatprep.mubr.f32.mxu0 0.0
    %1222 = vmatmul.mubr.f32.gmra.mxu0 %v1133
    %v1223 = vpop.f32.mrf.mxu0
    %v1224 = vadd.f32 0.0, %v1223
    %v1225 = vpop.f32.mrf.mxu0
    %1226 = vmatprep.mubr.f32.mxu0 0.0
    %1227 = vmatmul.mubr.f32.gmra.mxu0 %v1135
    %v1228 = vpop.f32.mrf.mxu0
    %v1229 = vadd.f32 0.0, %v1228
    %v1230 = vpop.f32.mrf.mxu0
    %1231 = vmatprep.mubr.f32.mxu0 0.0
    %1232 = vmatmul.mubr.f32.gmra.mxu0 %v1137
    %v1233 = vpop.f32.mrf.mxu0
    %v1234 = vadd.f32 0.0, %v1233
    %v1235 = vpop.f32.mrf.mxu0
    %1236 = vdwg.mxu0
    %v1237 = vadd.f32 %v1105, %v1209
    %v1238 = vadd.f32 %v1106, %v1214
    %v1239 = vadd.f32 %v1107, %v1219
    %v1240 = vadd.f32 %v1108, %v1224
    %v1241 = vadd.f32 %v1109, %v1229
    %v1242 = vadd.f32 %v1110, %v1234
    %s1243 = scalar_lea.vmem [#allocation3], 24
    %v1244 = vld [vmem:[%s1243] sm:$0xf]
    %vm1245 = vcmask 1040384
    %v1246 = vrot.slane %v460, 7
    %v1247 = vrot.slane %v449, 7
    %v1248 = vsel %vm1245, %v1246, %v1247
    %v1249 = vrot.slane %v451, 7
    %v1250 = vsel %vm1245, %v1247, %v1249
    %v1251 = vrot.slane %v453, 7
    %v1252 = vsel %vm1245, %v1249, %v1251
    %v1253 = vrot.slane %v455, 7
    %v1254 = vsel %vm1245, %v1251, %v1253
    %v1255 = vrot.slane %v457, 7
    %v1256 = vsel %vm1245, %v1253, %v1255
    %v1257 = vrot.slane %v461, 7
    %v1258 = vsel %vm1245, %v1255, %v1257
    %v1259 = vsel %vm481, %v1248, 0
    %v1261 = vsel %vm481, %v1250, 0
    %v1263 = vsel %vm481, %v1252, 0
    %v1265 = vsel %vm481, %v1254, 0
    %v1267 = vsel %vm481, %v1256, 0
    %v1269 = vsel %vm481, %v1258, 0
    %v1272 = vsel %vm446, %v1244, 0
    %1274 = vmatprep.subr.mxu0 0.0
    %1275 = vmatpush1.msra.mxu0 0.0
    %1276 = vmatprep.subr.mxu0 0.0
    %1277 = vmatpush1.msra.mxu0 0.0
    %1278 = vmatprep.subr.mxu0 0.0
    %1279 = vmatpush1.msra.mxu0 0.0
    %1280 = vmatprep.subr.mxu0 0.0
    %1281 = vmatpush1.msra.mxu0 0.0
    %1282 = vmatprep.subr.mxu0 0.0
    %1283 = vmatpush1.msra.mxu0 0.0
    %1284 = vmatprep.subr.mxu0 0.0
    %1285 = vmatpush1.msra.mxu0 0.0
    %1286 = vmatprep.subr.mxu0 0.0
    %1287 = vmatpush1.msra.mxu0 0.0
    %1288 = vmatprep.subr.mxu0 0.0
    %1289 = vmatpush1.msra.mxu0 0.0
    %1290 = vmatprep.subr.mxu0 0.0
    %1291 = vmatpush1.msra.mxu0 0.0
    %1292 = vmatprep.subr.mxu0 0.0
    %1293 = vmatpush1.msra.mxu0 0.0
    %1294 = vmatprep.subr.mxu0 0.0
    %1295 = vmatpush1.msra.mxu0 0.0
    %1296 = vmatprep.subr.mxu0 0.0
    %1297 = vmatpush1.msra.mxu0 0.0
    %1298 = vmatprep.subr.mxu0 0.0
    %1299 = vmatpush1.msra.mxu0 0.0
    %1300 = vmatprep.subr.mxu0 0.0
    %1301 = vmatpush1.msra.mxu0 0.0
    %1302 = vmatprep.subr.mxu0 0.0
    %1303 = vmatpush1.msra.mxu0 0.0
    %1304 = vmatprep.subr.mxu0 0.0
    %1305 = vmatpush1.msra.mxu0 %v1272
    %1306 = vmatprep.subr.mxu0 0.0
    %1307 = vmatpush2.msra.mxu0 0.0
    %1308 = vmatprep.subr.mxu0 0.0
    %1309 = vmatpush2.msra.mxu0 0.0
    %1310 = vmatprep.subr.mxu0 0.0
    %1311 = vmatpush2.msra.mxu0 0.0
    %1312 = vmatprep.subr.mxu0 0.0
    %1313 = vmatpush2.msra.mxu0 0.0
    %1314 = vmatprep.subr.mxu0 0.0
    %1315 = vmatpush2.msra.mxu0 0.0
    %1316 = vmatprep.subr.mxu0 0.0
    %1317 = vmatpush2.msra.mxu0 0.0
    %1318 = vmatprep.subr.mxu0 0.0
    %1319 = vmatpush2.msra.mxu0 0.0
    %1320 = vmatprep.subr.mxu0 0.0
    %1321 = vmatpush2.msra.mxu0 0.0
    %1322 = vmatprep.subr.mxu0 0.0
    %1323 = vmatpush2.msra.mxu0 0.0
    %1324 = vmatprep.subr.mxu0 0.0
    %1325 = vmatpush2.msra.mxu0 0.0
    %1326 = vmatprep.subr.mxu0 0.0
    %1327 = vmatpush2.msra.mxu0 0.0
    %1328 = vmatprep.subr.mxu0 0.0
    %1329 = vmatpush2.msra.mxu0 0.0
    %1330 = vmatprep.subr.mxu0 0.0
    %1331 = vmatpush2.msra.mxu0 0.0
    %1332 = vmatprep.subr.mxu0 0.0
    %1333 = vmatpush2.msra.mxu0 0.0
    %1334 = vmatprep.subr.mxu0 0.0
    %1335 = vmatpush2.msra.mxu0 0.0
    %1336 = vmatprep.subr.mxu0 0.0
    %1337 = vmatpush2.msra.mxu0 0.0
    %1338 = vmatprep.mubr.f32.mxu0 0.0
    %1339 = vmatmul.mubr.f32.gmra.mxu0 %v1259
    %v1340 = vpop.f32.mrf.mxu0
    %v1341 = vadd.f32 0.0, %v1340
    %v1342 = vpop.f32.mrf.mxu0
    %1343 = vmatprep.mubr.f32.mxu0 0.0
    %1344 = vmatmul.mubr.f32.gmra.mxu0 %v1261
    %v1345 = vpop.f32.mrf.mxu0
    %v1346 = vadd.f32 0.0, %v1345
    %v1347 = vpop.f32.mrf.mxu0
    %1348 = vmatprep.mubr.f32.mxu0 0.0
    %1349 = vmatmul.mubr.f32.gmra.mxu0 %v1263
    %v1350 = vpop.f32.mrf.mxu0
    %v1351 = vadd.f32 0.0, %v1350
    %v1352 = vpop.f32.mrf.mxu0
    %1353 = vmatprep.mubr.f32.mxu0 0.0
    %1354 = vmatmul.mubr.f32.gmra.mxu0 %v1265
    %v1355 = vpop.f32.mrf.mxu0
    %v1356 = vadd.f32 0.0, %v1355
    %v1357 = vpop.f32.mrf.mxu0
    %1358 = vmatprep.mubr.f32.mxu0 0.0
    %1359 = vmatmul.mubr.f32.gmra.mxu0 %v1267
    %v1360 = vpop.f32.mrf.mxu0
    %v1361 = vadd.f32 0.0, %v1360
    %v1362 = vpop.f32.mrf.mxu0
    %1363 = vmatprep.mubr.f32.mxu0 0.0
    %1364 = vmatmul.mubr.f32.gmra.mxu0 %v1269
    %v1365 = vpop.f32.mrf.mxu0
    %v1366 = vadd.f32 0.0, %v1365
    %v1367 = vpop.f32.mrf.mxu0
    %1368 = vdwg.mxu0
    %v1369 = vadd.f32 %v1237, %v1341
    %v1370 = vadd.f32 %v1238, %v1346
    %v1371 = vadd.f32 %v1239, %v1351
    %v1372 = vadd.f32 %v1240, %v1356
    %v1373 = vadd.f32 %v1241, %v1361
    %v1374 = vadd.f32 %v1242, %v1366
    %s1375 = scalar_lea.vmem [#allocation3], 28
    %v1376 = vld [vmem:[%s1375] sm:$0xf]
    %v1377 = vsel %vm481, %v449, 0
    %v1379 = vsel %vm481, %v451, 0
    %v1381 = vsel %vm481, %v453, 0
    %v1383 = vsel %vm481, %v455, 0
    %v1385 = vsel %vm481, %v457, 0
    %v1387 = vsel %vm481, %v461, 0
    %v1390 = vsel %vm446, %v1376, 0
    %1392 = vmatprep.subr.mxu0 0.0
    %1393 = vmatpush1.msra.mxu0 0.0
    %1394 = vmatprep.subr.mxu0 0.0
    %1395 = vmatpush1.msra.mxu0 0.0
    %1396 = vmatprep.subr.mxu0 0.0
    %1397 = vmatpush1.msra.mxu0 0.0
    %1398 = vmatprep.subr.mxu0 0.0
    %1399 = vmatpush1.msra.mxu0 0.0
    %1400 = vmatprep.subr.mxu0 0.0
    %1401 = vmatpush1.msra.mxu0 0.0
    %1402 = vmatprep.subr.mxu0 0.0
    %1403 = vmatpush1.msra.mxu0 0.0
    %1404 = vmatprep.subr.mxu0 0.0
    %1405 = vmatpush1.msra.mxu0 0.0
    %1406 = vmatprep.subr.mxu0 0.0
    %1407 = vmatpush1.msra.mxu0 0.0
    %1408 = vmatprep.subr.mxu0 0.0
    %1409 = vmatpush1.msra.mxu0 0.0
    %1410 = vmatprep.subr.mxu0 0.0
    %1411 = vmatpush1.msra.mxu0 0.0
    %1412 = vmatprep.subr.mxu0 0.0
    %1413 = vmatpush1.msra.mxu0 0.0
    %1414 = vmatprep.subr.mxu0 0.0
    %1415 = vmatpush1.msra.mxu0 0.0
    %1416 = vmatprep.subr.mxu0 0.0
    %1417 = vmatpush1.msra.mxu0 0.0
    %1418 = vmatprep.subr.mxu0 0.0
    %1419 = vmatpush1.msra.mxu0 0.0
    %1420 = vmatprep.subr.mxu0 0.0
    %1421 = vmatpush1.msra.mxu0 0.0
    %1422 = vmatprep.subr.mxu0 0.0
    %1423 = vmatpush1.msra.mxu0 %v1390
    %1424 = vmatprep.subr.mxu0 0.0
    %1425 = vmatpush2.msra.mxu0 0.0
    %1426 = vmatprep.subr.mxu0 0.0
    %1427 = vmatpush2.msra.mxu0 0.0
    %1428 = vmatprep.subr.mxu0 0.0
    %1429 = vmatpush2.msra.mxu0 0.0
    %1430 = vmatprep.subr.mxu0 0.0
    %1431 = vmatpush2.msra.mxu0 0.0
    %1432 = vmatprep.subr.mxu0 0.0
    %1433 = vmatpush2.msra.mxu0 0.0
    %1434 = vmatprep.subr.mxu0 0.0
    %1435 = vmatpush2.msra.mxu0 0.0
    %1436 = vmatprep.subr.mxu0 0.0
    %1437 = vmatpush2.msra.mxu0 0.0
    %1438 = vmatprep.subr.mxu0 0.0
    %1439 = vmatpush2.msra.mxu0 0.0
    %1440 = vmatprep.subr.mxu0 0.0
    %1441 = vmatpush2.msra.mxu0 0.0
    %1442 = vmatprep.subr.mxu0 0.0
    %1443 = vmatpush2.msra.mxu0 0.0
    %1444 = vmatprep.subr.mxu0 0.0
    %1445 = vmatpush2.msra.mxu0 0.0
    %1446 = vmatprep.subr.mxu0 0.0
    %1447 = vmatpush2.msra.mxu0 0.0
    %1448 = vmatprep.subr.mxu0 0.0
    %1449 = vmatpush2.msra.mxu0 0.0
    %1450 = vmatprep.subr.mxu0 0.0
    %1451 = vmatpush2.msra.mxu0 0.0
    %1452 = vmatprep.subr.mxu0 0.0
    %1453 = vmatpush2.msra.mxu0 0.0
    %1454 = vmatprep.subr.mxu0 0.0
    %1455 = vmatpush2.msra.mxu0 0.0
    %1456 = vmatprep.mubr.f32.mxu0 0.0
    %1457 = vmatmul.mubr.f32.gmra.mxu0 %v1377
    %v1458 = vpop.f32.mrf.mxu0
    %v1459 = vadd.f32 0.0, %v1458
    %v1460 = vpop.f32.mrf.mxu0
    %1461 = vmatprep.mubr.f32.mxu0 0.0
    %1462 = vmatmul.mubr.f32.gmra.mxu0 %v1379
    %v1463 = vpop.f32.mrf.mxu0
    %v1464 = vadd.f32 0.0, %v1463
    %v1465 = vpop.f32.mrf.mxu0
    %1466 = vmatprep.mubr.f32.mxu0 0.0
    %1467 = vmatmul.mubr.f32.gmra.mxu0 %v1381
    %v1468 = vpop.f32.mrf.mxu0
    %v1469 = vadd.f32 0.0, %v1468
    %v1470 = vpop.f32.mrf.mxu0
    %1471 = vmatprep.mubr.f32.mxu0 0.0
    %1472 = vmatmul.mubr.f32.gmra.mxu0 %v1383
    %v1473 = vpop.f32.mrf.mxu0
    %v1474 = vadd.f32 0.0, %v1473
    %v1475 = vpop.f32.mrf.mxu0
    %1476 = vmatprep.mubr.f32.mxu0 0.0
    %1477 = vmatmul.mubr.f32.gmra.mxu0 %v1385
    %v1478 = vpop.f32.mrf.mxu0
    %v1479 = vadd.f32 0.0, %v1478
    %v1480 = vpop.f32.mrf.mxu0
    %1481 = vmatprep.mubr.f32.mxu0 0.0
    %1482 = vmatmul.mubr.f32.gmra.mxu0 %v1387
    %v1483 = vpop.f32.mrf.mxu0
    %v1484 = vadd.f32 0.0, %v1483
    %v1485 = vpop.f32.mrf.mxu0
    %1486 = vdwg.mxu0
    %v1487 = vadd.f32 %v1369, %v1459
    %v1488 = vadd.f32 %v1370, %v1464
    %v1489 = vadd.f32 %v1371, %v1469
    %v1490 = vadd.f32 %v1372, %v1474
    %v1491 = vadd.f32 %v1373, %v1479
    %v1492 = vadd.f32 %v1374, %v1484
    %v1493 = vld [vmem:[%s9] sm:$0x1]
    %v1495 = vlaneseq
    %v1496 = vshrl.u32 %v1495, 7
    %v1497 = vsub.s32 0, %v1496
    %v1498 = vrot.slane %v1493, %v1497
    %v1500 = vadd.f32 %v1487, %v1498
    %v1501 = vadd.f32 %v1488, %v1498
    %v1502 = vadd.f32 %v1489, %v1498
    %v1503 = vadd.f32 %v1490, %v1498
    %v1504 = vadd.f32 %v1491, %v1498
    %v1505 = vadd.f32 %v1492, %v1498
    %1507 = vset.pattern.permute.xlu0 0
    %1508 = vperm.xlu0 %1507, %v428
    %v1509 = vpop.permute.xlu0 %1508
    %1512 = vset.pattern.permute.xlu0 0
    %1513 = vperm.xlu0 %1512, %v429
    %v1514 = vpop.permute.xlu0 %1513
    %1517 = vset.pattern.permute.xlu0 0
    %1518 = vperm.xlu0 %1517, %v430
    %v1519 = vpop.permute.xlu0 %1518
    %1522 = vset.pattern.permute.xlu0 0
    %1523 = vperm.xlu0 %1522, %v431
    %v1524 = vpop.permute.xlu0 %1523
    %1527 = vset.pattern.permute.xlu0 0
    %1528 = vperm.xlu0 %1527, %v432
    %v1529 = vpop.permute.xlu0 %1528
    %1532 = vset.pattern.permute.xlu0 0
    %1533 = vperm.xlu0 %1532, %v433
    %v1534 = vpop.permute.xlu0 %1533
    %v1536 = vmul.f32 %v1500, %v1509
    %v1537 = vmul.f32 %v1501, %v1514
    %v1538 = vmul.f32 %v1502, %v1519
    %v1539 = vmul.f32 %v1503, %v1524
    %v1540 = vmul.f32 %v1504, %v1529
    %v1541 = vmul.f32 %v1505, %v1534
    %vm1542 = vcmask 130048
    %v1543 = vsel %vm1542, %v1536, 0.0
    %v1544 = vsel %vm1542, %v1537, 0.0
    %v1545 = vadd.f32 %v1543, %v1544
    %v1546 = vsel %vm1542, %v1538, 0.0
    %v1547 = vadd.f32 %v1545, %v1546
    %v1548 = vsel %vm1542, %v1539, 0.0
    %v1549 = vadd.f32 %v1547, %v1548
    %v1550 = vsel %vm1542, %v1540, 0.0
    %v1551 = vadd.f32 %v1549, %v1550
    %v1552 = vsel %vm1542, %v1541, 0.0
    %v1553 = vadd.f32 %v1551, %v1552
    %v1554 = vrot.slane %v1553, 4
    %v1555 = vadd.f32 %v1553, %v1554
    %v1556 = vrot.slane %v1555, 2
    %v1557 = vadd.f32 %v1555, %v1556
    %v1558 = vrot.slane %v1557, 1
    %v1559 = vadd.f32 %v1557, %v1558
    %v1560 = vmul.f32 %v1559, 0.03125
    %v1561 = vsub.f32 %v1500, %v1560
    %v1562 = vsub.f32 %v1501, %v1560
    %v1563 = vsub.f32 %v1502, %v1560
    %v1564 = vsub.f32 %v1503, %v1560
    %v1565 = vsub.f32 %v1504, %v1560
    %v1566 = vsub.f32 %v1505, %v1560
    %v1567 = vmul.f32 %v1561, %v1509
    %v1568 = vmul.f32 %v1562, %v1514
    %v1569 = vmul.f32 %v1563, %v1519
    %v1570 = vmul.f32 %v1564, %v1524
    %v1571 = vmul.f32 %v1565, %v1529
    %v1572 = vmul.f32 %v1566, %v1534
    %v1573 = vmul.f32 %v1567, %v1567
    %v1574 = vmul.f32 %v1568, %v1568
    %v1575 = vmul.f32 %v1569, %v1569
    %v1576 = vmul.f32 %v1570, %v1570
    %v1577 = vmul.f32 %v1571, %v1571
    %v1578 = vmul.f32 %v1572, %v1572
    %v1579 = vsel %vm1542, %v1573, 0.0
    %v1580 = vsel %vm1542, %v1574, 0.0
    %v1581 = vadd.f32 %v1579, %v1580
    %v1582 = vsel %vm1542, %v1575, 0.0
    %v1583 = vadd.f32 %v1581, %v1582
    %v1584 = vsel %vm1542, %v1576, 0.0
    %v1585 = vadd.f32 %v1583, %v1584
    %v1586 = vsel %vm1542, %v1577, 0.0
    %v1587 = vadd.f32 %v1585, %v1586
    %v1588 = vsel %vm1542, %v1578, 0.0
    %v1589 = vadd.f32 %v1587, %v1588
    %v1590 = vrot.slane %v1589, 4
    %v1591 = vadd.f32 %v1589, %v1590
    %v1592 = vrot.slane %v1591, 2
    %v1593 = vadd.f32 %v1591, %v1592
    %v1594 = vrot.slane %v1593, 1
    %v1595 = vadd.f32 %v1593, %v1594
    %v1596 = vmul.f32 %v1595, 0.03125
    %v1597 = vld [vmem:[#allocation5] sm:$0x1]
    %v1598 = vadd.f32 %v1596, 1e-05
    %v1599 = vrsqrt.pop %v1598
    %v1600 = vmul.f32 %v1597, %v1599
    %v1601 = vld [vmem:[#allocation7] sm:$0x1]
    %v1602 = vmul.f32 %v1560, %v1600
    %v1603 = vsub.f32 %v1601, %v1602
    %v1605 = vlaneseq
    %v1606 = vshrl.u32 %v1605, 7
    %v1607 = vsub.s32 0, %v1606
    %v1608 = vrot.slane %v1600, %v1607
    %v1610 = vmul.f32 %v1500, %v1608
    %v1611 = vmul.f32 %v1501, %v1608
    %v1612 = vmul.f32 %v1502, %v1608
    %v1613 = vmul.f32 %v1503, %v1608
    %v1614 = vmul.f32 %v1504, %v1608
    %v1615 = vmul.f32 %v1505, %v1608
    %v1617 = vlaneseq
    %v1618 = vshrl.u32 %v1617, 7
    %v1619 = vsub.s32 0, %v1618
    %v1620 = vrot.slane %v1603, %v1619
    %v1622 = vadd.f32 %v1610, %v1620
    %v1623 = vadd.f32 %v1611, %v1620
    %v1624 = vadd.f32 %v1612, %v1620
    %v1625 = vadd.f32 %v1613, %v1620
    %v1626 = vadd.f32 %v1614, %v1620
    %v1627 = vadd.f32 %v1615, %v1620
    %v1628 = vmul.f32 %v1622, %v1509
    %v1629 = vmul.f32 %v1623, %v1514
    %v1630 = vmul.f32 %v1624, %v1519
    %v1631 = vmul.f32 %v1625, %v1524
    %v1632 = vmul.f32 %v1626, %v1529
    %v1633 = vmul.f32 %v1627, %v1534
    %v1634 = vmax.f32 %v1628, 0.0
    %v1635 = vmax.f32 %v1629, 0.0
    %v1636 = vmax.f32 %v1630, 0.0
    %v1637 = vmax.f32 %v1631, 0.0
    %v1638 = vmax.f32 %v1632, 0.0
    %v1639 = vmax.f32 %v1633, 0.0
    %v1646 = vrot.slane %v1634, 4
    %v1647 = vrot.slane %v1635, 4
    %v1648 = vsel %vm446, %v1646, %v1647
    %v1649 = vrot.slane %v1636, 4
    %v1650 = vsel %vm446, %v1647, %v1649
    %v1651 = vrot.slane %v1637, 4
    %v1652 = vsel %vm446, %v1649, %v1651
    %v1653 = vrot.slane %v1638, 4
    %v1654 = vsel %vm446, %v1651, %v1653
    %v1655 = vrot.slane %v1639, 4
    %v1656 = vsel %vm446, %v1653, %v1655
    %v1659 = vsel %vm446, 0.0, %v1646
    %v1660 = vsel %vm446, %v1655, 0.0
    %v1661 = vld [vmem:[#allocation8] sm:$0xff]
    %s1662 = scalar_lea.vmem [#allocation8], 8
    %v1663 = vld [vmem:[%s1662] sm:$0xff]
    %v1666 = vrot.slane %v1659, 3
    %v1667 = vrot.slane %v1648, 3
    %v1668 = vsel %vm718, %v1666, %v1667
    %v1669 = vrot.slane %v1650, 3
    %v1670 = vsel %vm718, %v1667, %v1669
    %v1671 = vrot.slane %v1652, 3
    %v1672 = vsel %vm718, %v1669, %v1671
    %v1673 = vrot.slane %v1654, 3
    %v1674 = vsel %vm718, %v1671, %v1673
    %v1675 = vrot.slane %v1656, 3
    %v1676 = vsel %vm718, %v1673, %v1675
    %v1677 = vrot.slane %v1660, 3
    %v1678 = vsel %vm718, %v1675, %v1677
    %vm1679 = vcmask 64512
    %v1680 = vsel %vm1679, %v1668, 0
    %v1682 = vsel %vm1679, %v1670, 0
    %v1684 = vsel %vm1679, %v1672, 0
    %v1686 = vsel %vm1679, %v1674, 0
    %v1688 = vsel %vm1679, %v1676, 0
    %v1690 = vsel %vm1679, %v1678, 0
    %1692 = vmatprep.subr.mxu0 0.0
    %1693 = vmatpush1.msra.mxu0 0.0
    %1694 = vmatprep.subr.mxu0 0.0
    %1695 = vmatpush1.msra.mxu0 0.0
    %1696 = vmatprep.subr.mxu0 0.0
    %1697 = vmatpush1.msra.mxu0 0.0
    %1698 = vmatprep.subr.mxu0 0.0
    %1699 = vmatpush1.msra.mxu0 0.0
    %1700 = vmatprep.subr.mxu0 0.0
    %1701 = vmatpush1.msra.mxu0 0.0
    %1702 = vmatprep.subr.mxu0 0.0
    %1703 = vmatpush1.msra.mxu0 0.0
    %1704 = vmatprep.subr.mxu0 0.0
    %1705 = vmatpush1.msra.mxu0 0.0
    %1706 = vmatprep.subr.mxu0 0.0
    %1707 = vmatpush1.msra.mxu0 0.0
    %1708 = vmatprep.subr.mxu0 0.0
    %1709 = vmatpush1.msra.mxu0 0.0
    %1710 = vmatprep.subr.mxu0 0.0
    %1711 = vmatpush1.msra.mxu0 0.0
    %1712 = vmatprep.subr.mxu0 0.0
    %1713 = vmatpush1.msra.mxu0 0.0
    %1714 = vmatprep.subr.mxu0 0.0
    %1715 = vmatpush1.msra.mxu0 0.0
    %1716 = vmatprep.subr.mxu0 0.0
    %1717 = vmatpush1.msra.mxu0 0.0
    %1718 = vmatprep.subr.mxu0 0.0
    %1719 = vmatpush1.msra.mxu0 0.0
    %1720 = vmatprep.subr.mxu0 0.0
    %1721 = vmatpush1.msra.mxu0 0.0
    %1722 = vmatprep.subr.mxu0 0.0
    %1723 = vmatpush1.msra.mxu0 %v1663
    %1724 = vmatprep.subr.mxu0 0.0
    %1725 = vmatpush2.msra.mxu0 0.0
    %1726 = vmatprep.subr.mxu0 0.0
    %1727 = vmatpush2.msra.mxu0 0.0
    %1728 = vmatprep.subr.mxu0 0.0
    %1729 = vmatpush2.msra.mxu0 0.0
    %1730 = vmatprep.subr.mxu0 0.0
    %1731 = vmatpush2.msra.mxu0 0.0
    %1732 = vmatprep.subr.mxu0 0.0
    %1733 = vmatpush2.msra.mxu0 0.0
    %1734 = vmatprep.subr.mxu0 0.0
    %1735 = vmatpush2.msra.mxu0 0.0
    %1736 = vmatprep.subr.mxu0 0.0
    %1737 = vmatpush2.msra.mxu0 0.0
    %1738 = vmatprep.subr.mxu0 0.0
    %1739 = vmatpush2.msra.mxu0 0.0
    %1740 = vmatprep.subr.mxu0 0.0
    %1741 = vmatpush2.msra.mxu0 0.0
    %1742 = vmatprep.subr.mxu0 0.0
    %1743 = vmatpush2.msra.mxu0 0.0
    %1744 = vmatprep.subr.mxu0 0.0
    %1745 = vmatpush2.msra.mxu0 0.0
    %1746 = vmatprep.subr.mxu0 0.0
    %1747 = vmatpush2.msra.mxu0 0.0
    %1748 = vmatprep.subr.mxu0 0.0
    %1749 = vmatpush2.msra.mxu0 0.0
    %1750 = vmatprep.subr.mxu0 0.0
    %1751 = vmatpush2.msra.mxu0 0.0
    %1752 = vmatprep.subr.mxu0 0.0
    %1753 = vmatpush2.msra.mxu0 0.0
    %1754 = vmatprep.subr.mxu0 0.0
    %1755 = vmatpush2.msra.mxu0 0.0
    %1756 = vmatprep.mubr.f32.mxu0 0.0
    %1757 = vmatmul.mubr.f32.gmra.mxu0 %v1680
    %v1758 = vpop.f32.mrf.mxu0
    %v1759 = vadd.f32 0.0, %v1758
    %v1760 = vpop.f32.mrf.mxu0
    %1761 = vmatprep.mubr.f32.mxu0 0.0
    %1762 = vmatmul.mubr.f32.gmra.mxu0 %v1682
    %v1763 = vpop.f32.mrf.mxu0
    %v1764 = vadd.f32 0.0, %v1763
    %v1765 = vpop.f32.mrf.mxu0
    %1766 = vmatprep.mubr.f32.mxu0 0.0
    %1767 = vmatmul.mubr.f32.gmra.mxu0 %v1684
    %v1768 = vpop.f32.mrf.mxu0
    %v1769 = vadd.f32 0.0, %v1768
    %v1770 = vpop.f32.mrf.mxu0
    %1771 = vmatprep.mubr.f32.mxu0 0.0
    %1772 = vmatmul.mubr.f32.gmra.mxu0 %v1686
    %v1773 = vpop.f32.mrf.mxu0
    %v1774 = vadd.f32 0.0, %v1773
    %v1775 = vpop.f32.mrf.mxu0
    %1776 = vmatprep.mubr.f32.mxu0 0.0
    %1777 = vmatmul.mubr.f32.gmra.mxu0 %v1688
    %v1778 = vpop.f32.mrf.mxu0
    %v1779 = vadd.f32 0.0, %v1778
    %v1780 = vpop.f32.mrf.mxu0
    %1781 = vmatprep.mubr.f32.mxu0 0.0
    %1782 = vmatmul.mubr.f32.gmra.mxu0 %v1690
    %v1783 = vpop.f32.mrf.mxu0
    %v1784 = vadd.f32 0.0, %v1783
    %v1785 = vpop.f32.mrf.mxu0
    %1786 = vdwg.mxu0
    %v1787 = vrot.slane %v1659, 2
    %v1788 = vrot.slane %v1648, 2
    %v1789 = vsel %vm467, %v1787, %v1788
    %v1790 = vrot.slane %v1650, 2
    %v1791 = vsel %vm467, %v1788, %v1790
    %v1792 = vrot.slane %v1652, 2
    %v1793 = vsel %vm467, %v1790, %v1792
    %v1794 = vrot.slane %v1654, 2
    %v1795 = vsel %vm467, %v1792, %v1794
    %v1796 = vrot.slane %v1656, 2
    %v1797 = vsel %vm467, %v1794, %v1796
    %v1798 = vrot.slane %v1660, 2
    %v1799 = vsel %vm467, %v1796, %v1798
    %v1800 = vsel %vm1679, %v1789, 0
    %v1802 = vsel %vm1679, %v1791, 0
    %v1804 = vsel %vm1679, %v1793, 0
    %v1806 = vsel %vm1679, %v1795, 0
    %v1808 = vsel %vm1679, %v1797, 0
    %v1810 = vsel %vm1679, %v1799, 0
    %1812 = vmatprep.subr.mxu0 0.0
    %1813 = vmatpush1.msra.mxu0 0.0
    %1814 = vmatprep.subr.mxu0 0.0
    %1815 = vmatpush1.msra.mxu0 0.0
    %1816 = vmatprep.subr.mxu0 0.0
    %1817 = vmatpush1.msra.mxu0 0.0
    %1818 = vmatprep.subr.mxu0 0.0
    %1819 = vmatpush1.msra.mxu0 0.0
    %1820 = vmatprep.subr.mxu0 0.0
    %1821 = vmatpush1.msra.mxu0 0.0
    %1822 = vmatprep.subr.mxu0 0.0
    %1823 = vmatpush1.msra.mxu0 0.0
    %1824 = vmatprep.subr.mxu0 0.0
    %1825 = vmatpush1.msra.mxu0 0.0
    %1826 = vmatprep.subr.mxu0 0.0
    %1827 = vmatpush1.msra.mxu0 0.0
    %1828 = vmatprep.subr.mxu0 0.0
    %1829 = vmatpush1.msra.mxu0 0.0
    %1830 = vmatprep.subr.mxu0 0.0
    %1831 = vmatpush1.msra.mxu0 0.0
    %1832 = vmatprep.subr.mxu0 0.0
    %1833 = vmatpush1.msra.mxu0 0.0
    %1834 = vmatprep.subr.mxu0 0.0
    %1835 = vmatpush1.msra.mxu0 0.0
    %1836 = vmatprep.subr.mxu0 0.0
    %1837 = vmatpush1.msra.mxu0 0.0
    %1838 = vmatprep.subr.mxu0 0.0
    %1839 = vmatpush1.msra.mxu0 0.0
    %1840 = vmatprep.subr.mxu0 0.0
    %1841 = vmatpush1.msra.mxu0 0.0
    %1842 = vmatprep.subr.mxu0 0.0
    %1843 = vmatpush1.msra.mxu0 %v1661
    %1844 = vmatprep.subr.mxu0 0.0
    %1845 = vmatpush2.msra.mxu0 0.0
    %1846 = vmatprep.subr.mxu0 0.0
    %1847 = vmatpush2.msra.mxu0 0.0
    %1848 = vmatprep.subr.mxu0 0.0
    %1849 = vmatpush2.msra.mxu0 0.0
    %1850 = vmatprep.subr.mxu0 0.0
    %1851 = vmatpush2.msra.mxu0 0.0
    %1852 = vmatprep.subr.mxu0 0.0
    %1853 = vmatpush2.msra.mxu0 0.0
    %1854 = vmatprep.subr.mxu0 0.0
    %1855 = vmatpush2.msra.mxu0 0.0
    %1856 = vmatprep.subr.mxu0 0.0
    %1857 = vmatpush2.msra.mxu0 0.0
    %1858 = vmatprep.subr.mxu0 0.0
    %1859 = vmatpush2.msra.mxu0 0.0
    %1860 = vmatprep.subr.mxu0 0.0
    %1861 = vmatpush2.msra.mxu0 0.0
    %1862 = vmatprep.subr.mxu0 0.0
    %1863 = vmatpush2.msra.mxu0 0.0
    %1864 = vmatprep.subr.mxu0 0.0
    %1865 = vmatpush2.msra.mxu0 0.0
    %1866 = vmatprep.subr.mxu0 0.0
    %1867 = vmatpush2.msra.mxu0 0.0
    %1868 = vmatprep.subr.mxu0 0.0
    %1869 = vmatpush2.msra.mxu0 0.0
    %1870 = vmatprep.subr.mxu0 0.0
    %1871 = vmatpush2.msra.mxu0 0.0
    %1872 = vmatprep.subr.mxu0 0.0
    %1873 = vmatpush2.msra.mxu0 0.0
    %1874 = vmatprep.subr.mxu0 0.0
    %1875 = vmatpush2.msra.mxu0 0.0
    %1876 = vmatprep.mubr.f32.mxu0 0.0
    %1877 = vmatmul.mubr.f32.gmra.mxu0 %v1800
    %v1878 = vpop.f32.mrf.mxu0
    %v1879 = vadd.f32 %v1759, %v1878
    %v1880 = vpop.f32.mrf.mxu0
    %1881 = vmatprep.mubr.f32.mxu0 0.0
    %1882 = vmatmul.mubr.f32.gmra.mxu0 %v1802
    %v1883 = vpop.f32.mrf.mxu0
    %v1884 = vadd.f32 %v1764, %v1883
    %v1885 = vpop.f32.mrf.mxu0
    %1886 = vmatprep.mubr.f32.mxu0 0.0
    %1887 = vmatmul.mubr.f32.gmra.mxu0 %v1804
    %v1888 = vpop.f32.mrf.mxu0
    %v1889 = vadd.f32 %v1769, %v1888
    %v1890 = vpop.f32.mrf.mxu0
    %1891 = vmatprep.mubr.f32.mxu0 0.0
    %1892 = vmatmul.mubr.f32.gmra.mxu0 %v1806
    %v1893 = vpop.f32.mrf.mxu0
    %v1894 = vadd.f32 %v1774, %v1893
    %v1895 = vpop.f32.mrf.mxu0
    %1896 = vmatprep.mubr.f32.mxu0 0.0
    %1897 = vmatmul.mubr.f32.gmra.mxu0 %v1808
    %v1898 = vpop.f32.mrf.mxu0
    %v1899 = vadd.f32 %v1779, %v1898
    %v1900 = vpop.f32.mrf.mxu0
    %1901 = vmatprep.mubr.f32.mxu0 0.0
    %1902 = vmatmul.mubr.f32.gmra.mxu0 %v1810
    %v1903 = vpop.f32.mrf.mxu0
    %v1904 = vadd.f32 %v1784, %v1903
    %v1905 = vpop.f32.mrf.mxu0
    %1906 = vdwg.mxu0
    %s1907 = scalar_lea.vmem [#allocation8], 16
    %v1908 = vld [vmem:[%s1907] sm:$0xff]
    %v1909 = vrot.slane %v1659, 4
    %v1910 = vrot.slane %v1648, 4
    %v1911 = vsel %vm446, %v1909, %v1910
    %v1912 = vrot.slane %v1650, 4
    %v1913 = vsel %vm446, %v1910, %v1912
    %v1914 = vrot.slane %v1652, 4
    %v1915 = vsel %vm446, %v1912, %v1914
    %v1916 = vrot.slane %v1654, 4
    %v1917 = vsel %vm446, %v1914, %v1916
    %v1918 = vrot.slane %v1656, 4
    %v1919 = vsel %vm446, %v1916, %v1918
    %v1920 = vrot.slane %v1660, 4
    %v1921 = vsel %vm446, %v1918, %v1920
    %v1922 = vsel %vm1679, %v1911, 0
    %v1924 = vsel %vm1679, %v1913, 0
    %v1926 = vsel %vm1679, %v1915, 0
    %v1928 = vsel %vm1679, %v1917, 0
    %v1930 = vsel %vm1679, %v1919, 0
    %v1932 = vsel %vm1679, %v1921, 0
    %1934 = vmatprep.subr.mxu0 0.0
    %1935 = vmatpush1.msra.mxu0 0.0
    %1936 = vmatprep.subr.mxu0 0.0
    %1937 = vmatpush1.msra.mxu0 0.0
    %1938 = vmatprep.subr.mxu0 0.0
    %1939 = vmatpush1.msra.mxu0 0.0
    %1940 = vmatprep.subr.mxu0 0.0
    %1941 = vmatpush1.msra.mxu0 0.0
    %1942 = vmatprep.subr.mxu0 0.0
    %1943 = vmatpush1.msra.mxu0 0.0
    %1944 = vmatprep.subr.mxu0 0.0
    %1945 = vmatpush1.msra.mxu0 0.0
    %1946 = vmatprep.subr.mxu0 0.0
    %1947 = vmatpush1.msra.mxu0 0.0
    %1948 = vmatprep.subr.mxu0 0.0
    %1949 = vmatpush1.msra.mxu0 0.0
    %1950 = vmatprep.subr.mxu0 0.0
    %1951 = vmatpush1.msra.mxu0 0.0
    %1952 = vmatprep.subr.mxu0 0.0
    %1953 = vmatpush1.msra.mxu0 0.0
    %1954 = vmatprep.subr.mxu0 0.0
    %1955 = vmatpush1.msra.mxu0 0.0
    %1956 = vmatprep.subr.mxu0 0.0
    %1957 = vmatpush1.msra.mxu0 0.0
    %1958 = vmatprep.subr.mxu0 0.0
    %1959 = vmatpush1.msra.mxu0 0.0
    %1960 = vmatprep.subr.mxu0 0.0
    %1961 = vmatpush1.msra.mxu0 0.0
    %1962 = vmatprep.subr.mxu0 0.0
    %1963 = vmatpush1.msra.mxu0 0.0
    %1964 = vmatprep.subr.mxu0 0.0
    %1965 = vmatpush1.msra.mxu0 %v1908
    %1966 = vmatprep.subr.mxu0 0.0
    %1967 = vmatpush2.msra.mxu0 0.0
    %1968 = vmatprep.subr.mxu0 0.0
    %1969 = vmatpush2.msra.mxu0 0.0
    %1970 = vmatprep.subr.mxu0 0.0
    %1971 = vmatpush2.msra.mxu0 0.0
    %1972 = vmatprep.subr.mxu0 0.0
    %1973 = vmatpush2.msra.mxu0 0.0
    %1974 = vmatprep.subr.mxu0 0.0
    %1975 = vmatpush2.msra.mxu0 0.0
    %1976 = vmatprep.subr.mxu0 0.0
    %1977 = vmatpush2.msra.mxu0 0.0
    %1978 = vmatprep.subr.mxu0 0.0
    %1979 = vmatpush2.msra.mxu0 0.0
    %1980 = vmatprep.subr.mxu0 0.0
    %1981 = vmatpush2.msra.mxu0 0.0
    %1982 = vmatprep.subr.mxu0 0.0
    %1983 = vmatpush2.msra.mxu0 0.0
    %1984 = vmatprep.subr.mxu0 0.0
    %1985 = vmatpush2.msra.mxu0 0.0
    %1986 = vmatprep.subr.mxu0 0.0
    %1987 = vmatpush2.msra.mxu0 0.0
    %1988 = vmatprep.subr.mxu0 0.0
    %1989 = vmatpush2.msra.mxu0 0.0
    %1990 = vmatprep.subr.mxu0 0.0
    %1991 = vmatpush2.msra.mxu0 0.0
    %1992 = vmatprep.subr.mxu0 0.0
    %1993 = vmatpush2.msra.mxu0 0.0
    %1994 = vmatprep.subr.mxu0 0.0
    %1995 = vmatpush2.msra.mxu0 0.0
    %1996 = vmatprep.subr.mxu0 0.0
    %1997 = vmatpush2.msra.mxu0 0.0
    %1998 = vmatprep.mubr.f32.mxu0 0.0
    %1999 = vmatmul.mubr.f32.gmra.mxu0 %v1922
    %v2000 = vpop.f32.mrf.mxu0
    %v2001 = vadd.f32 0.0, %v2000
    %v2002 = vpop.f32.mrf.mxu0
    %2003 = vmatprep.mubr.f32.mxu0 0.0
    %2004 = vmatmul.mubr.f32.gmra.mxu0 %v1924
    %v2005 = vpop.f32.mrf.mxu0
    %v2006 = vadd.f32 0.0, %v2005
    %v2007 = vpop.f32.mrf.mxu0
    %2008 = vmatprep.mubr.f32.mxu0 0.0
    %2009 = vmatmul.mubr.f32.gmra.mxu0 %v1926
    %v2010 = vpop.f32.mrf.mxu0
    %v2011 = vadd.f32 0.0, %v2010
    %v2012 = vpop.f32.mrf.mxu0
    %2013 = vmatprep.mubr.f32.mxu0 0.0
    %2014 = vmatmul.mubr.f32.gmra.mxu0 %v1928
    %v2015 = vpop.f32.mrf.mxu0
    %v2016 = vadd.f32 0.0, %v2015
    %v2017 = vpop.f32.mrf.mxu0
    %2018 = vmatprep.mubr.f32.mxu0 0.0
    %2019 = vmatmul.mubr.f32.gmra.mxu0 %v1930
    %v2020 = vpop.f32.mrf.mxu0
    %v2021 = vadd.f32 0.0, %v2020
    %v2022 = vpop.f32.mrf.mxu0
    %2023 = vmatprep.mubr.f32.mxu0 0.0
    %2024 = vmatmul.mubr.f32.gmra.mxu0 %v1932
    %v2025 = vpop.f32.mrf.mxu0
    %v2026 = vadd.f32 0.0, %v2025
    %v2027 = vpop.f32.mrf.mxu0
    %2028 = vdwg.mxu0
    %v2029 = vadd.f32 %v1879, %v2001
    %v2030 = vadd.f32 %v1884, %v2006
    %v2031 = vadd.f32 %v1889, %v2011
    %v2032 = vadd.f32 %v1894, %v2016
    %v2033 = vadd.f32 %v1899, %v2021
    %v2034 = vadd.f32 %v1904, %v2026
    %s2035 = scalar_lea.vmem [#allocation8], 24
    %v2036 = vld [vmem:[%s2035] sm:$0xff]
    %v2037 = vrot.slane %v1659, 5
    %v2038 = vrot.slane %v1648, 5
    %v2039 = vsel %vm981, %v2037, %v2038
    %v2040 = vrot.slane %v1650, 5
    %v2041 = vsel %vm981, %v2038, %v2040
    %v2042 = vrot.slane %v1652, 5
    %v2043 = vsel %vm981, %v2040, %v2042
    %v2044 = vrot.slane %v1654, 5
    %v2045 = vsel %vm981, %v2042, %v2044
    %v2046 = vrot.slane %v1656, 5
    %v2047 = vsel %vm981, %v2044, %v2046
    %v2048 = vrot.slane %v1660, 5
    %v2049 = vsel %vm981, %v2046, %v2048
    %v2050 = vsel %vm1679, %v2039, 0
    %v2052 = vsel %vm1679, %v2041, 0
    %v2054 = vsel %vm1679, %v2043, 0
    %v2056 = vsel %vm1679, %v2045, 0
    %v2058 = vsel %vm1679, %v2047, 0
    %v2060 = vsel %vm1679, %v2049, 0
    %2062 = vmatprep.subr.mxu0 0.0
    %2063 = vmatpush1.msra.mxu0 0.0
    %2064 = vmatprep.subr.mxu0 0.0
    %2065 = vmatpush1.msra.mxu0 0.0
    %2066 = vmatprep.subr.mxu0 0.0
    %2067 = vmatpush1.msra.mxu0 0.0
    %2068 = vmatprep.subr.mxu0 0.0
    %2069 = vmatpush1.msra.mxu0 0.0
    %2070 = vmatprep.subr.mxu0 0.0
    %2071 = vmatpush1.msra.mxu0 0.0
    %2072 = vmatprep.subr.mxu0 0.0
    %2073 = vmatpush1.msra.mxu0 0.0
    %2074 = vmatprep.subr.mxu0 0.0
    %2075 = vmatpush1.msra.mxu0 0.0
    %2076 = vmatprep.subr.mxu0 0.0
    %2077 = vmatpush1.msra.mxu0 0.0
    %2078 = vmatprep.subr.mxu0 0.0
    %2079 = vmatpush1.msra.mxu0 0.0
    %2080 = vmatprep.subr.mxu0 0.0
    %2081 = vmatpush1.msra.mxu0 0.0
    %2082 = vmatprep.subr.mxu0 0.0
    %2083 = vmatpush1.msra.mxu0 0.0
    %2084 = vmatprep.subr.mxu0 0.0
    %2085 = vmatpush1.msra.mxu0 0.0
    %2086 = vmatprep.subr.mxu0 0.0
    %2087 = vmatpush1.msra.mxu0 0.0
    %2088 = vmatprep.subr.mxu0 0.0
    %2089 = vmatpush1.msra.mxu0 0.0
    %2090 = vmatprep.subr.mxu0 0.0
    %2091 = vmatpush1.msra.mxu0 0.0
    %2092 = vmatprep.subr.mxu0 0.0
    %2093 = vmatpush1.msra.mxu0 %v2036
    %2094 = vmatprep.subr.mxu0 0.0
    %2095 = vmatpush2.msra.mxu0 0.0
    %2096 = vmatprep.subr.mxu0 0.0
    %2097 = vmatpush2.msra.mxu0 0.0
    %2098 = vmatprep.subr.mxu0 0.0
    %2099 = vmatpush2.msra.mxu0 0.0
    %2100 = vmatprep.subr.mxu0 0.0
    %2101 = vmatpush2.msra.mxu0 0.0
    %2102 = vmatprep.subr.mxu0 0.0
    %2103 = vmatpush2.msra.mxu0 0.0
    %2104 = vmatprep.subr.mxu0 0.0
    %2105 = vmatpush2.msra.mxu0 0.0
    %2106 = vmatprep.subr.mxu0 0.0
    %2107 = vmatpush2.msra.mxu0 0.0
    %2108 = vmatprep.subr.mxu0 0.0
    %2109 = vmatpush2.msra.mxu0 0.0
    %2110 = vmatprep.subr.mxu0 0.0
    %2111 = vmatpush2.msra.mxu0 0.0
    %2112 = vmatprep.subr.mxu0 0.0
    %2113 = vmatpush2.msra.mxu0 0.0
    %2114 = vmatprep.subr.mxu0 0.0
    %2115 = vmatpush2.msra.mxu0 0.0
    %2116 = vmatprep.subr.mxu0 0.0
    %2117 = vmatpush2.msra.mxu0 0.0
    %2118 = vmatprep.subr.mxu0 0.0
    %2119 = vmatpush2.msra.mxu0 0.0
    %2120 = vmatprep.subr.mxu0 0.0
    %2121 = vmatpush2.msra.mxu0 0.0
    %2122 = vmatprep.subr.mxu0 0.0
    %2123 = vmatpush2.msra.mxu0 0.0
    %2124 = vmatprep.subr.mxu0 0.0
    %2125 = vmatpush2.msra.mxu0 0.0
    %2126 = vmatprep.mubr.f32.mxu0 0.0
    %2127 = vmatmul.mubr.f32.gmra.mxu0 %v2050
    %v2128 = vpop.f32.mrf.mxu0
    %v2129 = vadd.f32 0.0, %v2128
    %v2130 = vpop.f32.mrf.mxu0
    %2131 = vmatprep.mubr.f32.mxu0 0.0
    %2132 = vmatmul.mubr.f32.gmra.mxu0 %v2052
    %v2133 = vpop.f32.mrf.mxu0
    %v2134 = vadd.f32 0.0, %v2133
    %v2135 = vpop.f32.mrf.mxu0
    %2136 = vmatprep.mubr.f32.mxu0 0.0
    %2137 = vmatmul.mubr.f32.gmra.mxu0 %v2054
    %v2138 = vpop.f32.mrf.mxu0
    %v2139 = vadd.f32 0.0, %v2138
    %v2140 = vpop.f32.mrf.mxu0
    %2141 = vmatprep.mubr.f32.mxu0 0.0
    %2142 = vmatmul.mubr.f32.gmra.mxu0 %v2056
    %v2143 = vpop.f32.mrf.mxu0
    %v2144 = vadd.f32 0.0, %v2143
    %v2145 = vpop.f32.mrf.mxu0
    %2146 = vmatprep.mubr.f32.mxu0 0.0
    %2147 = vmatmul.mubr.f32.gmra.mxu0 %v2058
    %v2148 = vpop.f32.mrf.mxu0
    %v2149 = vadd.f32 0.0, %v2148
    %v2150 = vpop.f32.mrf.mxu0
    %2151 = vmatprep.mubr.f32.mxu0 0.0
    %2152 = vmatmul.mubr.f32.gmra.mxu0 %v2060
    %v2153 = vpop.f32.mrf.mxu0
    %v2154 = vadd.f32 0.0, %v2153
    %v2155 = vpop.f32.mrf.mxu0
    %2156 = vdwg.mxu0
    %v2157 = vadd.f32 %v2029, %v2129
    %v2158 = vadd.f32 %v2030, %v2134
    %v2159 = vadd.f32 %v2031, %v2139
    %v2160 = vadd.f32 %v2032, %v2144
    %v2161 = vadd.f32 %v2033, %v2149
    %v2162 = vadd.f32 %v2034, %v2154
    %s2163 = scalar_lea.vmem [#allocation8], 32
    %v2164 = vld [vmem:[%s2163] sm:$0xff]
    %v2165 = vrot.slane %v1659, 6
    %v2166 = vrot.slane %v1648, 6
    %v2167 = vsel %vm1113, %v2165, %v2166
    %v2168 = vrot.slane %v1650, 6
    %v2169 = vsel %vm1113, %v2166, %v2168
    %v2170 = vrot.slane %v1652, 6
    %v2171 = vsel %vm1113, %v2168, %v2170
    %v2172 = vrot.slane %v1654, 6
    %v2173 = vsel %vm1113, %v2170, %v2172
    %v2174 = vrot.slane %v1656, 6
    %v2175 = vsel %vm1113, %v2172, %v2174
    %v2176 = vrot.slane %v1660, 6
    %v2177 = vsel %vm1113, %v2174, %v2176
    %v2178 = vsel %vm1679, %v2167, 0
    %v2180 = vsel %vm1679, %v2169, 0
    %v2182 = vsel %vm1679, %v2171, 0
    %v2184 = vsel %vm1679, %v2173, 0
    %v2186 = vsel %vm1679, %v2175, 0
    %v2188 = vsel %vm1679, %v2177, 0
    %2190 = vmatprep.subr.mxu0 0.0
    %2191 = vmatpush1.msra.mxu0 0.0
    %2192 = vmatprep.subr.mxu0 0.0
    %2193 = vmatpush1.msra.mxu0 0.0
    %2194 = vmatprep.subr.mxu0 0.0
    %2195 = vmatpush1.msra.mxu0 0.0
    %2196 = vmatprep.subr.mxu0 0.0
    %2197 = vmatpush1.msra.mxu0 0.0
    %2198 = vmatprep.subr.mxu0 0.0
    %2199 = vmatpush1.msra.mxu0 0.0
    %2200 = vmatprep.subr.mxu0 0.0
    %2201 = vmatpush1.msra.mxu0 0.0
    %2202 = vmatprep.subr.mxu0 0.0
    %2203 = vmatpush1.msra.mxu0 0.0
    %2204 = vmatprep.subr.mxu0 0.0
    %2205 = vmatpush1.msra.mxu0 0.0
    %2206 = vmatprep.subr.mxu0 0.0
    %2207 = vmatpush1.msra.mxu0 0.0
    %2208 = vmatprep.subr.mxu0 0.0
    %2209 = vmatpush1.msra.mxu0 0.0
    %2210 = vmatprep.subr.mxu0 0.0
    %2211 = vmatpush1.msra.mxu0 0.0
    %2212 = vmatprep.subr.mxu0 0.0
    %2213 = vmatpush1.msra.mxu0 0.0
    %2214 = vmatprep.subr.mxu0 0.0
    %2215 = vmatpush1.msra.mxu0 0.0
    %2216 = vmatprep.subr.mxu0 0.0
    %2217 = vmatpush1.msra.mxu0 0.0
    %2218 = vmatprep.subr.mxu0 0.0
    %2219 = vmatpush1.msra.mxu0 0.0
    %2220 = vmatprep.subr.mxu0 0.0
    %2221 = vmatpush1.msra.mxu0 %v2164
    %2222 = vmatprep.subr.mxu0 0.0
    %2223 = vmatpush2.msra.mxu0 0.0
    %2224 = vmatprep.subr.mxu0 0.0
    %2225 = vmatpush2.msra.mxu0 0.0
    %2226 = vmatprep.subr.mxu0 0.0
    %2227 = vmatpush2.msra.mxu0 0.0
    %2228 = vmatprep.subr.mxu0 0.0
    %2229 = vmatpush2.msra.mxu0 0.0
    %2230 = vmatprep.subr.mxu0 0.0
    %2231 = vmatpush2.msra.mxu0 0.0
    %2232 = vmatprep.subr.mxu0 0.0
    %2233 = vmatpush2.msra.mxu0 0.0
    %2234 = vmatprep.subr.mxu0 0.0
    %2235 = vmatpush2.msra.mxu0 0.0
    %2236 = vmatprep.subr.mxu0 0.0
    %2237 = vmatpush2.msra.mxu0 0.0
    %2238 = vmatprep.subr.mxu0 0.0
    %2239 = vmatpush2.msra.mxu0 0.0
    %2240 = vmatprep.subr.mxu0 0.0
    %2241 = vmatpush2.msra.mxu0 0.0
    %2242 = vmatprep.subr.mxu0 0.0
    %2243 = vmatpush2.msra.mxu0 0.0
    %2244 = vmatprep.subr.mxu0 0.0
    %2245 = vmatpush2.msra.mxu0 0.0
    %2246 = vmatprep.subr.mxu0 0.0
    %2247 = vmatpush2.msra.mxu0 0.0
    %2248 = vmatprep.subr.mxu0 0.0
    %2249 = vmatpush2.msra.mxu0 0.0
    %2250 = vmatprep.subr.mxu0 0.0
    %2251 = vmatpush2.msra.mxu0 0.0
    %2252 = vmatprep.subr.mxu0 0.0
    %2253 = vmatpush2.msra.mxu0 0.0
    %2254 = vmatprep.mubr.f32.mxu0 0.0
    %2255 = vmatmul.mubr.f32.gmra.mxu0 %v2178
    %v2256 = vpop.f32.mrf.mxu0
    %v2257 = vadd.f32 0.0, %v2256
    %v2258 = vpop.f32.mrf.mxu0
    %2259 = vmatprep.mubr.f32.mxu0 0.0
    %2260 = vmatmul.mubr.f32.gmra.mxu0 %v2180
    %v2261 = vpop.f32.mrf.mxu0
    %v2262 = vadd.f32 0.0, %v2261
    %v2263 = vpop.f32.mrf.mxu0
    %2264 = vmatprep.mubr.f32.mxu0 0.0
    %2265 = vmatmul.mubr.f32.gmra.mxu0 %v2182
    %v2266 = vpop.f32.mrf.mxu0
    %v2267 = vadd.f32 0.0, %v2266
    %v2268 = vpop.f32.mrf.mxu0
    %2269 = vmatprep.mubr.f32.mxu0 0.0
    %2270 = vmatmul.mubr.f32.gmra.mxu0 %v2184
    %v2271 = vpop.f32.mrf.mxu0
    %v2272 = vadd.f32 0.0, %v2271
    %v2273 = vpop.f32.mrf.mxu0
    %2274 = vmatprep.mubr.f32.mxu0 0.0
    %2275 = vmatmul.mubr.f32.gmra.mxu0 %v2186
    %v2276 = vpop.f32.mrf.mxu0
    %v2277 = vadd.f32 0.0, %v2276
    %v2278 = vpop.f32.mrf.mxu0
    %2279 = vmatprep.mubr.f32.mxu0 0.0
    %2280 = vmatmul.mubr.f32.gmra.mxu0 %v2188
    %v2281 = vpop.f32.mrf.mxu0
    %v2282 = vadd.f32 0.0, %v2281
    %v2283 = vpop.f32.mrf.mxu0
    %2284 = vdwg.mxu0
    %v2285 = vadd.f32 %v2157, %v2257
    %v2286 = vadd.f32 %v2158, %v2262
    %v2287 = vadd.f32 %v2159, %v2267
    %v2288 = vadd.f32 %v2160, %v2272
    %v2289 = vadd.f32 %v2161, %v2277
    %v2290 = vadd.f32 %v2162, %v2282
    %v2291 = vld [vmem:[#allocation10] sm:$0x1]
    %v2293 = vlaneseq
    %v2294 = vshrl.u32 %v2293, 7
    %v2295 = vsub.s32 0, %v2294
    %v2296 = vrot.slane %v2291, %v2295
    %v2298 = vadd.f32 %v2285, %v2296
    %v2299 = vadd.f32 %v2286, %v2296
    %v2300 = vadd.f32 %v2287, %v2296
    %v2301 = vadd.f32 %v2288, %v2296
    %v2302 = vadd.f32 %v2289, %v2296
    %v2303 = vadd.f32 %v2290, %v2296
    %v2304 = vmul.f32 %v2298, %v1509
    %v2305 = vmul.f32 %v2299, %v1514
    %v2306 = vmul.f32 %v2300, %v1519
    %v2307 = vmul.f32 %v2301, %v1524
    %v2308 = vmul.f32 %v2302, %v1529
    %v2309 = vmul.f32 %v2303, %v1534
    %v2310 = vsel %vm1679, %v2304, 0.0
    %v2311 = vsel %vm1679, %v2305, 0.0
    %v2312 = vadd.f32 %v2310, %v2311
    %v2313 = vsel %vm1679, %v2306, 0.0
    %v2314 = vadd.f32 %v2312, %v2313
    %v2315 = vsel %vm1679, %v2307, 0.0
    %v2316 = vadd.f32 %v2314, %v2315
    %v2317 = vsel %vm1679, %v2308, 0.0
    %v2318 = vadd.f32 %v2316, %v2317
    %v2319 = vsel %vm1679, %v2309, 0.0
    %v2320 = vadd.f32 %v2318, %v2319
    %v2321 = vrot.slane %v2320, 4
    %v2322 = vadd.f32 %v2320, %v2321
    %v2323 = vrot.slane %v2322, 2
    %v2324 = vadd.f32 %v2322, %v2323
    %v2325 = vrot.slane %v2324, 1
    %v2326 = vadd.f32 %v2324, %v2325
    %v2327 = vmul.f32 %v2326, 0.03125
    %v2328 = vsub.f32 %v2298, %v2327
    %v2329 = vsub.f32 %v2299, %v2327
    %v2330 = vsub.f32 %v2300, %v2327
    %v2331 = vsub.f32 %v2301, %v2327
    %v2332 = vsub.f32 %v2302, %v2327
    %v2333 = vsub.f32 %v2303, %v2327
    %v2334 = vmul.f32 %v2328, %v1509
    %v2335 = vmul.f32 %v2329, %v1514
    %v2336 = vmul.f32 %v2330, %v1519
    %v2337 = vmul.f32 %v2331, %v1524
    %v2338 = vmul.f32 %v2332, %v1529
    %v2339 = vmul.f32 %v2333, %v1534
    %v2340 = vmul.f32 %v2334, %v2334
    %v2341 = vmul.f32 %v2335, %v2335
    %v2342 = vmul.f32 %v2336, %v2336
    %v2343 = vmul.f32 %v2337, %v2337
    %v2344 = vmul.f32 %v2338, %v2338
    %v2345 = vmul.f32 %v2339, %v2339
    %v2346 = vsel %vm1679, %v2340, 0.0
    %v2347 = vsel %vm1679, %v2341, 0.0
    %v2348 = vadd.f32 %v2346, %v2347
    %v2349 = vsel %vm1679, %v2342, 0.0
    %v2350 = vadd.f32 %v2348, %v2349
    %v2351 = vsel %vm1679, %v2343, 0.0
    %v2352 = vadd.f32 %v2350, %v2351
    %v2353 = vsel %vm1679, %v2344, 0.0
    %v2354 = vadd.f32 %v2352, %v2353
    %v2355 = vsel %vm1679, %v2345, 0.0
    %v2356 = vadd.f32 %v2354, %v2355
    %v2357 = vrot.slane %v2356, 4
    %v2358 = vadd.f32 %v2356, %v2357
    %v2359 = vrot.slane %v2358, 2
    %v2360 = vadd.f32 %v2358, %v2359
    %v2361 = vrot.slane %v2360, 1
    %v2362 = vadd.f32 %v2360, %v2361
    %v2363 = vmul.f32 %v2362, 0.03125
    %v2364 = vld [vmem:[#allocation11] sm:$0x1]
    %v2365 = vadd.f32 %v2363, 1e-05
    %v2366 = vrsqrt.pop %v2365
    %v2367 = vmul.f32 %v2364, %v2366
    %v2368 = vld [vmem:[#allocation13] sm:$0x1]
    %v2369 = vmul.f32 %v2327, %v2367
    %v2370 = vsub.f32 %v2368, %v2369
    %v2372 = vlaneseq
    %v2373 = vshrl.u32 %v2372, 7
    %v2374 = vsub.s32 0, %v2373
    %v2375 = vrot.slane %v2367, %v2374
    %v2377 = vmul.f32 %v2298, %v2375
    %v2378 = vmul.f32 %v2299, %v2375
    %v2379 = vmul.f32 %v2300, %v2375
    %v2380 = vmul.f32 %v2301, %v2375
    %v2381 = vmul.f32 %v2302, %v2375
    %v2382 = vmul.f32 %v2303, %v2375
    %v2384 = vlaneseq
    %v2385 = vshrl.u32 %v2384, 7
    %v2386 = vsub.s32 0, %v2385
    %v2387 = vrot.slane %v2370, %v2386
    %v2389 = vadd.f32 %v2377, %v2387
    %v2390 = vadd.f32 %v2378, %v2387
    %v2391 = vadd.f32 %v2379, %v2387
    %v2392 = vadd.f32 %v2380, %v2387
    %v2393 = vadd.f32 %v2381, %v2387
    %v2394 = vadd.f32 %v2382, %v2387
    %v2395 = vmul.f32 %v2389, %v1509
    %v2396 = vmul.f32 %v2390, %v1514
    %v2397 = vmul.f32 %v2391, %v1519
    %v2398 = vmul.f32 %v2392, %v1524
    %v2399 = vmul.f32 %v2393, %v1529
    %v2400 = vmul.f32 %v2394, %v1534
    %v2401 = vmax.f32 %v2395, 0.0
    %v2402 = vmax.f32 %v2396, 0.0
    %v2403 = vmax.f32 %v2397, 0.0
    %v2404 = vmax.f32 %v2398, 0.0
    %v2405 = vmax.f32 %v2399, 0.0
    %v2406 = vmax.f32 %v2400, 0.0
    %v2413 = vrot.slane %v2401, 4
    %v2414 = vrot.slane %v2402, 4
    %v2415 = vsel %vm446, %v2413, %v2414
    %v2416 = vrot.slane %v2403, 4
    %v2417 = vsel %vm446, %v2414, %v2416
    %v2418 = vrot.slane %v2404, 4
    %v2419 = vsel %vm446, %v2416, %v2418
    %v2420 = vrot.slane %v2405, 4
    %v2421 = vsel %vm446, %v2418, %v2420
    %v2422 = vrot.slane %v2406, 4
    %v2423 = vsel %vm446, %v2420, %v2422
    %v2426 = vsel %vm446, 0.0, %v2413
    %v2427 = vsel %vm446, %v2422, 0.0
    %v2428 = vld [vmem:[#allocation14] sm:$0xff]
    %s2429 = scalar_lea.vmem [#allocation14], 8
    %v2430 = vld [vmem:[%s2429] sm:$0xff]
    %v2433 = vrot.slane %v2426, 2
    %v2434 = vrot.slane %v2415, 2
    %v2435 = vsel %vm467, %v2433, %v2434
    %v2436 = vrot.slane %v2417, 2
    %v2437 = vsel %vm467, %v2434, %v2436
    %v2438 = vrot.slane %v2419, 2
    %v2439 = vsel %vm467, %v2436, %v2438
    %v2440 = vrot.slane %v2421, 2
    %v2441 = vsel %vm467, %v2438, %v2440
    %v2442 = vrot.slane %v2423, 2
    %v2443 = vsel %vm467, %v2440, %v2442
    %v2444 = vrot.slane %v2427, 2
    %v2445 = vsel %vm467, %v2442, %v2444
    %v2446 = vsel %vm1679, %v2435, 0
    %v2448 = vsel %vm1679, %v2437, 0
    %v2450 = vsel %vm1679, %v2439, 0
    %v2452 = vsel %vm1679, %v2441, 0
    %v2454 = vsel %vm1679, %v2443, 0
    %v2456 = vsel %vm1679, %v2445, 0
    %2458 = vmatprep.subr.mxu0 0.0
    %2459 = vmatpush1.msra.mxu0 0.0
    %2460 = vmatprep.subr.mxu0 0.0
    %2461 = vmatpush1.msra.mxu0 0.0
    %2462 = vmatprep.subr.mxu0 0.0
    %2463 = vmatpush1.msra.mxu0 0.0
    %2464 = vmatprep.subr.mxu0 0.0
    %2465 = vmatpush1.msra.mxu0 0.0
    %2466 = vmatprep.subr.mxu0 0.0
    %2467 = vmatpush1.msra.mxu0 0.0
    %2468 = vmatprep.subr.mxu0 0.0
    %2469 = vmatpush1.msra.mxu0 0.0
    %2470 = vmatprep.subr.mxu0 0.0
    %2471 = vmatpush1.msra.mxu0 0.0
    %2472 = vmatprep.subr.mxu0 0.0
    %2473 = vmatpush1.msra.mxu0 0.0
    %2474 = vmatprep.subr.mxu0 0.0
    %2475 = vmatpush1.msra.mxu0 0.0
    %2476 = vmatprep.subr.mxu0 0.0
    %2477 = vmatpush1.msra.mxu0 0.0
    %2478 = vmatprep.subr.mxu0 0.0
    %2479 = vmatpush1.msra.mxu0 0.0
    %2480 = vmatprep.subr.mxu0 0.0
    %2481 = vmatpush1.msra.mxu0 0.0
    %2482 = vmatprep.subr.mxu0 0.0
    %2483 = vmatpush1.msra.mxu0 0.0
    %2484 = vmatprep.subr.mxu0 0.0
    %2485 = vmatpush1.msra.mxu0 0.0
    %2486 = vmatprep.subr.mxu0 0.0
    %2487 = vmatpush1.msra.mxu0 0.0
    %2488 = vmatprep.subr.mxu0 0.0
    %2489 = vmatpush1.msra.mxu0 %v2430
    %2490 = vmatprep.subr.mxu0 0.0
    %2491 = vmatpush2.msra.mxu0 0.0
    %2492 = vmatprep.subr.mxu0 0.0
    %2493 = vmatpush2.msra.mxu0 0.0
    %2494 = vmatprep.subr.mxu0 0.0
    %2495 = vmatpush2.msra.mxu0 0.0
    %2496 = vmatprep.subr.mxu0 0.0
    %2497 = vmatpush2.msra.mxu0 0.0
    %2498 = vmatprep.subr.mxu0 0.0
    %2499 = vmatpush2.msra.mxu0 0.0
    %2500 = vmatprep.subr.mxu0 0.0
    %2501 = vmatpush2.msra.mxu0 0.0
    %2502 = vmatprep.subr.mxu0 0.0
    %2503 = vmatpush2.msra.mxu0 0.0
    %2504 = vmatprep.subr.mxu0 0.0
    %2505 = vmatpush2.msra.mxu0 0.0
    %2506 = vmatprep.subr.mxu0 0.0
    %2507 = vmatpush2.msra.mxu0 0.0
    %2508 = vmatprep.subr.mxu0 0.0
    %2509 = vmatpush2.msra.mxu0 0.0
    %2510 = vmatprep.subr.mxu0 0.0
    %2511 = vmatpush2.msra.mxu0 0.0
    %2512 = vmatprep.subr.mxu0 0.0
    %2513 = vmatpush2.msra.mxu0 0.0
    %2514 = vmatprep.subr.mxu0 0.0
    %2515 = vmatpush2.msra.mxu0 0.0
    %2516 = vmatprep.subr.mxu0 0.0
    %2517 = vmatpush2.msra.mxu0 0.0
    %2518 = vmatprep.subr.mxu0 0.0
    %2519 = vmatpush2.msra.mxu0 0.0
    %2520 = vmatprep.subr.mxu0 0.0
    %2521 = vmatpush2.msra.mxu0 0.0
    %2522 = vmatprep.mubr.f32.mxu0 0.0
    %2523 = vmatmul.mubr.f32.gmra.mxu0 %v2446
    %v2524 = vpop.f32.mrf.mxu0
    %v2525 = vadd.f32 0.0, %v2524
    %v2526 = vpop.f32.mrf.mxu0
    %2527 = vmatprep.mubr.f32.mxu0 0.0
    %2528 = vmatmul.mubr.f32.gmra.mxu0 %v2448
    %v2529 = vpop.f32.mrf.mxu0
    %v2530 = vadd.f32 0.0, %v2529
    %v2531 = vpop.f32.mrf.mxu0
    %2532 = vmatprep.mubr.f32.mxu0 0.0
    %2533 = vmatmul.mubr.f32.gmra.mxu0 %v2450
    %v2534 = vpop.f32.mrf.mxu0
    %v2535 = vadd.f32 0.0, %v2534
    %v2536 = vpop.f32.mrf.mxu0
    %2537 = vmatprep.mubr.f32.mxu0 0.0
    %2538 = vmatmul.mubr.f32.gmra.mxu0 %v2452
    %v2539 = vpop.f32.mrf.mxu0
    %v2540 = vadd.f32 0.0, %v2539
    %v2541 = vpop.f32.mrf.mxu0
    %2542 = vmatprep.mubr.f32.mxu0 0.0
    %2543 = vmatmul.mubr.f32.gmra.mxu0 %v2454
    %v2544 = vpop.f32.mrf.mxu0
    %v2545 = vadd.f32 0.0, %v2544
    %v2546 = vpop.f32.mrf.mxu0
    %2547 = vmatprep.mubr.f32.mxu0 0.0
    %2548 = vmatmul.mubr.f32.gmra.mxu0 %v2456
    %v2549 = vpop.f32.mrf.mxu0
    %v2550 = vadd.f32 0.0, %v2549
    %v2551 = vpop.f32.mrf.mxu0
    %2552 = vdwg.mxu0
    %v2553 = vrot.slane %v2426, 1
    %v2554 = vrot.slane %v2415, 1
    %v2555 = vsel %vm592, %v2553, %v2554
    %v2556 = vrot.slane %v2417, 1
    %v2557 = vsel %vm592, %v2554, %v2556
    %v2558 = vrot.slane %v2419, 1
    %v2559 = vsel %vm592, %v2556, %v2558
    %v2560 = vrot.slane %v2421, 1
    %v2561 = vsel %vm592, %v2558, %v2560
    %v2562 = vrot.slane %v2423, 1
    %v2563 = vsel %vm592, %v2560, %v2562
    %v2564 = vrot.slane %v2427, 1
    %v2565 = vsel %vm592, %v2562, %v2564
    %v2566 = vsel %vm1679, %v2555, 0
    %v2568 = vsel %vm1679, %v2557, 0
    %v2570 = vsel %vm1679, %v2559, 0
    %v2572 = vsel %vm1679, %v2561, 0
    %v2574 = vsel %vm1679, %v2563, 0
    %v2576 = vsel %vm1679, %v2565, 0
    %2578 = vmatprep.subr.mxu0 0.0
    %2579 = vmatpush1.msra.mxu0 0.0
    %2580 = vmatprep.subr.mxu0 0.0
    %2581 = vmatpush1.msra.mxu0 0.0
    %2582 = vmatprep.subr.mxu0 0.0
    %2583 = vmatpush1.msra.mxu0 0.0
    %2584 = vmatprep.subr.mxu0 0.0
    %2585 = vmatpush1.msra.mxu0 0.0
    %2586 = vmatprep.subr.mxu0 0.0
    %2587 = vmatpush1.msra.mxu0 0.0
    %2588 = vmatprep.subr.mxu0 0.0
    %2589 = vmatpush1.msra.mxu0 0.0
    %2590 = vmatprep.subr.mxu0 0.0
    %2591 = vmatpush1.msra.mxu0 0.0
    %2592 = vmatprep.subr.mxu0 0.0
    %2593 = vmatpush1.msra.mxu0 0.0
    %2594 = vmatprep.subr.mxu0 0.0
    %2595 = vmatpush1.msra.mxu0 0.0
    %2596 = vmatprep.subr.mxu0 0.0
    %2597 = vmatpush1.msra.mxu0 0.0
    %2598 = vmatprep.subr.mxu0 0.0
    %2599 = vmatpush1.msra.mxu0 0.0
    %2600 = vmatprep.subr.mxu0 0.0
    %2601 = vmatpush1.msra.mxu0 0.0
    %2602 = vmatprep.subr.mxu0 0.0
    %2603 = vmatpush1.msra.mxu0 0.0
    %2604 = vmatprep.subr.mxu0 0.0
    %2605 = vmatpush1.msra.mxu0 0.0
    %2606 = vmatprep.subr.mxu0 0.0
    %2607 = vmatpush1.msra.mxu0 0.0
    %2608 = vmatprep.subr.mxu0 0.0
    %2609 = vmatpush1.msra.mxu0 %v2428
    %2610 = vmatprep.subr.mxu0 0.0
    %2611 = vmatpush2.msra.mxu0 0.0
    %2612 = vmatprep.subr.mxu0 0.0
    %2613 = vmatpush2.msra.mxu0 0.0
    %2614 = vmatprep.subr.mxu0 0.0
    %2615 = vmatpush2.msra.mxu0 0.0
    %2616 = vmatprep.subr.mxu0 0.0
    %2617 = vmatpush2.msra.mxu0 0.0
    %2618 = vmatprep.subr.mxu0 0.0
    %2619 = vmatpush2.msra.mxu0 0.0
    %2620 = vmatprep.subr.mxu0 0.0
    %2621 = vmatpush2.msra.mxu0 0.0
    %2622 = vmatprep.subr.mxu0 0.0
    %2623 = vmatpush2.msra.mxu0 0.0
    %2624 = vmatprep.subr.mxu0 0.0
    %2625 = vmatpush2.msra.mxu0 0.0
    %2626 = vmatprep.subr.mxu0 0.0
    %2627 = vmatpush2.msra.mxu0 0.0
    %2628 = vmatprep.subr.mxu0 0.0
    %2629 = vmatpush2.msra.mxu0 0.0
    %2630 = vmatprep.subr.mxu0 0.0
    %2631 = vmatpush2.msra.mxu0 0.0
    %2632 = vmatprep.subr.mxu0 0.0
    %2633 = vmatpush2.msra.mxu0 0.0
    %2634 = vmatprep.subr.mxu0 0.0
    %2635 = vmatpush2.msra.mxu0 0.0
    %2636 = vmatprep.subr.mxu0 0.0
    %2637 = vmatpush2.msra.mxu0 0.0
    %2638 = vmatprep.subr.mxu0 0.0
    %2639 = vmatpush2.msra.mxu0 0.0
    %2640 = vmatprep.subr.mxu0 0.0
    %2641 = vmatpush2.msra.mxu0 0.0
    %2642 = vmatprep.mubr.f32.mxu0 0.0
    %2643 = vmatmul.mubr.f32.gmra.mxu0 %v2566
    %v2644 = vpop.f32.mrf.mxu0
    %v2645 = vadd.f32 %v2525, %v2644
    %v2646 = vpop.f32.mrf.mxu0
    %2647 = vmatprep.mubr.f32.mxu0 0.0
    %2648 = vmatmul.mubr.f32.gmra.mxu0 %v2568
    %v2649 = vpop.f32.mrf.mxu0
    %v2650 = vadd.f32 %v2530, %v2649
    %v2651 = vpop.f32.mrf.mxu0
    %2652 = vmatprep.mubr.f32.mxu0 0.0
    %2653 = vmatmul.mubr.f32.gmra.mxu0 %v2570
    %v2654 = vpop.f32.mrf.mxu0
    %v2655 = vadd.f32 %v2535, %v2654
    %v2656 = vpop.f32.mrf.mxu0
    %2657 = vmatprep.mubr.f32.mxu0 0.0
    %2658 = vmatmul.mubr.f32.gmra.mxu0 %v2572
    %v2659 = vpop.f32.mrf.mxu0
    %v2660 = vadd.f32 %v2540, %v2659
    %v2661 = vpop.f32.mrf.mxu0
    %2662 = vmatprep.mubr.f32.mxu0 0.0
    %2663 = vmatmul.mubr.f32.gmra.mxu0 %v2574
    %v2664 = vpop.f32.mrf.mxu0
    %v2665 = vadd.f32 %v2545, %v2664
    %v2666 = vpop.f32.mrf.mxu0
    %2667 = vmatprep.mubr.f32.mxu0 0.0
    %2668 = vmatmul.mubr.f32.gmra.mxu0 %v2576
    %v2669 = vpop.f32.mrf.mxu0
    %v2670 = vadd.f32 %v2550, %v2669
    %v2671 = vpop.f32.mrf.mxu0
    %2672 = vdwg.mxu0
    %s2673 = scalar_lea.vmem [#allocation14], 16
    %v2674 = vld [vmem:[%s2673] sm:$0xff]
    %v2675 = vrot.slane %v2426, 3
    %v2676 = vrot.slane %v2415, 3
    %v2677 = vsel %vm718, %v2675, %v2676
    %v2678 = vrot.slane %v2417, 3
    %v2679 = vsel %vm718, %v2676, %v2678
    %v2680 = vrot.slane %v2419, 3
    %v2681 = vsel %vm718, %v2678, %v2680
    %v2682 = vrot.slane %v2421, 3
    %v2683 = vsel %vm718, %v2680, %v2682
    %v2684 = vrot.slane %v2423, 3
    %v2685 = vsel %vm718, %v2682, %v2684
    %v2686 = vrot.slane %v2427, 3
    %v2687 = vsel %vm718, %v2684, %v2686
    %v2688 = vsel %vm1679, %v2677, 0
    %v2690 = vsel %vm1679, %v2679, 0
    %v2692 = vsel %vm1679, %v2681, 0
    %v2694 = vsel %vm1679, %v2683, 0
    %v2696 = vsel %vm1679, %v2685, 0
    %v2698 = vsel %vm1679, %v2687, 0
    %2700 = vmatprep.subr.mxu0 0.0
    %2701 = vmatpush1.msra.mxu0 0.0
    %2702 = vmatprep.subr.mxu0 0.0
    %2703 = vmatpush1.msra.mxu0 0.0
    %2704 = vmatprep.subr.mxu0 0.0
    %2705 = vmatpush1.msra.mxu0 0.0
    %2706 = vmatprep.subr.mxu0 0.0
    %2707 = vmatpush1.msra.mxu0 0.0
    %2708 = vmatprep.subr.mxu0 0.0
    %2709 = vmatpush1.msra.mxu0 0.0
    %2710 = vmatprep.subr.mxu0 0.0
    %2711 = vmatpush1.msra.mxu0 0.0
    %2712 = vmatprep.subr.mxu0 0.0
    %2713 = vmatpush1.msra.mxu0 0.0
    %2714 = vmatprep.subr.mxu0 0.0
    %2715 = vmatpush1.msra.mxu0 0.0
    %2716 = vmatprep.subr.mxu0 0.0
    %2717 = vmatpush1.msra.mxu0 0.0
    %2718 = vmatprep.subr.mxu0 0.0
    %2719 = vmatpush1.msra.mxu0 0.0
    %2720 = vmatprep.subr.mxu0 0.0
    %2721 = vmatpush1.msra.mxu0 0.0
    %2722 = vmatprep.subr.mxu0 0.0
    %2723 = vmatpush1.msra.mxu0 0.0
    %2724 = vmatprep.subr.mxu0 0.0
    %2725 = vmatpush1.msra.mxu0 0.0
    %2726 = vmatprep.subr.mxu0 0.0
    %2727 = vmatpush1.msra.mxu0 0.0
    %2728 = vmatprep.subr.mxu0 0.0
    %2729 = vmatpush1.msra.mxu0 0.0
    %2730 = vmatprep.subr.mxu0 0.0
    %2731 = vmatpush1.msra.mxu0 %v2674
    %2732 = vmatprep.subr.mxu0 0.0
    %2733 = vmatpush2.msra.mxu0 0.0
    %2734 = vmatprep.subr.mxu0 0.0
    %2735 = vmatpush2.msra.mxu0 0.0
    %2736 = vmatprep.subr.mxu0 0.0
    %2737 = vmatpush2.msra.mxu0 0.0
    %2738 = vmatprep.subr.mxu0 0.0
    %2739 = vmatpush2.msra.mxu0 0.0
    %2740 = vmatprep.subr.mxu0 0.0
    %2741 = vmatpush2.msra.mxu0 0.0
    %2742 = vmatprep.subr.mxu0 0.0
    %2743 = vmatpush2.msra.mxu0 0.0
    %2744 = vmatprep.subr.mxu0 0.0
    %2745 = vmatpush2.msra.mxu0 0.0
    %2746 = vmatprep.subr.mxu0 0.0
    %2747 = vmatpush2.msra.mxu0 0.0
    %2748 = vmatprep.subr.mxu0 0.0
    %2749 = vmatpush2.msra.mxu0 0.0
    %2750 = vmatprep.subr.mxu0 0.0
    %2751 = vmatpush2.msra.mxu0 0.0
    %2752 = vmatprep.subr.mxu0 0.0
    %2753 = vmatpush2.msra.mxu0 0.0
    %2754 = vmatprep.subr.mxu0 0.0
    %2755 = vmatpush2.msra.mxu0 0.0
    %2756 = vmatprep.subr.mxu0 0.0
    %2757 = vmatpush2.msra.mxu0 0.0
    %2758 = vmatprep.subr.mxu0 0.0
    %2759 = vmatpush2.msra.mxu0 0.0
    %2760 = vmatprep.subr.mxu0 0.0
    %2761 = vmatpush2.msra.mxu0 0.0
    %2762 = vmatprep.subr.mxu0 0.0
    %2763 = vmatpush2.msra.mxu0 0.0
    %2764 = vmatprep.mubr.f32.mxu0 0.0
    %2765 = vmatmul.mubr.f32.gmra.mxu0 %v2688
    %v2766 = vpop.f32.mrf.mxu0
    %v2767 = vadd.f32 0.0, %v2766
    %v2768 = vpop.f32.mrf.mxu0
    %2769 = vmatprep.mubr.f32.mxu0 0.0
    %2770 = vmatmul.mubr.f32.gmra.mxu0 %v2690
    %v2771 = vpop.f32.mrf.mxu0
    %v2772 = vadd.f32 0.0, %v2771
    %v2773 = vpop.f32.mrf.mxu0
    %2774 = vmatprep.mubr.f32.mxu0 0.0
    %2775 = vmatmul.mubr.f32.gmra.mxu0 %v2692
    %v2776 = vpop.f32.mrf.mxu0
    %v2777 = vadd.f32 0.0, %v2776
    %v2778 = vpop.f32.mrf.mxu0
    %2779 = vmatprep.mubr.f32.mxu0 0.0
    %2780 = vmatmul.mubr.f32.gmra.mxu0 %v2694
    %v2781 = vpop.f32.mrf.mxu0
    %v2782 = vadd.f32 0.0, %v2781
    %v2783 = vpop.f32.mrf.mxu0
    %2784 = vmatprep.mubr.f32.mxu0 0.0
    %2785 = vmatmul.mubr.f32.gmra.mxu0 %v2696
    %v2786 = vpop.f32.mrf.mxu0
    %v2787 = vadd.f32 0.0, %v2786
    %v2788 = vpop.f32.mrf.mxu0
    %2789 = vmatprep.mubr.f32.mxu0 0.0
    %2790 = vmatmul.mubr.f32.gmra.mxu0 %v2698
    %v2791 = vpop.f32.mrf.mxu0
    %v2792 = vadd.f32 0.0, %v2791
    %v2793 = vpop.f32.mrf.mxu0
    %2794 = vdwg.mxu0
    %v2795 = vadd.f32 %v2645, %v2767
    %v2796 = vadd.f32 %v2650, %v2772
    %v2797 = vadd.f32 %v2655, %v2777
    %v2798 = vadd.f32 %v2660, %v2782
    %v2799 = vadd.f32 %v2665, %v2787
    %v2800 = vadd.f32 %v2670, %v2792
    %s2801 = scalar_lea.vmem [#allocation14], 24
    %v2802 = vld [vmem:[%s2801] sm:$0xff]
    %v2803 = vrot.slane %v2426, 4
    %v2804 = vrot.slane %v2415, 4
    %v2805 = vsel %vm446, %v2803, %v2804
    %v2806 = vrot.slane %v2417, 4
    %v2807 = vsel %vm446, %v2804, %v2806
    %v2808 = vrot.slane %v2419, 4
    %v2809 = vsel %vm446, %v2806, %v2808
    %v2810 = vrot.slane %v2421, 4
    %v2811 = vsel %vm446, %v2808, %v2810
    %v2812 = vrot.slane %v2423, 4
    %v2813 = vsel %vm446, %v2810, %v2812
    %v2814 = vrot.slane %v2427, 4
    %v2815 = vsel %vm446, %v2812, %v2814
    %v2816 = vsel %vm1679, %v2805, 0
    %v2818 = vsel %vm1679, %v2807, 0
    %v2820 = vsel %vm1679, %v2809, 0
    %v2822 = vsel %vm1679, %v2811, 0
    %v2824 = vsel %vm1679, %v2813, 0
    %v2826 = vsel %vm1679, %v2815, 0
    %2828 = vmatprep.subr.mxu0 0.0
    %2829 = vmatpush1.msra.mxu0 0.0
    %2830 = vmatprep.subr.mxu0 0.0
    %2831 = vmatpush1.msra.mxu0 0.0
    %2832 = vmatprep.subr.mxu0 0.0
    %2833 = vmatpush1.msra.mxu0 0.0
    %2834 = vmatprep.subr.mxu0 0.0
    %2835 = vmatpush1.msra.mxu0 0.0
    %2836 = vmatprep.subr.mxu0 0.0
    %2837 = vmatpush1.msra.mxu0 0.0
    %2838 = vmatprep.subr.mxu0 0.0
    %2839 = vmatpush1.msra.mxu0 0.0
    %2840 = vmatprep.subr.mxu0 0.0
    %2841 = vmatpush1.msra.mxu0 0.0
    %2842 = vmatprep.subr.mxu0 0.0
    %2843 = vmatpush1.msra.mxu0 0.0
    %2844 = vmatprep.subr.mxu0 0.0
    %2845 = vmatpush1.msra.mxu0 0.0
    %2846 = vmatprep.subr.mxu0 0.0
    %2847 = vmatpush1.msra.mxu0 0.0
    %2848 = vmatprep.subr.mxu0 0.0
    %2849 = vmatpush1.msra.mxu0 0.0
    %2850 = vmatprep.subr.mxu0 0.0
    %2851 = vmatpush1.msra.mxu0 0.0
    %2852 = vmatprep.subr.mxu0 0.0
    %2853 = vmatpush1.msra.mxu0 0.0
    %2854 = vmatprep.subr.mxu0 0.0
    %2855 = vmatpush1.msra.mxu0 0.0
    %2856 = vmatprep.subr.mxu0 0.0
    %2857 = vmatpush1.msra.mxu0 0.0
    %2858 = vmatprep.subr.mxu0 0.0
    %2859 = vmatpush1.msra.mxu0 %v2802
    %2860 = vmatprep.subr.mxu0 0.0
    %2861 = vmatpush2.msra.mxu0 0.0
    %2862 = vmatprep.subr.mxu0 0.0
    %2863 = vmatpush2.msra.mxu0 0.0
    %2864 = vmatprep.subr.mxu0 0.0
    %2865 = vmatpush2.msra.mxu0 0.0
    %2866 = vmatprep.subr.mxu0 0.0
    %2867 = vmatpush2.msra.mxu0 0.0
    %2868 = vmatprep.subr.mxu0 0.0
    %2869 = vmatpush2.msra.mxu0 0.0
    %2870 = vmatprep.subr.mxu0 0.0
    %2871 = vmatpush2.msra.mxu0 0.0
    %2872 = vmatprep.subr.mxu0 0.0
    %2873 = vmatpush2.msra.mxu0 0.0
    %2874 = vmatprep.subr.mxu0 0.0
    %2875 = vmatpush2.msra.mxu0 0.0
    %2876 = vmatprep.subr.mxu0 0.0
    %2877 = vmatpush2.msra.mxu0 0.0
    %2878 = vmatprep.subr.mxu0 0.0
    %2879 = vmatpush2.msra.mxu0 0.0
    %2880 = vmatprep.subr.mxu0 0.0
    %2881 = vmatpush2.msra.mxu0 0.0
    %2882 = vmatprep.subr.mxu0 0.0
    %2883 = vmatpush2.msra.mxu0 0.0
    %2884 = vmatprep.subr.mxu0 0.0
    %2885 = vmatpush2.msra.mxu0 0.0
    %2886 = vmatprep.subr.mxu0 0.0
    %2887 = vmatpush2.msra.mxu0 0.0
    %2888 = vmatprep.subr.mxu0 0.0
    %2889 = vmatpush2.msra.mxu0 0.0
    %2890 = vmatprep.subr.mxu0 0.0
    %2891 = vmatpush2.msra.mxu0 0.0
    %2892 = vmatprep.mubr.f32.mxu0 0.0
    %2893 = vmatmul.mubr.f32.gmra.mxu0 %v2816
    %v2894 = vpop.f32.mrf.mxu0
    %v2895 = vadd.f32 0.0, %v2894
    %v2896 = vpop.f32.mrf.mxu0
    %2897 = vmatprep.mubr.f32.mxu0 0.0
    %2898 = vmatmul.mubr.f32.gmra.mxu0 %v2818
    %v2899 = vpop.f32.mrf.mxu0
    %v2900 = vadd.f32 0.0, %v2899
    %v2901 = vpop.f32.mrf.mxu0
    %2902 = vmatprep.mubr.f32.mxu0 0.0
    %2903 = vmatmul.mubr.f32.gmra.mxu0 %v2820
    %v2904 = vpop.f32.mrf.mxu0
    %v2905 = vadd.f32 0.0, %v2904
    %v2906 = vpop.f32.mrf.mxu0
    %2907 = vmatprep.mubr.f32.mxu0 0.0
    %2908 = vmatmul.mubr.f32.gmra.mxu0 %v2822
    %v2909 = vpop.f32.mrf.mxu0
    %v2910 = vadd.f32 0.0, %v2909
    %v2911 = vpop.f32.mrf.mxu0
    %2912 = vmatprep.mubr.f32.mxu0 0.0
    %2913 = vmatmul.mubr.f32.gmra.mxu0 %v2824
    %v2914 = vpop.f32.mrf.mxu0
    %v2915 = vadd.f32 0.0, %v2914
    %v2916 = vpop.f32.mrf.mxu0
    %2917 = vmatprep.mubr.f32.mxu0 0.0
    %2918 = vmatmul.mubr.f32.gmra.mxu0 %v2826
    %v2919 = vpop.f32.mrf.mxu0
    %v2920 = vadd.f32 0.0, %v2919
    %v2921 = vpop.f32.mrf.mxu0
    %2922 = vdwg.mxu0
    %v2923 = vadd.f32 %v2795, %v2895
    %v2924 = vadd.f32 %v2796, %v2900
    %v2925 = vadd.f32 %v2797, %v2905
    %v2926 = vadd.f32 %v2798, %v2910
    %v2927 = vadd.f32 %v2799, %v2915
    %v2928 = vadd.f32 %v2800, %v2920
    %s2929 = scalar_lea.vmem [#allocation14], 32
    %v2930 = vld [vmem:[%s2929] sm:$0xff]
    %v2931 = vrot.slane %v2426, 5
    %v2932 = vrot.slane %v2415, 5
    %v2933 = vsel %vm981, %v2931, %v2932
    %v2934 = vrot.slane %v2417, 5
    %v2935 = vsel %vm981, %v2932, %v2934
    %v2936 = vrot.slane %v2419, 5
    %v2937 = vsel %vm981, %v2934, %v2936
    %v2938 = vrot.slane %v2421, 5
    %v2939 = vsel %vm981, %v2936, %v2938
    %v2940 = vrot.slane %v2423, 5
    %v2941 = vsel %vm981, %v2938, %v2940
    %v2942 = vrot.slane %v2427, 5
    %v2943 = vsel %vm981, %v2940, %v2942
    %v2944 = vsel %vm1679, %v2933, 0
    %v2946 = vsel %vm1679, %v2935, 0
    %v2948 = vsel %vm1679, %v2937, 0
    %v2950 = vsel %vm1679, %v2939, 0
    %v2952 = vsel %vm1679, %v2941, 0
    %v2954 = vsel %vm1679, %v2943, 0
    %2956 = vmatprep.subr.mxu0 0.0
    %2957 = vmatpush1.msra.mxu0 0.0
    %2958 = vmatprep.subr.mxu0 0.0
    %2959 = vmatpush1.msra.mxu0 0.0
    %2960 = vmatprep.subr.mxu0 0.0
    %2961 = vmatpush1.msra.mxu0 0.0
    %2962 = vmatprep.subr.mxu0 0.0
    %2963 = vmatpush1.msra.mxu0 0.0
    %2964 = vmatprep.subr.mxu0 0.0
    %2965 = vmatpush1.msra.mxu0 0.0
    %2966 = vmatprep.subr.mxu0 0.0
    %2967 = vmatpush1.msra.mxu0 0.0
    %2968 = vmatprep.subr.mxu0 0.0
    %2969 = vmatpush1.msra.mxu0 0.0
    %2970 = vmatprep.subr.mxu0 0.0
    %2971 = vmatpush1.msra.mxu0 0.0
    %2972 = vmatprep.subr.mxu0 0.0
    %2973 = vmatpush1.msra.mxu0 0.0
    %2974 = vmatprep.subr.mxu0 0.0
    %2975 = vmatpush1.msra.mxu0 0.0
    %2976 = vmatprep.subr.mxu0 0.0
    %2977 = vmatpush1.msra.mxu0 0.0
    %2978 = vmatprep.subr.mxu0 0.0
    %2979 = vmatpush1.msra.mxu0 0.0
    %2980 = vmatprep.subr.mxu0 0.0
    %2981 = vmatpush1.msra.mxu0 0.0
    %2982 = vmatprep.subr.mxu0 0.0
    %2983 = vmatpush1.msra.mxu0 0.0
    %2984 = vmatprep.subr.mxu0 0.0
    %2985 = vmatpush1.msra.mxu0 0.0
    %2986 = vmatprep.subr.mxu0 0.0
    %2987 = vmatpush1.msra.mxu0 %v2930
    %2988 = vmatprep.subr.mxu0 0.0
    %2989 = vmatpush2.msra.mxu0 0.0
    %2990 = vmatprep.subr.mxu0 0.0
    %2991 = vmatpush2.msra.mxu0 0.0
    %2992 = vmatprep.subr.mxu0 0.0
    %2993 = vmatpush2.msra.mxu0 0.0
    %2994 = vmatprep.subr.mxu0 0.0
    %2995 = vmatpush2.msra.mxu0 0.0
    %2996 = vmatprep.subr.mxu0 0.0
    %2997 = vmatpush2.msra.mxu0 0.0
    %2998 = vmatprep.subr.mxu0 0.0
    %2999 = vmatpush2.msra.mxu0 0.0
    %3000 = vmatprep.subr.mxu0 0.0
    %3001 = vmatpush2.msra.mxu0 0.0
    %3002 = vmatprep.subr.mxu0 0.0
    %3003 = vmatpush2.msra.mxu0 0.0
    %3004 = vmatprep.subr.mxu0 0.0
    %3005 = vmatpush2.msra.mxu0 0.0
    %3006 = vmatprep.subr.mxu0 0.0
    %3007 = vmatpush2.msra.mxu0 0.0
    %3008 = vmatprep.subr.mxu0 0.0
    %3009 = vmatpush2.msra.mxu0 0.0
    %3010 = vmatprep.subr.mxu0 0.0
    %3011 = vmatpush2.msra.mxu0 0.0
    %3012 = vmatprep.subr.mxu0 0.0
    %3013 = vmatpush2.msra.mxu0 0.0
    %3014 = vmatprep.subr.mxu0 0.0
    %3015 = vmatpush2.msra.mxu0 0.0
    %3016 = vmatprep.subr.mxu0 0.0
    %3017 = vmatpush2.msra.mxu0 0.0
    %3018 = vmatprep.subr.mxu0 0.0
    %3019 = vmatpush2.msra.mxu0 0.0
    %3020 = vmatprep.mubr.f32.mxu0 0.0
    %3021 = vmatmul.mubr.f32.gmra.mxu0 %v2944
    %v3022 = vpop.f32.mrf.mxu0
    %v3023 = vadd.f32 0.0, %v3022
    %v3024 = vpop.f32.mrf.mxu0
    %3025 = vmatprep.mubr.f32.mxu0 0.0
    %3026 = vmatmul.mubr.f32.gmra.mxu0 %v2946
    %v3027 = vpop.f32.mrf.mxu0
    %v3028 = vadd.f32 0.0, %v3027
    %v3029 = vpop.f32.mrf.mxu0
    %3030 = vmatprep.mubr.f32.mxu0 0.0
    %3031 = vmatmul.mubr.f32.gmra.mxu0 %v2948
    %v3032 = vpop.f32.mrf.mxu0
    %v3033 = vadd.f32 0.0, %v3032
    %v3034 = vpop.f32.mrf.mxu0
    %3035 = vmatprep.mubr.f32.mxu0 0.0
    %3036 = vmatmul.mubr.f32.gmra.mxu0 %v2950
    %v3037 = vpop.f32.mrf.mxu0
    %v3038 = vadd.f32 0.0, %v3037
    %v3039 = vpop.f32.mrf.mxu0
    %3040 = vmatprep.mubr.f32.mxu0 0.0
    %3041 = vmatmul.mubr.f32.gmra.mxu0 %v2952
    %v3042 = vpop.f32.mrf.mxu0
    %v3043 = vadd.f32 0.0, %v3042
    %v3044 = vpop.f32.mrf.mxu0
    %3045 = vmatprep.mubr.f32.mxu0 0.0
    %3046 = vmatmul.mubr.f32.gmra.mxu0 %v2954
    %v3047 = vpop.f32.mrf.mxu0
    %v3048 = vadd.f32 0.0, %v3047
    %v3049 = vpop.f32.mrf.mxu0
    %3050 = vdwg.mxu0
    %v3051 = vadd.f32 %v2923, %v3023
    %v3052 = vadd.f32 %v2924, %v3028
    %v3053 = vadd.f32 %v2925, %v3033
    %v3054 = vadd.f32 %v2926, %v3038
    %v3055 = vadd.f32 %v2927, %v3043
    %v3056 = vadd.f32 %v2928, %v3048
    %s3057 = scalar_lea.vmem [#allocation14], 40
    %v3058 = vld [vmem:[%s3057] sm:$0xff]
    %v3059 = vrot.slane %v2426, 6
    %v3060 = vrot.slane %v2415, 6
    %v3061 = vsel %vm1113, %v3059, %v3060
    %v3062 = vrot.slane %v2417, 6
    %v3063 = vsel %vm1113, %v3060, %v3062
    %v3064 = vrot.slane %v2419, 6
    %v3065 = vsel %vm1113, %v3062, %v3064
    %v3066 = vrot.slane %v2421, 6
    %v3067 = vsel %vm1113, %v3064, %v3066
    %v3068 = vrot.slane %v2423, 6
    %v3069 = vsel %vm1113, %v3066, %v3068
    %v3070 = vrot.slane %v2427, 6
    %v3071 = vsel %vm1113, %v3068, %v3070
    %v3072 = vsel %vm1679, %v3061, 0
    %v3074 = vsel %vm1679, %v3063, 0
    %v3076 = vsel %vm1679, %v3065, 0
    %v3078 = vsel %vm1679, %v3067, 0
    %v3080 = vsel %vm1679, %v3069, 0
    %v3082 = vsel %vm1679, %v3071, 0
    %3084 = vmatprep.subr.mxu0 0.0
    %3085 = vmatpush1.msra.mxu0 0.0
    %3086 = vmatprep.subr.mxu0 0.0
    %3087 = vmatpush1.msra.mxu0 0.0
    %3088 = vmatprep.subr.mxu0 0.0
    %3089 = vmatpush1.msra.mxu0 0.0
    %3090 = vmatprep.subr.mxu0 0.0
    %3091 = vmatpush1.msra.mxu0 0.0
    %3092 = vmatprep.subr.mxu0 0.0
    %3093 = vmatpush1.msra.mxu0 0.0
    %3094 = vmatprep.subr.mxu0 0.0
    %3095 = vmatpush1.msra.mxu0 0.0
    %3096 = vmatprep.subr.mxu0 0.0
    %3097 = vmatpush1.msra.mxu0 0.0
    %3098 = vmatprep.subr.mxu0 0.0
    %3099 = vmatpush1.msra.mxu0 0.0
    %3100 = vmatprep.subr.mxu0 0.0
    %3101 = vmatpush1.msra.mxu0 0.0
    %3102 = vmatprep.subr.mxu0 0.0
    %3103 = vmatpush1.msra.mxu0 0.0
    %3104 = vmatprep.subr.mxu0 0.0
    %3105 = vmatpush1.msra.mxu0 0.0
    %3106 = vmatprep.subr.mxu0 0.0
    %3107 = vmatpush1.msra.mxu0 0.0
    %3108 = vmatprep.subr.mxu0 0.0
    %3109 = vmatpush1.msra.mxu0 0.0
    %3110 = vmatprep.subr.mxu0 0.0
    %3111 = vmatpush1.msra.mxu0 0.0
    %3112 = vmatprep.subr.mxu0 0.0
    %3113 = vmatpush1.msra.mxu0 0.0
    %3114 = vmatprep.subr.mxu0 0.0
    %3115 = vmatpush1.msra.mxu0 %v3058
    %3116 = vmatprep.subr.mxu0 0.0
    %3117 = vmatpush2.msra.mxu0 0.0
    %3118 = vmatprep.subr.mxu0 0.0
    %3119 = vmatpush2.msra.mxu0 0.0
    %3120 = vmatprep.subr.mxu0 0.0
    %3121 = vmatpush2.msra.mxu0 0.0
    %3122 = vmatprep.subr.mxu0 0.0
    %3123 = vmatpush2.msra.mxu0 0.0
    %3124 = vmatprep.subr.mxu0 0.0
    %3125 = vmatpush2.msra.mxu0 0.0
    %3126 = vmatprep.subr.mxu0 0.0
    %3127 = vmatpush2.msra.mxu0 0.0
    %3128 = vmatprep.subr.mxu0 0.0
    %3129 = vmatpush2.msra.mxu0 0.0
    %3130 = vmatprep.subr.mxu0 0.0
    %3131 = vmatpush2.msra.mxu0 0.0
    %3132 = vmatprep.subr.mxu0 0.0
    %3133 = vmatpush2.msra.mxu0 0.0
    %3134 = vmatprep.subr.mxu0 0.0
    %3135 = vmatpush2.msra.mxu0 0.0
    %3136 = vmatprep.subr.mxu0 0.0
    %3137 = vmatpush2.msra.mxu0 0.0
    %3138 = vmatprep.subr.mxu0 0.0
    %3139 = vmatpush2.msra.mxu0 0.0
    %3140 = vmatprep.subr.mxu0 0.0
    %3141 = vmatpush2.msra.mxu0 0.0
    %3142 = vmatprep.subr.mxu0 0.0
    %3143 = vmatpush2.msra.mxu0 0.0
    %3144 = vmatprep.subr.mxu0 0.0
    %3145 = vmatpush2.msra.mxu0 0.0
    %3146 = vmatprep.subr.mxu0 0.0
    %3147 = vmatpush2.msra.mxu0 0.0
    %3148 = vmatprep.mubr.f32.mxu0 0.0
    %3149 = vmatmul.mubr.f32.gmra.mxu0 %v3072
    %v3150 = vpop.f32.mrf.mxu0
    %v3151 = vadd.f32 0.0, %v3150
    %v3152 = vpop.f32.mrf.mxu0
    %3153 = vmatprep.mubr.f32.mxu0 0.0
    %3154 = vmatmul.mubr.f32.gmra.mxu0 %v3074
    %v3155 = vpop.f32.mrf.mxu0
    %v3156 = vadd.f32 0.0, %v3155
    %v3157 = vpop.f32.mrf.mxu0
    %3158 = vmatprep.mubr.f32.mxu0 0.0
    %3159 = vmatmul.mubr.f32.gmra.mxu0 %v3076
    %v3160 = vpop.f32.mrf.mxu0
    %v3161 = vadd.f32 0.0, %v3160
    %v3162 = vpop.f32.mrf.mxu0
    %3163 = vmatprep.mubr.f32.mxu0 0.0
    %3164 = vmatmul.mubr.f32.gmra.mxu0 %v3078
    %v3165 = vpop.f32.mrf.mxu0
    %v3166 = vadd.f32 0.0, %v3165
    %v3167 = vpop.f32.mrf.mxu0
    %3168 = vmatprep.mubr.f32.mxu0 0.0
    %3169 = vmatmul.mubr.f32.gmra.mxu0 %v3080
    %v3170 = vpop.f32.mrf.mxu0
    %v3171 = vadd.f32 0.0, %v3170
    %v3172 = vpop.f32.mrf.mxu0
    %3173 = vmatprep.mubr.f32.mxu0 0.0
    %3174 = vmatmul.mubr.f32.gmra.mxu0 %v3082
    %v3175 = vpop.f32.mrf.mxu0
    %v3176 = vadd.f32 0.0, %v3175
    %v3177 = vpop.f32.mrf.mxu0
    %3178 = vdwg.mxu0
    %v3179 = vadd.f32 %v3051, %v3151
    %v3180 = vadd.f32 %v3052, %v3156
    %v3181 = vadd.f32 %v3053, %v3161
    %v3182 = vadd.f32 %v3054, %v3166
    %v3183 = vadd.f32 %v3055, %v3171
    %v3184 = vadd.f32 %v3056, %v3176
    %s3185 = scalar_lea.vmem [#allocation14], 48
    %v3186 = vld [vmem:[%s3185] sm:$0xff]
    %v3187 = vrot.slane %v2426, 7
    %v3188 = vrot.slane %v2415, 7
    %v3189 = vsel %vm1245, %v3187, %v3188
    %v3190 = vrot.slane %v2417, 7
    %v3191 = vsel %vm1245, %v3188, %v3190
    %v3192 = vrot.slane %v2419, 7
    %v3193 = vsel %vm1245, %v3190, %v3192
    %v3194 = vrot.slane %v2421, 7
    %v3195 = vsel %vm1245, %v3192, %v3194
    %v3196 = vrot.slane %v2423, 7
    %v3197 = vsel %vm1245, %v3194, %v3196
    %v3198 = vrot.slane %v2427, 7
    %v3199 = vsel %vm1245, %v3196, %v3198
    %v3200 = vsel %vm1679, %v3189, 0
    %v3202 = vsel %vm1679, %v3191, 0
    %v3204 = vsel %vm1679, %v3193, 0
    %v3206 = vsel %vm1679, %v3195, 0
    %v3208 = vsel %vm1679, %v3197, 0
    %v3210 = vsel %vm1679, %v3199, 0
    %3212 = vmatprep.subr.mxu0 0.0
    %3213 = vmatpush1.msra.mxu0 0.0
    %3214 = vmatprep.subr.mxu0 0.0
    %3215 = vmatpush1.msra.mxu0 0.0
    %3216 = vmatprep.subr.mxu0 0.0
    %3217 = vmatpush1.msra.mxu0 0.0
    %3218 = vmatprep.subr.mxu0 0.0
    %3219 = vmatpush1.msra.mxu0 0.0
    %3220 = vmatprep.subr.mxu0 0.0
    %3221 = vmatpush1.msra.mxu0 0.0
    %3222 = vmatprep.subr.mxu0 0.0
    %3223 = vmatpush1.msra.mxu0 0.0
    %3224 = vmatprep.subr.mxu0 0.0
    %3225 = vmatpush1.msra.mxu0 0.0
    %3226 = vmatprep.subr.mxu0 0.0
    %3227 = vmatpush1.msra.mxu0 0.0
    %3228 = vmatprep.subr.mxu0 0.0
    %3229 = vmatpush1.msra.mxu0 0.0
    %3230 = vmatprep.subr.mxu0 0.0
    %3231 = vmatpush1.msra.mxu0 0.0
    %3232 = vmatprep.subr.mxu0 0.0
    %3233 = vmatpush1.msra.mxu0 0.0
    %3234 = vmatprep.subr.mxu0 0.0
    %3235 = vmatpush1.msra.mxu0 0.0
    %3236 = vmatprep.subr.mxu0 0.0
    %3237 = vmatpush1.msra.mxu0 0.0
    %3238 = vmatprep.subr.mxu0 0.0
    %3239 = vmatpush1.msra.mxu0 0.0
    %3240 = vmatprep.subr.mxu0 0.0
    %3241 = vmatpush1.msra.mxu0 0.0
    %3242 = vmatprep.subr.mxu0 0.0
    %3243 = vmatpush1.msra.mxu0 %v3186
    %3244 = vmatprep.subr.mxu0 0.0
    %3245 = vmatpush2.msra.mxu0 0.0
    %3246 = vmatprep.subr.mxu0 0.0
    %3247 = vmatpush2.msra.mxu0 0.0
    %3248 = vmatprep.subr.mxu0 0.0
    %3249 = vmatpush2.msra.mxu0 0.0
    %3250 = vmatprep.subr.mxu0 0.0
    %3251 = vmatpush2.msra.mxu0 0.0
    %3252 = vmatprep.subr.mxu0 0.0
    %3253 = vmatpush2.msra.mxu0 0.0
    %3254 = vmatprep.subr.mxu0 0.0
    %3255 = vmatpush2.msra.mxu0 0.0
    %3256 = vmatprep.subr.mxu0 0.0
    %3257 = vmatpush2.msra.mxu0 0.0
    %3258 = vmatprep.subr.mxu0 0.0
    %3259 = vmatpush2.msra.mxu0 0.0
    %3260 = vmatprep.subr.mxu0 0.0
    %3261 = vmatpush2.msra.mxu0 0.0
    %3262 = vmatprep.subr.mxu0 0.0
    %3263 = vmatpush2.msra.mxu0 0.0
    %3264 = vmatprep.subr.mxu0 0.0
    %3265 = vmatpush2.msra.mxu0 0.0
    %3266 = vmatprep.subr.mxu0 0.0
    %3267 = vmatpush2.msra.mxu0 0.0
    %3268 = vmatprep.subr.mxu0 0.0
    %3269 = vmatpush2.msra.mxu0 0.0
    %3270 = vmatprep.subr.mxu0 0.0
    %3271 = vmatpush2.msra.mxu0 0.0
    %3272 = vmatprep.subr.mxu0 0.0
    %3273 = vmatpush2.msra.mxu0 0.0
    %3274 = vmatprep.subr.mxu0 0.0
    %3275 = vmatpush2.msra.mxu0 0.0
    %3276 = vmatprep.mubr.f32.mxu0 0.0
    %3277 = vmatmul.mubr.f32.gmra.mxu0 %v3200
    %v3278 = vpop.f32.mrf.mxu0
    %v3279 = vadd.f32 0.0, %v3278
    %v3280 = vpop.f32.mrf.mxu0
    %3281 = vmatprep.mubr.f32.mxu0 0.0
    %3282 = vmatmul.mubr.f32.gmra.mxu0 %v3202
    %v3283 = vpop.f32.mrf.mxu0
    %v3284 = vadd.f32 0.0, %v3283
    %v3285 = vpop.f32.mrf.mxu0
    %3286 = vmatprep.mubr.f32.mxu0 0.0
    %3287 = vmatmul.mubr.f32.gmra.mxu0 %v3204
    %v3288 = vpop.f32.mrf.mxu0
    %v3289 = vadd.f32 0.0, %v3288
    %v3290 = vpop.f32.mrf.mxu0
    %3291 = vmatprep.mubr.f32.mxu0 0.0
    %3292 = vmatmul.mubr.f32.gmra.mxu0 %v3206
    %v3293 = vpop.f32.mrf.mxu0
    %v3294 = vadd.f32 0.0, %v3293
    %v3295 = vpop.f32.mrf.mxu0
    %3296 = vmatprep.mubr.f32.mxu0 0.0
    %3297 = vmatmul.mubr.f32.gmra.mxu0 %v3208
    %v3298 = vpop.f32.mrf.mxu0
    %v3299 = vadd.f32 0.0, %v3298
    %v3300 = vpop.f32.mrf.mxu0
    %3301 = vmatprep.mubr.f32.mxu0 0.0
    %3302 = vmatmul.mubr.f32.gmra.mxu0 %v3210
    %v3303 = vpop.f32.mrf.mxu0
    %v3304 = vadd.f32 0.0, %v3303
    %v3305 = vpop.f32.mrf.mxu0
    %3306 = vdwg.mxu0
    %v3307 = vadd.f32 %v3179, %v3279
    %v3308 = vadd.f32 %v3180, %v3284
    %v3309 = vadd.f32 %v3181, %v3289
    %v3310 = vadd.f32 %v3182, %v3294
    %v3311 = vadd.f32 %v3183, %v3299
    %v3312 = vadd.f32 %v3184, %v3304
    %s3313 = scalar_lea.vmem [#allocation14], 56
    %v3314 = vld [vmem:[%s3313] sm:$0xff]
    %v3315 = vsel %vm1679, %v2415, 0
    %v3317 = vsel %vm1679, %v2417, 0
    %v3319 = vsel %vm1679, %v2419, 0
    %v3321 = vsel %vm1679, %v2421, 0
    %v3323 = vsel %vm1679, %v2423, 0
    %v3325 = vsel %vm1679, %v2427, 0
    %3327 = vmatprep.subr.mxu0 0.0
    %3328 = vmatpush1.msra.mxu0 0.0
    %3329 = vmatprep.subr.mxu0 0.0
    %3330 = vmatpush1.msra.mxu0 0.0
    %3331 = vmatprep.subr.mxu0 0.0
    %3332 = vmatpush1.msra.mxu0 0.0
    %3333 = vmatprep.subr.mxu0 0.0
    %3334 = vmatpush1.msra.mxu0 0.0
    %3335 = vmatprep.subr.mxu0 0.0
    %3336 = vmatpush1.msra.mxu0 0.0
    %3337 = vmatprep.subr.mxu0 0.0
    %3338 = vmatpush1.msra.mxu0 0.0
    %3339 = vmatprep.subr.mxu0 0.0
    %3340 = vmatpush1.msra.mxu0 0.0
    %3341 = vmatprep.subr.mxu0 0.0
    %3342 = vmatpush1.msra.mxu0 0.0
    %3343 = vmatprep.subr.mxu0 0.0
    %3344 = vmatpush1.msra.mxu0 0.0
    %3345 = vmatprep.subr.mxu0 0.0
    %3346 = vmatpush1.msra.mxu0 0.0
    %3347 = vmatprep.subr.mxu0 0.0
    %3348 = vmatpush1.msra.mxu0 0.0
    %3349 = vmatprep.subr.mxu0 0.0
    %3350 = vmatpush1.msra.mxu0 0.0
    %3351 = vmatprep.subr.mxu0 0.0
    %3352 = vmatpush1.msra.mxu0 0.0
    %3353 = vmatprep.subr.mxu0 0.0
    %3354 = vmatpush1.msra.mxu0 0.0
    %3355 = vmatprep.subr.mxu0 0.0
    %3356 = vmatpush1.msra.mxu0 0.0
    %3357 = vmatprep.subr.mxu0 0.0
    %3358 = vmatpush1.msra.mxu0 %v3314
    %3359 = vmatprep.subr.mxu0 0.0
    %3360 = vmatpush2.msra.mxu0 0.0
    %3361 = vmatprep.subr.mxu0 0.0
    %3362 = vmatpush2.msra.mxu0 0.0
    %3363 = vmatprep.subr.mxu0 0.0
    %3364 = vmatpush2.msra.mxu0 0.0
    %3365 = vmatprep.subr.mxu0 0.0
    %3366 = vmatpush2.msra.mxu0 0.0
    %3367 = vmatprep.subr.mxu0 0.0
    %3368 = vmatpush2.msra.mxu0 0.0
    %3369 = vmatprep.subr.mxu0 0.0
    %3370 = vmatpush2.msra.mxu0 0.0
    %3371 = vmatprep.subr.mxu0 0.0
    %3372 = vmatpush2.msra.mxu0 0.0
    %3373 = vmatprep.subr.mxu0 0.0
    %3374 = vmatpush2.msra.mxu0 0.0
    %3375 = vmatprep.subr.mxu0 0.0
    %3376 = vmatpush2.msra.mxu0 0.0
    %3377 = vmatprep.subr.mxu0 0.0
    %3378 = vmatpush2.msra.mxu0 0.0
    %3379 = vmatprep.subr.mxu0 0.0
    %3380 = vmatpush2.msra.mxu0 0.0
    %3381 = vmatprep.subr.mxu0 0.0
    %3382 = vmatpush2.msra.mxu0 0.0
    %3383 = vmatprep.subr.mxu0 0.0
    %3384 = vmatpush2.msra.mxu0 0.0
    %3385 = vmatprep.subr.mxu0 0.0
    %3386 = vmatpush2.msra.mxu0 0.0
    %3387 = vmatprep.subr.mxu0 0.0
    %3388 = vmatpush2.msra.mxu0 0.0
    %3389 = vmatprep.subr.mxu0 0.0
    %3390 = vmatpush2.msra.mxu0 0.0
    %3391 = vmatprep.mubr.f32.mxu0 0.0
    %3392 = vmatmul.mubr.f32.gmra.mxu0 %v3315
    %v3393 = vpop.f32.mrf.mxu0
    %v3394 = vadd.f32 0.0, %v3393
    %v3395 = vpop.f32.mrf.mxu0
    %3396 = vmatprep.mubr.f32.mxu0 0.0
    %3397 = vmatmul.mubr.f32.gmra.mxu0 %v3317
    %v3398 = vpop.f32.mrf.mxu0
    %v3399 = vadd.f32 0.0, %v3398
    %v3400 = vpop.f32.mrf.mxu0
    %3401 = vmatprep.mubr.f32.mxu0 0.0
    %3402 = vmatmul.mubr.f32.gmra.mxu0 %v3319
    %v3403 = vpop.f32.mrf.mxu0
    %v3404 = vadd.f32 0.0, %v3403
    %v3405 = vpop.f32.mrf.mxu0
    %3406 = vmatprep.mubr.f32.mxu0 0.0
    %3407 = vmatmul.mubr.f32.gmra.mxu0 %v3321
    %v3408 = vpop.f32.mrf.mxu0
    %v3409 = vadd.f32 0.0, %v3408
    %v3410 = vpop.f32.mrf.mxu0
    %3411 = vmatprep.mubr.f32.mxu0 0.0
    %3412 = vmatmul.mubr.f32.gmra.mxu0 %v3323
    %v3413 = vpop.f32.mrf.mxu0
    %v3414 = vadd.f32 0.0, %v3413
    %v3415 = vpop.f32.mrf.mxu0
    %3416 = vmatprep.mubr.f32.mxu0 0.0
    %3417 = vmatmul.mubr.f32.gmra.mxu0 %v3325
    %v3418 = vpop.f32.mrf.mxu0
    %v3419 = vadd.f32 0.0, %v3418
    %v3420 = vpop.f32.mrf.mxu0
    %3421 = vdwg.mxu0
    %v3422 = vadd.f32 %v3307, %v3394
    %v3423 = vadd.f32 %v3308, %v3399
    %v3424 = vadd.f32 %v3309, %v3404
    %v3425 = vadd.f32 %v3310, %v3409
    %v3426 = vadd.f32 %v3311, %v3414
    %v3427 = vadd.f32 %v3312, %v3419
    %v3428 = vld [vmem:[#allocation16] sm:$0x1]
    %v3430 = vlaneseq
    %v3431 = vshrl.u32 %v3430, 7
    %v3432 = vsub.s32 0, %v3431
    %v3433 = vrot.slane %v3428, %v3432
    %v3435 = vadd.f32 %v3422, %v3433
    %v3436 = vadd.f32 %v3423, %v3433
    %v3437 = vadd.f32 %v3424, %v3433
    %v3438 = vadd.f32 %v3425, %v3433
    %v3439 = vadd.f32 %v3426, %v3433
    %v3440 = vadd.f32 %v3427, %v3433
    %v3441 = vmul.f32 %v3435, %v1509
    %v3442 = vmul.f32 %v3436, %v1514
    %v3443 = vmul.f32 %v3437, %v1519
    %v3444 = vmul.f32 %v3438, %v1524
    %v3445 = vmul.f32 %v3439, %v1529
    %v3446 = vmul.f32 %v3440, %v1534
    %v3447 = vsel %vm1679, %v3441, 0.0
    %v3448 = vsel %vm1679, %v3442, 0.0
    %v3449 = vadd.f32 %v3447, %v3448
    %v3450 = vsel %vm1679, %v3443, 0.0
    %v3451 = vadd.f32 %v3449, %v3450
    %v3452 = vsel %vm1679, %v3444, 0.0
    %v3453 = vadd.f32 %v3451, %v3452
    %v3454 = vsel %vm1679, %v3445, 0.0
    %v3455 = vadd.f32 %v3453, %v3454
    %v3456 = vsel %vm1679, %v3446, 0.0
    %v3457 = vadd.f32 %v3455, %v3456
    %v3458 = vrot.slane %v3457, 4
    %v3459 = vadd.f32 %v3457, %v3458
    %v3460 = vrot.slane %v3459, 2
    %v3461 = vadd.f32 %v3459, %v3460
    %v3462 = vrot.slane %v3461, 1
    %v3463 = vadd.f32 %v3461, %v3462
    %v3464 = vmul.f32 %v3463, 0.03125
    %v3465 = vsub.f32 %v3435, %v3464
    %v3466 = vsub.f32 %v3436, %v3464
    %v3467 = vsub.f32 %v3437, %v3464
    %v3468 = vsub.f32 %v3438, %v3464
    %v3469 = vsub.f32 %v3439, %v3464
    %v3470 = vsub.f32 %v3440, %v3464
    %v3471 = vmul.f32 %v3465, %v1509
    %v3472 = vmul.f32 %v3466, %v1514
    %v3473 = vmul.f32 %v3467, %v1519
    %v3474 = vmul.f32 %v3468, %v1524
    %v3475 = vmul.f32 %v3469, %v1529
    %v3476 = vmul.f32 %v3470, %v1534
    %v3477 = vmul.f32 %v3471, %v3471
    %v3478 = vmul.f32 %v3472, %v3472
    %v3479 = vmul.f32 %v3473, %v3473
    %v3480 = vmul.f32 %v3474, %v3474
    %v3481 = vmul.f32 %v3475, %v3475
    %v3482 = vmul.f32 %v3476, %v3476
    %v3483 = vsel %vm1679, %v3477, 0.0
    %v3484 = vsel %vm1679, %v3478, 0.0
    %v3485 = vadd.f32 %v3483, %v3484
    %v3486 = vsel %vm1679, %v3479, 0.0
    %v3487 = vadd.f32 %v3485, %v3486
    %v3488 = vsel %vm1679, %v3480, 0.0
    %v3489 = vadd.f32 %v3487, %v3488
    %v3490 = vsel %vm1679, %v3481, 0.0
    %v3491 = vadd.f32 %v3489, %v3490
    %v3492 = vsel %vm1679, %v3482, 0.0
    %v3493 = vadd.f32 %v3491, %v3492
    %v3494 = vrot.slane %v3493, 4
    %v3495 = vadd.f32 %v3493, %v3494
    %v3496 = vrot.slane %v3495, 2
    %v3497 = vadd.f32 %v3495, %v3496
    %v3498 = vrot.slane %v3497, 1
    %v3499 = vadd.f32 %v3497, %v3498
    %v3500 = vmul.f32 %v3499, 0.03125
    %v3501 = vld [vmem:[#allocation17] sm:$0x1]
    %v3502 = vadd.f32 %v3500, 1e-05
    %v3503 = vrsqrt.pop %v3502
    %v3504 = vmul.f32 %v3501, %v3503
    %v3505 = vld [vmem:[#allocation19] sm:$0x1]
    %v3506 = vmul.f32 %v3464, %v3504
    %v3507 = vsub.f32 %v3505, %v3506
    %v3509 = vlaneseq
    %v3510 = vshrl.u32 %v3509, 7
    %v3511 = vsub.s32 0, %v3510
    %v3512 = vrot.slane %v3504, %v3511
    %v3514 = vmul.f32 %v3435, %v3512
    %v3515 = vmul.f32 %v3436, %v3512
    %v3516 = vmul.f32 %v3437, %v3512
    %v3517 = vmul.f32 %v3438, %v3512
    %v3518 = vmul.f32 %v3439, %v3512
    %v3519 = vmul.f32 %v3440, %v3512
    %v3521 = vlaneseq
    %v3522 = vshrl.u32 %v3521, 7
    %v3523 = vsub.s32 0, %v3522
    %v3524 = vrot.slane %v3507, %v3523
    %v3526 = vadd.f32 %v3514, %v3524
    %v3527 = vadd.f32 %v3515, %v3524
    %v3528 = vadd.f32 %v3516, %v3524
    %v3529 = vadd.f32 %v3517, %v3524
    %v3530 = vadd.f32 %v3518, %v3524
    %v3531 = vadd.f32 %v3519, %v3524
    %v3532 = vmul.f32 %v3526, %v1509
    %v3533 = vmul.f32 %v3527, %v1514
    %v3534 = vmul.f32 %v3528, %v1519
    %v3535 = vmul.f32 %v3529, %v1524
    %v3536 = vmul.f32 %v3530, %v1529
    %v3537 = vmul.f32 %v3531, %v1534
    %3544 = vrot.lane.b32.xlu0 %v3532, 8
    %v3545 = vpop.permute.xlu0 %3544
    %3546 = vrot.lane.b32.xlu0 %v3533, 8
    %v3547 = vpop.permute.xlu0 %3546
    %3548 = vrot.lane.b32.xlu0 %v3534, 8
    %v3549 = vpop.permute.xlu0 %3548
    %3550 = vrot.lane.b32.xlu0 %v3535, 8
    %v3551 = vpop.permute.xlu0 %3550
    %3552 = vrot.lane.b32.xlu0 %v3536, 8
    %v3553 = vpop.permute.xlu0 %3552
    %3554 = vrot.lane.b32.xlu0 %v3537, 8
    %v3555 = vpop.permute.xlu0 %3554
    %v3562 = vadd.f32 %v1628, %v3545
    %v3563 = vadd.f32 %v1629, %v3547
    %v3564 = vadd.f32 %v1630, %v3549
    %v3565 = vadd.f32 %v1631, %v3551
    %v3566 = vadd.f32 %v1632, %v3553
    %v3567 = vadd.f32 %v1633, %v3555
    %v3568 = vmax.f32 %v3562, 0.0
    %v3569 = vmax.f32 %v3563, 0.0
    %v3570 = vmax.f32 %v3564, 0.0
    %v3571 = vmax.f32 %v3565, 0.0
    %v3572 = vmax.f32 %v3566, 0.0
    %v3573 = vmax.f32 %v3567, 0.0
    %v3580 = vrot.slane %v3568, 4
    %v3581 = vrot.slane %v3569, 4
    %v3582 = vsel %vm446, %v3580, %v3581
    %v3583 = vrot.slane %v3570, 4
    %v3584 = vsel %vm446, %v3581, %v3583
    %v3585 = vrot.slane %v3571, 4
    %v3586 = vsel %vm446, %v3583, %v3585
    %v3587 = vrot.slane %v3572, 4
    %v3588 = vsel %vm446, %v3585, %v3587
    %v3589 = vrot.slane %v3573, 4
    %v3590 = vsel %vm446, %v3587, %v3589
    %3591 = vrot.lane.b32.xlu0 %v3580, 120
    %v3592 = vpop.permute.xlu0 %3591
    %3593 = vrot.lane.b32.xlu0 %v3582, 120
    %v3594 = vpop.permute.xlu0 %3593
    %3595 = vrot.lane.b32.xlu0 %v3584, 120
    %v3596 = vpop.permute.xlu0 %3595
    %3597 = vrot.lane.b32.xlu0 %v3586, 120
    %v3598 = vpop.permute.xlu0 %3597
    %3599 = vrot.lane.b32.xlu0 %v3588, 120
    %v3600 = vpop.permute.xlu0 %3599
    %3601 = vrot.lane.b32.xlu0 %v3590, 120
    %v3602 = vpop.permute.xlu0 %3601
    %3603 = vrot.lane.b32.xlu0 %v3589, 120
    %v3604 = vpop.permute.xlu0 %3603
    %v3607 = vsel %vm446, 0.0, %v3592
    %v3608 = vsel %vm446, %v3604, 0.0
    %v3609 = vld [vmem:[#allocation20] sm:$0xff]
    %s3610 = scalar_lea.vmem [#allocation20], 8
    %v3611 = vld [vmem:[%s3610] sm:$0xff]
    %v3614 = vrot.slane %v3607, 2
    %v3615 = vrot.slane %v3594, 2
    %v3616 = vsel %vm467, %v3614, %v3615
    %v3617 = vrot.slane %v3596, 2
    %v3618 = vsel %vm467, %v3615, %v3617
    %v3619 = vrot.slane %v3598, 2
    %v3620 = vsel %vm467, %v3617, %v3619
    %v3621 = vrot.slane %v3600, 2
    %v3622 = vsel %vm467, %v3619, %v3621
    %v3623 = vrot.slane %v3602, 2
    %v3624 = vsel %vm467, %v3621, %v3623
    %v3625 = vrot.slane %v3608, 2
    %v3626 = vsel %vm467, %v3623, %v3625
    %v3627 = vsel %vm1679, %v3616, 0
    %v3629 = vsel %vm1679, %v3618, 0
    %v3631 = vsel %vm1679, %v3620, 0
    %v3633 = vsel %vm1679, %v3622, 0
    %v3635 = vsel %vm1679, %v3624, 0
    %v3637 = vsel %vm1679, %v3626, 0
    %3639 = vmatprep.subr.mxu0 0.0
    %3640 = vmatpush1.msra.mxu0 0.0
    %3641 = vmatprep.subr.mxu0 0.0
    %3642 = vmatpush1.msra.mxu0 0.0
    %3643 = vmatprep.subr.mxu0 0.0
    %3644 = vmatpush1.msra.mxu0 0.0
    %3645 = vmatprep.subr.mxu0 0.0
    %3646 = vmatpush1.msra.mxu0 0.0
    %3647 = vmatprep.subr.mxu0 0.0
    %3648 = vmatpush1.msra.mxu0 0.0
    %3649 = vmatprep.subr.mxu0 0.0
    %3650 = vmatpush1.msra.mxu0 0.0
    %3651 = vmatprep.subr.mxu0 0.0
    %3652 = vmatpush1.msra.mxu0 0.0
    %3653 = vmatprep.subr.mxu0 0.0
    %3654 = vmatpush1.msra.mxu0 0.0
    %3655 = vmatprep.subr.mxu0 0.0
    %3656 = vmatpush1.msra.mxu0 0.0
    %3657 = vmatprep.subr.mxu0 0.0
    %3658 = vmatpush1.msra.mxu0 0.0
    %3659 = vmatprep.subr.mxu0 0.0
    %3660 = vmatpush1.msra.mxu0 0.0
    %3661 = vmatprep.subr.mxu0 0.0
    %3662 = vmatpush1.msra.mxu0 0.0
    %3663 = vmatprep.subr.mxu0 0.0
    %3664 = vmatpush1.msra.mxu0 0.0
    %3665 = vmatprep.subr.mxu0 0.0
    %3666 = vmatpush1.msra.mxu0 0.0
    %3667 = vmatprep.subr.mxu0 0.0
    %3668 = vmatpush1.msra.mxu0 0.0
    %3669 = vmatprep.subr.mxu0 0.0
    %3670 = vmatpush1.msra.mxu0 %v3611
    %3671 = vmatprep.subr.mxu0 0.0
    %3672 = vmatpush2.msra.mxu0 0.0
    %3673 = vmatprep.subr.mxu0 0.0
    %3674 = vmatpush2.msra.mxu0 0.0
    %3675 = vmatprep.subr.mxu0 0.0
    %3676 = vmatpush2.msra.mxu0 0.0
    %3677 = vmatprep.subr.mxu0 0.0
    %3678 = vmatpush2.msra.mxu0 0.0
    %3679 = vmatprep.subr.mxu0 0.0
    %3680 = vmatpush2.msra.mxu0 0.0
    %3681 = vmatprep.subr.mxu0 0.0
    %3682 = vmatpush2.msra.mxu0 0.0
    %3683 = vmatprep.subr.mxu0 0.0
    %3684 = vmatpush2.msra.mxu0 0.0
    %3685 = vmatprep.subr.mxu0 0.0
    %3686 = vmatpush2.msra.mxu0 0.0
    %3687 = vmatprep.subr.mxu0 0.0
    %3688 = vmatpush2.msra.mxu0 0.0
    %3689 = vmatprep.subr.mxu0 0.0
    %3690 = vmatpush2.msra.mxu0 0.0
    %3691 = vmatprep.subr.mxu0 0.0
    %3692 = vmatpush2.msra.mxu0 0.0
    %3693 = vmatprep.subr.mxu0 0.0
    %3694 = vmatpush2.msra.mxu0 0.0
    %3695 = vmatprep.subr.mxu0 0.0
    %3696 = vmatpush2.msra.mxu0 0.0
    %3697 = vmatprep.subr.mxu0 0.0
    %3698 = vmatpush2.msra.mxu0 0.0
    %3699 = vmatprep.subr.mxu0 0.0
    %3700 = vmatpush2.msra.mxu0 0.0
    %3701 = vmatprep.subr.mxu0 0.0
    %3702 = vmatpush2.msra.mxu0 0.0
    %3703 = vmatprep.mubr.f32.mxu0 0.0
    %3704 = vmatmul.mubr.f32.gmra.mxu0 %v3627
    %v3705 = vpop.f32.mrf.mxu0
    %v3706 = vadd.f32 0.0, %v3705
    %v3707 = vpop.f32.mrf.mxu0
    %3708 = vmatprep.mubr.f32.mxu0 0.0
    %3709 = vmatmul.mubr.f32.gmra.mxu0 %v3629
    %v3710 = vpop.f32.mrf.mxu0
    %v3711 = vadd.f32 0.0, %v3710
    %v3712 = vpop.f32.mrf.mxu0
    %3713 = vmatprep.mubr.f32.mxu0 0.0
    %3714 = vmatmul.mubr.f32.gmra.mxu0 %v3631
    %v3715 = vpop.f32.mrf.mxu0
    %v3716 = vadd.f32 0.0, %v3715
    %v3717 = vpop.f32.mrf.mxu0
    %3718 = vmatprep.mubr.f32.mxu0 0.0
    %3719 = vmatmul.mubr.f32.gmra.mxu0 %v3633
    %v3720 = vpop.f32.mrf.mxu0
    %v3721 = vadd.f32 0.0, %v3720
    %v3722 = vpop.f32.mrf.mxu0
    %3723 = vmatprep.mubr.f32.mxu0 0.0
    %3724 = vmatmul.mubr.f32.gmra.mxu0 %v3635
    %v3725 = vpop.f32.mrf.mxu0
    %v3726 = vadd.f32 0.0, %v3725
    %v3727 = vpop.f32.mrf.mxu0
    %3728 = vmatprep.mubr.f32.mxu0 0.0
    %3729 = vmatmul.mubr.f32.gmra.mxu0 %v3637
    %v3730 = vpop.f32.mrf.mxu0
    %v3731 = vadd.f32 0.0, %v3730
    %v3732 = vpop.f32.mrf.mxu0
    %3733 = vdwg.mxu0
    %v3734 = vrot.slane %v3607, 1
    %v3735 = vrot.slane %v3594, 1
    %v3736 = vsel %vm592, %v3734, %v3735
    %v3737 = vrot.slane %v3596, 1
    %v3738 = vsel %vm592, %v3735, %v3737
    %v3739 = vrot.slane %v3598, 1
    %v3740 = vsel %vm592, %v3737, %v3739
    %v3741 = vrot.slane %v3600, 1
    %v3742 = vsel %vm592, %v3739, %v3741
    %v3743 = vrot.slane %v3602, 1
    %v3744 = vsel %vm592, %v3741, %v3743
    %v3745 = vrot.slane %v3608, 1
    %v3746 = vsel %vm592, %v3743, %v3745
    %v3747 = vsel %vm1679, %v3736, 0
    %v3749 = vsel %vm1679, %v3738, 0
    %v3751 = vsel %vm1679, %v3740, 0
    %v3753 = vsel %vm1679, %v3742, 0
    %v3755 = vsel %vm1679, %v3744, 0
    %v3757 = vsel %vm1679, %v3746, 0
    %3759 = vmatprep.subr.mxu0 0.0
    %3760 = vmatpush1.msra.mxu0 0.0
    %3761 = vmatprep.subr.mxu0 0.0
    %3762 = vmatpush1.msra.mxu0 0.0
    %3763 = vmatprep.subr.mxu0 0.0
    %3764 = vmatpush1.msra.mxu0 0.0
    %3765 = vmatprep.subr.mxu0 0.0
    %3766 = vmatpush1.msra.mxu0 0.0
    %3767 = vmatprep.subr.mxu0 0.0
    %3768 = vmatpush1.msra.mxu0 0.0
    %3769 = vmatprep.subr.mxu0 0.0
    %3770 = vmatpush1.msra.mxu0 0.0
    %3771 = vmatprep.subr.mxu0 0.0
    %3772 = vmatpush1.msra.mxu0 0.0
    %3773 = vmatprep.subr.mxu0 0.0
    %3774 = vmatpush1.msra.mxu0 0.0
    %3775 = vmatprep.subr.mxu0 0.0
    %3776 = vmatpush1.msra.mxu0 0.0
    %3777 = vmatprep.subr.mxu0 0.0
    %3778 = vmatpush1.msra.mxu0 0.0
    %3779 = vmatprep.subr.mxu0 0.0
    %3780 = vmatpush1.msra.mxu0 0.0
    %3781 = vmatprep.subr.mxu0 0.0
    %3782 = vmatpush1.msra.mxu0 0.0
    %3783 = vmatprep.subr.mxu0 0.0
    %3784 = vmatpush1.msra.mxu0 0.0
    %3785 = vmatprep.subr.mxu0 0.0
    %3786 = vmatpush1.msra.mxu0 0.0
    %3787 = vmatprep.subr.mxu0 0.0
    %3788 = vmatpush1.msra.mxu0 0.0
    %3789 = vmatprep.subr.mxu0 0.0
    %3790 = vmatpush1.msra.mxu0 %v3609
    %3791 = vmatprep.subr.mxu0 0.0
    %3792 = vmatpush2.msra.mxu0 0.0
    %3793 = vmatprep.subr.mxu0 0.0
    %3794 = vmatpush2.msra.mxu0 0.0
    %3795 = vmatprep.subr.mxu0 0.0
    %3796 = vmatpush2.msra.mxu0 0.0
    %3797 = vmatprep.subr.mxu0 0.0
    %3798 = vmatpush2.msra.mxu0 0.0
    %3799 = vmatprep.subr.mxu0 0.0
    %3800 = vmatpush2.msra.mxu0 0.0
    %3801 = vmatprep.subr.mxu0 0.0
    %3802 = vmatpush2.msra.mxu0 0.0
    %3803 = vmatprep.subr.mxu0 0.0
    %3804 = vmatpush2.msra.mxu0 0.0
    %3805 = vmatprep.subr.mxu0 0.0
    %3806 = vmatpush2.msra.mxu0 0.0
    %3807 = vmatprep.subr.mxu0 0.0
    %3808 = vmatpush2.msra.mxu0 0.0
    %3809 = vmatprep.subr.mxu0 0.0
    %3810 = vmatpush2.msra.mxu0 0.0
    %3811 = vmatprep.subr.mxu0 0.0
    %3812 = vmatpush2.msra.mxu0 0.0
    %3813 = vmatprep.subr.mxu0 0.0
    %3814 = vmatpush2.msra.mxu0 0.0
    %3815 = vmatprep.subr.mxu0 0.0
    %3816 = vmatpush2.msra.mxu0 0.0
    %3817 = vmatprep.subr.mxu0 0.0
    %3818 = vmatpush2.msra.mxu0 0.0
    %3819 = vmatprep.subr.mxu0 0.0
    %3820 = vmatpush2.msra.mxu0 0.0
    %3821 = vmatprep.subr.mxu0 0.0
    %3822 = vmatpush2.msra.mxu0 0.0
    %3823 = vmatprep.mubr.f32.mxu0 0.0
    %3824 = vmatmul.mubr.f32.gmra.mxu0 %v3747
    %v3825 = vpop.f32.mrf.mxu0
    %v3826 = vadd.f32 %v3706, %v3825
    %v3827 = vpop.f32.mrf.mxu0
    %3828 = vmatprep.mubr.f32.mxu0 0.0
    %3829 = vmatmul.mubr.f32.gmra.mxu0 %v3749
    %v3830 = vpop.f32.mrf.mxu0
    %v3831 = vadd.f32 %v3711, %v3830
    %v3832 = vpop.f32.mrf.mxu0
    %3833 = vmatprep.mubr.f32.mxu0 0.0
    %3834 = vmatmul.mubr.f32.gmra.mxu0 %v3751
    %v3835 = vpop.f32.mrf.mxu0
    %v3836 = vadd.f32 %v3716, %v3835
    %v3837 = vpop.f32.mrf.mxu0
    %3838 = vmatprep.mubr.f32.mxu0 0.0
    %3839 = vmatmul.mubr.f32.gmra.mxu0 %v3753
    %v3840 = vpop.f32.mrf.mxu0
    %v3841 = vadd.f32 %v3721, %v3840
    %v3842 = vpop.f32.mrf.mxu0
    %3843 = vmatprep.mubr.f32.mxu0 0.0
    %3844 = vmatmul.mubr.f32.gmra.mxu0 %v3755
    %v3845 = vpop.f32.mrf.mxu0
    %v3846 = vadd.f32 %v3726, %v3845
    %v3847 = vpop.f32.mrf.mxu0
    %3848 = vmatprep.mubr.f32.mxu0 0.0
    %3849 = vmatmul.mubr.f32.gmra.mxu0 %v3757
    %v3850 = vpop.f32.mrf.mxu0
    %v3851 = vadd.f32 %v3731, %v3850
    %v3852 = vpop.f32.mrf.mxu0
    %3853 = vdwg.mxu0
    %s3854 = scalar_lea.vmem [#allocation20], 16
    %v3855 = vld [vmem:[%s3854] sm:$0xff]
    %v3856 = vrot.slane %v3607, 3
    %v3857 = vrot.slane %v3594, 3
    %v3858 = vsel %vm718, %v3856, %v3857
    %v3859 = vrot.slane %v3596, 3
    %v3860 = vsel %vm718, %v3857, %v3859
    %v3861 = vrot.slane %v3598, 3
    %v3862 = vsel %vm718, %v3859, %v3861
    %v3863 = vrot.slane %v3600, 3
    %v3864 = vsel %vm718, %v3861, %v3863
    %v3865 = vrot.slane %v3602, 3
    %v3866 = vsel %vm718, %v3863, %v3865
    %v3867 = vrot.slane %v3608, 3
    %v3868 = vsel %vm718, %v3865, %v3867
    %v3869 = vsel %vm1679, %v3858, 0
    %v3871 = vsel %vm1679, %v3860, 0
    %v3873 = vsel %vm1679, %v3862, 0
    %v3875 = vsel %vm1679, %v3864, 0
    %v3877 = vsel %vm1679, %v3866, 0
    %v3879 = vsel %vm1679, %v3868, 0
    %3881 = vmatprep.subr.mxu0 0.0
    %3882 = vmatpush1.msra.mxu0 0.0
    %3883 = vmatprep.subr.mxu0 0.0
    %3884 = vmatpush1.msra.mxu0 0.0
    %3885 = vmatprep.subr.mxu0 0.0
    %3886 = vmatpush1.msra.mxu0 0.0
    %3887 = vmatprep.subr.mxu0 0.0
    %3888 = vmatpush1.msra.mxu0 0.0
    %3889 = vmatprep.subr.mxu0 0.0
    %3890 = vmatpush1.msra.mxu0 0.0
    %3891 = vmatprep.subr.mxu0 0.0
    %3892 = vmatpush1.msra.mxu0 0.0
    %3893 = vmatprep.subr.mxu0 0.0
    %3894 = vmatpush1.msra.mxu0 0.0
    %3895 = vmatprep.subr.mxu0 0.0
    %3896 = vmatpush1.msra.mxu0 0.0
    %3897 = vmatprep.subr.mxu0 0.0
    %3898 = vmatpush1.msra.mxu0 0.0
    %3899 = vmatprep.subr.mxu0 0.0
    %3900 = vmatpush1.msra.mxu0 0.0
    %3901 = vmatprep.subr.mxu0 0.0
    %3902 = vmatpush1.msra.mxu0 0.0
    %3903 = vmatprep.subr.mxu0 0.0
    %3904 = vmatpush1.msra.mxu0 0.0
    %3905 = vmatprep.subr.mxu0 0.0
    %3906 = vmatpush1.msra.mxu0 0.0
    %3907 = vmatprep.subr.mxu0 0.0
    %3908 = vmatpush1.msra.mxu0 0.0
    %3909 = vmatprep.subr.mxu0 0.0
    %3910 = vmatpush1.msra.mxu0 0.0
    %3911 = vmatprep.subr.mxu0 0.0
    %3912 = vmatpush1.msra.mxu0 %v3855
    %3913 = vmatprep.subr.mxu0 0.0
    %3914 = vmatpush2.msra.mxu0 0.0
    %3915 = vmatprep.subr.mxu0 0.0
    %3916 = vmatpush2.msra.mxu0 0.0
    %3917 = vmatprep.subr.mxu0 0.0
    %3918 = vmatpush2.msra.mxu0 0.0
    %3919 = vmatprep.subr.mxu0 0.0
    %3920 = vmatpush2.msra.mxu0 0.0
    %3921 = vmatprep.subr.mxu0 0.0
    %3922 = vmatpush2.msra.mxu0 0.0
    %3923 = vmatprep.subr.mxu0 0.0
    %3924 = vmatpush2.msra.mxu0 0.0
    %3925 = vmatprep.subr.mxu0 0.0
    %3926 = vmatpush2.msra.mxu0 0.0
    %3927 = vmatprep.subr.mxu0 0.0
    %3928 = vmatpush2.msra.mxu0 0.0
    %3929 = vmatprep.subr.mxu0 0.0
    %3930 = vmatpush2.msra.mxu0 0.0
    %3931 = vmatprep.subr.mxu0 0.0
    %3932 = vmatpush2.msra.mxu0 0.0
    %3933 = vmatprep.subr.mxu0 0.0
    %3934 = vmatpush2.msra.mxu0 0.0
    %3935 = vmatprep.subr.mxu0 0.0
    %3936 = vmatpush2.msra.mxu0 0.0
    %3937 = vmatprep.subr.mxu0 0.0
    %3938 = vmatpush2.msra.mxu0 0.0
    %3939 = vmatprep.subr.mxu0 0.0
    %3940 = vmatpush2.msra.mxu0 0.0
    %3941 = vmatprep.subr.mxu0 0.0
    %3942 = vmatpush2.msra.mxu0 0.0
    %3943 = vmatprep.subr.mxu0 0.0
    %3944 = vmatpush2.msra.mxu0 0.0
    %3945 = vmatprep.mubr.f32.mxu0 0.0
    %3946 = vmatmul.mubr.f32.gmra.mxu0 %v3869
    %v3947 = vpop.f32.mrf.mxu0
    %v3948 = vadd.f32 0.0, %v3947
    %v3949 = vpop.f32.mrf.mxu0
    %3950 = vmatprep.mubr.f32.mxu0 0.0
    %3951 = vmatmul.mubr.f32.gmra.mxu0 %v3871
    %v3952 = vpop.f32.mrf.mxu0
    %v3953 = vadd.f32 0.0, %v3952
    %v3954 = vpop.f32.mrf.mxu0
    %3955 = vmatprep.mubr.f32.mxu0 0.0
    %3956 = vmatmul.mubr.f32.gmra.mxu0 %v3873
    %v3957 = vpop.f32.mrf.mxu0
    %v3958 = vadd.f32 0.0, %v3957
    %v3959 = vpop.f32.mrf.mxu0
    %3960 = vmatprep.mubr.f32.mxu0 0.0
    %3961 = vmatmul.mubr.f32.gmra.mxu0 %v3875
    %v3962 = vpop.f32.mrf.mxu0
    %v3963 = vadd.f32 0.0, %v3962
    %v3964 = vpop.f32.mrf.mxu0
    %3965 = vmatprep.mubr.f32.mxu0 0.0
    %3966 = vmatmul.mubr.f32.gmra.mxu0 %v3877
    %v3967 = vpop.f32.mrf.mxu0
    %v3968 = vadd.f32 0.0, %v3967
    %v3969 = vpop.f32.mrf.mxu0
    %3970 = vmatprep.mubr.f32.mxu0 0.0
    %3971 = vmatmul.mubr.f32.gmra.mxu0 %v3879
    %v3972 = vpop.f32.mrf.mxu0
    %v3973 = vadd.f32 0.0, %v3972
    %v3974 = vpop.f32.mrf.mxu0
    %3975 = vdwg.mxu0
    %v3976 = vadd.f32 %v3826, %v3948
    %v3977 = vadd.f32 %v3831, %v3953
    %v3978 = vadd.f32 %v3836, %v3958
    %v3979 = vadd.f32 %v3841, %v3963
    %v3980 = vadd.f32 %v3846, %v3968
    %v3981 = vadd.f32 %v3851, %v3973
    %s3982 = scalar_lea.vmem [#allocation20], 24
    %v3983 = vld [vmem:[%s3982] sm:$0xff]
    %v3984 = vrot.slane %v3607, 4
    %v3985 = vrot.slane %v3594, 4
    %v3986 = vsel %vm446, %v3984, %v3985
    %v3987 = vrot.slane %v3596, 4
    %v3988 = vsel %vm446, %v3985, %v3987
    %v3989 = vrot.slane %v3598, 4
    %v3990 = vsel %vm446, %v3987, %v3989
    %v3991 = vrot.slane %v3600, 4
    %v3992 = vsel %vm446, %v3989, %v3991
    %v3993 = vrot.slane %v3602, 4
    %v3994 = vsel %vm446, %v3991, %v3993
    %v3995 = vrot.slane %v3608, 4
    %v3996 = vsel %vm446, %v3993, %v3995
    %v3997 = vsel %vm1679, %v3986, 0
    %v3999 = vsel %vm1679, %v3988, 0
    %v4001 = vsel %vm1679, %v3990, 0
    %v4003 = vsel %vm1679, %v3992, 0
    %v4005 = vsel %vm1679, %v3994, 0
    %v4007 = vsel %vm1679, %v3996, 0
    %4009 = vmatprep.subr.mxu0 0.0
    %4010 = vmatpush1.msra.mxu0 0.0
    %4011 = vmatprep.subr.mxu0 0.0
    %4012 = vmatpush1.msra.mxu0 0.0
    %4013 = vmatprep.subr.mxu0 0.0
    %4014 = vmatpush1.msra.mxu0 0.0
    %4015 = vmatprep.subr.mxu0 0.0
    %4016 = vmatpush1.msra.mxu0 0.0
    %4017 = vmatprep.subr.mxu0 0.0
    %4018 = vmatpush1.msra.mxu0 0.0
    %4019 = vmatprep.subr.mxu0 0.0
    %4020 = vmatpush1.msra.mxu0 0.0
    %4021 = vmatprep.subr.mxu0 0.0
    %4022 = vmatpush1.msra.mxu0 0.0
    %4023 = vmatprep.subr.mxu0 0.0
    %4024 = vmatpush1.msra.mxu0 0.0
    %4025 = vmatprep.subr.mxu0 0.0
    %4026 = vmatpush1.msra.mxu0 0.0
    %4027 = vmatprep.subr.mxu0 0.0
    %4028 = vmatpush1.msra.mxu0 0.0
    %4029 = vmatprep.subr.mxu0 0.0
    %4030 = vmatpush1.msra.mxu0 0.0
    %4031 = vmatprep.subr.mxu0 0.0
    %4032 = vmatpush1.msra.mxu0 0.0
    %4033 = vmatprep.subr.mxu0 0.0
    %4034 = vmatpush1.msra.mxu0 0.0
    %4035 = vmatprep.subr.mxu0 0.0
    %4036 = vmatpush1.msra.mxu0 0.0
    %4037 = vmatprep.subr.mxu0 0.0
    %4038 = vmatpush1.msra.mxu0 0.0
    %4039 = vmatprep.subr.mxu0 0.0
    %4040 = vmatpush1.msra.mxu0 %v3983
    %4041 = vmatprep.subr.mxu0 0.0
    %4042 = vmatpush2.msra.mxu0 0.0
    %4043 = vmatprep.subr.mxu0 0.0
    %4044 = vmatpush2.msra.mxu0 0.0
    %4045 = vmatprep.subr.mxu0 0.0
    %4046 = vmatpush2.msra.mxu0 0.0
    %4047 = vmatprep.subr.mxu0 0.0
    %4048 = vmatpush2.msra.mxu0 0.0
    %4049 = vmatprep.subr.mxu0 0.0
    %4050 = vmatpush2.msra.mxu0 0.0
    %4051 = vmatprep.subr.mxu0 0.0
    %4052 = vmatpush2.msra.mxu0 0.0
    %4053 = vmatprep.subr.mxu0 0.0
    %4054 = vmatpush2.msra.mxu0 0.0
    %4055 = vmatprep.subr.mxu0 0.0
    %4056 = vmatpush2.msra.mxu0 0.0
    %4057 = vmatprep.subr.mxu0 0.0
    %4058 = vmatpush2.msra.mxu0 0.0
    %4059 = vmatprep.subr.mxu0 0.0
    %4060 = vmatpush2.msra.mxu0 0.0
    %4061 = vmatprep.subr.mxu0 0.0
    %4062 = vmatpush2.msra.mxu0 0.0
    %4063 = vmatprep.subr.mxu0 0.0
    %4064 = vmatpush2.msra.mxu0 0.0
    %4065 = vmatprep.subr.mxu0 0.0
    %4066 = vmatpush2.msra.mxu0 0.0
    %4067 = vmatprep.subr.mxu0 0.0
    %4068 = vmatpush2.msra.mxu0 0.0
    %4069 = vmatprep.subr.mxu0 0.0
    %4070 = vmatpush2.msra.mxu0 0.0
    %4071 = vmatprep.subr.mxu0 0.0
    %4072 = vmatpush2.msra.mxu0 0.0
    %4073 = vmatprep.mubr.f32.mxu0 0.0
    %4074 = vmatmul.mubr.f32.gmra.mxu0 %v3997
    %v4075 = vpop.f32.mrf.mxu0
    %v4076 = vadd.f32 0.0, %v4075
    %v4077 = vpop.f32.mrf.mxu0
    %4078 = vmatprep.mubr.f32.mxu0 0.0
    %4079 = vmatmul.mubr.f32.gmra.mxu0 %v3999
    %v4080 = vpop.f32.mrf.mxu0
    %v4081 = vadd.f32 0.0, %v4080
    %v4082 = vpop.f32.mrf.mxu0
    %4083 = vmatprep.mubr.f32.mxu0 0.0
    %4084 = vmatmul.mubr.f32.gmra.mxu0 %v4001
    %v4085 = vpop.f32.mrf.mxu0
    %v4086 = vadd.f32 0.0, %v4085
    %v4087 = vpop.f32.mrf.mxu0
    %4088 = vmatprep.mubr.f32.mxu0 0.0
    %4089 = vmatmul.mubr.f32.gmra.mxu0 %v4003
    %v4090 = vpop.f32.mrf.mxu0
    %v4091 = vadd.f32 0.0, %v4090
    %v4092 = vpop.f32.mrf.mxu0
    %4093 = vmatprep.mubr.f32.mxu0 0.0
    %4094 = vmatmul.mubr.f32.gmra.mxu0 %v4005
    %v4095 = vpop.f32.mrf.mxu0
    %v4096 = vadd.f32 0.0, %v4095
    %v4097 = vpop.f32.mrf.mxu0
    %4098 = vmatprep.mubr.f32.mxu0 0.0
    %4099 = vmatmul.mubr.f32.gmra.mxu0 %v4007
    %v4100 = vpop.f32.mrf.mxu0
    %v4101 = vadd.f32 0.0, %v4100
    %v4102 = vpop.f32.mrf.mxu0
    %4103 = vdwg.mxu0
    %v4104 = vadd.f32 %v3976, %v4076
    %v4105 = vadd.f32 %v3977, %v4081
    %v4106 = vadd.f32 %v3978, %v4086
    %v4107 = vadd.f32 %v3979, %v4091
    %v4108 = vadd.f32 %v3980, %v4096
    %v4109 = vadd.f32 %v3981, %v4101
    %s4110 = scalar_lea.vmem [#allocation20], 32
    %v4111 = vld [vmem:[%s4110] sm:$0xff]
    %v4112 = vrot.slane %v3607, 5
    %v4113 = vrot.slane %v3594, 5
    %v4114 = vsel %vm981, %v4112, %v4113
    %v4115 = vrot.slane %v3596, 5
    %v4116 = vsel %vm981, %v4113, %v4115
    %v4117 = vrot.slane %v3598, 5
    %v4118 = vsel %vm981, %v4115, %v4117
    %v4119 = vrot.slane %v3600, 5
    %v4120 = vsel %vm981, %v4117, %v4119
    %v4121 = vrot.slane %v3602, 5
    %v4122 = vsel %vm981, %v4119, %v4121
    %v4123 = vrot.slane %v3608, 5
    %v4124 = vsel %vm981, %v4121, %v4123
    %v4125 = vsel %vm1679, %v4114, 0
    %v4127 = vsel %vm1679, %v4116, 0
    %v4129 = vsel %vm1679, %v4118, 0
    %v4131 = vsel %vm1679, %v4120, 0
    %v4133 = vsel %vm1679, %v4122, 0
    %v4135 = vsel %vm1679, %v4124, 0
    %4137 = vmatprep.subr.mxu0 0.0
    %4138 = vmatpush1.msra.mxu0 0.0
    %4139 = vmatprep.subr.mxu0 0.0
    %4140 = vmatpush1.msra.mxu0 0.0
    %4141 = vmatprep.subr.mxu0 0.0
    %4142 = vmatpush1.msra.mxu0 0.0
    %4143 = vmatprep.subr.mxu0 0.0
    %4144 = vmatpush1.msra.mxu0 0.0
    %4145 = vmatprep.subr.mxu0 0.0
    %4146 = vmatpush1.msra.mxu0 0.0
    %4147 = vmatprep.subr.mxu0 0.0
    %4148 = vmatpush1.msra.mxu0 0.0
    %4149 = vmatprep.subr.mxu0 0.0
    %4150 = vmatpush1.msra.mxu0 0.0
    %4151 = vmatprep.subr.mxu0 0.0
    %4152 = vmatpush1.msra.mxu0 0.0
    %4153 = vmatprep.subr.mxu0 0.0
    %4154 = vmatpush1.msra.mxu0 0.0
    %4155 = vmatprep.subr.mxu0 0.0
    %4156 = vmatpush1.msra.mxu0 0.0
    %4157 = vmatprep.subr.mxu0 0.0
    %4158 = vmatpush1.msra.mxu0 0.0
    %4159 = vmatprep.subr.mxu0 0.0
    %4160 = vmatpush1.msra.mxu0 0.0
    %4161 = vmatprep.subr.mxu0 0.0
    %4162 = vmatpush1.msra.mxu0 0.0
    %4163 = vmatprep.subr.mxu0 0.0
    %4164 = vmatpush1.msra.mxu0 0.0
    %4165 = vmatprep.subr.mxu0 0.0
    %4166 = vmatpush1.msra.mxu0 0.0
    %4167 = vmatprep.subr.mxu0 0.0
    %4168 = vmatpush1.msra.mxu0 %v4111
    %4169 = vmatprep.subr.mxu0 0.0
    %4170 = vmatpush2.msra.mxu0 0.0
    %4171 = vmatprep.subr.mxu0 0.0
    %4172 = vmatpush2.msra.mxu0 0.0
    %4173 = vmatprep.subr.mxu0 0.0
    %4174 = vmatpush2.msra.mxu0 0.0
    %4175 = vmatprep.subr.mxu0 0.0
    %4176 = vmatpush2.msra.mxu0 0.0
    %4177 = vmatprep.subr.mxu0 0.0
    %4178 = vmatpush2.msra.mxu0 0.0
    %4179 = vmatprep.subr.mxu0 0.0
    %4180 = vmatpush2.msra.mxu0 0.0
    %4181 = vmatprep.subr.mxu0 0.0
    %4182 = vmatpush2.msra.mxu0 0.0
    %4183 = vmatprep.subr.mxu0 0.0
    %4184 = vmatpush2.msra.mxu0 0.0
    %4185 = vmatprep.subr.mxu0 0.0
    %4186 = vmatpush2.msra.mxu0 0.0
    %4187 = vmatprep.subr.mxu0 0.0
    %4188 = vmatpush2.msra.mxu0 0.0
    %4189 = vmatprep.subr.mxu0 0.0
    %4190 = vmatpush2.msra.mxu0 0.0
    %4191 = vmatprep.subr.mxu0 0.0
    %4192 = vmatpush2.msra.mxu0 0.0
    %4193 = vmatprep.subr.mxu0 0.0
    %4194 = vmatpush2.msra.mxu0 0.0
    %4195 = vmatprep.subr.mxu0 0.0
    %4196 = vmatpush2.msra.mxu0 0.0
    %4197 = vmatprep.subr.mxu0 0.0
    %4198 = vmatpush2.msra.mxu0 0.0
    %4199 = vmatprep.subr.mxu0 0.0
    %4200 = vmatpush2.msra.mxu0 0.0
    %4201 = vmatprep.mubr.f32.mxu0 0.0
    %4202 = vmatmul.mubr.f32.gmra.mxu0 %v4125
    %v4203 = vpop.f32.mrf.mxu0
    %v4204 = vadd.f32 0.0, %v4203
    %v4205 = vpop.f32.mrf.mxu0
    %4206 = vmatprep.mubr.f32.mxu0 0.0
    %4207 = vmatmul.mubr.f32.gmra.mxu0 %v4127
    %v4208 = vpop.f32.mrf.mxu0
    %v4209 = vadd.f32 0.0, %v4208
    %v4210 = vpop.f32.mrf.mxu0
    %4211 = vmatprep.mubr.f32.mxu0 0.0
    %4212 = vmatmul.mubr.f32.gmra.mxu0 %v4129
    %v4213 = vpop.f32.mrf.mxu0
    %v4214 = vadd.f32 0.0, %v4213
    %v4215 = vpop.f32.mrf.mxu0
    %4216 = vmatprep.mubr.f32.mxu0 0.0
    %4217 = vmatmul.mubr.f32.gmra.mxu0 %v4131
    %v4218 = vpop.f32.mrf.mxu0
    %v4219 = vadd.f32 0.0, %v4218
    %v4220 = vpop.f32.mrf.mxu0
    %4221 = vmatprep.mubr.f32.mxu0 0.0
    %4222 = vmatmul.mubr.f32.gmra.mxu0 %v4133
    %v4223 = vpop.f32.mrf.mxu0
    %v4224 = vadd.f32 0.0, %v4223
    %v4225 = vpop.f32.mrf.mxu0
    %4226 = vmatprep.mubr.f32.mxu0 0.0
    %4227 = vmatmul.mubr.f32.gmra.mxu0 %v4135
    %v4228 = vpop.f32.mrf.mxu0
    %v4229 = vadd.f32 0.0, %v4228
    %v4230 = vpop.f32.mrf.mxu0
    %4231 = vdwg.mxu0
    %v4232 = vadd.f32 %v4104, %v4204
    %v4233 = vadd.f32 %v4105, %v4209
    %v4234 = vadd.f32 %v4106, %v4214
    %v4235 = vadd.f32 %v4107, %v4219
    %v4236 = vadd.f32 %v4108, %v4224
    %v4237 = vadd.f32 %v4109, %v4229
    %s4238 = scalar_lea.vmem [#allocation20], 40
    %v4239 = vld [vmem:[%s4238] sm:$0xff]
    %v4240 = vrot.slane %v3607, 6
    %v4241 = vrot.slane %v3594, 6
    %v4242 = vsel %vm1113, %v4240, %v4241
    %v4243 = vrot.slane %v3596, 6
    %v4244 = vsel %vm1113, %v4241, %v4243
    %v4245 = vrot.slane %v3598, 6
    %v4246 = vsel %vm1113, %v4243, %v4245
    %v4247 = vrot.slane %v3600, 6
    %v4248 = vsel %vm1113, %v4245, %v4247
    %v4249 = vrot.slane %v3602, 6
    %v4250 = vsel %vm1113, %v4247, %v4249
    %v4251 = vrot.slane %v3608, 6
    %v4252 = vsel %vm1113, %v4249, %v4251
    %v4253 = vsel %vm1679, %v4242, 0
    %v4255 = vsel %vm1679, %v4244, 0
    %v4257 = vsel %vm1679, %v4246, 0
    %v4259 = vsel %vm1679, %v4248, 0
    %v4261 = vsel %vm1679, %v4250, 0
    %v4263 = vsel %vm1679, %v4252, 0
    %4265 = vmatprep.subr.mxu0 0.0
    %4266 = vmatpush1.msra.mxu0 0.0
    %4267 = vmatprep.subr.mxu0 0.0
    %4268 = vmatpush1.msra.mxu0 0.0
    %4269 = vmatprep.subr.mxu0 0.0
    %4270 = vmatpush1.msra.mxu0 0.0
    %4271 = vmatprep.subr.mxu0 0.0
    %4272 = vmatpush1.msra.mxu0 0.0
    %4273 = vmatprep.subr.mxu0 0.0
    %4274 = vmatpush1.msra.mxu0 0.0
    %4275 = vmatprep.subr.mxu0 0.0
    %4276 = vmatpush1.msra.mxu0 0.0
    %4277 = vmatprep.subr.mxu0 0.0
    %4278 = vmatpush1.msra.mxu0 0.0
    %4279 = vmatprep.subr.mxu0 0.0
    %4280 = vmatpush1.msra.mxu0 0.0
    %4281 = vmatprep.subr.mxu0 0.0
    %4282 = vmatpush1.msra.mxu0 0.0
    %4283 = vmatprep.subr.mxu0 0.0
    %4284 = vmatpush1.msra.mxu0 0.0
    %4285 = vmatprep.subr.mxu0 0.0
    %4286 = vmatpush1.msra.mxu0 0.0
    %4287 = vmatprep.subr.mxu0 0.0
    %4288 = vmatpush1.msra.mxu0 0.0
    %4289 = vmatprep.subr.mxu0 0.0
    %4290 = vmatpush1.msra.mxu0 0.0
    %4291 = vmatprep.subr.mxu0 0.0
    %4292 = vmatpush1.msra.mxu0 0.0
    %4293 = vmatprep.subr.mxu0 0.0
    %4294 = vmatpush1.msra.mxu0 0.0
    %4295 = vmatprep.subr.mxu0 0.0
    %4296 = vmatpush1.msra.mxu0 %v4239
    %4297 = vmatprep.subr.mxu0 0.0
    %4298 = vmatpush2.msra.mxu0 0.0
    %4299 = vmatprep.subr.mxu0 0.0
    %4300 = vmatpush2.msra.mxu0 0.0
    %4301 = vmatprep.subr.mxu0 0.0
    %4302 = vmatpush2.msra.mxu0 0.0
    %4303 = vmatprep.subr.mxu0 0.0
    %4304 = vmatpush2.msra.mxu0 0.0
    %4305 = vmatprep.subr.mxu0 0.0
    %4306 = vmatpush2.msra.mxu0 0.0
    %4307 = vmatprep.subr.mxu0 0.0
    %4308 = vmatpush2.msra.mxu0 0.0
    %4309 = vmatprep.subr.mxu0 0.0
    %4310 = vmatpush2.msra.mxu0 0.0
    %4311 = vmatprep.subr.mxu0 0.0
    %4312 = vmatpush2.msra.mxu0 0.0
    %4313 = vmatprep.subr.mxu0 0.0
    %4314 = vmatpush2.msra.mxu0 0.0
    %4315 = vmatprep.subr.mxu0 0.0
    %4316 = vmatpush2.msra.mxu0 0.0
    %4317 = vmatprep.subr.mxu0 0.0
    %4318 = vmatpush2.msra.mxu0 0.0
    %4319 = vmatprep.subr.mxu0 0.0
    %4320 = vmatpush2.msra.mxu0 0.0
    %4321 = vmatprep.subr.mxu0 0.0
    %4322 = vmatpush2.msra.mxu0 0.0
    %4323 = vmatprep.subr.mxu0 0.0
    %4324 = vmatpush2.msra.mxu0 0.0
    %4325 = vmatprep.subr.mxu0 0.0
    %4326 = vmatpush2.msra.mxu0 0.0
    %4327 = vmatprep.subr.mxu0 0.0
    %4328 = vmatpush2.msra.mxu0 0.0
    %4329 = vmatprep.mubr.f32.mxu0 0.0
    %4330 = vmatmul.mubr.f32.gmra.mxu0 %v4253
    %v4331 = vpop.f32.mrf.mxu0
    %v4332 = vadd.f32 0.0, %v4331
    %v4333 = vpop.f32.mrf.mxu0
    %4334 = vmatprep.mubr.f32.mxu0 0.0
    %4335 = vmatmul.mubr.f32.gmra.mxu0 %v4255
    %v4336 = vpop.f32.mrf.mxu0
    %v4337 = vadd.f32 0.0, %v4336
    %v4338 = vpop.f32.mrf.mxu0
    %4339 = vmatprep.mubr.f32.mxu0 0.0
    %4340 = vmatmul.mubr.f32.gmra.mxu0 %v4257
    %v4341 = vpop.f32.mrf.mxu0
    %v4342 = vadd.f32 0.0, %v4341
    %v4343 = vpop.f32.mrf.mxu0
    %4344 = vmatprep.mubr.f32.mxu0 0.0
    %4345 = vmatmul.mubr.f32.gmra.mxu0 %v4259
    %v4346 = vpop.f32.mrf.mxu0
    %v4347 = vadd.f32 0.0, %v4346
    %v4348 = vpop.f32.mrf.mxu0
    %4349 = vmatprep.mubr.f32.mxu0 0.0
    %4350 = vmatmul.mubr.f32.gmra.mxu0 %v4261
    %v4351 = vpop.f32.mrf.mxu0
    %v4352 = vadd.f32 0.0, %v4351
    %v4353 = vpop.f32.mrf.mxu0
    %4354 = vmatprep.mubr.f32.mxu0 0.0
    %4355 = vmatmul.mubr.f32.gmra.mxu0 %v4263
    %v4356 = vpop.f32.mrf.mxu0
    %v4357 = vadd.f32 0.0, %v4356
    %v4358 = vpop.f32.mrf.mxu0
    %4359 = vdwg.mxu0
    %v4360 = vadd.f32 %v4232, %v4332
    %v4361 = vadd.f32 %v4233, %v4337
    %v4362 = vadd.f32 %v4234, %v4342
    %v4363 = vadd.f32 %v4235, %v4347
    %v4364 = vadd.f32 %v4236, %v4352
    %v4365 = vadd.f32 %v4237, %v4357
    %s4366 = scalar_lea.vmem [#allocation20], 48
    %v4367 = vld [vmem:[%s4366] sm:$0xff]
    %v4368 = vrot.slane %v3607, 7
    %v4369 = vrot.slane %v3594, 7
    %v4370 = vsel %vm1245, %v4368, %v4369
    %v4371 = vrot.slane %v3596, 7
    %v4372 = vsel %vm1245, %v4369, %v4371
    %v4373 = vrot.slane %v3598, 7
    %v4374 = vsel %vm1245, %v4371, %v4373
    %v4375 = vrot.slane %v3600, 7
    %v4376 = vsel %vm1245, %v4373, %v4375
    %v4377 = vrot.slane %v3602, 7
    %v4378 = vsel %vm1245, %v4375, %v4377
    %v4379 = vrot.slane %v3608, 7
    %v4380 = vsel %vm1245, %v4377, %v4379
    %v4381 = vsel %vm1679, %v4370, 0
    %v4383 = vsel %vm1679, %v4372, 0
    %v4385 = vsel %vm1679, %v4374, 0
    %v4387 = vsel %vm1679, %v4376, 0
    %v4389 = vsel %vm1679, %v4378, 0
    %v4391 = vsel %vm1679, %v4380, 0
    %4393 = vmatprep.subr.mxu0 0.0
    %4394 = vmatpush1.msra.mxu0 0.0
    %4395 = vmatprep.subr.mxu0 0.0
    %4396 = vmatpush1.msra.mxu0 0.0
    %4397 = vmatprep.subr.mxu0 0.0
    %4398 = vmatpush1.msra.mxu0 0.0
    %4399 = vmatprep.subr.mxu0 0.0
    %4400 = vmatpush1.msra.mxu0 0.0
    %4401 = vmatprep.subr.mxu0 0.0
    %4402 = vmatpush1.msra.mxu0 0.0
    %4403 = vmatprep.subr.mxu0 0.0
    %4404 = vmatpush1.msra.mxu0 0.0
    %4405 = vmatprep.subr.mxu0 0.0
    %4406 = vmatpush1.msra.mxu0 0.0
    %4407 = vmatprep.subr.mxu0 0.0
    %4408 = vmatpush1.msra.mxu0 0.0
    %4409 = vmatprep.subr.mxu0 0.0
    %4410 = vmatpush1.msra.mxu0 0.0
    %4411 = vmatprep.subr.mxu0 0.0
    %4412 = vmatpush1.msra.mxu0 0.0
    %4413 = vmatprep.subr.mxu0 0.0
    %4414 = vmatpush1.msra.mxu0 0.0
    %4415 = vmatprep.subr.mxu0 0.0
    %4416 = vmatpush1.msra.mxu0 0.0
    %4417 = vmatprep.subr.mxu0 0.0
    %4418 = vmatpush1.msra.mxu0 0.0
    %4419 = vmatprep.subr.mxu0 0.0
    %4420 = vmatpush1.msra.mxu0 0.0
    %4421 = vmatprep.subr.mxu0 0.0
    %4422 = vmatpush1.msra.mxu0 0.0
    %4423 = vmatprep.subr.mxu0 0.0
    %4424 = vmatpush1.msra.mxu0 %v4367
    %4425 = vmatprep.subr.mxu0 0.0
    %4426 = vmatpush2.msra.mxu0 0.0
    %4427 = vmatprep.subr.mxu0 0.0
    %4428 = vmatpush2.msra.mxu0 0.0
    %4429 = vmatprep.subr.mxu0 0.0
    %4430 = vmatpush2.msra.mxu0 0.0
    %4431 = vmatprep.subr.mxu0 0.0
    %4432 = vmatpush2.msra.mxu0 0.0
    %4433 = vmatprep.subr.mxu0 0.0
    %4434 = vmatpush2.msra.mxu0 0.0
    %4435 = vmatprep.subr.mxu0 0.0
    %4436 = vmatpush2.msra.mxu0 0.0
    %4437 = vmatprep.subr.mxu0 0.0
    %4438 = vmatpush2.msra.mxu0 0.0
    %4439 = vmatprep.subr.mxu0 0.0
    %4440 = vmatpush2.msra.mxu0 0.0
    %4441 = vmatprep.subr.mxu0 0.0
    %4442 = vmatpush2.msra.mxu0 0.0
    %4443 = vmatprep.subr.mxu0 0.0
    %4444 = vmatpush2.msra.mxu0 0.0
    %4445 = vmatprep.subr.mxu0 0.0
    %4446 = vmatpush2.msra.mxu0 0.0
    %4447 = vmatprep.subr.mxu0 0.0
    %4448 = vmatpush2.msra.mxu0 0.0
    %4449 = vmatprep.subr.mxu0 0.0
    %4450 = vmatpush2.msra.mxu0 0.0
    %4451 = vmatprep.subr.mxu0 0.0
    %4452 = vmatpush2.msra.mxu0 0.0
    %4453 = vmatprep.subr.mxu0 0.0
    %4454 = vmatpush2.msra.mxu0 0.0
    %4455 = vmatprep.subr.mxu0 0.0
    %4456 = vmatpush2.msra.mxu0 0.0
    %4457 = vmatprep.mubr.f32.mxu0 0.0
    %4458 = vmatmul.mubr.f32.gmra.mxu0 %v4381
    %v4459 = vpop.f32.mrf.mxu0
    %v4460 = vadd.f32 0.0, %v4459
    %v4461 = vpop.f32.mrf.mxu0
    %4462 = vmatprep.mubr.f32.mxu0 0.0
    %4463 = vmatmul.mubr.f32.gmra.mxu0 %v4383
    %v4464 = vpop.f32.mrf.mxu0
    %v4465 = vadd.f32 0.0, %v4464
    %v4466 = vpop.f32.mrf.mxu0
    %4467 = vmatprep.mubr.f32.mxu0 0.0
    %4468 = vmatmul.mubr.f32.gmra.mxu0 %v4385
    %v4469 = vpop.f32.mrf.mxu0
    %v4470 = vadd.f32 0.0, %v4469
    %v4471 = vpop.f32.mrf.mxu0
    %4472 = vmatprep.mubr.f32.mxu0 0.0
    %4473 = vmatmul.mubr.f32.gmra.mxu0 %v4387
    %v4474 = vpop.f32.mrf.mxu0
    %v4475 = vadd.f32 0.0, %v4474
    %v4476 = vpop.f32.mrf.mxu0
    %4477 = vmatprep.mubr.f32.mxu0 0.0
    %4478 = vmatmul.mubr.f32.gmra.mxu0 %v4389
    %v4479 = vpop.f32.mrf.mxu0
    %v4480 = vadd.f32 0.0, %v4479
    %v4481 = vpop.f32.mrf.mxu0
    %4482 = vmatprep.mubr.f32.mxu0 0.0
    %4483 = vmatmul.mubr.f32.gmra.mxu0 %v4391
    %v4484 = vpop.f32.mrf.mxu0
    %v4485 = vadd.f32 0.0, %v4484
    %v4486 = vpop.f32.mrf.mxu0
    %4487 = vdwg.mxu0
    %v4488 = vadd.f32 %v4360, %v4460
    %v4489 = vadd.f32 %v4361, %v4465
    %v4490 = vadd.f32 %v4362, %v4470
    %v4491 = vadd.f32 %v4363, %v4475
    %v4492 = vadd.f32 %v4364, %v4480
    %v4493 = vadd.f32 %v4365, %v4485
    %s4494 = scalar_lea.vmem [#allocation20], 56
    %v4495 = vld [vmem:[%s4494] sm:$0xff]
    %v4496 = vsel %vm1679, %v3594, 0
    %v4498 = vsel %vm1679, %v3596, 0
    %v4500 = vsel %vm1679, %v3598, 0
    %v4502 = vsel %vm1679, %v3600, 0
    %v4504 = vsel %vm1679, %v3602, 0
    %v4506 = vsel %vm1679, %v3608, 0
    %4508 = vmatprep.subr.mxu0 0.0
    %4509 = vmatpush1.msra.mxu0 0.0
    %4510 = vmatprep.subr.mxu0 0.0
    %4511 = vmatpush1.msra.mxu0 0.0
    %4512 = vmatprep.subr.mxu0 0.0
    %4513 = vmatpush1.msra.mxu0 0.0
    %4514 = vmatprep.subr.mxu0 0.0
    %4515 = vmatpush1.msra.mxu0 0.0
    %4516 = vmatprep.subr.mxu0 0.0
    %4517 = vmatpush1.msra.mxu0 0.0
    %4518 = vmatprep.subr.mxu0 0.0
    %4519 = vmatpush1.msra.mxu0 0.0
    %4520 = vmatprep.subr.mxu0 0.0
    %4521 = vmatpush1.msra.mxu0 0.0
    %4522 = vmatprep.subr.mxu0 0.0
    %4523 = vmatpush1.msra.mxu0 0.0
    %4524 = vmatprep.subr.mxu0 0.0
    %4525 = vmatpush1.msra.mxu0 0.0
    %4526 = vmatprep.subr.mxu0 0.0
    %4527 = vmatpush1.msra.mxu0 0.0
    %4528 = vmatprep.subr.mxu0 0.0
    %4529 = vmatpush1.msra.mxu0 0.0
    %4530 = vmatprep.subr.mxu0 0.0
    %4531 = vmatpush1.msra.mxu0 0.0
    %4532 = vmatprep.subr.mxu0 0.0
    %4533 = vmatpush1.msra.mxu0 0.0
    %4534 = vmatprep.subr.mxu0 0.0
    %4535 = vmatpush1.msra.mxu0 0.0
    %4536 = vmatprep.subr.mxu0 0.0
    %4537 = vmatpush1.msra.mxu0 0.0
    %4538 = vmatprep.subr.mxu0 0.0
    %4539 = vmatpush1.msra.mxu0 %v4495
    %4540 = vmatprep.subr.mxu0 0.0
    %4541 = vmatpush2.msra.mxu0 0.0
    %4542 = vmatprep.subr.mxu0 0.0
    %4543 = vmatpush2.msra.mxu0 0.0
    %4544 = vmatprep.subr.mxu0 0.0
    %4545 = vmatpush2.msra.mxu0 0.0
    %4546 = vmatprep.subr.mxu0 0.0
    %4547 = vmatpush2.msra.mxu0 0.0
    %4548 = vmatprep.subr.mxu0 0.0
    %4549 = vmatpush2.msra.mxu0 0.0
    %4550 = vmatprep.subr.mxu0 0.0
    %4551 = vmatpush2.msra.mxu0 0.0
    %4552 = vmatprep.subr.mxu0 0.0
    %4553 = vmatpush2.msra.mxu0 0.0
    %4554 = vmatprep.subr.mxu0 0.0
    %4555 = vmatpush2.msra.mxu0 0.0
    %4556 = vmatprep.subr.mxu0 0.0
    %4557 = vmatpush2.msra.mxu0 0.0
    %4558 = vmatprep.subr.mxu0 0.0
    %4559 = vmatpush2.msra.mxu0 0.0
    %4560 = vmatprep.subr.mxu0 0.0
    %4561 = vmatpush2.msra.mxu0 0.0
    %4562 = vmatprep.subr.mxu0 0.0
    %4563 = vmatpush2.msra.mxu0 0.0
    %4564 = vmatprep.subr.mxu0 0.0
    %4565 = vmatpush2.msra.mxu0 0.0
    %4566 = vmatprep.subr.mxu0 0.0
    %4567 = vmatpush2.msra.mxu0 0.0
    %4568 = vmatprep.subr.mxu0 0.0
    %4569 = vmatpush2.msra.mxu0 0.0
    %4570 = vmatprep.subr.mxu0 0.0
    %4571 = vmatpush2.msra.mxu0 0.0
    %4572 = vmatprep.mubr.f32.mxu0 0.0
    %4573 = vmatmul.mubr.f32.gmra.mxu0 %v4496
    %v4574 = vpop.f32.mrf.mxu0
    %v4575 = vadd.f32 0.0, %v4574
    %v4576 = vpop.f32.mrf.mxu0
    %4577 = vmatprep.mubr.f32.mxu0 0.0
    %4578 = vmatmul.mubr.f32.gmra.mxu0 %v4498
    %v4579 = vpop.f32.mrf.mxu0
    %v4580 = vadd.f32 0.0, %v4579
    %v4581 = vpop.f32.mrf.mxu0
    %4582 = vmatprep.mubr.f32.mxu0 0.0
    %4583 = vmatmul.mubr.f32.gmra.mxu0 %v4500
    %v4584 = vpop.f32.mrf.mxu0
    %v4585 = vadd.f32 0.0, %v4584
    %v4586 = vpop.f32.mrf.mxu0
    %4587 = vmatprep.mubr.f32.mxu0 0.0
    %4588 = vmatmul.mubr.f32.gmra.mxu0 %v4502
    %v4589 = vpop.f32.mrf.mxu0
    %v4590 = vadd.f32 0.0, %v4589
    %v4591 = vpop.f32.mrf.mxu0
    %4592 = vmatprep.mubr.f32.mxu0 0.0
    %4593 = vmatmul.mubr.f32.gmra.mxu0 %v4504
    %v4594 = vpop.f32.mrf.mxu0
    %v4595 = vadd.f32 0.0, %v4594
    %v4596 = vpop.f32.mrf.mxu0
    %4597 = vmatprep.mubr.f32.mxu0 0.0
    %4598 = vmatmul.mubr.f32.gmra.mxu0 %v4506
    %v4599 = vpop.f32.mrf.mxu0
    %v4600 = vadd.f32 0.0, %v4599
    %v4601 = vpop.f32.mrf.mxu0
    %4602 = vdwg.mxu0
    %v4603 = vadd.f32 %v4488, %v4575
    %v4604 = vadd.f32 %v4489, %v4580
    %v4605 = vadd.f32 %v4490, %v4585
    %v4606 = vadd.f32 %v4491, %v4590
    %v4607 = vadd.f32 %v4492, %v4595
    %v4608 = vadd.f32 %v4493, %v4600
    %v4609 = vld [vmem:[#allocation22] sm:$0x1]
    %v4611 = vlaneseq
    %v4612 = vshrl.u32 %v4611, 7
    %v4613 = vsub.s32 0, %v4612
    %v4614 = vrot.slane %v4609, %v4613
    %v4616 = vadd.f32 %v4603, %v4614
    %v4617 = vadd.f32 %v4604, %v4614
    %v4618 = vadd.f32 %v4605, %v4614
    %v4619 = vadd.f32 %v4606, %v4614
    %v4620 = vadd.f32 %v4607, %v4614
    %v4621 = vadd.f32 %v4608, %v4614
    %v4622 = vmul.f32 %v4616, %v1509
    %v4623 = vmul.f32 %v4617, %v1514
    %v4624 = vmul.f32 %v4618, %v1519
    %v4625 = vmul.f32 %v4619, %v1524
    %v4626 = vmul.f32 %v4620, %v1529
    %v4627 = vmul.f32 %v4621, %v1534
    %vm4628 = vcmask 261120
    %v4629 = vsel %vm4628, %v4622, 0.0
    %v4630 = vsel %vm4628, %v4623, 0.0
    %v4631 = vadd.f32 %v4629, %v4630
    %v4632 = vsel %vm4628, %v4624, 0.0
    %v4633 = vadd.f32 %v4631, %v4632
    %v4634 = vsel %vm4628, %v4625, 0.0
    %v4635 = vadd.f32 %v4633, %v4634
    %v4636 = vsel %vm4628, %v4626, 0.0
    %v4637 = vadd.f32 %v4635, %v4636
    %v4638 = vsel %vm4628, %v4627, 0.0
    %v4639 = vadd.f32 %v4637, %v4638
    %v4640 = vrot.slane %v4639, 4
    %v4641 = vadd.f32 %v4639, %v4640
    %v4642 = vrot.slane %v4641, 2
    %v4643 = vadd.f32 %v4641, %v4642
    %v4644 = vrot.slane %v4643, 1
    %v4645 = vadd.f32 %v4643, %v4644
    %v4646 = vmul.f32 %v4645, 0.03125
    %v4647 = vsub.f32 %v4616, %v4646
    %v4648 = vsub.f32 %v4617, %v4646
    %v4649 = vsub.f32 %v4618, %v4646
    %v4650 = vsub.f32 %v4619, %v4646
    %v4651 = vsub.f32 %v4620, %v4646
    %v4652 = vsub.f32 %v4621, %v4646
    %v4653 = vmul.f32 %v4647, %v1509
    %v4654 = vmul.f32 %v4648, %v1514
    %v4655 = vmul.f32 %v4649, %v1519
    %v4656 = vmul.f32 %v4650, %v1524
    %v4657 = vmul.f32 %v4651, %v1529
    %v4658 = vmul.f32 %v4652, %v1534
    %v4659 = vmul.f32 %v4653, %v4653
    %v4660 = vmul.f32 %v4654, %v4654
    %v4661 = vmul.f32 %v4655, %v4655
    %v4662 = vmul.f32 %v4656, %v4656
    %v4663 = vmul.f32 %v4657, %v4657
    %v4664 = vmul.f32 %v4658, %v4658
    %v4665 = vsel %vm4628, %v4659, 0.0
    %v4666 = vsel %vm4628, %v4660, 0.0
    %v4667 = vadd.f32 %v4665, %v4666
    %v4668 = vsel %vm4628, %v4661, 0.0
    %v4669 = vadd.f32 %v4667, %v4668
    %v4670 = vsel %vm4628, %v4662, 0.0
    %v4671 = vadd.f32 %v4669, %v4670
    %v4672 = vsel %vm4628, %v4663, 0.0
    %v4673 = vadd.f32 %v4671, %v4672
    %v4674 = vsel %vm4628, %v4664, 0.0
    %v4675 = vadd.f32 %v4673, %v4674
    %v4676 = vrot.slane %v4675, 4
    %v4677 = vadd.f32 %v4675, %v4676
    %v4678 = vrot.slane %v4677, 2
    %v4679 = vadd.f32 %v4677, %v4678
    %v4680 = vrot.slane %v4679, 1
    %v4681 = vadd.f32 %v4679, %v4680
    %v4682 = vmul.f32 %v4681, 0.03125
    %v4683 = vld [vmem:[#allocation23] sm:$0x1]
    %v4684 = vadd.f32 %v4682, 1e-05
    %v4685 = vrsqrt.pop %v4684
    %v4686 = vmul.f32 %v4683, %v4685
    %v4687 = vld [vmem:[#allocation25] sm:$0x1]
    %v4688 = vmul.f32 %v4646, %v4686
    %v4689 = vsub.f32 %v4687, %v4688
    %v4691 = vlaneseq
    %v4692 = vshrl.u32 %v4691, 7
    %v4693 = vsub.s32 0, %v4692
    %v4694 = vrot.slane %v4686, %v4693
    %v4696 = vmul.f32 %v4616, %v4694
    %v4697 = vmul.f32 %v4617, %v4694
    %v4698 = vmul.f32 %v4618, %v4694
    %v4699 = vmul.f32 %v4619, %v4694
    %v4700 = vmul.f32 %v4620, %v4694
    %v4701 = vmul.f32 %v4621, %v4694
    %v4703 = vlaneseq
    %v4704 = vshrl.u32 %v4703, 7
    %v4705 = vsub.s32 0, %v4704
    %v4706 = vrot.slane %v4689, %v4705
    %v4708 = vadd.f32 %v4696, %v4706
    %v4709 = vadd.f32 %v4697, %v4706
    %v4710 = vadd.f32 %v4698, %v4706
    %v4711 = vadd.f32 %v4699, %v4706
    %v4712 = vadd.f32 %v4700, %v4706
    %v4713 = vadd.f32 %v4701, %v4706
    %v4714 = vmul.f32 %v4708, %v1509
    %v4715 = vmul.f32 %v4709, %v1514
    %v4716 = vmul.f32 %v4710, %v1519
    %v4717 = vmul.f32 %v4711, %v1524
    %v4718 = vmul.f32 %v4712, %v1529
    %v4719 = vmul.f32 %v4713, %v1534
    %v4720 = vmax.f32 %v4714, 0.0
    %v4721 = vmax.f32 %v4715, 0.0
    %v4722 = vmax.f32 %v4716, 0.0
    %v4723 = vmax.f32 %v4717, 0.0
    %v4724 = vmax.f32 %v4718, 0.0
    %v4725 = vmax.f32 %v4719, 0.0
    %v4732 = vrot.slane %v4720, 4
    %v4733 = vrot.slane %v4721, 4
    %v4734 = vsel %vm446, %v4732, %v4733
    %v4735 = vrot.slane %v4722, 4
    %v4736 = vsel %vm446, %v4733, %v4735
    %v4737 = vrot.slane %v4723, 4
    %v4738 = vsel %vm446, %v4735, %v4737
    %v4739 = vrot.slane %v4724, 4
    %v4740 = vsel %vm446, %v4737, %v4739
    %v4741 = vrot.slane %v4725, 4
    %v4742 = vsel %vm446, %v4739, %v4741
    %v4745 = vsel %vm446, 0.0, %v4732
    %v4746 = vsel %vm446, %v4741, 0.0
    %v4747 = vld [vmem:[#allocation26] sm:$0xff]
    %v4748 = vld [vmem:[#allocation26 + $0x8] sm:$0xff]
    %s4749 = scalar_lea.vmem [#allocation26], 16
    %v4750 = vld [vmem:[%s4749] sm:$0xff]
    %v4751 = vld [vmem:[%s4749 + $0x8] sm:$0xff]
    %v4754 = vrot.slane %v4745, 3
    %v4755 = vrot.slane %v4734, 3
    %v4756 = vsel %vm718, %v4754, %v4755
    %v4757 = vrot.slane %v4736, 3
    %v4758 = vsel %vm718, %v4755, %v4757
    %v4759 = vrot.slane %v4738, 3
    %v4760 = vsel %vm718, %v4757, %v4759
    %v4761 = vrot.slane %v4740, 3
    %v4762 = vsel %vm718, %v4759, %v4761
    %v4763 = vrot.slane %v4742, 3
    %v4764 = vsel %vm718, %v4761, %v4763
    %v4765 = vrot.slane %v4746, 3
    %v4766 = vsel %vm718, %v4763, %v4765
    %v4767 = vsel %vm1542, %v4756, 0
    %v4769 = vsel %vm1542, %v4758, 0
    %v4771 = vsel %vm1542, %v4760, 0
    %v4773 = vsel %vm1542, %v4762, 0
    %v4775 = vsel %vm1542, %v4764, 0
    %v4777 = vsel %vm1542, %v4766, 0
    %4779 = vmatprep.subr.mxu0 0.0
    %4780 = vmatpush1.msra.mxu0 0.0
    %4781 = vmatprep.subr.mxu0 0.0
    %4782 = vmatpush1.msra.mxu0 0.0
    %4783 = vmatprep.subr.mxu0 0.0
    %4784 = vmatpush1.msra.mxu0 0.0
    %4785 = vmatprep.subr.mxu0 0.0
    %4786 = vmatpush1.msra.mxu0 0.0
    %4787 = vmatprep.subr.mxu0 0.0
    %4788 = vmatpush1.msra.mxu0 0.0
    %4789 = vmatprep.subr.mxu0 0.0
    %4790 = vmatpush1.msra.mxu0 0.0
    %4791 = vmatprep.subr.mxu0 0.0
    %4792 = vmatpush1.msra.mxu0 0.0
    %4793 = vmatprep.subr.mxu0 0.0
    %4794 = vmatpush1.msra.mxu0 0.0
    %4795 = vmatprep.subr.mxu0 0.0
    %4796 = vmatpush1.msra.mxu0 0.0
    %4797 = vmatprep.subr.mxu0 0.0
    %4798 = vmatpush1.msra.mxu0 0.0
    %4799 = vmatprep.subr.mxu0 0.0
    %4800 = vmatpush1.msra.mxu0 0.0
    %4801 = vmatprep.subr.mxu0 0.0
    %4802 = vmatpush1.msra.mxu0 0.0
    %4803 = vmatprep.subr.mxu0 0.0
    %4804 = vmatpush1.msra.mxu0 0.0
    %4805 = vmatprep.subr.mxu0 0.0
    %4806 = vmatpush1.msra.mxu0 0.0
    %4807 = vmatprep.subr.mxu0 0.0
    %4808 = vmatpush1.msra.mxu0 %v4751
    %4809 = vmatprep.subr.mxu0 0.0
    %4810 = vmatpush1.msra.mxu0 %v4750
    %4811 = vmatprep.subr.mxu0 0.0
    %4812 = vmatpush2.msra.mxu0 0.0
    %4813 = vmatprep.subr.mxu0 0.0
    %4814 = vmatpush2.msra.mxu0 0.0
    %4815 = vmatprep.subr.mxu0 0.0
    %4816 = vmatpush2.msra.mxu0 0.0
    %4817 = vmatprep.subr.mxu0 0.0
    %4818 = vmatpush2.msra.mxu0 0.0
    %4819 = vmatprep.subr.mxu0 0.0
    %4820 = vmatpush2.msra.mxu0 0.0
    %4821 = vmatprep.subr.mxu0 0.0
    %4822 = vmatpush2.msra.mxu0 0.0
    %4823 = vmatprep.subr.mxu0 0.0
    %4824 = vmatpush2.msra.mxu0 0.0
    %4825 = vmatprep.subr.mxu0 0.0
    %4826 = vmatpush2.msra.mxu0 0.0
    %4827 = vmatprep.subr.mxu0 0.0
    %4828 = vmatpush2.msra.mxu0 0.0
    %4829 = vmatprep.subr.mxu0 0.0
    %4830 = vmatpush2.msra.mxu0 0.0
    %4831 = vmatprep.subr.mxu0 0.0
    %4832 = vmatpush2.msra.mxu0 0.0
    %4833 = vmatprep.subr.mxu0 0.0
    %4834 = vmatpush2.msra.mxu0 0.0
    %4835 = vmatprep.subr.mxu0 0.0
    %4836 = vmatpush2.msra.mxu0 0.0
    %4837 = vmatprep.subr.mxu0 0.0
    %4838 = vmatpush2.msra.mxu0 0.0
    %4839 = vmatprep.subr.mxu0 0.0
    %4840 = vmatpush2.msra.mxu0 0.0
    %4841 = vmatprep.subr.mxu0 0.0
    %4842 = vmatpush2.msra.mxu0 0.0
    %4843 = vmatprep.mubr.f32.mxu0 0.0
    %4844 = vmatmul.mubr.f32.gmra.mxu0 %v4767
    %v4845 = vpop.f32.mrf.mxu0
    %v4846 = vadd.f32 0.0, %v4845
    %v4847 = vpop.f32.mrf.mxu0
    %4848 = vmatprep.mubr.f32.mxu0 0.0
    %4849 = vmatmul.mubr.f32.gmra.mxu0 %v4769
    %v4850 = vpop.f32.mrf.mxu0
    %v4851 = vadd.f32 0.0, %v4850
    %v4852 = vpop.f32.mrf.mxu0
    %4853 = vmatprep.mubr.f32.mxu0 0.0
    %4854 = vmatmul.mubr.f32.gmra.mxu0 %v4771
    %v4855 = vpop.f32.mrf.mxu0
    %v4856 = vadd.f32 0.0, %v4855
    %v4857 = vpop.f32.mrf.mxu0
    %4858 = vmatprep.mubr.f32.mxu0 0.0
    %4859 = vmatmul.mubr.f32.gmra.mxu0 %v4773
    %v4860 = vpop.f32.mrf.mxu0
    %v4861 = vadd.f32 0.0, %v4860
    %v4862 = vpop.f32.mrf.mxu0
    %4863 = vmatprep.mubr.f32.mxu0 0.0
    %4864 = vmatmul.mubr.f32.gmra.mxu0 %v4775
    %v4865 = vpop.f32.mrf.mxu0
    %v4866 = vadd.f32 0.0, %v4865
    %v4867 = vpop.f32.mrf.mxu0
    %4868 = vmatprep.mubr.f32.mxu0 0.0
    %4869 = vmatmul.mubr.f32.gmra.mxu0 %v4777
    %v4870 = vpop.f32.mrf.mxu0
    %v4871 = vadd.f32 0.0, %v4870
    %v4872 = vpop.f32.mrf.mxu0
    %4873 = vdwg.mxu0
    %v4874 = vrot.slane %v4745, 2
    %v4875 = vrot.slane %v4734, 2
    %v4876 = vsel %vm467, %v4874, %v4875
    %v4877 = vrot.slane %v4736, 2
    %v4878 = vsel %vm467, %v4875, %v4877
    %v4879 = vrot.slane %v4738, 2
    %v4880 = vsel %vm467, %v4877, %v4879
    %v4881 = vrot.slane %v4740, 2
    %v4882 = vsel %vm467, %v4879, %v4881
    %v4883 = vrot.slane %v4742, 2
    %v4884 = vsel %vm467, %v4881, %v4883
    %v4885 = vrot.slane %v4746, 2
    %v4886 = vsel %vm467, %v4883, %v4885
    %v4887 = vsel %vm1542, %v4876, 0
    %v4889 = vsel %vm1542, %v4878, 0
    %v4891 = vsel %vm1542, %v4880, 0
    %v4893 = vsel %vm1542, %v4882, 0
    %v4895 = vsel %vm1542, %v4884, 0
    %v4897 = vsel %vm1542, %v4886, 0
    %4899 = vmatprep.subr.mxu0 0.0
    %4900 = vmatpush1.msra.mxu0 0.0
    %4901 = vmatprep.subr.mxu0 0.0
    %4902 = vmatpush1.msra.mxu0 0.0
    %4903 = vmatprep.subr.mxu0 0.0
    %4904 = vmatpush1.msra.mxu0 0.0
    %4905 = vmatprep.subr.mxu0 0.0
    %4906 = vmatpush1.msra.mxu0 0.0
    %4907 = vmatprep.subr.mxu0 0.0
    %4908 = vmatpush1.msra.mxu0 0.0
    %4909 = vmatprep.subr.mxu0 0.0
    %4910 = vmatpush1.msra.mxu0 0.0
    %4911 = vmatprep.subr.mxu0 0.0
    %4912 = vmatpush1.msra.mxu0 0.0
    %4913 = vmatprep.subr.mxu0 0.0
    %4914 = vmatpush1.msra.mxu0 0.0
    %4915 = vmatprep.subr.mxu0 0.0
    %4916 = vmatpush1.msra.mxu0 0.0
    %4917 = vmatprep.subr.mxu0 0.0
    %4918 = vmatpush1.msra.mxu0 0.0
    %4919 = vmatprep.subr.mxu0 0.0
    %4920 = vmatpush1.msra.mxu0 0.0
    %4921 = vmatprep.subr.mxu0 0.0
    %4922 = vmatpush1.msra.mxu0 0.0
    %4923 = vmatprep.subr.mxu0 0.0
    %4924 = vmatpush1.msra.mxu0 0.0
    %4925 = vmatprep.subr.mxu0 0.0
    %4926 = vmatpush1.msra.mxu0 0.0
    %4927 = vmatprep.subr.mxu0 0.0
    %4928 = vmatpush1.msra.mxu0 %v4748
    %4929 = vmatprep.subr.mxu0 0.0
    %4930 = vmatpush1.msra.mxu0 %v4747
    %4931 = vmatprep.subr.mxu0 0.0
    %4932 = vmatpush2.msra.mxu0 0.0
    %4933 = vmatprep.subr.mxu0 0.0
    %4934 = vmatpush2.msra.mxu0 0.0
    %4935 = vmatprep.subr.mxu0 0.0
    %4936 = vmatpush2.msra.mxu0 0.0
    %4937 = vmatprep.subr.mxu0 0.0
    %4938 = vmatpush2.msra.mxu0 0.0
    %4939 = vmatprep.subr.mxu0 0.0
    %4940 = vmatpush2.msra.mxu0 0.0
    %4941 = vmatprep.subr.mxu0 0.0
    %4942 = vmatpush2.msra.mxu0 0.0
    %4943 = vmatprep.subr.mxu0 0.0
    %4944 = vmatpush2.msra.mxu0 0.0
    %4945 = vmatprep.subr.mxu0 0.0
    %4946 = vmatpush2.msra.mxu0 0.0
    %4947 = vmatprep.subr.mxu0 0.0
    %4948 = vmatpush2.msra.mxu0 0.0
    %4949 = vmatprep.subr.mxu0 0.0
    %4950 = vmatpush2.msra.mxu0 0.0
    %4951 = vmatprep.subr.mxu0 0.0
    %4952 = vmatpush2.msra.mxu0 0.0
    %4953 = vmatprep.subr.mxu0 0.0
    %4954 = vmatpush2.msra.mxu0 0.0
    %4955 = vmatprep.subr.mxu0 0.0
    %4956 = vmatpush2.msra.mxu0 0.0
    %4957 = vmatprep.subr.mxu0 0.0
    %4958 = vmatpush2.msra.mxu0 0.0
    %4959 = vmatprep.subr.mxu0 0.0
    %4960 = vmatpush2.msra.mxu0 0.0
    %4961 = vmatprep.subr.mxu0 0.0
    %4962 = vmatpush2.msra.mxu0 0.0
    %4963 = vmatprep.mubr.f32.mxu0 0.0
    %4964 = vmatmul.mubr.f32.gmra.mxu0 %v4887
    %v4965 = vpop.f32.mrf.mxu0
    %v4966 = vadd.f32 %v4846, %v4965
    %v4967 = vpop.f32.mrf.mxu0
    %4968 = vmatprep.mubr.f32.mxu0 0.0
    %4969 = vmatmul.mubr.f32.gmra.mxu0 %v4889
    %v4970 = vpop.f32.mrf.mxu0
    %v4971 = vadd.f32 %v4851, %v4970
    %v4972 = vpop.f32.mrf.mxu0
    %4973 = vmatprep.mubr.f32.mxu0 0.0
    %4974 = vmatmul.mubr.f32.gmra.mxu0 %v4891
    %v4975 = vpop.f32.mrf.mxu0
    %v4976 = vadd.f32 %v4856, %v4975
    %v4977 = vpop.f32.mrf.mxu0
    %4978 = vmatprep.mubr.f32.mxu0 0.0
    %4979 = vmatmul.mubr.f32.gmra.mxu0 %v4893
    %v4980 = vpop.f32.mrf.mxu0
    %v4981 = vadd.f32 %v4861, %v4980
    %v4982 = vpop.f32.mrf.mxu0
    %4983 = vmatprep.mubr.f32.mxu0 0.0
    %4984 = vmatmul.mubr.f32.gmra.mxu0 %v4895
    %v4985 = vpop.f32.mrf.mxu0
    %v4986 = vadd.f32 %v4866, %v4985
    %v4987 = vpop.f32.mrf.mxu0
    %4988 = vmatprep.mubr.f32.mxu0 0.0
    %4989 = vmatmul.mubr.f32.gmra.mxu0 %v4897
    %v4990 = vpop.f32.mrf.mxu0
    %v4991 = vadd.f32 %v4871, %v4990
    %v4992 = vpop.f32.mrf.mxu0
    %4993 = vdwg.mxu0
    %s4994 = scalar_lea.vmem [#allocation26], 32
    %v4995 = vld [vmem:[%s4994] sm:$0xff]
    %v4996 = vld [vmem:[%s4994 + $0x8] sm:$0xff]
    %v4997 = vrot.slane %v4745, 4
    %v4998 = vrot.slane %v4734, 4
    %v4999 = vsel %vm446, %v4997, %v4998
    %v5000 = vrot.slane %v4736, 4
    %v5001 = vsel %vm446, %v4998, %v5000
    %v5002 = vrot.slane %v4738, 4
    %v5003 = vsel %vm446, %v5000, %v5002
    %v5004 = vrot.slane %v4740, 4
    %v5005 = vsel %vm446, %v5002, %v5004
    %v5006 = vrot.slane %v4742, 4
    %v5007 = vsel %vm446, %v5004, %v5006
    %v5008 = vrot.slane %v4746, 4
    %v5009 = vsel %vm446, %v5006, %v5008
    %v5010 = vsel %vm1542, %v4999, 0
    %v5012 = vsel %vm1542, %v5001, 0
    %v5014 = vsel %vm1542, %v5003, 0
    %v5016 = vsel %vm1542, %v5005, 0
    %v5018 = vsel %vm1542, %v5007, 0
    %v5020 = vsel %vm1542, %v5009, 0
    %5022 = vmatprep.subr.mxu0 0.0
    %5023 = vmatpush1.msra.mxu0 0.0
    %5024 = vmatprep.subr.mxu0 0.0
    %5025 = vmatpush1.msra.mxu0 0.0
    %5026 = vmatprep.subr.mxu0 0.0
    %5027 = vmatpush1.msra.mxu0 0.0
    %5028 = vmatprep.subr.mxu0 0.0
    %5029 = vmatpush1.msra.mxu0 0.0
    %5030 = vmatprep.subr.mxu0 0.0
    %5031 = vmatpush1.msra.mxu0 0.0
    %5032 = vmatprep.subr.mxu0 0.0
    %5033 = vmatpush1.msra.mxu0 0.0
    %5034 = vmatprep.subr.mxu0 0.0
    %5035 = vmatpush1.msra.mxu0 0.0
    %5036 = vmatprep.subr.mxu0 0.0
    %5037 = vmatpush1.msra.mxu0 0.0
    %5038 = vmatprep.subr.mxu0 0.0
    %5039 = vmatpush1.msra.mxu0 0.0
    %5040 = vmatprep.subr.mxu0 0.0
    %5041 = vmatpush1.msra.mxu0 0.0
    %5042 = vmatprep.subr.mxu0 0.0
    %5043 = vmatpush1.msra.mxu0 0.0
    %5044 = vmatprep.subr.mxu0 0.0
    %5045 = vmatpush1.msra.mxu0 0.0
    %5046 = vmatprep.subr.mxu0 0.0
    %5047 = vmatpush1.msra.mxu0 0.0
    %5048 = vmatprep.subr.mxu0 0.0
    %5049 = vmatpush1.msra.mxu0 0.0
    %5050 = vmatprep.subr.mxu0 0.0
    %5051 = vmatpush1.msra.mxu0 %v4996
    %5052 = vmatprep.subr.mxu0 0.0
    %5053 = vmatpush1.msra.mxu0 %v4995
    %5054 = vmatprep.subr.mxu0 0.0
    %5055 = vmatpush2.msra.mxu0 0.0
    %5056 = vmatprep.subr.mxu0 0.0
    %5057 = vmatpush2.msra.mxu0 0.0
    %5058 = vmatprep.subr.mxu0 0.0
    %5059 = vmatpush2.msra.mxu0 0.0
    %5060 = vmatprep.subr.mxu0 0.0
    %5061 = vmatpush2.msra.mxu0 0.0
    %5062 = vmatprep.subr.mxu0 0.0
    %5063 = vmatpush2.msra.mxu0 0.0
    %5064 = vmatprep.subr.mxu0 0.0
    %5065 = vmatpush2.msra.mxu0 0.0
    %5066 = vmatprep.subr.mxu0 0.0
    %5067 = vmatpush2.msra.mxu0 0.0
    %5068 = vmatprep.subr.mxu0 0.0
    %5069 = vmatpush2.msra.mxu0 0.0
    %5070 = vmatprep.subr.mxu0 0.0
    %5071 = vmatpush2.msra.mxu0 0.0
    %5072 = vmatprep.subr.mxu0 0.0
    %5073 = vmatpush2.msra.mxu0 0.0
    %5074 = vmatprep.subr.mxu0 0.0
    %5075 = vmatpush2.msra.mxu0 0.0
    %5076 = vmatprep.subr.mxu0 0.0
    %5077 = vmatpush2.msra.mxu0 0.0
    %5078 = vmatprep.subr.mxu0 0.0
    %5079 = vmatpush2.msra.mxu0 0.0
    %5080 = vmatprep.subr.mxu0 0.0
    %5081 = vmatpush2.msra.mxu0 0.0
    %5082 = vmatprep.subr.mxu0 0.0
    %5083 = vmatpush2.msra.mxu0 0.0
    %5084 = vmatprep.subr.mxu0 0.0
    %5085 = vmatpush2.msra.mxu0 0.0
    %5086 = vmatprep.mubr.f32.mxu0 0.0
    %5087 = vmatmul.mubr.f32.gmra.mxu0 %v5010
    %v5088 = vpop.f32.mrf.mxu0
    %v5089 = vadd.f32 0.0, %v5088
    %v5090 = vpop.f32.mrf.mxu0
    %5091 = vmatprep.mubr.f32.mxu0 0.0
    %5092 = vmatmul.mubr.f32.gmra.mxu0 %v5012
    %v5093 = vpop.f32.mrf.mxu0
    %v5094 = vadd.f32 0.0, %v5093
    %v5095 = vpop.f32.mrf.mxu0
    %5096 = vmatprep.mubr.f32.mxu0 0.0
    %5097 = vmatmul.mubr.f32.gmra.mxu0 %v5014
    %v5098 = vpop.f32.mrf.mxu0
    %v5099 = vadd.f32 0.0, %v5098
    %v5100 = vpop.f32.mrf.mxu0
    %5101 = vmatprep.mubr.f32.mxu0 0.0
    %5102 = vmatmul.mubr.f32.gmra.mxu0 %v5016
    %v5103 = vpop.f32.mrf.mxu0
    %v5104 = vadd.f32 0.0, %v5103
    %v5105 = vpop.f32.mrf.mxu0
    %5106 = vmatprep.mubr.f32.mxu0 0.0
    %5107 = vmatmul.mubr.f32.gmra.mxu0 %v5018
    %v5108 = vpop.f32.mrf.mxu0
    %v5109 = vadd.f32 0.0, %v5108
    %v5110 = vpop.f32.mrf.mxu0
    %5111 = vmatprep.mubr.f32.mxu0 0.0
    %5112 = vmatmul.mubr.f32.gmra.mxu0 %v5020
    %v5113 = vpop.f32.mrf.mxu0
    %v5114 = vadd.f32 0.0, %v5113
    %v5115 = vpop.f32.mrf.mxu0
    %5116 = vdwg.mxu0
    %v5117 = vadd.f32 %v4966, %v5089
    %v5118 = vadd.f32 %v4971, %v5094
    %v5119 = vadd.f32 %v4976, %v5099
    %v5120 = vadd.f32 %v4981, %v5104
    %v5121 = vadd.f32 %v4986, %v5109
    %v5122 = vadd.f32 %v4991, %v5114
    %s5123 = scalar_lea.vmem [#allocation26], 48
    %v5124 = vld [vmem:[%s5123] sm:$0xff]
    %v5125 = vld [vmem:[%s5123 + $0x8] sm:$0xff]
    %v5126 = vrot.slane %v4745, 5
    %v5127 = vrot.slane %v4734, 5
    %v5128 = vsel %vm981, %v5126, %v5127
    %v5129 = vrot.slane %v4736, 5
    %v5130 = vsel %vm981, %v5127, %v5129
    %v5131 = vrot.slane %v4738, 5
    %v5132 = vsel %vm981, %v5129, %v5131
    %v5133 = vrot.slane %v4740, 5
    %v5134 = vsel %vm981, %v5131, %v5133
    %v5135 = vrot.slane %v4742, 5
    %v5136 = vsel %vm981, %v5133, %v5135
    %v5137 = vrot.slane %v4746, 5
    %v5138 = vsel %vm981, %v5135, %v5137
    %v5139 = vsel %vm1542, %v5128, 0
    %v5141 = vsel %vm1542, %v5130, 0
    %v5143 = vsel %vm1542, %v5132, 0
    %v5145 = vsel %vm1542, %v5134, 0
    %v5147 = vsel %vm1542, %v5136, 0
    %v5149 = vsel %vm1542, %v5138, 0
    %5151 = vmatprep.subr.mxu0 0.0
    %5152 = vmatpush1.msra.mxu0 0.0
    %5153 = vmatprep.subr.mxu0 0.0
    %5154 = vmatpush1.msra.mxu0 0.0
    %5155 = vmatprep.subr.mxu0 0.0
    %5156 = vmatpush1.msra.mxu0 0.0
    %5157 = vmatprep.subr.mxu0 0.0
    %5158 = vmatpush1.msra.mxu0 0.0
    %5159 = vmatprep.subr.mxu0 0.0
    %5160 = vmatpush1.msra.mxu0 0.0
    %5161 = vmatprep.subr.mxu0 0.0
    %5162 = vmatpush1.msra.mxu0 0.0
    %5163 = vmatprep.subr.mxu0 0.0
    %5164 = vmatpush1.msra.mxu0 0.0
    %5165 = vmatprep.subr.mxu0 0.0
    %5166 = vmatpush1.msra.mxu0 0.0
    %5167 = vmatprep.subr.mxu0 0.0
    %5168 = vmatpush1.msra.mxu0 0.0
    %5169 = vmatprep.subr.mxu0 0.0
    %5170 = vmatpush1.msra.mxu0 0.0
    %5171 = vmatprep.subr.mxu0 0.0
    %5172 = vmatpush1.msra.mxu0 0.0
    %5173 = vmatprep.subr.mxu0 0.0
    %5174 = vmatpush1.msra.mxu0 0.0
    %5175 = vmatprep.subr.mxu0 0.0
    %5176 = vmatpush1.msra.mxu0 0.0
    %5177 = vmatprep.subr.mxu0 0.0
    %5178 = vmatpush1.msra.mxu0 0.0
    %5179 = vmatprep.subr.mxu0 0.0
    %5180 = vmatpush1.msra.mxu0 %v5125
    %5181 = vmatprep.subr.mxu0 0.0
    %5182 = vmatpush1.msra.mxu0 %v5124
    %5183 = vmatprep.subr.mxu0 0.0
    %5184 = vmatpush2.msra.mxu0 0.0
    %5185 = vmatprep.subr.mxu0 0.0
    %5186 = vmatpush2.msra.mxu0 0.0
    %5187 = vmatprep.subr.mxu0 0.0
    %5188 = vmatpush2.msra.mxu0 0.0
    %5189 = vmatprep.subr.mxu0 0.0
    %5190 = vmatpush2.msra.mxu0 0.0
    %5191 = vmatprep.subr.mxu0 0.0
    %5192 = vmatpush2.msra.mxu0 0.0
    %5193 = vmatprep.subr.mxu0 0.0
    %5194 = vmatpush2.msra.mxu0 0.0
    %5195 = vmatprep.subr.mxu0 0.0
    %5196 = vmatpush2.msra.mxu0 0.0
    %5197 = vmatprep.subr.mxu0 0.0
    %5198 = vmatpush2.msra.mxu0 0.0
    %5199 = vmatprep.subr.mxu0 0.0
    %5200 = vmatpush2.msra.mxu0 0.0
    %5201 = vmatprep.subr.mxu0 0.0
    %5202 = vmatpush2.msra.mxu0 0.0
    %5203 = vmatprep.subr.mxu0 0.0
    %5204 = vmatpush2.msra.mxu0 0.0
    %5205 = vmatprep.subr.mxu0 0.0
    %5206 = vmatpush2.msra.mxu0 0.0
    %5207 = vmatprep.subr.mxu0 0.0
    %5208 = vmatpush2.msra.mxu0 0.0
    %5209 = vmatprep.subr.mxu0 0.0
    %5210 = vmatpush2.msra.mxu0 0.0
    %5211 = vmatprep.subr.mxu0 0.0
    %5212 = vmatpush2.msra.mxu0 0.0
    %5213 = vmatprep.subr.mxu0 0.0
    %5214 = vmatpush2.msra.mxu0 0.0
    %5215 = vmatprep.mubr.f32.mxu0 0.0
    %5216 = vmatmul.mubr.f32.gmra.mxu0 %v5139
    %v5217 = vpop.f32.mrf.mxu0
    %v5218 = vadd.f32 0.0, %v5217
    %v5219 = vpop.f32.mrf.mxu0
    %5220 = vmatprep.mubr.f32.mxu0 0.0
    %5221 = vmatmul.mubr.f32.gmra.mxu0 %v5141
    %v5222 = vpop.f32.mrf.mxu0
    %v5223 = vadd.f32 0.0, %v5222
    %v5224 = vpop.f32.mrf.mxu0
    %5225 = vmatprep.mubr.f32.mxu0 0.0
    %5226 = vmatmul.mubr.f32.gmra.mxu0 %v5143
    %v5227 = vpop.f32.mrf.mxu0
    %v5228 = vadd.f32 0.0, %v5227
    %v5229 = vpop.f32.mrf.mxu0
    %5230 = vmatprep.mubr.f32.mxu0 0.0
    %5231 = vmatmul.mubr.f32.gmra.mxu0 %v5145
    %v5232 = vpop.f32.mrf.mxu0
    %v5233 = vadd.f32 0.0, %v5232
    %v5234 = vpop.f32.mrf.mxu0
    %5235 = vmatprep.mubr.f32.mxu0 0.0
    %5236 = vmatmul.mubr.f32.gmra.mxu0 %v5147
    %v5237 = vpop.f32.mrf.mxu0
    %v5238 = vadd.f32 0.0, %v5237
    %v5239 = vpop.f32.mrf.mxu0
    %5240 = vmatprep.mubr.f32.mxu0 0.0
    %5241 = vmatmul.mubr.f32.gmra.mxu0 %v5149
    %v5242 = vpop.f32.mrf.mxu0
    %v5243 = vadd.f32 0.0, %v5242
    %v5244 = vpop.f32.mrf.mxu0
    %5245 = vdwg.mxu0
    %v5246 = vadd.f32 %v5117, %v5218
    %v5247 = vadd.f32 %v5118, %v5223
    %v5248 = vadd.f32 %v5119, %v5228
    %v5249 = vadd.f32 %v5120, %v5233
    %v5250 = vadd.f32 %v5121, %v5238
    %v5251 = vadd.f32 %v5122, %v5243
    %s5252 = scalar_lea.vmem [#allocation26], 64
    %v5253 = vld [vmem:[%s5252] sm:$0xff]
    %v5254 = vld [vmem:[%s5252 + $0x8] sm:$0xff]
    %v5255 = vrot.slane %v4745, 6
    %v5256 = vrot.slane %v4734, 6
    %v5257 = vsel %vm1113, %v5255, %v5256
    %v5258 = vrot.slane %v4736, 6
    %v5259 = vsel %vm1113, %v5256, %v5258
    %v5260 = vrot.slane %v4738, 6
    %v5261 = vsel %vm1113, %v5258, %v5260
    %v5262 = vrot.slane %v4740, 6
    %v5263 = vsel %vm1113, %v5260, %v5262
    %v5264 = vrot.slane %v4742, 6
    %v5265 = vsel %vm1113, %v5262, %v5264
    %v5266 = vrot.slane %v4746, 6
    %v5267 = vsel %vm1113, %v5264, %v5266
    %v5268 = vsel %vm1542, %v5257, 0
    %v5270 = vsel %vm1542, %v5259, 0
    %v5272 = vsel %vm1542, %v5261, 0
    %v5274 = vsel %vm1542, %v5263, 0
    %v5276 = vsel %vm1542, %v5265, 0
    %v5278 = vsel %vm1542, %v5267, 0
    %5280 = vmatprep.subr.mxu0 0.0
    %5281 = vmatpush1.msra.mxu0 0.0
    %5282 = vmatprep.subr.mxu0 0.0
    %5283 = vmatpush1.msra.mxu0 0.0
    %5284 = vmatprep.subr.mxu0 0.0
    %5285 = vmatpush1.msra.mxu0 0.0
    %5286 = vmatprep.subr.mxu0 0.0
    %5287 = vmatpush1.msra.mxu0 0.0
    %5288 = vmatprep.subr.mxu0 0.0
    %5289 = vmatpush1.msra.mxu0 0.0
    %5290 = vmatprep.subr.mxu0 0.0
    %5291 = vmatpush1.msra.mxu0 0.0
    %5292 = vmatprep.subr.mxu0 0.0
    %5293 = vmatpush1.msra.mxu0 0.0
    %5294 = vmatprep.subr.mxu0 0.0
    %5295 = vmatpush1.msra.mxu0 0.0
    %5296 = vmatprep.subr.mxu0 0.0
    %5297 = vmatpush1.msra.mxu0 0.0
    %5298 = vmatprep.subr.mxu0 0.0
    %5299 = vmatpush1.msra.mxu0 0.0
    %5300 = vmatprep.subr.mxu0 0.0
    %5301 = vmatpush1.msra.mxu0 0.0
    %5302 = vmatprep.subr.mxu0 0.0
    %5303 = vmatpush1.msra.mxu0 0.0
    %5304 = vmatprep.subr.mxu0 0.0
    %5305 = vmatpush1.msra.mxu0 0.0
    %5306 = vmatprep.subr.mxu0 0.0
    %5307 = vmatpush1.msra.mxu0 0.0
    %5308 = vmatprep.subr.mxu0 0.0
    %5309 = vmatpush1.msra.mxu0 %v5254
    %5310 = vmatprep.subr.mxu0 0.0
    %5311 = vmatpush1.msra.mxu0 %v5253
    %5312 = vmatprep.subr.mxu0 0.0
    %5313 = vmatpush2.msra.mxu0 0.0
    %5314 = vmatprep.subr.mxu0 0.0
    %5315 = vmatpush2.msra.mxu0 0.0
    %5316 = vmatprep.subr.mxu0 0.0
    %5317 = vmatpush2.msra.mxu0 0.0
    %5318 = vmatprep.subr.mxu0 0.0
    %5319 = vmatpush2.msra.mxu0 0.0
    %5320 = vmatprep.subr.mxu0 0.0
    %5321 = vmatpush2.msra.mxu0 0.0
    %5322 = vmatprep.subr.mxu0 0.0
    %5323 = vmatpush2.msra.mxu0 0.0
    %5324 = vmatprep.subr.mxu0 0.0
    %5325 = vmatpush2.msra.mxu0 0.0
    %5326 = vmatprep.subr.mxu0 0.0
    %5327 = vmatpush2.msra.mxu0 0.0
    %5328 = vmatprep.subr.mxu0 0.0
    %5329 = vmatpush2.msra.mxu0 0.0
    %5330 = vmatprep.subr.mxu0 0.0
    %5331 = vmatpush2.msra.mxu0 0.0
    %5332 = vmatprep.subr.mxu0 0.0
    %5333 = vmatpush2.msra.mxu0 0.0
    %5334 = vmatprep.subr.mxu0 0.0
    %5335 = vmatpush2.msra.mxu0 0.0
    %5336 = vmatprep.subr.mxu0 0.0
    %5337 = vmatpush2.msra.mxu0 0.0
    %5338 = vmatprep.subr.mxu0 0.0
    %5339 = vmatpush2.msra.mxu0 0.0
    %5340 = vmatprep.subr.mxu0 0.0
    %5341 = vmatpush2.msra.mxu0 0.0
    %5342 = vmatprep.subr.mxu0 0.0
    %5343 = vmatpush2.msra.mxu0 0.0
    %5344 = vmatprep.mubr.f32.mxu0 0.0
    %5345 = vmatmul.mubr.f32.gmra.mxu0 %v5268
    %v5346 = vpop.f32.mrf.mxu0
    %v5347 = vadd.f32 0.0, %v5346
    %v5348 = vpop.f32.mrf.mxu0
    %5349 = vmatprep.mubr.f32.mxu0 0.0
    %5350 = vmatmul.mubr.f32.gmra.mxu0 %v5270
    %v5351 = vpop.f32.mrf.mxu0
    %v5352 = vadd.f32 0.0, %v5351
    %v5353 = vpop.f32.mrf.mxu0
    %5354 = vmatprep.mubr.f32.mxu0 0.0
    %5355 = vmatmul.mubr.f32.gmra.mxu0 %v5272
    %v5356 = vpop.f32.mrf.mxu0
    %v5357 = vadd.f32 0.0, %v5356
    %v5358 = vpop.f32.mrf.mxu0
    %5359 = vmatprep.mubr.f32.mxu0 0.0
    %5360 = vmatmul.mubr.f32.gmra.mxu0 %v5274
    %v5361 = vpop.f32.mrf.mxu0
    %v5362 = vadd.f32 0.0, %v5361
    %v5363 = vpop.f32.mrf.mxu0
    %5364 = vmatprep.mubr.f32.mxu0 0.0
    %5365 = vmatmul.mubr.f32.gmra.mxu0 %v5276
    %v5366 = vpop.f32.mrf.mxu0
    %v5367 = vadd.f32 0.0, %v5366
    %v5368 = vpop.f32.mrf.mxu0
    %5369 = vmatprep.mubr.f32.mxu0 0.0
    %5370 = vmatmul.mubr.f32.gmra.mxu0 %v5278
    %v5371 = vpop.f32.mrf.mxu0
    %v5372 = vadd.f32 0.0, %v5371
    %v5373 = vpop.f32.mrf.mxu0
    %5374 = vdwg.mxu0
    %v5375 = vadd.f32 %v5246, %v5347
    %v5376 = vadd.f32 %v5247, %v5352
    %v5377 = vadd.f32 %v5248, %v5357
    %v5378 = vadd.f32 %v5249, %v5362
    %v5379 = vadd.f32 %v5250, %v5367
    %v5380 = vadd.f32 %v5251, %v5372
    %v5381 = vld [vmem:[#allocation28] sm:$0x1]
    %v5383 = vlaneseq
    %v5384 = vshrl.u32 %v5383, 7
    %v5385 = vsub.s32 0, %v5384
    %v5386 = vrot.slane %v5381, %v5385
    %v5388 = vadd.f32 %v5375, %v5386
    %v5389 = vadd.f32 %v5376, %v5386
    %v5390 = vadd.f32 %v5377, %v5386
    %v5391 = vadd.f32 %v5378, %v5386
    %v5392 = vadd.f32 %v5379, %v5386
    %v5393 = vadd.f32 %v5380, %v5386
    %v5394 = vmul.f32 %v5388, %v1509
    %v5395 = vmul.f32 %v5389, %v1514
    %v5396 = vmul.f32 %v5390, %v1519
    %v5397 = vmul.f32 %v5391, %v1524
    %v5398 = vmul.f32 %v5392, %v1529
    %v5399 = vmul.f32 %v5393, %v1534
    %v5400 = vsel %vm1542, %v5394, 0.0
    %v5401 = vsel %vm1542, %v5395, 0.0
    %v5402 = vadd.f32 %v5400, %v5401
    %v5403 = vsel %vm1542, %v5396, 0.0
    %v5404 = vadd.f32 %v5402, %v5403
    %v5405 = vsel %vm1542, %v5397, 0.0
    %v5406 = vadd.f32 %v5404, %v5405
    %v5407 = vsel %vm1542, %v5398, 0.0
    %v5408 = vadd.f32 %v5406, %v5407
    %v5409 = vsel %vm1542, %v5399, 0.0
    %v5410 = vadd.f32 %v5408, %v5409
    %v5411 = vrot.slane %v5410, 4
    %v5412 = vadd.f32 %v5410, %v5411
    %v5413 = vrot.slane %v5412, 2
    %v5414 = vadd.f32 %v5412, %v5413
    %v5415 = vrot.slane %v5414, 1
    %v5416 = vadd.f32 %v5414, %v5415
    %v5417 = vmul.f32 %v5416, 0.03125
    %v5418 = vsub.f32 %v5388, %v5417
    %v5419 = vsub.f32 %v5389, %v5417
    %v5420 = vsub.f32 %v5390, %v5417
    %v5421 = vsub.f32 %v5391, %v5417
    %v5422 = vsub.f32 %v5392, %v5417
    %v5423 = vsub.f32 %v5393, %v5417
    %v5424 = vmul.f32 %v5418, %v1509
    %v5425 = vmul.f32 %v5419, %v1514
    %v5426 = vmul.f32 %v5420, %v1519
    %v5427 = vmul.f32 %v5421, %v1524
    %v5428 = vmul.f32 %v5422, %v1529
    %v5429 = vmul.f32 %v5423, %v1534
    %v5430 = vmul.f32 %v5424, %v5424
    %v5431 = vmul.f32 %v5425, %v5425
    %v5432 = vmul.f32 %v5426, %v5426
    %v5433 = vmul.f32 %v5427, %v5427
    %v5434 = vmul.f32 %v5428, %v5428
    %v5435 = vmul.f32 %v5429, %v5429
    %v5436 = vsel %vm1542, %v5430, 0.0
    %v5437 = vsel %vm1542, %v5431, 0.0
    %v5438 = vadd.f32 %v5436, %v5437
    %v5439 = vsel %vm1542, %v5432, 0.0
    %v5440 = vadd.f32 %v5438, %v5439
    %v5441 = vsel %vm1542, %v5433, 0.0
    %v5442 = vadd.f32 %v5440, %v5441
    %v5443 = vsel %vm1542, %v5434, 0.0
    %v5444 = vadd.f32 %v5442, %v5443
    %v5445 = vsel %vm1542, %v5435, 0.0
    %v5446 = vadd.f32 %v5444, %v5445
    %v5447 = vrot.slane %v5446, 4
    %v5448 = vadd.f32 %v5446, %v5447
    %v5449 = vrot.slane %v5448, 2
    %v5450 = vadd.f32 %v5448, %v5449
    %v5451 = vrot.slane %v5450, 1
    %v5452 = vadd.f32 %v5450, %v5451
    %v5453 = vmul.f32 %v5452, 0.03125
    %v5454 = vld [vmem:[#allocation29] sm:$0x1]
    %v5455 = vadd.f32 %v5453, 1e-05
    %v5456 = vrsqrt.pop %v5455
    %v5457 = vmul.f32 %v5454, %v5456
    %v5458 = vld [vmem:[#allocation31] sm:$0x1]
    %v5459 = vmul.f32 %v5417, %v5457
    %v5460 = vsub.f32 %v5458, %v5459
    %v5462 = vlaneseq
    %v5463 = vshrl.u32 %v5462, 7
    %v5464 = vsub.s32 0, %v5463
    %v5465 = vrot.slane %v5457, %v5464
    %v5467 = vmul.f32 %v5388, %v5465
    %v5468 = vmul.f32 %v5389, %v5465
    %v5469 = vmul.f32 %v5390, %v5465
    %v5470 = vmul.f32 %v5391, %v5465
    %v5471 = vmul.f32 %v5392, %v5465
    %v5472 = vmul.f32 %v5393, %v5465
    %v5474 = vlaneseq
    %v5475 = vshrl.u32 %v5474, 7
    %v5476 = vsub.s32 0, %v5475
    %v5477 = vrot.slane %v5460, %v5476
    %v5479 = vadd.f32 %v5467, %v5477
    %v5480 = vadd.f32 %v5468, %v5477
    %v5481 = vadd.f32 %v5469, %v5477
    %v5482 = vadd.f32 %v5470, %v5477
    %v5483 = vadd.f32 %v5471, %v5477
    %v5484 = vadd.f32 %v5472, %v5477
    %v5485 = vmul.f32 %v5479, %v1509
    %v5486 = vmul.f32 %v5480, %v1514
    %v5487 = vmul.f32 %v5481, %v1519
    %v5488 = vmul.f32 %v5482, %v1524
    %v5489 = vmul.f32 %v5483, %v1529
    %v5490 = vmul.f32 %v5484, %v1534
    %v5491 = vmax.f32 %v5485, 0.0
    %v5492 = vmax.f32 %v5486, 0.0
    %v5493 = vmax.f32 %v5487, 0.0
    %v5494 = vmax.f32 %v5488, 0.0
    %v5495 = vmax.f32 %v5489, 0.0
    %v5496 = vmax.f32 %v5490, 0.0
    %v5503 = vrot.slane %v5491, 4
    %v5504 = vrot.slane %v5492, 4
    %v5505 = vsel %vm446, %v5503, %v5504
    %v5506 = vrot.slane %v5493, 4
    %v5507 = vsel %vm446, %v5504, %v5506
    %v5508 = vrot.slane %v5494, 4
    %v5509 = vsel %vm446, %v5506, %v5508
    %v5510 = vrot.slane %v5495, 4
    %v5511 = vsel %vm446, %v5508, %v5510
    %v5512 = vrot.slane %v5496, 4
    %v5513 = vsel %vm446, %v5510, %v5512
    %v5516 = vsel %vm446, 0.0, %v5503
    %v5517 = vsel %vm446, %v5512, 0.0
    %v5518 = vld [vmem:[%s47] sm:$0xff]
    %v5519 = vld [vmem:[%s47 + $0x8] sm:$0xff]
    %s5520 = scalar_lea.vmem %s47, 16
    %v5521 = vld [vmem:[%s5520] sm:$0xff]
    %v5522 = vld [vmem:[%s5520 + $0x8] sm:$0xff]
    %v5525 = vrot.slane %v5516, 2
    %v5526 = vrot.slane %v5505, 2
    %v5527 = vsel %vm467, %v5525, %v5526
    %v5528 = vrot.slane %v5507, 2
    %v5529 = vsel %vm467, %v5526, %v5528
    %v5530 = vrot.slane %v5509, 2
    %v5531 = vsel %vm467, %v5528, %v5530
    %v5532 = vrot.slane %v5511, 2
    %v5533 = vsel %vm467, %v5530, %v5532
    %v5534 = vrot.slane %v5513, 2
    %v5535 = vsel %vm467, %v5532, %v5534
    %v5536 = vrot.slane %v5517, 2
    %v5537 = vsel %vm467, %v5534, %v5536
    %v5538 = vsel %vm1542, %v5527, 0
    %v5540 = vsel %vm1542, %v5529, 0
    %v5542 = vsel %vm1542, %v5531, 0
    %v5544 = vsel %vm1542, %v5533, 0
    %v5546 = vsel %vm1542, %v5535, 0
    %v5548 = vsel %vm1542, %v5537, 0
    %5550 = vmatprep.subr.mxu0 0.0
    %5551 = vmatpush1.msra.mxu0 0.0
    %5552 = vmatprep.subr.mxu0 0.0
    %5553 = vmatpush1.msra.mxu0 0.0
    %5554 = vmatprep.subr.mxu0 0.0
    %5555 = vmatpush1.msra.mxu0 0.0
    %5556 = vmatprep.subr.mxu0 0.0
    %5557 = vmatpush1.msra.mxu0 0.0
    %5558 = vmatprep.subr.mxu0 0.0
    %5559 = vmatpush1.msra.mxu0 0.0
    %5560 = vmatprep.subr.mxu0 0.0
    %5561 = vmatpush1.msra.mxu0 0.0
    %5562 = vmatprep.subr.mxu0 0.0
    %5563 = vmatpush1.msra.mxu0 0.0
    %5564 = vmatprep.subr.mxu0 0.0
    %5565 = vmatpush1.msra.mxu0 0.0
    %5566 = vmatprep.subr.mxu0 0.0
    %5567 = vmatpush1.msra.mxu0 0.0
    %5568 = vmatprep.subr.mxu0 0.0
    %5569 = vmatpush1.msra.mxu0 0.0
    %5570 = vmatprep.subr.mxu0 0.0
    %5571 = vmatpush1.msra.mxu0 0.0
    %5572 = vmatprep.subr.mxu0 0.0
    %5573 = vmatpush1.msra.mxu0 0.0
    %5574 = vmatprep.subr.mxu0 0.0
    %5575 = vmatpush1.msra.mxu0 0.0
    %5576 = vmatprep.subr.mxu0 0.0
    %5577 = vmatpush1.msra.mxu0 0.0
    %5578 = vmatprep.subr.mxu0 0.0
    %5579 = vmatpush1.msra.mxu0 %v5522
    %5580 = vmatprep.subr.mxu0 0.0
    %5581 = vmatpush1.msra.mxu0 %v5521
    %5582 = vmatprep.subr.mxu0 0.0
    %5583 = vmatpush2.msra.mxu0 0.0
    %5584 = vmatprep.subr.mxu0 0.0
    %5585 = vmatpush2.msra.mxu0 0.0
    %5586 = vmatprep.subr.mxu0 0.0
    %5587 = vmatpush2.msra.mxu0 0.0
    %5588 = vmatprep.subr.mxu0 0.0
    %5589 = vmatpush2.msra.mxu0 0.0
    %5590 = vmatprep.subr.mxu0 0.0
    %5591 = vmatpush2.msra.mxu0 0.0
    %5592 = vmatprep.subr.mxu0 0.0
    %5593 = vmatpush2.msra.mxu0 0.0
    %5594 = vmatprep.subr.mxu0 0.0
    %5595 = vmatpush2.msra.mxu0 0.0
    %5596 = vmatprep.subr.mxu0 0.0
    %5597 = vmatpush2.msra.mxu0 0.0
    %5598 = vmatprep.subr.mxu0 0.0
    %5599 = vmatpush2.msra.mxu0 0.0
    %5600 = vmatprep.subr.mxu0 0.0
    %5601 = vmatpush2.msra.mxu0 0.0
    %5602 = vmatprep.subr.mxu0 0.0
    %5603 = vmatpush2.msra.mxu0 0.0
    %5604 = vmatprep.subr.mxu0 0.0
    %5605 = vmatpush2.msra.mxu0 0.0
    %5606 = vmatprep.subr.mxu0 0.0
    %5607 = vmatpush2.msra.mxu0 0.0
    %5608 = vmatprep.subr.mxu0 0.0
    %5609 = vmatpush2.msra.mxu0 0.0
    %5610 = vmatprep.subr.mxu0 0.0
    %5611 = vmatpush2.msra.mxu0 0.0
    %5612 = vmatprep.subr.mxu0 0.0
    %5613 = vmatpush2.msra.mxu0 0.0
    %5614 = vmatprep.mubr.f32.mxu0 0.0
    %5615 = vmatmul.mubr.f32.gmra.mxu0 %v5538
    %v5616 = vpop.f32.mrf.mxu0
    %v5617 = vadd.f32 0.0, %v5616
    %v5618 = vpop.f32.mrf.mxu0
    %5619 = vmatprep.mubr.f32.mxu0 0.0
    %5620 = vmatmul.mubr.f32.gmra.mxu0 %v5540
    %v5621 = vpop.f32.mrf.mxu0
    %v5622 = vadd.f32 0.0, %v5621
    %v5623 = vpop.f32.mrf.mxu0
    %5624 = vmatprep.mubr.f32.mxu0 0.0
    %5625 = vmatmul.mubr.f32.gmra.mxu0 %v5542
    %v5626 = vpop.f32.mrf.mxu0
    %v5627 = vadd.f32 0.0, %v5626
    %v5628 = vpop.f32.mrf.mxu0
    %5629 = vmatprep.mubr.f32.mxu0 0.0
    %5630 = vmatmul.mubr.f32.gmra.mxu0 %v5544
    %v5631 = vpop.f32.mrf.mxu0
    %v5632 = vadd.f32 0.0, %v5631
    %v5633 = vpop.f32.mrf.mxu0
    %5634 = vmatprep.mubr.f32.mxu0 0.0
    %5635 = vmatmul.mubr.f32.gmra.mxu0 %v5546
    %v5636 = vpop.f32.mrf.mxu0
    %v5637 = vadd.f32 0.0, %v5636
    %v5638 = vpop.f32.mrf.mxu0
    %5639 = vmatprep.mubr.f32.mxu0 0.0
    %5640 = vmatmul.mubr.f32.gmra.mxu0 %v5548
    %v5641 = vpop.f32.mrf.mxu0
    %v5642 = vadd.f32 0.0, %v5641
    %v5643 = vpop.f32.mrf.mxu0
    %5644 = vdwg.mxu0
    %v5645 = vrot.slane %v5516, 1
    %v5646 = vrot.slane %v5505, 1
    %v5647 = vsel %vm592, %v5645, %v5646
    %v5648 = vrot.slane %v5507, 1
    %v5649 = vsel %vm592, %v5646, %v5648
    %v5650 = vrot.slane %v5509, 1
    %v5651 = vsel %vm592, %v5648, %v5650
    %v5652 = vrot.slane %v5511, 1
    %v5653 = vsel %vm592, %v5650, %v5652
    %v5654 = vrot.slane %v5513, 1
    %v5655 = vsel %vm592, %v5652, %v5654
    %v5656 = vrot.slane %v5517, 1
    %v5657 = vsel %vm592, %v5654, %v5656
    %v5658 = vsel %vm1542, %v5647, 0
    %v5660 = vsel %vm1542, %v5649, 0
    %v5662 = vsel %vm1542, %v5651, 0
    %v5664 = vsel %vm1542, %v5653, 0
    %v5666 = vsel %vm1542, %v5655, 0
    %v5668 = vsel %vm1542, %v5657, 0
    %5670 = vmatprep.subr.mxu0 0.0
    %5671 = vmatpush1.msra.mxu0 0.0
    %5672 = vmatprep.subr.mxu0 0.0
    %5673 = vmatpush1.msra.mxu0 0.0
    %5674 = vmatprep.subr.mxu0 0.0
    %5675 = vmatpush1.msra.mxu0 0.0
    %5676 = vmatprep.subr.mxu0 0.0
    %5677 = vmatpush1.msra.mxu0 0.0
    %5678 = vmatprep.subr.mxu0 0.0
    %5679 = vmatpush1.msra.mxu0 0.0
    %5680 = vmatprep.subr.mxu0 0.0
    %5681 = vmatpush1.msra.mxu0 0.0
    %5682 = vmatprep.subr.mxu0 0.0
    %5683 = vmatpush1.msra.mxu0 0.0
    %5684 = vmatprep.subr.mxu0 0.0
    %5685 = vmatpush1.msra.mxu0 0.0
    %5686 = vmatprep.subr.mxu0 0.0
    %5687 = vmatpush1.msra.mxu0 0.0
    %5688 = vmatprep.subr.mxu0 0.0
    %5689 = vmatpush1.msra.mxu0 0.0
    %5690 = vmatprep.subr.mxu0 0.0
    %5691 = vmatpush1.msra.mxu0 0.0
    %5692 = vmatprep.subr.mxu0 0.0
    %5693 = vmatpush1.msra.mxu0 0.0
    %5694 = vmatprep.subr.mxu0 0.0
    %5695 = vmatpush1.msra.mxu0 0.0
    %5696 = vmatprep.subr.mxu0 0.0
    %5697 = vmatpush1.msra.mxu0 0.0
    %5698 = vmatprep.subr.mxu0 0.0
    %5699 = vmatpush1.msra.mxu0 %v5519
    %5700 = vmatprep.subr.mxu0 0.0
    %5701 = vmatpush1.msra.mxu0 %v5518
    %5702 = vmatprep.subr.mxu0 0.0
    %5703 = vmatpush2.msra.mxu0 0.0
    %5704 = vmatprep.subr.mxu0 0.0
    %5705 = vmatpush2.msra.mxu0 0.0
    %5706 = vmatprep.subr.mxu0 0.0
    %5707 = vmatpush2.msra.mxu0 0.0
    %5708 = vmatprep.subr.mxu0 0.0
    %5709 = vmatpush2.msra.mxu0 0.0
    %5710 = vmatprep.subr.mxu0 0.0
    %5711 = vmatpush2.msra.mxu0 0.0
    %5712 = vmatprep.subr.mxu0 0.0
    %5713 = vmatpush2.msra.mxu0 0.0
    %5714 = vmatprep.subr.mxu0 0.0
    %5715 = vmatpush2.msra.mxu0 0.0
    %5716 = vmatprep.subr.mxu0 0.0
    %5717 = vmatpush2.msra.mxu0 0.0
    %5718 = vmatprep.subr.mxu0 0.0
    %5719 = vmatpush2.msra.mxu0 0.0
    %5720 = vmatprep.subr.mxu0 0.0
    %5721 = vmatpush2.msra.mxu0 0.0
    %5722 = vmatprep.subr.mxu0 0.0
    %5723 = vmatpush2.msra.mxu0 0.0
    %5724 = vmatprep.subr.mxu0 0.0
    %5725 = vmatpush2.msra.mxu0 0.0
    %5726 = vmatprep.subr.mxu0 0.0
    %5727 = vmatpush2.msra.mxu0 0.0
    %5728 = vmatprep.subr.mxu0 0.0
    %5729 = vmatpush2.msra.mxu0 0.0
    %5730 = vmatprep.subr.mxu0 0.0
    %5731 = vmatpush2.msra.mxu0 0.0
    %5732 = vmatprep.subr.mxu0 0.0
    %5733 = vmatpush2.msra.mxu0 0.0
    %5734 = vmatprep.mubr.f32.mxu0 0.0
    %5735 = vmatmul.mubr.f32.gmra.mxu0 %v5658
    %v5736 = vpop.f32.mrf.mxu0
    %v5737 = vadd.f32 %v5617, %v5736
    %v5738 = vpop.f32.mrf.mxu0
    %5739 = vmatprep.mubr.f32.mxu0 0.0
    %5740 = vmatmul.mubr.f32.gmra.mxu0 %v5660
    %v5741 = vpop.f32.mrf.mxu0
    %v5742 = vadd.f32 %v5622, %v5741
    %v5743 = vpop.f32.mrf.mxu0
    %5744 = vmatprep.mubr.f32.mxu0 0.0
    %5745 = vmatmul.mubr.f32.gmra.mxu0 %v5662
    %v5746 = vpop.f32.mrf.mxu0
    %v5747 = vadd.f32 %v5627, %v5746
    %v5748 = vpop.f32.mrf.mxu0
    %5749 = vmatprep.mubr.f32.mxu0 0.0
    %5750 = vmatmul.mubr.f32.gmra.mxu0 %v5664
    %v5751 = vpop.f32.mrf.mxu0
    %v5752 = vadd.f32 %v5632, %v5751
    %v5753 = vpop.f32.mrf.mxu0
    %5754 = vmatprep.mubr.f32.mxu0 0.0
    %5755 = vmatmul.mubr.f32.gmra.mxu0 %v5666
    %v5756 = vpop.f32.mrf.mxu0
    %v5757 = vadd.f32 %v5637, %v5756
    %v5758 = vpop.f32.mrf.mxu0
    %5759 = vmatprep.mubr.f32.mxu0 0.0
    %5760 = vmatmul.mubr.f32.gmra.mxu0 %v5668
    %v5761 = vpop.f32.mrf.mxu0
    %v5762 = vadd.f32 %v5642, %v5761
    %v5763 = vpop.f32.mrf.mxu0
    %5764 = vdwg.mxu0
    %s5765 = scalar_lea.vmem %s47, 32
    %v5766 = vld [vmem:[%s5765] sm:$0xff]
    %v5767 = vld [vmem:[%s5765 + $0x8] sm:$0xff]
    %v5768 = vrot.slane %v5516, 3
    %v5769 = vrot.slane %v5505, 3
    %v5770 = vsel %vm718, %v5768, %v5769
    %v5771 = vrot.slane %v5507, 3
    %v5772 = vsel %vm718, %v5769, %v5771
    %v5773 = vrot.slane %v5509, 3
    %v5774 = vsel %vm718, %v5771, %v5773
    %v5775 = vrot.slane %v5511, 3
    %v5776 = vsel %vm718, %v5773, %v5775
    %v5777 = vrot.slane %v5513, 3
    %v5778 = vsel %vm718, %v5775, %v5777
    %v5779 = vrot.slane %v5517, 3
    %v5780 = vsel %vm718, %v5777, %v5779
    %v5781 = vsel %vm1542, %v5770, 0
    %v5783 = vsel %vm1542, %v5772, 0
    %v5785 = vsel %vm1542, %v5774, 0
    %v5787 = vsel %vm1542, %v5776, 0
    %v5789 = vsel %vm1542, %v5778, 0
    %v5791 = vsel %vm1542, %v5780, 0
    %5793 = vmatprep.subr.mxu0 0.0
    %5794 = vmatpush1.msra.mxu0 0.0
    %5795 = vmatprep.subr.mxu0 0.0
    %5796 = vmatpush1.msra.mxu0 0.0
    %5797 = vmatprep.subr.mxu0 0.0
    %5798 = vmatpush1.msra.mxu0 0.0
    %5799 = vmatprep.subr.mxu0 0.0
    %5800 = vmatpush1.msra.mxu0 0.0
    %5801 = vmatprep.subr.mxu0 0.0
    %5802 = vmatpush1.msra.mxu0 0.0
    %5803 = vmatprep.subr.mxu0 0.0
    %5804 = vmatpush1.msra.mxu0 0.0
    %5805 = vmatprep.subr.mxu0 0.0
    %5806 = vmatpush1.msra.mxu0 0.0
    %5807 = vmatprep.subr.mxu0 0.0
    %5808 = vmatpush1.msra.mxu0 0.0
    %5809 = vmatprep.subr.mxu0 0.0
    %5810 = vmatpush1.msra.mxu0 0.0
    %5811 = vmatprep.subr.mxu0 0.0
    %5812 = vmatpush1.msra.mxu0 0.0
    %5813 = vmatprep.subr.mxu0 0.0
    %5814 = vmatpush1.msra.mxu0 0.0
    %5815 = vmatprep.subr.mxu0 0.0
    %5816 = vmatpush1.msra.mxu0 0.0
    %5817 = vmatprep.subr.mxu0 0.0
    %5818 = vmatpush1.msra.mxu0 0.0
    %5819 = vmatprep.subr.mxu0 0.0
    %5820 = vmatpush1.msra.mxu0 0.0
    %5821 = vmatprep.subr.mxu0 0.0
    %5822 = vmatpush1.msra.mxu0 %v5767
    %5823 = vmatprep.subr.mxu0 0.0
    %5824 = vmatpush1.msra.mxu0 %v5766
    %5825 = vmatprep.subr.mxu0 0.0
    %5826 = vmatpush2.msra.mxu0 0.0
    %5827 = vmatprep.subr.mxu0 0.0
    %5828 = vmatpush2.msra.mxu0 0.0
    %5829 = vmatprep.subr.mxu0 0.0
    %5830 = vmatpush2.msra.mxu0 0.0
    %5831 = vmatprep.subr.mxu0 0.0
    %5832 = vmatpush2.msra.mxu0 0.0
    %5833 = vmatprep.subr.mxu0 0.0
    %5834 = vmatpush2.msra.mxu0 0.0
    %5835 = vmatprep.subr.mxu0 0.0
    %5836 = vmatpush2.msra.mxu0 0.0
    %5837 = vmatprep.subr.mxu0 0.0
    %5838 = vmatpush2.msra.mxu0 0.0
    %5839 = vmatprep.subr.mxu0 0.0
    %5840 = vmatpush2.msra.mxu0 0.0
    %5841 = vmatprep.subr.mxu0 0.0
    %5842 = vmatpush2.msra.mxu0 0.0
    %5843 = vmatprep.subr.mxu0 0.0
    %5844 = vmatpush2.msra.mxu0 0.0
    %5845 = vmatprep.subr.mxu0 0.0
    %5846 = vmatpush2.msra.mxu0 0.0
    %5847 = vmatprep.subr.mxu0 0.0
    %5848 = vmatpush2.msra.mxu0 0.0
    %5849 = vmatprep.subr.mxu0 0.0
    %5850 = vmatpush2.msra.mxu0 0.0
    %5851 = vmatprep.subr.mxu0 0.0
    %5852 = vmatpush2.msra.mxu0 0.0
    %5853 = vmatprep.subr.mxu0 0.0
    %5854 = vmatpush2.msra.mxu0 0.0
    %5855 = vmatprep.subr.mxu0 0.0
    %5856 = vmatpush2.msra.mxu0 0.0
    %5857 = vmatprep.mubr.f32.mxu0 0.0
    %5858 = vmatmul.mubr.f32.gmra.mxu0 %v5781
    %v5859 = vpop.f32.mrf.mxu0
    %v5860 = vadd.f32 0.0, %v5859
    %v5861 = vpop.f32.mrf.mxu0
    %5862 = vmatprep.mubr.f32.mxu0 0.0
    %5863 = vmatmul.mubr.f32.gmra.mxu0 %v5783
    %v5864 = vpop.f32.mrf.mxu0
    %v5865 = vadd.f32 0.0, %v5864
    %v5866 = vpop.f32.mrf.mxu0
    %5867 = vmatprep.mubr.f32.mxu0 0.0
    %5868 = vmatmul.mubr.f32.gmra.mxu0 %v5785
    %v5869 = vpop.f32.mrf.mxu0
    %v5870 = vadd.f32 0.0, %v5869
    %v5871 = vpop.f32.mrf.mxu0
    %5872 = vmatprep.mubr.f32.mxu0 0.0
    %5873 = vmatmul.mubr.f32.gmra.mxu0 %v5787
    %v5874 = vpop.f32.mrf.mxu0
    %v5875 = vadd.f32 0.0, %v5874
    %v5876 = vpop.f32.mrf.mxu0
    %5877 = vmatprep.mubr.f32.mxu0 0.0
    %5878 = vmatmul.mubr.f32.gmra.mxu0 %v5789
    %v5879 = vpop.f32.mrf.mxu0
    %v5880 = vadd.f32 0.0, %v5879
    %v5881 = vpop.f32.mrf.mxu0
    %5882 = vmatprep.mubr.f32.mxu0 0.0
    %5883 = vmatmul.mubr.f32.gmra.mxu0 %v5791
    %v5884 = vpop.f32.mrf.mxu0
    %v5885 = vadd.f32 0.0, %v5884
    %v5886 = vpop.f32.mrf.mxu0
    %5887 = vdwg.mxu0
    %v5888 = vadd.f32 %v5737, %v5860
    %v5889 = vadd.f32 %v5742, %v5865
    %v5890 = vadd.f32 %v5747, %v5870
    %v5891 = vadd.f32 %v5752, %v5875
    %v5892 = vadd.f32 %v5757, %v5880
    %v5893 = vadd.f32 %v5762, %v5885
    %s5894 = scalar_lea.vmem %s47, 48
    %v5895 = vld [vmem:[%s5894] sm:$0xff]
    %v5896 = vld [vmem:[%s5894 + $0x8] sm:$0xff]
    %v5897 = vrot.slane %v5516, 4
    %v5898 = vrot.slane %v5505, 4
    %v5899 = vsel %vm446, %v5897, %v5898
    %v5900 = vrot.slane %v5507, 4
    %v5901 = vsel %vm446, %v5898, %v5900
    %v5902 = vrot.slane %v5509, 4
    %v5903 = vsel %vm446, %v5900, %v5902
    %v5904 = vrot.slane %v5511, 4
    %v5905 = vsel %vm446, %v5902, %v5904
    %v5906 = vrot.slane %v5513, 4
    %v5907 = vsel %vm446, %v5904, %v5906
    %v5908 = vrot.slane %v5517, 4
    %v5909 = vsel %vm446, %v5906, %v5908
    %v5910 = vsel %vm1542, %v5899, 0
    %v5912 = vsel %vm1542, %v5901, 0
    %v5914 = vsel %vm1542, %v5903, 0
    %v5916 = vsel %vm1542, %v5905, 0
    %v5918 = vsel %vm1542, %v5907, 0
    %v5920 = vsel %vm1542, %v5909, 0
    %5922 = vmatprep.subr.mxu0 0.0
    %5923 = vmatpush1.msra.mxu0 0.0
    %5924 = vmatprep.subr.mxu0 0.0
    %5925 = vmatpush1.msra.mxu0 0.0
    %5926 = vmatprep.subr.mxu0 0.0
    %5927 = vmatpush1.msra.mxu0 0.0
    %5928 = vmatprep.subr.mxu0 0.0
    %5929 = vmatpush1.msra.mxu0 0.0
    %5930 = vmatprep.subr.mxu0 0.0
    %5931 = vmatpush1.msra.mxu0 0.0
    %5932 = vmatprep.subr.mxu0 0.0
    %5933 = vmatpush1.msra.mxu0 0.0
    %5934 = vmatprep.subr.mxu0 0.0
    %5935 = vmatpush1.msra.mxu0 0.0
    %5936 = vmatprep.subr.mxu0 0.0
    %5937 = vmatpush1.msra.mxu0 0.0
    %5938 = vmatprep.subr.mxu0 0.0
    %5939 = vmatpush1.msra.mxu0 0.0
    %5940 = vmatprep.subr.mxu0 0.0
    %5941 = vmatpush1.msra.mxu0 0.0
    %5942 = vmatprep.subr.mxu0 0.0
    %5943 = vmatpush1.msra.mxu0 0.0
    %5944 = vmatprep.subr.mxu0 0.0
    %5945 = vmatpush1.msra.mxu0 0.0
    %5946 = vmatprep.subr.mxu0 0.0
    %5947 = vmatpush1.msra.mxu0 0.0
    %5948 = vmatprep.subr.mxu0 0.0
    %5949 = vmatpush1.msra.mxu0 0.0
    %5950 = vmatprep.subr.mxu0 0.0
    %5951 = vmatpush1.msra.mxu0 %v5896
    %5952 = vmatprep.subr.mxu0 0.0
    %5953 = vmatpush1.msra.mxu0 %v5895
    %5954 = vmatprep.subr.mxu0 0.0
    %5955 = vmatpush2.msra.mxu0 0.0
    %5956 = vmatprep.subr.mxu0 0.0
    %5957 = vmatpush2.msra.mxu0 0.0
    %5958 = vmatprep.subr.mxu0 0.0
    %5959 = vmatpush2.msra.mxu0 0.0
    %5960 = vmatprep.subr.mxu0 0.0
    %5961 = vmatpush2.msra.mxu0 0.0
    %5962 = vmatprep.subr.mxu0 0.0
    %5963 = vmatpush2.msra.mxu0 0.0
    %5964 = vmatprep.subr.mxu0 0.0
    %5965 = vmatpush2.msra.mxu0 0.0
    %5966 = vmatprep.subr.mxu0 0.0
    %5967 = vmatpush2.msra.mxu0 0.0
    %5968 = vmatprep.subr.mxu0 0.0
    %5969 = vmatpush2.msra.mxu0 0.0
    %5970 = vmatprep.subr.mxu0 0.0
    %5971 = vmatpush2.msra.mxu0 0.0
    %5972 = vmatprep.subr.mxu0 0.0
    %5973 = vmatpush2.msra.mxu0 0.0
    %5974 = vmatprep.subr.mxu0 0.0
    %5975 = vmatpush2.msra.mxu0 0.0
    %5976 = vmatprep.subr.mxu0 0.0
    %5977 = vmatpush2.msra.mxu0 0.0
    %5978 = vmatprep.subr.mxu0 0.0
    %5979 = vmatpush2.msra.mxu0 0.0
    %5980 = vmatprep.subr.mxu0 0.0
    %5981 = vmatpush2.msra.mxu0 0.0
    %5982 = vmatprep.subr.mxu0 0.0
    %5983 = vmatpush2.msra.mxu0 0.0
    %5984 = vmatprep.subr.mxu0 0.0
    %5985 = vmatpush2.msra.mxu0 0.0
    %5986 = vmatprep.mubr.f32.mxu0 0.0
    %5987 = vmatmul.mubr.f32.gmra.mxu0 %v5910
    %v5988 = vpop.f32.mrf.mxu0
    %v5989 = vadd.f32 0.0, %v5988
    %v5990 = vpop.f32.mrf.mxu0
    %5991 = vmatprep.mubr.f32.mxu0 0.0
    %5992 = vmatmul.mubr.f32.gmra.mxu0 %v5912
    %v5993 = vpop.f32.mrf.mxu0
    %v5994 = vadd.f32 0.0, %v5993
    %v5995 = vpop.f32.mrf.mxu0
    %5996 = vmatprep.mubr.f32.mxu0 0.0
    %5997 = vmatmul.mubr.f32.gmra.mxu0 %v5914
    %v5998 = vpop.f32.mrf.mxu0
    %v5999 = vadd.f32 0.0, %v5998
    %v6000 = vpop.f32.mrf.mxu0
    %6001 = vmatprep.mubr.f32.mxu0 0.0
    %6002 = vmatmul.mubr.f32.gmra.mxu0 %v5916
    %v6003 = vpop.f32.mrf.mxu0
    %v6004 = vadd.f32 0.0, %v6003
    %v6005 = vpop.f32.mrf.mxu0
    %6006 = vmatprep.mubr.f32.mxu0 0.0
    %6007 = vmatmul.mubr.f32.gmra.mxu0 %v5918
    %v6008 = vpop.f32.mrf.mxu0
    %v6009 = vadd.f32 0.0, %v6008
    %v6010 = vpop.f32.mrf.mxu0
    %6011 = vmatprep.mubr.f32.mxu0 0.0
    %6012 = vmatmul.mubr.f32.gmra.mxu0 %v5920
    %v6013 = vpop.f32.mrf.mxu0
    %v6014 = vadd.f32 0.0, %v6013
    %v6015 = vpop.f32.mrf.mxu0
    %6016 = vdwg.mxu0
    %v6017 = vadd.f32 %v5888, %v5989
    %v6018 = vadd.f32 %v5889, %v5994
    %v6019 = vadd.f32 %v5890, %v5999
    %v6020 = vadd.f32 %v5891, %v6004
    %v6021 = vadd.f32 %v5892, %v6009
    %v6022 = vadd.f32 %v5893, %v6014
    %s6023 = scalar_lea.vmem %s47, 64
    %v6024 = vld [vmem:[%s6023] sm:$0xff]
    %v6025 = vld [vmem:[%s6023 + $0x8] sm:$0xff]
    %v6026 = vrot.slane %v5516, 5
    %v6027 = vrot.slane %v5505, 5
    %v6028 = vsel %vm981, %v6026, %v6027
    %v6029 = vrot.slane %v5507, 5
    %v6030 = vsel %vm981, %v6027, %v6029
    %v6031 = vrot.slane %v5509, 5
    %v6032 = vsel %vm981, %v6029, %v6031
    %v6033 = vrot.slane %v5511, 5
    %v6034 = vsel %vm981, %v6031, %v6033
    %v6035 = vrot.slane %v5513, 5
    %v6036 = vsel %vm981, %v6033, %v6035
    %v6037 = vrot.slane %v5517, 5
    %v6038 = vsel %vm981, %v6035, %v6037
    %v6039 = vsel %vm1542, %v6028, 0
    %v6041 = vsel %vm1542, %v6030, 0
    %v6043 = vsel %vm1542, %v6032, 0
    %v6045 = vsel %vm1542, %v6034, 0
    %v6047 = vsel %vm1542, %v6036, 0
    %v6049 = vsel %vm1542, %v6038, 0
    %6051 = vmatprep.subr.mxu0 0.0
    %6052 = vmatpush1.msra.mxu0 0.0
    %6053 = vmatprep.subr.mxu0 0.0
    %6054 = vmatpush1.msra.mxu0 0.0
    %6055 = vmatprep.subr.mxu0 0.0
    %6056 = vmatpush1.msra.mxu0 0.0
    %6057 = vmatprep.subr.mxu0 0.0
    %6058 = vmatpush1.msra.mxu0 0.0
    %6059 = vmatprep.subr.mxu0 0.0
    %6060 = vmatpush1.msra.mxu0 0.0
    %6061 = vmatprep.subr.mxu0 0.0
    %6062 = vmatpush1.msra.mxu0 0.0
    %6063 = vmatprep.subr.mxu0 0.0
    %6064 = vmatpush1.msra.mxu0 0.0
    %6065 = vmatprep.subr.mxu0 0.0
    %6066 = vmatpush1.msra.mxu0 0.0
    %6067 = vmatprep.subr.mxu0 0.0
    %6068 = vmatpush1.msra.mxu0 0.0
    %6069 = vmatprep.subr.mxu0 0.0
    %6070 = vmatpush1.msra.mxu0 0.0
    %6071 = vmatprep.subr.mxu0 0.0
    %6072 = vmatpush1.msra.mxu0 0.0
    %6073 = vmatprep.subr.mxu0 0.0
    %6074 = vmatpush1.msra.mxu0 0.0
    %6075 = vmatprep.subr.mxu0 0.0
    %6076 = vmatpush1.msra.mxu0 0.0
    %6077 = vmatprep.subr.mxu0 0.0
    %6078 = vmatpush1.msra.mxu0 0.0
    %6079 = vmatprep.subr.mxu0 0.0
    %6080 = vmatpush1.msra.mxu0 %v6025
    %6081 = vmatprep.subr.mxu0 0.0
    %6082 = vmatpush1.msra.mxu0 %v6024
    %6083 = vmatprep.subr.mxu0 0.0
    %6084 = vmatpush2.msra.mxu0 0.0
    %6085 = vmatprep.subr.mxu0 0.0
    %6086 = vmatpush2.msra.mxu0 0.0
    %6087 = vmatprep.subr.mxu0 0.0
    %6088 = vmatpush2.msra.mxu0 0.0
    %6089 = vmatprep.subr.mxu0 0.0
    %6090 = vmatpush2.msra.mxu0 0.0
    %6091 = vmatprep.subr.mxu0 0.0
    %6092 = vmatpush2.msra.mxu0 0.0
    %6093 = vmatprep.subr.mxu0 0.0
    %6094 = vmatpush2.msra.mxu0 0.0
    %6095 = vmatprep.subr.mxu0 0.0
    %6096 = vmatpush2.msra.mxu0 0.0
    %6097 = vmatprep.subr.mxu0 0.0
    %6098 = vmatpush2.msra.mxu0 0.0
    %6099 = vmatprep.subr.mxu0 0.0
    %6100 = vmatpush2.msra.mxu0 0.0
    %6101 = vmatprep.subr.mxu0 0.0
    %6102 = vmatpush2.msra.mxu0 0.0
    %6103 = vmatprep.subr.mxu0 0.0
    %6104 = vmatpush2.msra.mxu0 0.0
    %6105 = vmatprep.subr.mxu0 0.0
    %6106 = vmatpush2.msra.mxu0 0.0
    %6107 = vmatprep.subr.mxu0 0.0
    %6108 = vmatpush2.msra.mxu0 0.0
    %6109 = vmatprep.subr.mxu0 0.0
    %6110 = vmatpush2.msra.mxu0 0.0
    %6111 = vmatprep.subr.mxu0 0.0
    %6112 = vmatpush2.msra.mxu0 0.0
    %6113 = vmatprep.subr.mxu0 0.0
    %6114 = vmatpush2.msra.mxu0 0.0
    %6115 = vmatprep.mubr.f32.mxu0 0.0
    %6116 = vmatmul.mubr.f32.gmra.mxu0 %v6039
    %v6117 = vpop.f32.mrf.mxu0
    %v6118 = vadd.f32 0.0, %v6117
    %v6119 = vpop.f32.mrf.mxu0
    %6120 = vmatprep.mubr.f32.mxu0 0.0
    %6121 = vmatmul.mubr.f32.gmra.mxu0 %v6041
    %v6122 = vpop.f32.mrf.mxu0
    %v6123 = vadd.f32 0.0, %v6122
    %v6124 = vpop.f32.mrf.mxu0
    %6125 = vmatprep.mubr.f32.mxu0 0.0
    %6126 = vmatmul.mubr.f32.gmra.mxu0 %v6043
    %v6127 = vpop.f32.mrf.mxu0
    %v6128 = vadd.f32 0.0, %v6127
    %v6129 = vpop.f32.mrf.mxu0
    %6130 = vmatprep.mubr.f32.mxu0 0.0
    %6131 = vmatmul.mubr.f32.gmra.mxu0 %v6045
    %v6132 = vpop.f32.mrf.mxu0
    %v6133 = vadd.f32 0.0, %v6132
    %v6134 = vpop.f32.mrf.mxu0
    %6135 = vmatprep.mubr.f32.mxu0 0.0
    %6136 = vmatmul.mubr.f32.gmra.mxu0 %v6047
    %v6137 = vpop.f32.mrf.mxu0
    %v6138 = vadd.f32 0.0, %v6137
    %v6139 = vpop.f32.mrf.mxu0
    %6140 = vmatprep.mubr.f32.mxu0 0.0
    %6141 = vmatmul.mubr.f32.gmra.mxu0 %v6049
    %v6142 = vpop.f32.mrf.mxu0
    %v6143 = vadd.f32 0.0, %v6142
    %v6144 = vpop.f32.mrf.mxu0
    %6145 = vdwg.mxu0
    %v6146 = vadd.f32 %v6017, %v6118
    %v6147 = vadd.f32 %v6018, %v6123
    %v6148 = vadd.f32 %v6019, %v6128
    %v6149 = vadd.f32 %v6020, %v6133
    %v6150 = vadd.f32 %v6021, %v6138
    %v6151 = vadd.f32 %v6022, %v6143
    %s6152 = scalar_lea.vmem %s47, 80
    %v6153 = vld [vmem:[%s6152] sm:$0xff]
    %v6154 = vld [vmem:[%s6152 + $0x8] sm:$0xff]
    %v6155 = vrot.slane %v5516, 6
    %v6156 = vrot.slane %v5505, 6
    %v6157 = vsel %vm1113, %v6155, %v6156
    %v6158 = vrot.slane %v5507, 6
    %v6159 = vsel %vm1113, %v6156, %v6158
    %v6160 = vrot.slane %v5509, 6
    %v6161 = vsel %vm1113, %v6158, %v6160
    %v6162 = vrot.slane %v5511, 6
    %v6163 = vsel %vm1113, %v6160, %v6162
    %v6164 = vrot.slane %v5513, 6
    %v6165 = vsel %vm1113, %v6162, %v6164
    %v6166 = vrot.slane %v5517, 6
    %v6167 = vsel %vm1113, %v6164, %v6166
    %v6168 = vsel %vm1542, %v6157, 0
    %v6170 = vsel %vm1542, %v6159, 0
    %v6172 = vsel %vm1542, %v6161, 0
    %v6174 = vsel %vm1542, %v6163, 0
    %v6176 = vsel %vm1542, %v6165, 0
    %v6178 = vsel %vm1542, %v6167, 0
    %6180 = vmatprep.subr.mxu0 0.0
    %6181 = vmatpush1.msra.mxu0 0.0
    %6182 = vmatprep.subr.mxu0 0.0
    %6183 = vmatpush1.msra.mxu0 0.0
    %6184 = vmatprep.subr.mxu0 0.0
    %6185 = vmatpush1.msra.mxu0 0.0
    %6186 = vmatprep.subr.mxu0 0.0
    %6187 = vmatpush1.msra.mxu0 0.0
    %6188 = vmatprep.subr.mxu0 0.0
    %6189 = vmatpush1.msra.mxu0 0.0
    %6190 = vmatprep.subr.mxu0 0.0
    %6191 = vmatpush1.msra.mxu0 0.0
    %6192 = vmatprep.subr.mxu0 0.0
    %6193 = vmatpush1.msra.mxu0 0.0
    %6194 = vmatprep.subr.mxu0 0.0
    %6195 = vmatpush1.msra.mxu0 0.0
    %6196 = vmatprep.subr.mxu0 0.0
    %6197 = vmatpush1.msra.mxu0 0.0
    %6198 = vmatprep.subr.mxu0 0.0
    %6199 = vmatpush1.msra.mxu0 0.0
    %6200 = vmatprep.subr.mxu0 0.0
    %6201 = vmatpush1.msra.mxu0 0.0
    %6202 = vmatprep.subr.mxu0 0.0
    %6203 = vmatpush1.msra.mxu0 0.0
    %6204 = vmatprep.subr.mxu0 0.0
    %6205 = vmatpush1.msra.mxu0 0.0
    %6206 = vmatprep.subr.mxu0 0.0
    %6207 = vmatpush1.msra.mxu0 0.0
    %6208 = vmatprep.subr.mxu0 0.0
    %6209 = vmatpush1.msra.mxu0 %v6154
    %6210 = vmatprep.subr.mxu0 0.0
    %6211 = vmatpush1.msra.mxu0 %v6153
    %6212 = vmatprep.subr.mxu0 0.0
    %6213 = vmatpush2.msra.mxu0 0.0
    %6214 = vmatprep.subr.mxu0 0.0
    %6215 = vmatpush2.msra.mxu0 0.0
    %6216 = vmatprep.subr.mxu0 0.0
    %6217 = vmatpush2.msra.mxu0 0.0
    %6218 = vmatprep.subr.mxu0 0.0
    %6219 = vmatpush2.msra.mxu0 0.0
    %6220 = vmatprep.subr.mxu0 0.0
    %6221 = vmatpush2.msra.mxu0 0.0
    %6222 = vmatprep.subr.mxu0 0.0
    %6223 = vmatpush2.msra.mxu0 0.0
    %6224 = vmatprep.subr.mxu0 0.0
    %6225 = vmatpush2.msra.mxu0 0.0
    %6226 = vmatprep.subr.mxu0 0.0
    %6227 = vmatpush2.msra.mxu0 0.0
    %6228 = vmatprep.subr.mxu0 0.0
    %6229 = vmatpush2.msra.mxu0 0.0
    %6230 = vmatprep.subr.mxu0 0.0
    %6231 = vmatpush2.msra.mxu0 0.0
    %6232 = vmatprep.subr.mxu0 0.0
    %6233 = vmatpush2.msra.mxu0 0.0
    %6234 = vmatprep.subr.mxu0 0.0
    %6235 = vmatpush2.msra.mxu0 0.0
    %6236 = vmatprep.subr.mxu0 0.0
    %6237 = vmatpush2.msra.mxu0 0.0
    %6238 = vmatprep.subr.mxu0 0.0
    %6239 = vmatpush2.msra.mxu0 0.0
    %6240 = vmatprep.subr.mxu0 0.0
    %6241 = vmatpush2.msra.mxu0 0.0
    %6242 = vmatprep.subr.mxu0 0.0
    %6243 = vmatpush2.msra.mxu0 0.0
    %6244 = vmatprep.mubr.f32.mxu0 0.0
    %6245 = vmatmul.mubr.f32.gmra.mxu0 %v6168
    %v6246 = vpop.f32.mrf.mxu0
    %v6247 = vadd.f32 0.0, %v6246
    %v6248 = vpop.f32.mrf.mxu0
    %6249 = vmatprep.mubr.f32.mxu0 0.0
    %6250 = vmatmul.mubr.f32.gmra.mxu0 %v6170
    %v6251 = vpop.f32.mrf.mxu0
    %v6252 = vadd.f32 0.0, %v6251
    %v6253 = vpop.f32.mrf.mxu0
    %6254 = vmatprep.mubr.f32.mxu0 0.0
    %6255 = vmatmul.mubr.f32.gmra.mxu0 %v6172
    %v6256 = vpop.f32.mrf.mxu0
    %v6257 = vadd.f32 0.0, %v6256
    %v6258 = vpop.f32.mrf.mxu0
    %6259 = vmatprep.mubr.f32.mxu0 0.0
    %6260 = vmatmul.mubr.f32.gmra.mxu0 %v6174
    %v6261 = vpop.f32.mrf.mxu0
    %v6262 = vadd.f32 0.0, %v6261
    %v6263 = vpop.f32.mrf.mxu0
    %6264 = vmatprep.mubr.f32.mxu0 0.0
    %6265 = vmatmul.mubr.f32.gmra.mxu0 %v6176
    %v6266 = vpop.f32.mrf.mxu0
    %v6267 = vadd.f32 0.0, %v6266
    %v6268 = vpop.f32.mrf.mxu0
    %6269 = vmatprep.mubr.f32.mxu0 0.0
    %6270 = vmatmul.mubr.f32.gmra.mxu0 %v6178
    %v6271 = vpop.f32.mrf.mxu0
    %v6272 = vadd.f32 0.0, %v6271
    %v6273 = vpop.f32.mrf.mxu0
    %6274 = vdwg.mxu0
    %v6275 = vadd.f32 %v6146, %v6247
    %v6276 = vadd.f32 %v6147, %v6252
    %v6277 = vadd.f32 %v6148, %v6257
    %v6278 = vadd.f32 %v6149, %v6262
    %v6279 = vadd.f32 %v6150, %v6267
    %v6280 = vadd.f32 %v6151, %v6272
    %s6281 = scalar_lea.vmem %s47, 96
    %v6282 = vld [vmem:[%s6281] sm:$0xff]
    %v6283 = vld [vmem:[%s6281 + $0x8] sm:$0xff]
    %v6284 = vrot.slane %v5516, 7
    %v6285 = vrot.slane %v5505, 7
    %v6286 = vsel %vm1245, %v6284, %v6285
    %v6287 = vrot.slane %v5507, 7
    %v6288 = vsel %vm1245, %v6285, %v6287
    %v6289 = vrot.slane %v5509, 7
    %v6290 = vsel %vm1245, %v6287, %v6289
    %v6291 = vrot.slane %v5511, 7
    %v6292 = vsel %vm1245, %v6289, %v6291
    %v6293 = vrot.slane %v5513, 7
    %v6294 = vsel %vm1245, %v6291, %v6293
    %v6295 = vrot.slane %v5517, 7
    %v6296 = vsel %vm1245, %v6293, %v6295
    %v6297 = vsel %vm1542, %v6286, 0
    %v6299 = vsel %vm1542, %v6288, 0
    %v6301 = vsel %vm1542, %v6290, 0
    %v6303 = vsel %vm1542, %v6292, 0
    %v6305 = vsel %vm1542, %v6294, 0
    %v6307 = vsel %vm1542, %v6296, 0
    %6309 = vmatprep.subr.mxu0 0.0
    %6310 = vmatpush1.msra.mxu0 0.0
    %6311 = vmatprep.subr.mxu0 0.0
    %6312 = vmatpush1.msra.mxu0 0.0
    %6313 = vmatprep.subr.mxu0 0.0
    %6314 = vmatpush1.msra.mxu0 0.0
    %6315 = vmatprep.subr.mxu0 0.0
    %6316 = vmatpush1.msra.mxu0 0.0
    %6317 = vmatprep.subr.mxu0 0.0
    %6318 = vmatpush1.msra.mxu0 0.0
    %6319 = vmatprep.subr.mxu0 0.0
    %6320 = vmatpush1.msra.mxu0 0.0
    %6321 = vmatprep.subr.mxu0 0.0
    %6322 = vmatpush1.msra.mxu0 0.0
    %6323 = vmatprep.subr.mxu0 0.0
    %6324 = vmatpush1.msra.mxu0 0.0
    %6325 = vmatprep.subr.mxu0 0.0
    %6326 = vmatpush1.msra.mxu0 0.0
    %6327 = vmatprep.subr.mxu0 0.0
    %6328 = vmatpush1.msra.mxu0 0.0
    %6329 = vmatprep.subr.mxu0 0.0
    %6330 = vmatpush1.msra.mxu0 0.0
    %6331 = vmatprep.subr.mxu0 0.0
    %6332 = vmatpush1.msra.mxu0 0.0
    %6333 = vmatprep.subr.mxu0 0.0
    %6334 = vmatpush1.msra.mxu0 0.0
    %6335 = vmatprep.subr.mxu0 0.0
    %6336 = vmatpush1.msra.mxu0 0.0
    %6337 = vmatprep.subr.mxu0 0.0
    %6338 = vmatpush1.msra.mxu0 %v6283
    %6339 = vmatprep.subr.mxu0 0.0
    %6340 = vmatpush1.msra.mxu0 %v6282
    %6341 = vmatprep.subr.mxu0 0.0
    %6342 = vmatpush2.msra.mxu0 0.0
    %6343 = vmatprep.subr.mxu0 0.0
    %6344 = vmatpush2.msra.mxu0 0.0
    %6345 = vmatprep.subr.mxu0 0.0
    %6346 = vmatpush2.msra.mxu0 0.0
    %6347 = vmatprep.subr.mxu0 0.0
    %6348 = vmatpush2.msra.mxu0 0.0
    %6349 = vmatprep.subr.mxu0 0.0
    %6350 = vmatpush2.msra.mxu0 0.0
    %6351 = vmatprep.subr.mxu0 0.0
    %6352 = vmatpush2.msra.mxu0 0.0
    %6353 = vmatprep.subr.mxu0 0.0
    %6354 = vmatpush2.msra.mxu0 0.0
    %6355 = vmatprep.subr.mxu0 0.0
    %6356 = vmatpush2.msra.mxu0 0.0
    %6357 = vmatprep.subr.mxu0 0.0
    %6358 = vmatpush2.msra.mxu0 0.0
    %6359 = vmatprep.subr.mxu0 0.0
    %6360 = vmatpush2.msra.mxu0 0.0
    %6361 = vmatprep.subr.mxu0 0.0
    %6362 = vmatpush2.msra.mxu0 0.0
    %6363 = vmatprep.subr.mxu0 0.0
    %6364 = vmatpush2.msra.mxu0 0.0
    %6365 = vmatprep.subr.mxu0 0.0
    %6366 = vmatpush2.msra.mxu0 0.0
    %6367 = vmatprep.subr.mxu0 0.0
    %6368 = vmatpush2.msra.mxu0 0.0
    %6369 = vmatprep.subr.mxu0 0.0
    %6370 = vmatpush2.msra.mxu0 0.0
    %6371 = vmatprep.subr.mxu0 0.0
    %6372 = vmatpush2.msra.mxu0 0.0
    %6373 = vmatprep.mubr.f32.mxu0 0.0
    %6374 = vmatmul.mubr.f32.gmra.mxu0 %v6297
    %v6375 = vpop.f32.mrf.mxu0
    %v6376 = vadd.f32 0.0, %v6375
    %v6377 = vpop.f32.mrf.mxu0
    %6378 = vmatprep.mubr.f32.mxu0 0.0
    %6379 = vmatmul.mubr.f32.gmra.mxu0 %v6299
    %v6380 = vpop.f32.mrf.mxu0
    %v6381 = vadd.f32 0.0, %v6380
    %v6382 = vpop.f32.mrf.mxu0
    %6383 = vmatprep.mubr.f32.mxu0 0.0
    %6384 = vmatmul.mubr.f32.gmra.mxu0 %v6301
    %v6385 = vpop.f32.mrf.mxu0
    %v6386 = vadd.f32 0.0, %v6385
    %v6387 = vpop.f32.mrf.mxu0
    %6388 = vmatprep.mubr.f32.mxu0 0.0
    %6389 = vmatmul.mubr.f32.gmra.mxu0 %v6303
    %v6390 = vpop.f32.mrf.mxu0
    %v6391 = vadd.f32 0.0, %v6390
    %v6392 = vpop.f32.mrf.mxu0
    %6393 = vmatprep.mubr.f32.mxu0 0.0
    %6394 = vmatmul.mubr.f32.gmra.mxu0 %v6305
    %v6395 = vpop.f32.mrf.mxu0
    %v6396 = vadd.f32 0.0, %v6395
    %v6397 = vpop.f32.mrf.mxu0
    %6398 = vmatprep.mubr.f32.mxu0 0.0
    %6399 = vmatmul.mubr.f32.gmra.mxu0 %v6307
    %v6400 = vpop.f32.mrf.mxu0
    %v6401 = vadd.f32 0.0, %v6400
    %v6402 = vpop.f32.mrf.mxu0
    %6403 = vdwg.mxu0
    %v6404 = vadd.f32 %v6275, %v6376
    %v6405 = vadd.f32 %v6276, %v6381
    %v6406 = vadd.f32 %v6277, %v6386
    %v6407 = vadd.f32 %v6278, %v6391
    %v6408 = vadd.f32 %v6279, %v6396
    %v6409 = vadd.f32 %v6280, %v6401
    %s6410 = scalar_lea.vmem %s47, 112
    %v6411 = vld [vmem:[%s6410] sm:$0xff]
    %v6412 = vld [vmem:[%s6410 + $0x8] sm:$0xff]
    %v6413 = vsel %vm1542, %v5505, 0
    %v6415 = vsel %vm1542, %v5507, 0
    %v6417 = vsel %vm1542, %v5509, 0
    %v6419 = vsel %vm1542, %v5511, 0
    %v6421 = vsel %vm1542, %v5513, 0
    %v6423 = vsel %vm1542, %v5517, 0
    %6425 = vmatprep.subr.mxu0 0.0
    %6426 = vmatpush1.msra.mxu0 0.0
    %6427 = vmatprep.subr.mxu0 0.0
    %6428 = vmatpush1.msra.mxu0 0.0
    %6429 = vmatprep.subr.mxu0 0.0
    %6430 = vmatpush1.msra.mxu0 0.0
    %6431 = vmatprep.subr.mxu0 0.0
    %6432 = vmatpush1.msra.mxu0 0.0
    %6433 = vmatprep.subr.mxu0 0.0
    %6434 = vmatpush1.msra.mxu0 0.0
    %6435 = vmatprep.subr.mxu0 0.0
    %6436 = vmatpush1.msra.mxu0 0.0
    %6437 = vmatprep.subr.mxu0 0.0
    %6438 = vmatpush1.msra.mxu0 0.0
    %6439 = vmatprep.subr.mxu0 0.0
    %6440 = vmatpush1.msra.mxu0 0.0
    %6441 = vmatprep.subr.mxu0 0.0
    %6442 = vmatpush1.msra.mxu0 0.0
    %6443 = vmatprep.subr.mxu0 0.0
    %6444 = vmatpush1.msra.mxu0 0.0
    %6445 = vmatprep.subr.mxu0 0.0
    %6446 = vmatpush1.msra.mxu0 0.0
    %6447 = vmatprep.subr.mxu0 0.0
    %6448 = vmatpush1.msra.mxu0 0.0
    %6449 = vmatprep.subr.mxu0 0.0
    %6450 = vmatpush1.msra.mxu0 0.0
    %6451 = vmatprep.subr.mxu0 0.0
    %6452 = vmatpush1.msra.mxu0 0.0
    %6453 = vmatprep.subr.mxu0 0.0
    %6454 = vmatpush1.msra.mxu0 %v6412
    %6455 = vmatprep.subr.mxu0 0.0
    %6456 = vmatpush1.msra.mxu0 %v6411
    %6457 = vmatprep.subr.mxu0 0.0
    %6458 = vmatpush2.msra.mxu0 0.0
    %6459 = vmatprep.subr.mxu0 0.0
    %6460 = vmatpush2.msra.mxu0 0.0
    %6461 = vmatprep.subr.mxu0 0.0
    %6462 = vmatpush2.msra.mxu0 0.0
    %6463 = vmatprep.subr.mxu0 0.0
    %6464 = vmatpush2.msra.mxu0 0.0
    %6465 = vmatprep.subr.mxu0 0.0
    %6466 = vmatpush2.msra.mxu0 0.0
    %6467 = vmatprep.subr.mxu0 0.0
    %6468 = vmatpush2.msra.mxu0 0.0
    %6469 = vmatprep.subr.mxu0 0.0
    %6470 = vmatpush2.msra.mxu0 0.0
    %6471 = vmatprep.subr.mxu0 0.0
    %6472 = vmatpush2.msra.mxu0 0.0
    %6473 = vmatprep.subr.mxu0 0.0
    %6474 = vmatpush2.msra.mxu0 0.0
    %6475 = vmatprep.subr.mxu0 0.0
    %6476 = vmatpush2.msra.mxu0 0.0
    %6477 = vmatprep.subr.mxu0 0.0
    %6478 = vmatpush2.msra.mxu0 0.0
    %6479 = vmatprep.subr.mxu0 0.0
    %6480 = vmatpush2.msra.mxu0 0.0
    %6481 = vmatprep.subr.mxu0 0.0
    %6482 = vmatpush2.msra.mxu0 0.0
    %6483 = vmatprep.subr.mxu0 0.0
    %6484 = vmatpush2.msra.mxu0 0.0
    %6485 = vmatprep.subr.mxu0 0.0
    %6486 = vmatpush2.msra.mxu0 0.0
    %6487 = vmatprep.subr.mxu0 0.0
    %6488 = vmatpush2.msra.mxu0 0.0
    %6489 = vmatprep.mubr.f32.mxu0 0.0
    %6490 = vmatmul.mubr.f32.gmra.mxu0 %v6413
    %v6491 = vpop.f32.mrf.mxu0
    %v6492 = vadd.f32 0.0, %v6491
    %v6493 = vpop.f32.mrf.mxu0
    %6494 = vmatprep.mubr.f32.mxu0 0.0
    %6495 = vmatmul.mubr.f32.gmra.mxu0 %v6415
    %v6496 = vpop.f32.mrf.mxu0
    %v6497 = vadd.f32 0.0, %v6496
    %v6498 = vpop.f32.mrf.mxu0
    %6499 = vmatprep.mubr.f32.mxu0 0.0
    %6500 = vmatmul.mubr.f32.gmra.mxu0 %v6417
    %v6501 = vpop.f32.mrf.mxu0
    %v6502 = vadd.f32 0.0, %v6501
    %v6503 = vpop.f32.mrf.mxu0
    %6504 = vmatprep.mubr.f32.mxu0 0.0
    %6505 = vmatmul.mubr.f32.gmra.mxu0 %v6419
    %v6506 = vpop.f32.mrf.mxu0
    %v6507 = vadd.f32 0.0, %v6506
    %v6508 = vpop.f32.mrf.mxu0
    %6509 = vmatprep.mubr.f32.mxu0 0.0
    %6510 = vmatmul.mubr.f32.gmra.mxu0 %v6421
    %v6511 = vpop.f32.mrf.mxu0
    %v6512 = vadd.f32 0.0, %v6511
    %v6513 = vpop.f32.mrf.mxu0
    %6514 = vmatprep.mubr.f32.mxu0 0.0
    %6515 = vmatmul.mubr.f32.gmra.mxu0 %v6423
    %v6516 = vpop.f32.mrf.mxu0
    %v6517 = vadd.f32 0.0, %v6516
    %v6518 = vpop.f32.mrf.mxu0
    %6519 = vdwg.mxu0
    %v6520 = vadd.f32 %v6404, %v6492
    %v6521 = vadd.f32 %v6405, %v6497
    %v6522 = vadd.f32 %v6406, %v6502
    %v6523 = vadd.f32 %v6407, %v6507
    %v6524 = vadd.f32 %v6408, %v6512
    %v6525 = vadd.f32 %v6409, %v6517
    %v6526 = vld [vmem:[%s49] sm:$0x1]
    %v6528 = vlaneseq
    %v6529 = vshrl.u32 %v6528, 7
    %v6530 = vsub.s32 0, %v6529
    %v6531 = vrot.slane %v6526, %v6530
    %v6533 = vadd.f32 %v6520, %v6531
    %v6534 = vadd.f32 %v6521, %v6531
    %v6535 = vadd.f32 %v6522, %v6531
    %v6536 = vadd.f32 %v6523, %v6531
    %v6537 = vadd.f32 %v6524, %v6531
    %v6538 = vadd.f32 %v6525, %v6531
    %v6539 = vmul.f32 %v6533, %v1509
    %v6540 = vmul.f32 %v6534, %v1514
    %v6541 = vmul.f32 %v6535, %v1519
    %v6542 = vmul.f32 %v6536, %v1524
    %v6543 = vmul.f32 %v6537, %v1529
    %v6544 = vmul.f32 %v6538, %v1534
    %v6545 = vsel %vm1542, %v6539, 0.0
    %v6546 = vsel %vm1542, %v6540, 0.0
    %v6547 = vadd.f32 %v6545, %v6546
    %v6548 = vsel %vm1542, %v6541, 0.0
    %v6549 = vadd.f32 %v6547, %v6548
    %v6550 = vsel %vm1542, %v6542, 0.0
    %v6551 = vadd.f32 %v6549, %v6550
    %v6552 = vsel %vm1542, %v6543, 0.0
    %v6553 = vadd.f32 %v6551, %v6552
    %v6554 = vsel %vm1542, %v6544, 0.0
    %v6555 = vadd.f32 %v6553, %v6554
    %v6556 = vrot.slane %v6555, 4
    %v6557 = vadd.f32 %v6555, %v6556
    %v6558 = vrot.slane %v6557, 2
    %v6559 = vadd.f32 %v6557, %v6558
    %v6560 = vrot.slane %v6559, 1
    %v6561 = vadd.f32 %v6559, %v6560
    %v6562 = vmul.f32 %v6561, 0.03125
    %v6563 = vsub.f32 %v6533, %v6562
    %v6564 = vsub.f32 %v6534, %v6562
    %v6565 = vsub.f32 %v6535, %v6562
    %v6566 = vsub.f32 %v6536, %v6562
    %v6567 = vsub.f32 %v6537, %v6562
    %v6568 = vsub.f32 %v6538, %v6562
    %v6569 = vmul.f32 %v6563, %v1509
    %v6570 = vmul.f32 %v6564, %v1514
    %v6571 = vmul.f32 %v6565, %v1519
    %v6572 = vmul.f32 %v6566, %v1524
    %v6573 = vmul.f32 %v6567, %v1529
    %v6574 = vmul.f32 %v6568, %v1534
    %v6575 = vmul.f32 %v6569, %v6569
    %v6576 = vmul.f32 %v6570, %v6570
    %v6577 = vmul.f32 %v6571, %v6571
    %v6578 = vmul.f32 %v6572, %v6572
    %v6579 = vmul.f32 %v6573, %v6573
    %v6580 = vmul.f32 %v6574, %v6574
    %v6581 = vsel %vm1542, %v6575, 0.0
    %v6582 = vsel %vm1542, %v6576, 0.0
    %v6583 = vadd.f32 %v6581, %v6582
    %v6584 = vsel %vm1542, %v6577, 0.0
    %v6585 = vadd.f32 %v6583, %v6584
    %v6586 = vsel %vm1542, %v6578, 0.0
    %v6587 = vadd.f32 %v6585, %v6586
    %v6588 = vsel %vm1542, %v6579, 0.0
    %v6589 = vadd.f32 %v6587, %v6588
    %v6590 = vsel %vm1542, %v6580, 0.0
    %v6591 = vadd.f32 %v6589, %v6590
    %v6592 = vrot.slane %v6591, 4
    %v6593 = vadd.f32 %v6591, %v6592
    %v6594 = vrot.slane %v6593, 2
    %v6595 = vadd.f32 %v6593, %v6594
    %v6596 = vrot.slane %v6595, 1
    %v6597 = vadd.f32 %v6595, %v6596
    %v6598 = vmul.f32 %v6597, 0.03125
    %v6599 = vld [vmem:[%s51] sm:$0x1]
    %v6600 = vadd.f32 %v6598, 1e-05
    %v6601 = vrsqrt.pop %v6600
    %v6602 = vmul.f32 %v6599, %v6601
    %v6603 = vld [vmem:[%s53] sm:$0x1]
    %v6604 = vmul.f32 %v6562, %v6602
    %v6605 = vsub.f32 %v6603, %v6604
    %v6607 = vlaneseq
    %v6608 = vshrl.u32 %v6607, 7
    %v6609 = vsub.s32 0, %v6608
    %v6610 = vrot.slane %v6602, %v6609
    %v6612 = vmul.f32 %v6533, %v6610
    %v6613 = vmul.f32 %v6534, %v6610
    %v6614 = vmul.f32 %v6535, %v6610
    %v6615 = vmul.f32 %v6536, %v6610
    %v6616 = vmul.f32 %v6537, %v6610
    %v6617 = vmul.f32 %v6538, %v6610
    %v6619 = vlaneseq
    %v6620 = vshrl.u32 %v6619, 7
    %v6621 = vsub.s32 0, %v6620
    %v6622 = vrot.slane %v6605, %v6621
    %v6624 = vadd.f32 %v6612, %v6622
    %v6625 = vadd.f32 %v6613, %v6622
    %v6626 = vadd.f32 %v6614, %v6622
    %v6627 = vadd.f32 %v6615, %v6622
    %v6628 = vadd.f32 %v6616, %v6622
    %v6629 = vadd.f32 %v6617, %v6622
    %v6630 = vmul.f32 %v6624, %v1509
    %v6631 = vmul.f32 %v6625, %v1514
    %v6632 = vmul.f32 %v6626, %v1519
    %v6633 = vmul.f32 %v6627, %v1524
    %v6634 = vmul.f32 %v6628, %v1529
    %v6635 = vmul.f32 %v6629, %v1534
    %6642 = vrot.lane.b32.xlu0 %v6630, 16
    %v6643 = vpop.permute.xlu0 %6642
    %6644 = vrot.lane.b32.xlu0 %v6631, 16
    %v6645 = vpop.permute.xlu0 %6644
    %6646 = vrot.lane.b32.xlu0 %v6632, 16
    %v6647 = vpop.permute.xlu0 %6646
    %6648 = vrot.lane.b32.xlu0 %v6633, 16
    %v6649 = vpop.permute.xlu0 %6648
    %6650 = vrot.lane.b32.xlu0 %v6634, 16
    %v6651 = vpop.permute.xlu0 %6650
    %6652 = vrot.lane.b32.xlu0 %v6635, 16
    %v6653 = vpop.permute.xlu0 %6652
    %v6660 = vadd.f32 %v4714, %v6643
    %v6661 = vadd.f32 %v4715, %v6645
    %v6662 = vadd.f32 %v4716, %v6647
    %v6663 = vadd.f32 %v4717, %v6649
    %v6664 = vadd.f32 %v4718, %v6651
    %v6665 = vadd.f32 %v4719, %v6653
    %v6666 = vmax.f32 %v6660, 0.0
    %v6667 = vmax.f32 %v6661, 0.0
    %v6668 = vmax.f32 %v6662, 0.0
    %v6669 = vmax.f32 %v6663, 0.0
    %v6670 = vmax.f32 %v6664, 0.0
    %v6671 = vmax.f32 %v6665, 0.0
    %v6678 = vrot.slane %v6666, 4
    %v6679 = vrot.slane %v6667, 4
    %v6680 = vsel %vm446, %v6678, %v6679
    %v6681 = vrot.slane %v6668, 4
    %v6682 = vsel %vm446, %v6679, %v6681
    %v6683 = vrot.slane %v6669, 4
    %v6684 = vsel %vm446, %v6681, %v6683
    %v6685 = vrot.slane %v6670, 4
    %v6686 = vsel %vm446, %v6683, %v6685
    %v6687 = vrot.slane %v6671, 4
    %v6688 = vsel %vm446, %v6685, %v6687
    %6689 = vrot.lane.b32.xlu0 %v6678, 112
    %v6690 = vpop.permute.xlu0 %6689
    %6691 = vrot.lane.b32.xlu0 %v6680, 112
    %v6692 = vpop.permute.xlu0 %6691
    %6693 = vrot.lane.b32.xlu0 %v6682, 112
    %v6694 = vpop.permute.xlu0 %6693
    %6695 = vrot.lane.b32.xlu0 %v6684, 112
    %v6696 = vpop.permute.xlu0 %6695
    %6697 = vrot.lane.b32.xlu0 %v6686, 112
    %v6698 = vpop.permute.xlu0 %6697
    %6699 = vrot.lane.b32.xlu0 %v6688, 112
    %v6700 = vpop.permute.xlu0 %6699
    %6701 = vrot.lane.b32.xlu0 %v6687, 112
    %v6702 = vpop.permute.xlu0 %6701
    %v6705 = vsel %vm446, 0.0, %v6690
    %v6706 = vsel %vm446, %v6702, 0.0
    %v6707 = vld [vmem:[%s55] sm:$0xff]
    %v6708 = vld [vmem:[%s55 + $0x8] sm:$0xff]
    %s6709 = scalar_lea.vmem %s55, 16
    %v6710 = vld [vmem:[%s6709] sm:$0xff]
    %v6711 = vld [vmem:[%s6709 + $0x8] sm:$0xff]
    %v6714 = vrot.slane %v6705, 2
    %v6715 = vrot.slane %v6692, 2
    %v6716 = vsel %vm467, %v6714, %v6715
    %v6717 = vrot.slane %v6694, 2
    %v6718 = vsel %vm467, %v6715, %v6717
    %v6719 = vrot.slane %v6696, 2
    %v6720 = vsel %vm467, %v6717, %v6719
    %v6721 = vrot.slane %v6698, 2
    %v6722 = vsel %vm467, %v6719, %v6721
    %v6723 = vrot.slane %v6700, 2
    %v6724 = vsel %vm467, %v6721, %v6723
    %v6725 = vrot.slane %v6706, 2
    %v6726 = vsel %vm467, %v6723, %v6725
    %v6727 = vsel %vm1542, %v6716, 0
    %v6729 = vsel %vm1542, %v6718, 0
    %v6731 = vsel %vm1542, %v6720, 0
    %v6733 = vsel %vm1542, %v6722, 0
    %v6735 = vsel %vm1542, %v6724, 0
    %v6737 = vsel %vm1542, %v6726, 0
    %6739 = vmatprep.subr.mxu0 0.0
    %6740 = vmatpush1.msra.mxu0 0.0
    %6741 = vmatprep.subr.mxu0 0.0
    %6742 = vmatpush1.msra.mxu0 0.0
    %6743 = vmatprep.subr.mxu0 0.0
    %6744 = vmatpush1.msra.mxu0 0.0
    %6745 = vmatprep.subr.mxu0 0.0
    %6746 = vmatpush1.msra.mxu0 0.0
    %6747 = vmatprep.subr.mxu0 0.0
    %6748 = vmatpush1.msra.mxu0 0.0
    %6749 = vmatprep.subr.mxu0 0.0
    %6750 = vmatpush1.msra.mxu0 0.0
    %6751 = vmatprep.subr.mxu0 0.0
    %6752 = vmatpush1.msra.mxu0 0.0
    %6753 = vmatprep.subr.mxu0 0.0
    %6754 = vmatpush1.msra.mxu0 0.0
    %6755 = vmatprep.subr.mxu0 0.0
    %6756 = vmatpush1.msra.mxu0 0.0
    %6757 = vmatprep.subr.mxu0 0.0
    %6758 = vmatpush1.msra.mxu0 0.0
    %6759 = vmatprep.subr.mxu0 0.0
    %6760 = vmatpush1.msra.mxu0 0.0
    %6761 = vmatprep.subr.mxu0 0.0
    %6762 = vmatpush1.msra.mxu0 0.0
    %6763 = vmatprep.subr.mxu0 0.0
    %6764 = vmatpush1.msra.mxu0 0.0
    %6765 = vmatprep.subr.mxu0 0.0
    %6766 = vmatpush1.msra.mxu0 0.0
    %6767 = vmatprep.subr.mxu0 0.0
    %6768 = vmatpush1.msra.mxu0 %v6711
    %6769 = vmatprep.subr.mxu0 0.0
    %6770 = vmatpush1.msra.mxu0 %v6710
    %6771 = vmatprep.subr.mxu0 0.0
    %6772 = vmatpush2.msra.mxu0 0.0
    %6773 = vmatprep.subr.mxu0 0.0
    %6774 = vmatpush2.msra.mxu0 0.0
    %6775 = vmatprep.subr.mxu0 0.0
    %6776 = vmatpush2.msra.mxu0 0.0
    %6777 = vmatprep.subr.mxu0 0.0
    %6778 = vmatpush2.msra.mxu0 0.0
    %6779 = vmatprep.subr.mxu0 0.0
    %6780 = vmatpush2.msra.mxu0 0.0
    %6781 = vmatprep.subr.mxu0 0.0
    %6782 = vmatpush2.msra.mxu0 0.0
    %6783 = vmatprep.subr.mxu0 0.0
    %6784 = vmatpush2.msra.mxu0 0.0
    %6785 = vmatprep.subr.mxu0 0.0
    %6786 = vmatpush2.msra.mxu0 0.0
    %6787 = vmatprep.subr.mxu0 0.0
    %6788 = vmatpush2.msra.mxu0 0.0
    %6789 = vmatprep.subr.mxu0 0.0
    %6790 = vmatpush2.msra.mxu0 0.0
    %6791 = vmatprep.subr.mxu0 0.0
    %6792 = vmatpush2.msra.mxu0 0.0
    %6793 = vmatprep.subr.mxu0 0.0
    %6794 = vmatpush2.msra.mxu0 0.0
    %6795 = vmatprep.subr.mxu0 0.0
    %6796 = vmatpush2.msra.mxu0 0.0
    %6797 = vmatprep.subr.mxu0 0.0
    %6798 = vmatpush2.msra.mxu0 0.0
    %6799 = vmatprep.subr.mxu0 0.0
    %6800 = vmatpush2.msra.mxu0 0.0
    %6801 = vmatprep.subr.mxu0 0.0
    %6802 = vmatpush2.msra.mxu0 0.0
    %6803 = vmatprep.mubr.f32.mxu0 0.0
    %6804 = vmatmul.mubr.f32.gmra.mxu0 %v6727
    %v6805 = vpop.f32.mrf.mxu0
    %v6806 = vadd.f32 0.0, %v6805
    %v6807 = vpop.f32.mrf.mxu0
    %6808 = vmatprep.mubr.f32.mxu0 0.0
    %6809 = vmatmul.mubr.f32.gmra.mxu0 %v6729
    %v6810 = vpop.f32.mrf.mxu0
    %v6811 = vadd.f32 0.0, %v6810
    %v6812 = vpop.f32.mrf.mxu0
    %6813 = vmatprep.mubr.f32.mxu0 0.0
    %6814 = vmatmul.mubr.f32.gmra.mxu0 %v6731
    %v6815 = vpop.f32.mrf.mxu0
    %v6816 = vadd.f32 0.0, %v6815
    %v6817 = vpop.f32.mrf.mxu0
    %6818 = vmatprep.mubr.f32.mxu0 0.0
    %6819 = vmatmul.mubr.f32.gmra.mxu0 %v6733
    %v6820 = vpop.f32.mrf.mxu0
    %v6821 = vadd.f32 0.0, %v6820
    %v6822 = vpop.f32.mrf.mxu0
    %6823 = vmatprep.mubr.f32.mxu0 0.0
    %6824 = vmatmul.mubr.f32.gmra.mxu0 %v6735
    %v6825 = vpop.f32.mrf.mxu0
    %v6826 = vadd.f32 0.0, %v6825
    %v6827 = vpop.f32.mrf.mxu0
    %6828 = vmatprep.mubr.f32.mxu0 0.0
    %6829 = vmatmul.mubr.f32.gmra.mxu0 %v6737
    %v6830 = vpop.f32.mrf.mxu0
    %v6831 = vadd.f32 0.0, %v6830
    %v6832 = vpop.f32.mrf.mxu0
    %6833 = vdwg.mxu0
    %v6834 = vrot.slane %v6705, 1
    %v6835 = vrot.slane %v6692, 1
    %v6836 = vsel %vm592, %v6834, %v6835
    %v6837 = vrot.slane %v6694, 1
    %v6838 = vsel %vm592, %v6835, %v6837
    %v6839 = vrot.slane %v6696, 1
    %v6840 = vsel %vm592, %v6837, %v6839
    %v6841 = vrot.slane %v6698, 1
    %v6842 = vsel %vm592, %v6839, %v6841
    %v6843 = vrot.slane %v6700, 1
    %v6844 = vsel %vm592, %v6841, %v6843
    %v6845 = vrot.slane %v6706, 1
    %v6846 = vsel %vm592, %v6843, %v6845
    %v6847 = vsel %vm1542, %v6836, 0
    %v6849 = vsel %vm1542, %v6838, 0
    %v6851 = vsel %vm1542, %v6840, 0
    %v6853 = vsel %vm1542, %v6842, 0
    %v6855 = vsel %vm1542, %v6844, 0
    %v6857 = vsel %vm1542, %v6846, 0
    %6859 = vmatprep.subr.mxu0 0.0
    %6860 = vmatpush1.msra.mxu0 0.0
    %6861 = vmatprep.subr.mxu0 0.0
    %6862 = vmatpush1.msra.mxu0 0.0
    %6863 = vmatprep.subr.mxu0 0.0
    %6864 = vmatpush1.msra.mxu0 0.0
    %6865 = vmatprep.subr.mxu0 0.0
    %6866 = vmatpush1.msra.mxu0 0.0
    %6867 = vmatprep.subr.mxu0 0.0
    %6868 = vmatpush1.msra.mxu0 0.0
    %6869 = vmatprep.subr.mxu0 0.0
    %6870 = vmatpush1.msra.mxu0 0.0
    %6871 = vmatprep.subr.mxu0 0.0
    %6872 = vmatpush1.msra.mxu0 0.0
    %6873 = vmatprep.subr.mxu0 0.0
    %6874 = vmatpush1.msra.mxu0 0.0
    %6875 = vmatprep.subr.mxu0 0.0
    %6876 = vmatpush1.msra.mxu0 0.0
    %6877 = vmatprep.subr.mxu0 0.0
    %6878 = vmatpush1.msra.mxu0 0.0
    %6879 = vmatprep.subr.mxu0 0.0
    %6880 = vmatpush1.msra.mxu0 0.0
    %6881 = vmatprep.subr.mxu0 0.0
    %6882 = vmatpush1.msra.mxu0 0.0
    %6883 = vmatprep.subr.mxu0 0.0
    %6884 = vmatpush1.msra.mxu0 0.0
    %6885 = vmatprep.subr.mxu0 0.0
    %6886 = vmatpush1.msra.mxu0 0.0
    %6887 = vmatprep.subr.mxu0 0.0
    %6888 = vmatpush1.msra.mxu0 %v6708
    %6889 = vmatprep.subr.mxu0 0.0
    %6890 = vmatpush1.msra.mxu0 %v6707
    %6891 = vmatprep.subr.mxu0 0.0
    %6892 = vmatpush2.msra.mxu0 0.0
    %6893 = vmatprep.subr.mxu0 0.0
    %6894 = vmatpush2.msra.mxu0 0.0
    %6895 = vmatprep.subr.mxu0 0.0
    %6896 = vmatpush2.msra.mxu0 0.0
    %6897 = vmatprep.subr.mxu0 0.0
    %6898 = vmatpush2.msra.mxu0 0.0
    %6899 = vmatprep.subr.mxu0 0.0
    %6900 = vmatpush2.msra.mxu0 0.0
    %6901 = vmatprep.subr.mxu0 0.0
    %6902 = vmatpush2.msra.mxu0 0.0
    %6903 = vmatprep.subr.mxu0 0.0
    %6904 = vmatpush2.msra.mxu0 0.0
    %6905 = vmatprep.subr.mxu0 0.0
    %6906 = vmatpush2.msra.mxu0 0.0
    %6907 = vmatprep.subr.mxu0 0.0
    %6908 = vmatpush2.msra.mxu0 0.0
    %6909 = vmatprep.subr.mxu0 0.0
    %6910 = vmatpush2.msra.mxu0 0.0
    %6911 = vmatprep.subr.mxu0 0.0
    %6912 = vmatpush2.msra.mxu0 0.0
    %6913 = vmatprep.subr.mxu0 0.0
    %6914 = vmatpush2.msra.mxu0 0.0
    %6915 = vmatprep.subr.mxu0 0.0
    %6916 = vmatpush2.msra.mxu0 0.0
    %6917 = vmatprep.subr.mxu0 0.0
    %6918 = vmatpush2.msra.mxu0 0.0
    %6919 = vmatprep.subr.mxu0 0.0
    %6920 = vmatpush2.msra.mxu0 0.0
    %6921 = vmatprep.subr.mxu0 0.0
    %6922 = vmatpush2.msra.mxu0 0.0
    %6923 = vmatprep.mubr.f32.mxu0 0.0
    %6924 = vmatmul.mubr.f32.gmra.mxu0 %v6847
    %v6925 = vpop.f32.mrf.mxu0
    %v6926 = vadd.f32 %v6806, %v6925
    %v6927 = vpop.f32.mrf.mxu0
    %6928 = vmatprep.mubr.f32.mxu0 0.0
    %6929 = vmatmul.mubr.f32.gmra.mxu0 %v6849
    %v6930 = vpop.f32.mrf.mxu0
    %v6931 = vadd.f32 %v6811, %v6930
    %v6932 = vpop.f32.mrf.mxu0
    %6933 = vmatprep.mubr.f32.mxu0 0.0
    %6934 = vmatmul.mubr.f32.gmra.mxu0 %v6851
    %v6935 = vpop.f32.mrf.mxu0
    %v6936 = vadd.f32 %v6816, %v6935
    %v6937 = vpop.f32.mrf.mxu0
    %6938 = vmatprep.mubr.f32.mxu0 0.0
    %6939 = vmatmul.mubr.f32.gmra.mxu0 %v6853
    %v6940 = vpop.f32.mrf.mxu0
    %v6941 = vadd.f32 %v6821, %v6940
    %v6942 = vpop.f32.mrf.mxu0
    %6943 = vmatprep.mubr.f32.mxu0 0.0
    %6944 = vmatmul.mubr.f32.gmra.mxu0 %v6855
    %v6945 = vpop.f32.mrf.mxu0
    %v6946 = vadd.f32 %v6826, %v6945
    %v6947 = vpop.f32.mrf.mxu0
    %6948 = vmatprep.mubr.f32.mxu0 0.0
    %6949 = vmatmul.mubr.f32.gmra.mxu0 %v6857
    %v6950 = vpop.f32.mrf.mxu0
    %v6951 = vadd.f32 %v6831, %v6950
    %v6952 = vpop.f32.mrf.mxu0
    %6953 = vdwg.mxu0
    %s6954 = scalar_lea.vmem %s55, 32
    %v6955 = vld [vmem:[%s6954] sm:$0xff]
    %v6956 = vld [vmem:[%s6954 + $0x8] sm:$0xff]
    %v6957 = vrot.slane %v6705, 3
    %v6958 = vrot.slane %v6692, 3
    %v6959 = vsel %vm718, %v6957, %v6958
    %v6960 = vrot.slane %v6694, 3
    %v6961 = vsel %vm718, %v6958, %v6960
    %v6962 = vrot.slane %v6696, 3
    %v6963 = vsel %vm718, %v6960, %v6962
    %v6964 = vrot.slane %v6698, 3
    %v6965 = vsel %vm718, %v6962, %v6964
    %v6966 = vrot.slane %v6700, 3
    %v6967 = vsel %vm718, %v6964, %v6966
    %v6968 = vrot.slane %v6706, 3
    %v6969 = vsel %vm718, %v6966, %v6968
    %v6970 = vsel %vm1542, %v6959, 0
    %v6972 = vsel %vm1542, %v6961, 0
    %v6974 = vsel %vm1542, %v6963, 0
    %v6976 = vsel %vm1542, %v6965, 0
    %v6978 = vsel %vm1542, %v6967, 0
    %v6980 = vsel %vm1542, %v6969, 0
    %6982 = vmatprep.subr.mxu0 0.0
    %6983 = vmatpush1.msra.mxu0 0.0
    %6984 = vmatprep.subr.mxu0 0.0
    %6985 = vmatpush1.msra.mxu0 0.0
    %6986 = vmatprep.subr.mxu0 0.0
    %6987 = vmatpush1.msra.mxu0 0.0
    %6988 = vmatprep.subr.mxu0 0.0
    %6989 = vmatpush1.msra.mxu0 0.0
    %6990 = vmatprep.subr.mxu0 0.0
    %6991 = vmatpush1.msra.mxu0 0.0
    %6992 = vmatprep.subr.mxu0 0.0
    %6993 = vmatpush1.msra.mxu0 0.0
    %6994 = vmatprep.subr.mxu0 0.0
    %6995 = vmatpush1.msra.mxu0 0.0
    %6996 = vmatprep.subr.mxu0 0.0
    %6997 = vmatpush1.msra.mxu0 0.0
    %6998 = vmatprep.subr.mxu0 0.0
    %6999 = vmatpush1.msra.mxu0 0.0
    %7000 = vmatprep.subr.mxu0 0.0
    %7001 = vmatpush1.msra.mxu0 0.0
    %7002 = vmatprep.subr.mxu0 0.0
    %7003 = vmatpush1.msra.mxu0 0.0
    %7004 = vmatprep.subr.mxu0 0.0
    %7005 = vmatpush1.msra.mxu0 0.0
    %7006 = vmatprep.subr.mxu0 0.0
    %7007 = vmatpush1.msra.mxu0 0.0
    %7008 = vmatprep.subr.mxu0 0.0
    %7009 = vmatpush1.msra.mxu0 0.0
    %7010 = vmatprep.subr.mxu0 0.0
    %7011 = vmatpush1.msra.mxu0 %v6956
    %7012 = vmatprep.subr.mxu0 0.0
    %7013 = vmatpush1.msra.mxu0 %v6955
    %7014 = vmatprep.subr.mxu0 0.0
    %7015 = vmatpush2.msra.mxu0 0.0
    %7016 = vmatprep.subr.mxu0 0.0
    %7017 = vmatpush2.msra.mxu0 0.0
    %7018 = vmatprep.subr.mxu0 0.0
    %7019 = vmatpush2.msra.mxu0 0.0
    %7020 = vmatprep.subr.mxu0 0.0
    %7021 = vmatpush2.msra.mxu0 0.0
    %7022 = vmatprep.subr.mxu0 0.0
    %7023 = vmatpush2.msra.mxu0 0.0
    %7024 = vmatprep.subr.mxu0 0.0
    %7025 = vmatpush2.msra.mxu0 0.0
    %7026 = vmatprep.subr.mxu0 0.0
    %7027 = vmatpush2.msra.mxu0 0.0
    %7028 = vmatprep.subr.mxu0 0.0
    %7029 = vmatpush2.msra.mxu0 0.0
    %7030 = vmatprep.subr.mxu0 0.0
    %7031 = vmatpush2.msra.mxu0 0.0
    %7032 = vmatprep.subr.mxu0 0.0
    %7033 = vmatpush2.msra.mxu0 0.0
    %7034 = vmatprep.subr.mxu0 0.0
    %7035 = vmatpush2.msra.mxu0 0.0
    %7036 = vmatprep.subr.mxu0 0.0
    %7037 = vmatpush2.msra.mxu0 0.0
    %7038 = vmatprep.subr.mxu0 0.0
    %7039 = vmatpush2.msra.mxu0 0.0
    %7040 = vmatprep.subr.mxu0 0.0
    %7041 = vmatpush2.msra.mxu0 0.0
    %7042 = vmatprep.subr.mxu0 0.0
    %7043 = vmatpush2.msra.mxu0 0.0
    %7044 = vmatprep.subr.mxu0 0.0
    %7045 = vmatpush2.msra.mxu0 0.0
    %7046 = vmatprep.mubr.f32.mxu0 0.0
    %7047 = vmatmul.mubr.f32.gmra.mxu0 %v6970
    %v7048 = vpop.f32.mrf.mxu0
    %v7049 = vadd.f32 0.0, %v7048
    %v7050 = vpop.f32.mrf.mxu0
    %7051 = vmatprep.mubr.f32.mxu0 0.0
    %7052 = vmatmul.mubr.f32.gmra.mxu0 %v6972
    %v7053 = vpop.f32.mrf.mxu0
    %v7054 = vadd.f32 0.0, %v7053
    %v7055 = vpop.f32.mrf.mxu0
    %7056 = vmatprep.mubr.f32.mxu0 0.0
    %7057 = vmatmul.mubr.f32.gmra.mxu0 %v6974
    %v7058 = vpop.f32.mrf.mxu0
    %v7059 = vadd.f32 0.0, %v7058
    %v7060 = vpop.f32.mrf.mxu0
    %7061 = vmatprep.mubr.f32.mxu0 0.0
    %7062 = vmatmul.mubr.f32.gmra.mxu0 %v6976
    %v7063 = vpop.f32.mrf.mxu0
    %v7064 = vadd.f32 0.0, %v7063
    %v7065 = vpop.f32.mrf.mxu0
    %7066 = vmatprep.mubr.f32.mxu0 0.0
    %7067 = vmatmul.mubr.f32.gmra.mxu0 %v6978
    %v7068 = vpop.f32.mrf.mxu0
    %v7069 = vadd.f32 0.0, %v7068
    %v7070 = vpop.f32.mrf.mxu0
    %7071 = vmatprep.mubr.f32.mxu0 0.0
    %7072 = vmatmul.mubr.f32.gmra.mxu0 %v6980
    %v7073 = vpop.f32.mrf.mxu0
    %v7074 = vadd.f32 0.0, %v7073
    %v7075 = vpop.f32.mrf.mxu0
    %7076 = vdwg.mxu0
    %v7077 = vadd.f32 %v6926, %v7049
    %v7078 = vadd.f32 %v6931, %v7054
    %v7079 = vadd.f32 %v6936, %v7059
    %v7080 = vadd.f32 %v6941, %v7064
    %v7081 = vadd.f32 %v6946, %v7069
    %v7082 = vadd.f32 %v6951, %v7074
    %s7083 = scalar_lea.vmem %s55, 48
    %v7084 = vld [vmem:[%s7083] sm:$0xff]
    %v7085 = vld [vmem:[%s7083 + $0x8] sm:$0xff]
    %v7086 = vrot.slane %v6705, 4
    %v7087 = vrot.slane %v6692, 4
    %v7088 = vsel %vm446, %v7086, %v7087
    %v7089 = vrot.slane %v6694, 4
    %v7090 = vsel %vm446, %v7087, %v7089
    %v7091 = vrot.slane %v6696, 4
    %v7092 = vsel %vm446, %v7089, %v7091
    %v7093 = vrot.slane %v6698, 4
    %v7094 = vsel %vm446, %v7091, %v7093
    %v7095 = vrot.slane %v6700, 4
    %v7096 = vsel %vm446, %v7093, %v7095
    %v7097 = vrot.slane %v6706, 4
    %v7098 = vsel %vm446, %v7095, %v7097
    %v7099 = vsel %vm1542, %v7088, 0
    %v7101 = vsel %vm1542, %v7090, 0
    %v7103 = vsel %vm1542, %v7092, 0
    %v7105 = vsel %vm1542, %v7094, 0
    %v7107 = vsel %vm1542, %v7096, 0
    %v7109 = vsel %vm1542, %v7098, 0
    %7111 = vmatprep.subr.mxu0 0.0
    %7112 = vmatpush1.msra.mxu0 0.0
    %7113 = vmatprep.subr.mxu0 0.0
    %7114 = vmatpush1.msra.mxu0 0.0
    %7115 = vmatprep.subr.mxu0 0.0
    %7116 = vmatpush1.msra.mxu0 0.0
    %7117 = vmatprep.subr.mxu0 0.0
    %7118 = vmatpush1.msra.mxu0 0.0
    %7119 = vmatprep.subr.mxu0 0.0
    %7120 = vmatpush1.msra.mxu0 0.0
    %7121 = vmatprep.subr.mxu0 0.0
    %7122 = vmatpush1.msra.mxu0 0.0
    %7123 = vmatprep.subr.mxu0 0.0
    %7124 = vmatpush1.msra.mxu0 0.0
    %7125 = vmatprep.subr.mxu0 0.0
    %7126 = vmatpush1.msra.mxu0 0.0
    %7127 = vmatprep.subr.mxu0 0.0
    %7128 = vmatpush1.msra.mxu0 0.0
    %7129 = vmatprep.subr.mxu0 0.0
    %7130 = vmatpush1.msra.mxu0 0.0
    %7131 = vmatprep.subr.mxu0 0.0
    %7132 = vmatpush1.msra.mxu0 0.0
    %7133 = vmatprep.subr.mxu0 0.0
    %7134 = vmatpush1.msra.mxu0 0.0
    %7135 = vmatprep.subr.mxu0 0.0
    %7136 = vmatpush1.msra.mxu0 0.0
    %7137 = vmatprep.subr.mxu0 0.0
    %7138 = vmatpush1.msra.mxu0 0.0
    %7139 = vmatprep.subr.mxu0 0.0
    %7140 = vmatpush1.msra.mxu0 %v7085
    %7141 = vmatprep.subr.mxu0 0.0
    %7142 = vmatpush1.msra.mxu0 %v7084
    %7143 = vmatprep.subr.mxu0 0.0
    %7144 = vmatpush2.msra.mxu0 0.0
    %7145 = vmatprep.subr.mxu0 0.0
    %7146 = vmatpush2.msra.mxu0 0.0
    %7147 = vmatprep.subr.mxu0 0.0
    %7148 = vmatpush2.msra.mxu0 0.0
    %7149 = vmatprep.subr.mxu0 0.0
    %7150 = vmatpush2.msra.mxu0 0.0
    %7151 = vmatprep.subr.mxu0 0.0
    %7152 = vmatpush2.msra.mxu0 0.0
    %7153 = vmatprep.subr.mxu0 0.0
    %7154 = vmatpush2.msra.mxu0 0.0
    %7155 = vmatprep.subr.mxu0 0.0
    %7156 = vmatpush2.msra.mxu0 0.0
    %7157 = vmatprep.subr.mxu0 0.0
    %7158 = vmatpush2.msra.mxu0 0.0
    %7159 = vmatprep.subr.mxu0 0.0
    %7160 = vmatpush2.msra.mxu0 0.0
    %7161 = vmatprep.subr.mxu0 0.0
    %7162 = vmatpush2.msra.mxu0 0.0
    %7163 = vmatprep.subr.mxu0 0.0
    %7164 = vmatpush2.msra.mxu0 0.0
    %7165 = vmatprep.subr.mxu0 0.0
    %7166 = vmatpush2.msra.mxu0 0.0
    %7167 = vmatprep.subr.mxu0 0.0
    %7168 = vmatpush2.msra.mxu0 0.0
    %7169 = vmatprep.subr.mxu0 0.0
    %7170 = vmatpush2.msra.mxu0 0.0
    %7171 = vmatprep.subr.mxu0 0.0
    %7172 = vmatpush2.msra.mxu0 0.0
    %7173 = vmatprep.subr.mxu0 0.0
    %7174 = vmatpush2.msra.mxu0 0.0
    %7175 = vmatprep.mubr.f32.mxu0 0.0
    %7176 = vmatmul.mubr.f32.gmra.mxu0 %v7099
    %v7177 = vpop.f32.mrf.mxu0
    %v7178 = vadd.f32 0.0, %v7177
    %v7179 = vpop.f32.mrf.mxu0
    %7180 = vmatprep.mubr.f32.mxu0 0.0
    %7181 = vmatmul.mubr.f32.gmra.mxu0 %v7101
    %v7182 = vpop.f32.mrf.mxu0
    %v7183 = vadd.f32 0.0, %v7182
    %v7184 = vpop.f32.mrf.mxu0
    %7185 = vmatprep.mubr.f32.mxu0 0.0
    %7186 = vmatmul.mubr.f32.gmra.mxu0 %v7103
    %v7187 = vpop.f32.mrf.mxu0
    %v7188 = vadd.f32 0.0, %v7187
    %v7189 = vpop.f32.mrf.mxu0
    %7190 = vmatprep.mubr.f32.mxu0 0.0
    %7191 = vmatmul.mubr.f32.gmra.mxu0 %v7105
    %v7192 = vpop.f32.mrf.mxu0
    %v7193 = vadd.f32 0.0, %v7192
    %v7194 = vpop.f32.mrf.mxu0
    %7195 = vmatprep.mubr.f32.mxu0 0.0
    %7196 = vmatmul.mubr.f32.gmra.mxu0 %v7107
    %v7197 = vpop.f32.mrf.mxu0
    %v7198 = vadd.f32 0.0, %v7197
    %v7199 = vpop.f32.mrf.mxu0
    %7200 = vmatprep.mubr.f32.mxu0 0.0
    %7201 = vmatmul.mubr.f32.gmra.mxu0 %v7109
    %v7202 = vpop.f32.mrf.mxu0
    %v7203 = vadd.f32 0.0, %v7202
    %v7204 = vpop.f32.mrf.mxu0
    %7205 = vdwg.mxu0
    %v7206 = vadd.f32 %v7077, %v7178
    %v7207 = vadd.f32 %v7078, %v7183
    %v7208 = vadd.f32 %v7079, %v7188
    %v7209 = vadd.f32 %v7080, %v7193
    %v7210 = vadd.f32 %v7081, %v7198
    %v7211 = vadd.f32 %v7082, %v7203
    %s7212 = scalar_lea.vmem %s55, 64
    %v7213 = vld [vmem:[%s7212] sm:$0xff]
    %v7214 = vld [vmem:[%s7212 + $0x8] sm:$0xff]
    %v7215 = vrot.slane %v6705, 5
    %v7216 = vrot.slane %v6692, 5
    %v7217 = vsel %vm981, %v7215, %v7216
    %v7218 = vrot.slane %v6694, 5
    %v7219 = vsel %vm981, %v7216, %v7218
    %v7220 = vrot.slane %v6696, 5
    %v7221 = vsel %vm981, %v7218, %v7220
    %v7222 = vrot.slane %v6698, 5
    %v7223 = vsel %vm981, %v7220, %v7222
    %v7224 = vrot.slane %v6700, 5
    %v7225 = vsel %vm981, %v7222, %v7224
    %v7226 = vrot.slane %v6706, 5
    %v7227 = vsel %vm981, %v7224, %v7226
    %v7228 = vsel %vm1542, %v7217, 0
    %v7230 = vsel %vm1542, %v7219, 0
    %v7232 = vsel %vm1542, %v7221, 0
    %v7234 = vsel %vm1542, %v7223, 0
    %v7236 = vsel %vm1542, %v7225, 0
    %v7238 = vsel %vm1542, %v7227, 0
    %7240 = vmatprep.subr.mxu0 0.0
    %7241 = vmatpush1.msra.mxu0 0.0
    %7242 = vmatprep.subr.mxu0 0.0
    %7243 = vmatpush1.msra.mxu0 0.0
    %7244 = vmatprep.subr.mxu0 0.0
    %7245 = vmatpush1.msra.mxu0 0.0
    %7246 = vmatprep.subr.mxu0 0.0
    %7247 = vmatpush1.msra.mxu0 0.0
    %7248 = vmatprep.subr.mxu0 0.0
    %7249 = vmatpush1.msra.mxu0 0.0
    %7250 = vmatprep.subr.mxu0 0.0
    %7251 = vmatpush1.msra.mxu0 0.0
    %7252 = vmatprep.subr.mxu0 0.0
    %7253 = vmatpush1.msra.mxu0 0.0
    %7254 = vmatprep.subr.mxu0 0.0
    %7255 = vmatpush1.msra.mxu0 0.0
    %7256 = vmatprep.subr.mxu0 0.0
    %7257 = vmatpush1.msra.mxu0 0.0
    %7258 = vmatprep.subr.mxu0 0.0
    %7259 = vmatpush1.msra.mxu0 0.0
    %7260 = vmatprep.subr.mxu0 0.0
    %7261 = vmatpush1.msra.mxu0 0.0
    %7262 = vmatprep.subr.mxu0 0.0
    %7263 = vmatpush1.msra.mxu0 0.0
    %7264 = vmatprep.subr.mxu0 0.0
    %7265 = vmatpush1.msra.mxu0 0.0
    %7266 = vmatprep.subr.mxu0 0.0
    %7267 = vmatpush1.msra.mxu0 0.0
    %7268 = vmatprep.subr.mxu0 0.0
    %7269 = vmatpush1.msra.mxu0 %v7214
    %7270 = vmatprep.subr.mxu0 0.0
    %7271 = vmatpush1.msra.mxu0 %v7213
    %7272 = vmatprep.subr.mxu0 0.0
    %7273 = vmatpush2.msra.mxu0 0.0
    %7274 = vmatprep.subr.mxu0 0.0
    %7275 = vmatpush2.msra.mxu0 0.0
    %7276 = vmatprep.subr.mxu0 0.0
    %7277 = vmatpush2.msra.mxu0 0.0
    %7278 = vmatprep.subr.mxu0 0.0
    %7279 = vmatpush2.msra.mxu0 0.0
    %7280 = vmatprep.subr.mxu0 0.0
    %7281 = vmatpush2.msra.mxu0 0.0
    %7282 = vmatprep.subr.mxu0 0.0
    %7283 = vmatpush2.msra.mxu0 0.0
    %7284 = vmatprep.subr.mxu0 0.0
    %7285 = vmatpush2.msra.mxu0 0.0
    %7286 = vmatprep.subr.mxu0 0.0
    %7287 = vmatpush2.msra.mxu0 0.0
    %7288 = vmatprep.subr.mxu0 0.0
    %7289 = vmatpush2.msra.mxu0 0.0
    %7290 = vmatprep.subr.mxu0 0.0
    %7291 = vmatpush2.msra.mxu0 0.0
    %7292 = vmatprep.subr.mxu0 0.0
    %7293 = vmatpush2.msra.mxu0 0.0
    %7294 = vmatprep.subr.mxu0 0.0
    %7295 = vmatpush2.msra.mxu0 0.0
    %7296 = vmatprep.subr.mxu0 0.0
    %7297 = vmatpush2.msra.mxu0 0.0
    %7298 = vmatprep.subr.mxu0 0.0
    %7299 = vmatpush2.msra.mxu0 0.0
    %7300 = vmatprep.subr.mxu0 0.0
    %7301 = vmatpush2.msra.mxu0 0.0
    %7302 = vmatprep.subr.mxu0 0.0
    %7303 = vmatpush2.msra.mxu0 0.0
    %7304 = vmatprep.mubr.f32.mxu0 0.0
    %7305 = vmatmul.mubr.f32.gmra.mxu0 %v7228
    %v7306 = vpop.f32.mrf.mxu0
    %v7307 = vadd.f32 0.0, %v7306
    %v7308 = vpop.f32.mrf.mxu0
    %7309 = vmatprep.mubr.f32.mxu0 0.0
    %7310 = vmatmul.mubr.f32.gmra.mxu0 %v7230
    %v7311 = vpop.f32.mrf.mxu0
    %v7312 = vadd.f32 0.0, %v7311
    %v7313 = vpop.f32.mrf.mxu0
    %7314 = vmatprep.mubr.f32.mxu0 0.0
    %7315 = vmatmul.mubr.f32.gmra.mxu0 %v7232
    %v7316 = vpop.f32.mrf.mxu0
    %v7317 = vadd.f32 0.0, %v7316
    %v7318 = vpop.f32.mrf.mxu0
    %7319 = vmatprep.mubr.f32.mxu0 0.0
    %7320 = vmatmul.mubr.f32.gmra.mxu0 %v7234
    %v7321 = vpop.f32.mrf.mxu0
    %v7322 = vadd.f32 0.0, %v7321
    %v7323 = vpop.f32.mrf.mxu0
    %7324 = vmatprep.mubr.f32.mxu0 0.0
    %7325 = vmatmul.mubr.f32.gmra.mxu0 %v7236
    %v7326 = vpop.f32.mrf.mxu0
    %v7327 = vadd.f32 0.0, %v7326
    %v7328 = vpop.f32.mrf.mxu0
    %7329 = vmatprep.mubr.f32.mxu0 0.0
    %7330 = vmatmul.mubr.f32.gmra.mxu0 %v7238
    %v7331 = vpop.f32.mrf.mxu0
    %v7332 = vadd.f32 0.0, %v7331
    %v7333 = vpop.f32.mrf.mxu0
    %7334 = vdwg.mxu0
    %v7335 = vadd.f32 %v7206, %v7307
    %v7336 = vadd.f32 %v7207, %v7312
    %v7337 = vadd.f32 %v7208, %v7317
    %v7338 = vadd.f32 %v7209, %v7322
    %v7339 = vadd.f32 %v7210, %v7327
    %v7340 = vadd.f32 %v7211, %v7332
    %s7341 = scalar_lea.vmem %s55, 80
    %v7342 = vld [vmem:[%s7341] sm:$0xff]
    %v7343 = vld [vmem:[%s7341 + $0x8] sm:$0xff]
    %v7344 = vrot.slane %v6705, 6
    %v7345 = vrot.slane %v6692, 6
    %v7346 = vsel %vm1113, %v7344, %v7345
    %v7347 = vrot.slane %v6694, 6
    %v7348 = vsel %vm1113, %v7345, %v7347
    %v7349 = vrot.slane %v6696, 6
    %v7350 = vsel %vm1113, %v7347, %v7349
    %v7351 = vrot.slane %v6698, 6
    %v7352 = vsel %vm1113, %v7349, %v7351
    %v7353 = vrot.slane %v6700, 6
    %v7354 = vsel %vm1113, %v7351, %v7353
    %v7355 = vrot.slane %v6706, 6
    %v7356 = vsel %vm1113, %v7353, %v7355
    %v7357 = vsel %vm1542, %v7346, 0
    %v7359 = vsel %vm1542, %v7348, 0
    %v7361 = vsel %vm1542, %v7350, 0
    %v7363 = vsel %vm1542, %v7352, 0
    %v7365 = vsel %vm1542, %v7354, 0
    %v7367 = vsel %vm1542, %v7356, 0
    %7369 = vmatprep.subr.mxu0 0.0
    %7370 = vmatpush1.msra.mxu0 0.0
    %7371 = vmatprep.subr.mxu0 0.0
    %7372 = vmatpush1.msra.mxu0 0.0
    %7373 = vmatprep.subr.mxu0 0.0
    %7374 = vmatpush1.msra.mxu0 0.0
    %7375 = vmatprep.subr.mxu0 0.0
    %7376 = vmatpush1.msra.mxu0 0.0
    %7377 = vmatprep.subr.mxu0 0.0
    %7378 = vmatpush1.msra.mxu0 0.0
    %7379 = vmatprep.subr.mxu0 0.0
    %7380 = vmatpush1.msra.mxu0 0.0
    %7381 = vmatprep.subr.mxu0 0.0
    %7382 = vmatpush1.msra.mxu0 0.0
    %7383 = vmatprep.subr.mxu0 0.0
    %7384 = vmatpush1.msra.mxu0 0.0
    %7385 = vmatprep.subr.mxu0 0.0
    %7386 = vmatpush1.msra.mxu0 0.0
    %7387 = vmatprep.subr.mxu0 0.0
    %7388 = vmatpush1.msra.mxu0 0.0
    %7389 = vmatprep.subr.mxu0 0.0
    %7390 = vmatpush1.msra.mxu0 0.0
    %7391 = vmatprep.subr.mxu0 0.0
    %7392 = vmatpush1.msra.mxu0 0.0
    %7393 = vmatprep.subr.mxu0 0.0
    %7394 = vmatpush1.msra.mxu0 0.0
    %7395 = vmatprep.subr.mxu0 0.0
    %7396 = vmatpush1.msra.mxu0 0.0
    %7397 = vmatprep.subr.mxu0 0.0
    %7398 = vmatpush1.msra.mxu0 %v7343
    %7399 = vmatprep.subr.mxu0 0.0
    %7400 = vmatpush1.msra.mxu0 %v7342
    %7401 = vmatprep.subr.mxu0 0.0
    %7402 = vmatpush2.msra.mxu0 0.0
    %7403 = vmatprep.subr.mxu0 0.0
    %7404 = vmatpush2.msra.mxu0 0.0
    %7405 = vmatprep.subr.mxu0 0.0
    %7406 = vmatpush2.msra.mxu0 0.0
    %7407 = vmatprep.subr.mxu0 0.0
    %7408 = vmatpush2.msra.mxu0 0.0
    %7409 = vmatprep.subr.mxu0 0.0
    %7410 = vmatpush2.msra.mxu0 0.0
    %7411 = vmatprep.subr.mxu0 0.0
    %7412 = vmatpush2.msra.mxu0 0.0
    %7413 = vmatprep.subr.mxu0 0.0
    %7414 = vmatpush2.msra.mxu0 0.0
    %7415 = vmatprep.subr.mxu0 0.0
    %7416 = vmatpush2.msra.mxu0 0.0
    %7417 = vmatprep.subr.mxu0 0.0
    %7418 = vmatpush2.msra.mxu0 0.0
    %7419 = vmatprep.subr.mxu0 0.0
    %7420 = vmatpush2.msra.mxu0 0.0
    %7421 = vmatprep.subr.mxu0 0.0
    %7422 = vmatpush2.msra.mxu0 0.0
    %7423 = vmatprep.subr.mxu0 0.0
    %7424 = vmatpush2.msra.mxu0 0.0
    %7425 = vmatprep.subr.mxu0 0.0
    %7426 = vmatpush2.msra.mxu0 0.0
    %7427 = vmatprep.subr.mxu0 0.0
    %7428 = vmatpush2.msra.mxu0 0.0
    %7429 = vmatprep.subr.mxu0 0.0
    %7430 = vmatpush2.msra.mxu0 0.0
    %7431 = vmatprep.subr.mxu0 0.0
    %7432 = vmatpush2.msra.mxu0 0.0
    %7433 = vmatprep.mubr.f32.mxu0 0.0
    %7434 = vmatmul.mubr.f32.gmra.mxu0 %v7357
    %v7435 = vpop.f32.mrf.mxu0
    %v7436 = vadd.f32 0.0, %v7435
    %v7437 = vpop.f32.mrf.mxu0
    %7438 = vmatprep.mubr.f32.mxu0 0.0
    %7439 = vmatmul.mubr.f32.gmra.mxu0 %v7359
    %v7440 = vpop.f32.mrf.mxu0
    %v7441 = vadd.f32 0.0, %v7440
    %v7442 = vpop.f32.mrf.mxu0
    %7443 = vmatprep.mubr.f32.mxu0 0.0
    %7444 = vmatmul.mubr.f32.gmra.mxu0 %v7361
    %v7445 = vpop.f32.mrf.mxu0
    %v7446 = vadd.f32 0.0, %v7445
    %v7447 = vpop.f32.mrf.mxu0
    %7448 = vmatprep.mubr.f32.mxu0 0.0
    %7449 = vmatmul.mubr.f32.gmra.mxu0 %v7363
    %v7450 = vpop.f32.mrf.mxu0
    %v7451 = vadd.f32 0.0, %v7450
    %v7452 = vpop.f32.mrf.mxu0
    %7453 = vmatprep.mubr.f32.mxu0 0.0
    %7454 = vmatmul.mubr.f32.gmra.mxu0 %v7365
    %v7455 = vpop.f32.mrf.mxu0
    %v7456 = vadd.f32 0.0, %v7455
    %v7457 = vpop.f32.mrf.mxu0
    %7458 = vmatprep.mubr.f32.mxu0 0.0
    %7459 = vmatmul.mubr.f32.gmra.mxu0 %v7367
    %v7460 = vpop.f32.mrf.mxu0
    %v7461 = vadd.f32 0.0, %v7460
    %v7462 = vpop.f32.mrf.mxu0
    %7463 = vdwg.mxu0
    %v7464 = vadd.f32 %v7335, %v7436
    %v7465 = vadd.f32 %v7336, %v7441
    %v7466 = vadd.f32 %v7337, %v7446
    %v7467 = vadd.f32 %v7338, %v7451
    %v7468 = vadd.f32 %v7339, %v7456
    %v7469 = vadd.f32 %v7340, %v7461
    %s7470 = scalar_lea.vmem %s55, 96
    %v7471 = vld [vmem:[%s7470] sm:$0xff]
    %v7472 = vld [vmem:[%s7470 + $0x8] sm:$0xff]
    %v7473 = vrot.slane %v6705, 7
    %v7474 = vrot.slane %v6692, 7
    %v7475 = vsel %vm1245, %v7473, %v7474
    %v7476 = vrot.slane %v6694, 7
    %v7477 = vsel %vm1245, %v7474, %v7476
    %v7478 = vrot.slane %v6696, 7
    %v7479 = vsel %vm1245, %v7476, %v7478
    %v7480 = vrot.slane %v6698, 7
    %v7481 = vsel %vm1245, %v7478, %v7480
    %v7482 = vrot.slane %v6700, 7
    %v7483 = vsel %vm1245, %v7480, %v7482
    %v7484 = vrot.slane %v6706, 7
    %v7485 = vsel %vm1245, %v7482, %v7484
    %v7486 = vsel %vm1542, %v7475, 0
    %v7488 = vsel %vm1542, %v7477, 0
    %v7490 = vsel %vm1542, %v7479, 0
    %v7492 = vsel %vm1542, %v7481, 0
    %v7494 = vsel %vm1542, %v7483, 0
    %v7496 = vsel %vm1542, %v7485, 0
    %7498 = vmatprep.subr.mxu0 0.0
    %7499 = vmatpush1.msra.mxu0 0.0
    %7500 = vmatprep.subr.mxu0 0.0
    %7501 = vmatpush1.msra.mxu0 0.0
    %7502 = vmatprep.subr.mxu0 0.0
    %7503 = vmatpush1.msra.mxu0 0.0
    %7504 = vmatprep.subr.mxu0 0.0
    %7505 = vmatpush1.msra.mxu0 0.0
    %7506 = vmatprep.subr.mxu0 0.0
    %7507 = vmatpush1.msra.mxu0 0.0
    %7508 = vmatprep.subr.mxu0 0.0
    %7509 = vmatpush1.msra.mxu0 0.0
    %7510 = vmatprep.subr.mxu0 0.0
    %7511 = vmatpush1.msra.mxu0 0.0
    %7512 = vmatprep.subr.mxu0 0.0
    %7513 = vmatpush1.msra.mxu0 0.0
    %7514 = vmatprep.subr.mxu0 0.0
    %7515 = vmatpush1.msra.mxu0 0.0
    %7516 = vmatprep.subr.mxu0 0.0
    %7517 = vmatpush1.msra.mxu0 0.0
    %7518 = vmatprep.subr.mxu0 0.0
    %7519 = vmatpush1.msra.mxu0 0.0
    %7520 = vmatprep.subr.mxu0 0.0
    %7521 = vmatpush1.msra.mxu0 0.0
    %7522 = vmatprep.subr.mxu0 0.0
    %7523 = vmatpush1.msra.mxu0 0.0
    %7524 = vmatprep.subr.mxu0 0.0
    %7525 = vmatpush1.msra.mxu0 0.0
    %7526 = vmatprep.subr.mxu0 0.0
    %7527 = vmatpush1.msra.mxu0 %v7472
    %7528 = vmatprep.subr.mxu0 0.0
    %7529 = vmatpush1.msra.mxu0 %v7471
    %7530 = vmatprep.subr.mxu0 0.0
    %7531 = vmatpush2.msra.mxu0 0.0
    %7532 = vmatprep.subr.mxu0 0.0
    %7533 = vmatpush2.msra.mxu0 0.0
    %7534 = vmatprep.subr.mxu0 0.0
    %7535 = vmatpush2.msra.mxu0 0.0
    %7536 = vmatprep.subr.mxu0 0.0
    %7537 = vmatpush2.msra.mxu0 0.0
    %7538 = vmatprep.subr.mxu0 0.0
    %7539 = vmatpush2.msra.mxu0 0.0
    %7540 = vmatprep.subr.mxu0 0.0
    %7541 = vmatpush2.msra.mxu0 0.0
    %7542 = vmatprep.subr.mxu0 0.0
    %7543 = vmatpush2.msra.mxu0 0.0
    %7544 = vmatprep.subr.mxu0 0.0
    %7545 = vmatpush2.msra.mxu0 0.0
    %7546 = vmatprep.subr.mxu0 0.0
    %7547 = vmatpush2.msra.mxu0 0.0
    %7548 = vmatprep.subr.mxu0 0.0
    %7549 = vmatpush2.msra.mxu0 0.0
    %7550 = vmatprep.subr.mxu0 0.0
    %7551 = vmatpush2.msra.mxu0 0.0
    %7552 = vmatprep.subr.mxu0 0.0
    %7553 = vmatpush2.msra.mxu0 0.0
    %7554 = vmatprep.subr.mxu0 0.0
    %7555 = vmatpush2.msra.mxu0 0.0
    %7556 = vmatprep.subr.mxu0 0.0
    %7557 = vmatpush2.msra.mxu0 0.0
    %7558 = vmatprep.subr.mxu0 0.0
    %7559 = vmatpush2.msra.mxu0 0.0
    %7560 = vmatprep.subr.mxu0 0.0
    %7561 = vmatpush2.msra.mxu0 0.0
    %7562 = vmatprep.mubr.f32.mxu0 0.0
    %7563 = vmatmul.mubr.f32.gmra.mxu0 %v7486
    %v7564 = vpop.f32.mrf.mxu0
    %v7565 = vadd.f32 0.0, %v7564
    %v7566 = vpop.f32.mrf.mxu0
    %7567 = vmatprep.mubr.f32.mxu0 0.0
    %7568 = vmatmul.mubr.f32.gmra.mxu0 %v7488
    %v7569 = vpop.f32.mrf.mxu0
    %v7570 = vadd.f32 0.0, %v7569
    %v7571 = vpop.f32.mrf.mxu0
    %7572 = vmatprep.mubr.f32.mxu0 0.0
    %7573 = vmatmul.mubr.f32.gmra.mxu0 %v7490
    %v7574 = vpop.f32.mrf.mxu0
    %v7575 = vadd.f32 0.0, %v7574
    %v7576 = vpop.f32.mrf.mxu0
    %7577 = vmatprep.mubr.f32.mxu0 0.0
    %7578 = vmatmul.mubr.f32.gmra.mxu0 %v7492
    %v7579 = vpop.f32.mrf.mxu0
    %v7580 = vadd.f32 0.0, %v7579
    %v7581 = vpop.f32.mrf.mxu0
    %7582 = vmatprep.mubr.f32.mxu0 0.0
    %7583 = vmatmul.mubr.f32.gmra.mxu0 %v7494
    %v7584 = vpop.f32.mrf.mxu0
    %v7585 = vadd.f32 0.0, %v7584
    %v7586 = vpop.f32.mrf.mxu0
    %7587 = vmatprep.mubr.f32.mxu0 0.0
    %7588 = vmatmul.mubr.f32.gmra.mxu0 %v7496
    %v7589 = vpop.f32.mrf.mxu0
    %v7590 = vadd.f32 0.0, %v7589
    %v7591 = vpop.f32.mrf.mxu0
    %7592 = vdwg.mxu0
    %v7593 = vadd.f32 %v7464, %v7565
    %v7594 = vadd.f32 %v7465, %v7570
    %v7595 = vadd.f32 %v7466, %v7575
    %v7596 = vadd.f32 %v7467, %v7580
    %v7597 = vadd.f32 %v7468, %v7585
    %v7598 = vadd.f32 %v7469, %v7590
    %s7599 = scalar_lea.vmem %s55, 112
    %v7600 = vld [vmem:[%s7599] sm:$0xff]
    %v7601 = vld [vmem:[%s7599 + $0x8] sm:$0xff]
    %v7602 = vsel %vm1542, %v6692, 0
    %v7604 = vsel %vm1542, %v6694, 0
    %v7606 = vsel %vm1542, %v6696, 0
    %v7608 = vsel %vm1542, %v6698, 0
    %v7610 = vsel %vm1542, %v6700, 0
    %v7612 = vsel %vm1542, %v6706, 0
    %7614 = vmatprep.subr.mxu0 0.0
    %7615 = vmatpush1.msra.mxu0 0.0
    %7616 = vmatprep.subr.mxu0 0.0
    %7617 = vmatpush1.msra.mxu0 0.0
    %7618 = vmatprep.subr.mxu0 0.0
    %7619 = vmatpush1.msra.mxu0 0.0
    %7620 = vmatprep.subr.mxu0 0.0
    %7621 = vmatpush1.msra.mxu0 0.0
    %7622 = vmatprep.subr.mxu0 0.0
    %7623 = vmatpush1.msra.mxu0 0.0
    %7624 = vmatprep.subr.mxu0 0.0
    %7625 = vmatpush1.msra.mxu0 0.0
    %7626 = vmatprep.subr.mxu0 0.0
    %7627 = vmatpush1.msra.mxu0 0.0
    %7628 = vmatprep.subr.mxu0 0.0
    %7629 = vmatpush1.msra.mxu0 0.0
    %7630 = vmatprep.subr.mxu0 0.0
    %7631 = vmatpush1.msra.mxu0 0.0
    %7632 = vmatprep.subr.mxu0 0.0
    %7633 = vmatpush1.msra.mxu0 0.0
    %7634 = vmatprep.subr.mxu0 0.0
    %7635 = vmatpush1.msra.mxu0 0.0
    %7636 = vmatprep.subr.mxu0 0.0
    %7637 = vmatpush1.msra.mxu0 0.0
    %7638 = vmatprep.subr.mxu0 0.0
    %7639 = vmatpush1.msra.mxu0 0.0
    %7640 = vmatprep.subr.mxu0 0.0
    %7641 = vmatpush1.msra.mxu0 0.0
    %7642 = vmatprep.subr.mxu0 0.0
    %7643 = vmatpush1.msra.mxu0 %v7601
    %7644 = vmatprep.subr.mxu0 0.0
    %7645 = vmatpush1.msra.mxu0 %v7600
    %7646 = vmatprep.subr.mxu0 0.0
    %7647 = vmatpush2.msra.mxu0 0.0
    %7648 = vmatprep.subr.mxu0 0.0
    %7649 = vmatpush2.msra.mxu0 0.0
    %7650 = vmatprep.subr.mxu0 0.0
    %7651 = vmatpush2.msra.mxu0 0.0
    %7652 = vmatprep.subr.mxu0 0.0
    %7653 = vmatpush2.msra.mxu0 0.0
    %7654 = vmatprep.subr.mxu0 0.0
    %7655 = vmatpush2.msra.mxu0 0.0
    %7656 = vmatprep.subr.mxu0 0.0
    %7657 = vmatpush2.msra.mxu0 0.0
    %7658 = vmatprep.subr.mxu0 0.0
    %7659 = vmatpush2.msra.mxu0 0.0
    %7660 = vmatprep.subr.mxu0 0.0
    %7661 = vmatpush2.msra.mxu0 0.0
    %7662 = vmatprep.subr.mxu0 0.0
    %7663 = vmatpush2.msra.mxu0 0.0
    %7664 = vmatprep.subr.mxu0 0.0
    %7665 = vmatpush2.msra.mxu0 0.0
    %7666 = vmatprep.subr.mxu0 0.0
    %7667 = vmatpush2.msra.mxu0 0.0
    %7668 = vmatprep.subr.mxu0 0.0
    %7669 = vmatpush2.msra.mxu0 0.0
    %7670 = vmatprep.subr.mxu0 0.0
    %7671 = vmatpush2.msra.mxu0 0.0
    %7672 = vmatprep.subr.mxu0 0.0
    %7673 = vmatpush2.msra.mxu0 0.0
    %7674 = vmatprep.subr.mxu0 0.0
    %7675 = vmatpush2.msra.mxu0 0.0
    %7676 = vmatprep.subr.mxu0 0.0
    %7677 = vmatpush2.msra.mxu0 0.0
    %7678 = vmatprep.mubr.f32.mxu0 0.0
    %7679 = vmatmul.mubr.f32.gmra.mxu0 %v7602
    %v7680 = vpop.f32.mrf.mxu0
    %v7681 = vadd.f32 0.0, %v7680
    %v7682 = vpop.f32.mrf.mxu0
    %7683 = vmatprep.mubr.f32.mxu0 0.0
    %7684 = vmatmul.mubr.f32.gmra.mxu0 %v7604
    %v7685 = vpop.f32.mrf.mxu0
    %v7686 = vadd.f32 0.0, %v7685
    %v7687 = vpop.f32.mrf.mxu0
    %7688 = vmatprep.mubr.f32.mxu0 0.0
    %7689 = vmatmul.mubr.f32.gmra.mxu0 %v7606
    %v7690 = vpop.f32.mrf.mxu0
    %v7691 = vadd.f32 0.0, %v7690
    %v7692 = vpop.f32.mrf.mxu0
    %7693 = vmatprep.mubr.f32.mxu0 0.0
    %7694 = vmatmul.mubr.f32.gmra.mxu0 %v7608
    %v7695 = vpop.f32.mrf.mxu0
    %v7696 = vadd.f32 0.0, %v7695
    %v7697 = vpop.f32.mrf.mxu0
    %7698 = vmatprep.mubr.f32.mxu0 0.0
    %7699 = vmatmul.mubr.f32.gmra.mxu0 %v7610
    %v7700 = vpop.f32.mrf.mxu0
    %v7701 = vadd.f32 0.0, %v7700
    %v7702 = vpop.f32.mrf.mxu0
    %7703 = vmatprep.mubr.f32.mxu0 0.0
    %7704 = vmatmul.mubr.f32.gmra.mxu0 %v7612
    %v7705 = vpop.f32.mrf.mxu0
    %v7706 = vadd.f32 0.0, %v7705
    %v7707 = vpop.f32.mrf.mxu0
    %7708 = vdwg.mxu0
    %v7709 = vadd.f32 %v7593, %v7681
    %v7710 = vadd.f32 %v7594, %v7686
    %v7711 = vadd.f32 %v7595, %v7691
    %v7712 = vadd.f32 %v7596, %v7696
    %v7713 = vadd.f32 %v7597, %v7701
    %v7714 = vadd.f32 %v7598, %v7706
    %v7715 = vld [vmem:[%s57] sm:$0x1]
    %v7717 = vlaneseq
    %v7718 = vshrl.u32 %v7717, 7
    %v7719 = vsub.s32 0, %v7718
    %v7720 = vrot.slane %v7715, %v7719
    %v7722 = vadd.f32 %v7709, %v7720
    %v7723 = vadd.f32 %v7710, %v7720
    %v7724 = vadd.f32 %v7711, %v7720
    %v7725 = vadd.f32 %v7712, %v7720
    %v7726 = vadd.f32 %v7713, %v7720
    %v7727 = vadd.f32 %v7714, %v7720
    %v7728 = vmul.f32 %v7722, %v1509
    %v7729 = vmul.f32 %v7723, %v1514
    %v7730 = vmul.f32 %v7724, %v1519
    %v7731 = vmul.f32 %v7725, %v1524
    %v7732 = vmul.f32 %v7726, %v1529
    %v7733 = vmul.f32 %v7727, %v1534
    %v7734 = vsel %vm4628, %v7728, 0.0
    %v7735 = vsel %vm4628, %v7729, 0.0
    %v7736 = vadd.f32 %v7734, %v7735
    %v7737 = vsel %vm4628, %v7730, 0.0
    %v7738 = vadd.f32 %v7736, %v7737
    %v7739 = vsel %vm4628, %v7731, 0.0
    %v7740 = vadd.f32 %v7738, %v7739
    %v7741 = vsel %vm4628, %v7732, 0.0
    %v7742 = vadd.f32 %v7740, %v7741
    %v7743 = vsel %vm4628, %v7733, 0.0
    %v7744 = vadd.f32 %v7742, %v7743
    %v7745 = vrot.slane %v7744, 4
    %v7746 = vadd.f32 %v7744, %v7745
    %v7747 = vrot.slane %v7746, 2
    %v7748 = vadd.f32 %v7746, %v7747
    %v7749 = vrot.slane %v7748, 1
    %v7750 = vadd.f32 %v7748, %v7749
    %v7751 = vmul.f32 %v7750, 0.03125
    %v7752 = vsub.f32 %v7722, %v7751
    %v7753 = vsub.f32 %v7723, %v7751
    %v7754 = vsub.f32 %v7724, %v7751
    %v7755 = vsub.f32 %v7725, %v7751
    %v7756 = vsub.f32 %v7726, %v7751
    %v7757 = vsub.f32 %v7727, %v7751
    %v7758 = vmul.f32 %v7752, %v1509
    %v7759 = vmul.f32 %v7753, %v1514
    %v7760 = vmul.f32 %v7754, %v1519
    %v7761 = vmul.f32 %v7755, %v1524
    %v7762 = vmul.f32 %v7756, %v1529
    %v7763 = vmul.f32 %v7757, %v1534
    %v7764 = vmul.f32 %v7758, %v7758
    %v7765 = vmul.f32 %v7759, %v7759
    %v7766 = vmul.f32 %v7760, %v7760
    %v7767 = vmul.f32 %v7761, %v7761
    %v7768 = vmul.f32 %v7762, %v7762
    %v7769 = vmul.f32 %v7763, %v7763
    %v7770 = vsel %vm4628, %v7764, 0.0
    %v7771 = vsel %vm4628, %v7765, 0.0
    %v7772 = vadd.f32 %v7770, %v7771
    %v7773 = vsel %vm4628, %v7766, 0.0
    %v7774 = vadd.f32 %v7772, %v7773
    %v7775 = vsel %vm4628, %v7767, 0.0
    %v7776 = vadd.f32 %v7774, %v7775
    %v7777 = vsel %vm4628, %v7768, 0.0
    %v7778 = vadd.f32 %v7776, %v7777
    %v7779 = vsel %vm4628, %v7769, 0.0
    %v7780 = vadd.f32 %v7778, %v7779
    %v7781 = vrot.slane %v7780, 4
    %v7782 = vadd.f32 %v7780, %v7781
    %v7783 = vrot.slane %v7782, 2
    %v7784 = vadd.f32 %v7782, %v7783
    %v7785 = vrot.slane %v7784, 1
    %v7786 = vadd.f32 %v7784, %v7785
    %v7787 = vmul.f32 %v7786, 0.03125
    %v7788 = vld [vmem:[%s59] sm:$0x1]
    %v7789 = vadd.f32 %v7787, 1e-05
    %v7790 = vrsqrt.pop %v7789
    %v7791 = vmul.f32 %v7788, %v7790
    %v7792 = vld [vmem:[%s61] sm:$0x1]
    %v7793 = vmul.f32 %v7751, %v7791
    %v7794 = vsub.f32 %v7792, %v7793
    %v7796 = vlaneseq
    %v7797 = vshrl.u32 %v7796, 7
    %v7798 = vsub.s32 0, %v7797
    %v7799 = vrot.slane %v7791, %v7798
    %v7801 = vmul.f32 %v7722, %v7799
    %v7802 = vmul.f32 %v7723, %v7799
    %v7803 = vmul.f32 %v7724, %v7799
    %v7804 = vmul.f32 %v7725, %v7799
    %v7805 = vmul.f32 %v7726, %v7799
    %v7806 = vmul.f32 %v7727, %v7799
    %v7808 = vlaneseq
    %v7809 = vshrl.u32 %v7808, 7
    %v7810 = vsub.s32 0, %v7809
    %v7811 = vrot.slane %v7794, %v7810
    %v7813 = vadd.f32 %v7801, %v7811
    %v7814 = vadd.f32 %v7802, %v7811
    %v7815 = vadd.f32 %v7803, %v7811
    %v7816 = vadd.f32 %v7804, %v7811
    %v7817 = vadd.f32 %v7805, %v7811
    %v7818 = vadd.f32 %v7806, %v7811
    %v7819 = vmul.f32 %v7813, %v1509
    %v7820 = vmul.f32 %v7814, %v1514
    %v7821 = vmul.f32 %v7815, %v1519
    %v7822 = vmul.f32 %v7816, %v1524
    %v7823 = vmul.f32 %v7817, %v1529
    %v7824 = vmul.f32 %v7818, %v1534
    %v7825 = vmax.f32 %v7819, 0.0
    %v7826 = vmax.f32 %v7820, 0.0
    %v7827 = vmax.f32 %v7821, 0.0
    %v7828 = vmax.f32 %v7822, 0.0
    %v7829 = vmax.f32 %v7823, 0.0
    %v7830 = vmax.f32 %v7824, 0.0
    %v7837 = vrot.slane %v7825, 4
    %v7838 = vrot.slane %v7826, 4
    %v7839 = vsel %vm446, %v7837, %v7838
    %v7840 = vrot.slane %v7827, 4
    %v7841 = vsel %vm446, %v7838, %v7840
    %v7842 = vrot.slane %v7828, 4
    %v7843 = vsel %vm446, %v7840, %v7842
    %v7844 = vrot.slane %v7829, 4
    %v7845 = vsel %vm446, %v7842, %v7844
    %v7846 = vrot.slane %v7830, 4
    %v7847 = vsel %vm446, %v7844, %v7846
    %v7850 = vsel %vm446, 0.0, %v7837
    %v7851 = vsel %vm446, %v7846, 0.0
    %v7852 = vld [vmem:[#allocation32] sm:$0xff]
    %v7853 = vld [vmem:[#allocation32 + $0x8] sm:$0xff]
    %s7854 = scalar_lea.vmem [#allocation32], 16
    %v7855 = vld [vmem:[%s7854] sm:$0xff]
    %v7856 = vld [vmem:[%s7854 + $0x8] sm:$0xff]
    %v7859 = vrot.slane %v7850, 3
    %v7860 = vrot.slane %v7839, 3
    %v7861 = vsel %vm718, %v7859, %v7860
    %v7862 = vrot.slane %v7841, 3
    %v7863 = vsel %vm718, %v7860, %v7862
    %v7864 = vrot.slane %v7843, 3
    %v7865 = vsel %vm718, %v7862, %v7864
    %v7866 = vrot.slane %v7845, 3
    %v7867 = vsel %vm718, %v7864, %v7866
    %v7868 = vrot.slane %v7847, 3
    %v7869 = vsel %vm718, %v7866, %v7868
    %v7870 = vrot.slane %v7851, 3
    %v7871 = vsel %vm718, %v7868, %v7870
    %v7872 = vsel %vm1542, %v7861, 0
    %v7874 = vsel %vm1542, %v7863, 0
    %v7876 = vsel %vm1542, %v7865, 0
    %v7878 = vsel %vm1542, %v7867, 0
    %v7880 = vsel %vm1542, %v7869, 0
    %v7882 = vsel %vm1542, %v7871, 0
    %7884 = vmatprep.subr.mxu0 0.0
    %7885 = vmatpush1.msra.mxu0 0.0
    %7886 = vmatprep.subr.mxu0 0.0
    %7887 = vmatpush1.msra.mxu0 0.0
    %7888 = vmatprep.subr.mxu0 0.0
    %7889 = vmatpush1.msra.mxu0 0.0
    %7890 = vmatprep.subr.mxu0 0.0
    %7891 = vmatpush1.msra.mxu0 0.0
    %7892 = vmatprep.subr.mxu0 0.0
    %7893 = vmatpush1.msra.mxu0 0.0
    %7894 = vmatprep.subr.mxu0 0.0
    %7895 = vmatpush1.msra.mxu0 0.0
    %7896 = vmatprep.subr.mxu0 0.0
    %7897 = vmatpush1.msra.mxu0 0.0
    %7898 = vmatprep.subr.mxu0 0.0
    %7899 = vmatpush1.msra.mxu0 0.0
    %7900 = vmatprep.subr.mxu0 0.0
    %7901 = vmatpush1.msra.mxu0 0.0
    %7902 = vmatprep.subr.mxu0 0.0
    %7903 = vmatpush1.msra.mxu0 0.0
    %7904 = vmatprep.subr.mxu0 0.0
    %7905 = vmatpush1.msra.mxu0 0.0
    %7906 = vmatprep.subr.mxu0 0.0
    %7907 = vmatpush1.msra.mxu0 0.0
    %7908 = vmatprep.subr.mxu0 0.0
    %7909 = vmatpush1.msra.mxu0 0.0
    %7910 = vmatprep.subr.mxu0 0.0
    %7911 = vmatpush1.msra.mxu0 0.0
    %7912 = vmatprep.subr.mxu0 0.0
    %7913 = vmatpush1.msra.mxu0 %v7856
    %7914 = vmatprep.subr.mxu0 0.0
    %7915 = vmatpush1.msra.mxu0 %v7855
    %7916 = vmatprep.subr.mxu0 0.0
    %7917 = vmatpush2.msra.mxu0 0.0
    %7918 = vmatprep.subr.mxu0 0.0
    %7919 = vmatpush2.msra.mxu0 0.0
    %7920 = vmatprep.subr.mxu0 0.0
    %7921 = vmatpush2.msra.mxu0 0.0
    %7922 = vmatprep.subr.mxu0 0.0
    %7923 = vmatpush2.msra.mxu0 0.0
    %7924 = vmatprep.subr.mxu0 0.0
    %7925 = vmatpush2.msra.mxu0 0.0
    %7926 = vmatprep.subr.mxu0 0.0
    %7927 = vmatpush2.msra.mxu0 0.0
    %7928 = vmatprep.subr.mxu0 0.0
    %7929 = vmatpush2.msra.mxu0 0.0
    %7930 = vmatprep.subr.mxu0 0.0
    %7931 = vmatpush2.msra.mxu0 0.0
    %7932 = vmatprep.subr.mxu0 0.0
    %7933 = vmatpush2.msra.mxu0 0.0
    %7934 = vmatprep.subr.mxu0 0.0
    %7935 = vmatpush2.msra.mxu0 0.0
    %7936 = vmatprep.subr.mxu0 0.0
    %7937 = vmatpush2.msra.mxu0 0.0
    %7938 = vmatprep.subr.mxu0 0.0
    %7939 = vmatpush2.msra.mxu0 0.0
    %7940 = vmatprep.subr.mxu0 0.0
    %7941 = vmatpush2.msra.mxu0 0.0
    %7942 = vmatprep.subr.mxu0 0.0
    %7943 = vmatpush2.msra.mxu0 0.0
    %7944 = vmatprep.subr.mxu0 0.0
    %7945 = vmatpush2.msra.mxu0 0.0
    %7946 = vmatprep.subr.mxu0 0.0
    %7947 = vmatpush2.msra.mxu0 0.0
    %7948 = vmatprep.mubr.f32.mxu0 0.0
    %7949 = vmatmul.mubr.f32.gmra.mxu0 %v7872
    %v7950 = vpop.f32.mrf.mxu0
    %v7951 = vadd.f32 0.0, %v7950
    %v7952 = vpop.f32.mrf.mxu0
    %7953 = vmatprep.mubr.f32.mxu0 0.0
    %7954 = vmatmul.mubr.f32.gmra.mxu0 %v7874
    %v7955 = vpop.f32.mrf.mxu0
    %v7956 = vadd.f32 0.0, %v7955
    %v7957 = vpop.f32.mrf.mxu0
    %7958 = vmatprep.mubr.f32.mxu0 0.0
    %7959 = vmatmul.mubr.f32.gmra.mxu0 %v7876
    %v7960 = vpop.f32.mrf.mxu0
    %v7961 = vadd.f32 0.0, %v7960
    %v7962 = vpop.f32.mrf.mxu0
    %7963 = vmatprep.mubr.f32.mxu0 0.0
    %7964 = vmatmul.mubr.f32.gmra.mxu0 %v7878
    %v7965 = vpop.f32.mrf.mxu0
    %v7966 = vadd.f32 0.0, %v7965
    %v7967 = vpop.f32.mrf.mxu0
    %7968 = vmatprep.mubr.f32.mxu0 0.0
    %7969 = vmatmul.mubr.f32.gmra.mxu0 %v7880
    %v7970 = vpop.f32.mrf.mxu0
    %v7971 = vadd.f32 0.0, %v7970
    %v7972 = vpop.f32.mrf.mxu0
    %7973 = vmatprep.mubr.f32.mxu0 0.0
    %7974 = vmatmul.mubr.f32.gmra.mxu0 %v7882
    %v7975 = vpop.f32.mrf.mxu0
    %v7976 = vadd.f32 0.0, %v7975
    %v7977 = vpop.f32.mrf.mxu0
    %7978 = vdwg.mxu0
    %v7979 = vrot.slane %v7850, 2
    %v7980 = vrot.slane %v7839, 2
    %v7981 = vsel %vm467, %v7979, %v7980
    %v7982 = vrot.slane %v7841, 2
    %v7983 = vsel %vm467, %v7980, %v7982
    %v7984 = vrot.slane %v7843, 2
    %v7985 = vsel %vm467, %v7982, %v7984
    %v7986 = vrot.slane %v7845, 2
    %v7987 = vsel %vm467, %v7984, %v7986
    %v7988 = vrot.slane %v7847, 2
    %v7989 = vsel %vm467, %v7986, %v7988
    %v7990 = vrot.slane %v7851, 2
    %v7991 = vsel %vm467, %v7988, %v7990
    %v7992 = vsel %vm1542, %v7981, 0
    %v7994 = vsel %vm1542, %v7983, 0
    %v7996 = vsel %vm1542, %v7985, 0
    %v7998 = vsel %vm1542, %v7987, 0
    %v8000 = vsel %vm1542, %v7989, 0
    %v8002 = vsel %vm1542, %v7991, 0
    %8004 = vmatprep.subr.mxu0 0.0
    %8005 = vmatpush1.msra.mxu0 0.0
    %8006 = vmatprep.subr.mxu0 0.0
    %8007 = vmatpush1.msra.mxu0 0.0
    %8008 = vmatprep.subr.mxu0 0.0
    %8009 = vmatpush1.msra.mxu0 0.0
    %8010 = vmatprep.subr.mxu0 0.0
    %8011 = vmatpush1.msra.mxu0 0.0
    %8012 = vmatprep.subr.mxu0 0.0
    %8013 = vmatpush1.msra.mxu0 0.0
    %8014 = vmatprep.subr.mxu0 0.0
    %8015 = vmatpush1.msra.mxu0 0.0
    %8016 = vmatprep.subr.mxu0 0.0
    %8017 = vmatpush1.msra.mxu0 0.0
    %8018 = vmatprep.subr.mxu0 0.0
    %8019 = vmatpush1.msra.mxu0 0.0
    %8020 = vmatprep.subr.mxu0 0.0
    %8021 = vmatpush1.msra.mxu0 0.0
    %8022 = vmatprep.subr.mxu0 0.0
    %8023 = vmatpush1.msra.mxu0 0.0
    %8024 = vmatprep.subr.mxu0 0.0
    %8025 = vmatpush1.msra.mxu0 0.0
    %8026 = vmatprep.subr.mxu0 0.0
    %8027 = vmatpush1.msra.mxu0 0.0
    %8028 = vmatprep.subr.mxu0 0.0
    %8029 = vmatpush1.msra.mxu0 0.0
    %8030 = vmatprep.subr.mxu0 0.0
    %8031 = vmatpush1.msra.mxu0 0.0
    %8032 = vmatprep.subr.mxu0 0.0
    %8033 = vmatpush1.msra.mxu0 %v7853
    %8034 = vmatprep.subr.mxu0 0.0
    %8035 = vmatpush1.msra.mxu0 %v7852
    %8036 = vmatprep.subr.mxu0 0.0
    %8037 = vmatpush2.msra.mxu0 0.0
    %8038 = vmatprep.subr.mxu0 0.0
    %8039 = vmatpush2.msra.mxu0 0.0
    %8040 = vmatprep.subr.mxu0 0.0
    %8041 = vmatpush2.msra.mxu0 0.0
    %8042 = vmatprep.subr.mxu0 0.0
    %8043 = vmatpush2.msra.mxu0 0.0
    %8044 = vmatprep.subr.mxu0 0.0
    %8045 = vmatpush2.msra.mxu0 0.0
    %8046 = vmatprep.subr.mxu0 0.0
    %8047 = vmatpush2.msra.mxu0 0.0
    %8048 = vmatprep.subr.mxu0 0.0
    %8049 = vmatpush2.msra.mxu0 0.0
    %8050 = vmatprep.subr.mxu0 0.0
    %8051 = vmatpush2.msra.mxu0 0.0
    %8052 = vmatprep.subr.mxu0 0.0
    %8053 = vmatpush2.msra.mxu0 0.0
    %8054 = vmatprep.subr.mxu0 0.0
    %8055 = vmatpush2.msra.mxu0 0.0
    %8056 = vmatprep.subr.mxu0 0.0
    %8057 = vmatpush2.msra.mxu0 0.0
    %8058 = vmatprep.subr.mxu0 0.0
    %8059 = vmatpush2.msra.mxu0 0.0
    %8060 = vmatprep.subr.mxu0 0.0
    %8061 = vmatpush2.msra.mxu0 0.0
    %8062 = vmatprep.subr.mxu0 0.0
    %8063 = vmatpush2.msra.mxu0 0.0
    %8064 = vmatprep.subr.mxu0 0.0
    %8065 = vmatpush2.msra.mxu0 0.0
    %8066 = vmatprep.subr.mxu0 0.0
    %8067 = vmatpush2.msra.mxu0 0.0
    %8068 = vmatprep.mubr.f32.mxu0 0.0
    %8069 = vmatmul.mubr.f32.gmra.mxu0 %v7992
    %v8070 = vpop.f32.mrf.mxu0
    %v8071 = vadd.f32 %v7951, %v8070
    %v8072 = vpop.f32.mrf.mxu0
    %8073 = vmatprep.mubr.f32.mxu0 0.0
    %8074 = vmatmul.mubr.f32.gmra.mxu0 %v7994
    %v8075 = vpop.f32.mrf.mxu0
    %v8076 = vadd.f32 %v7956, %v8075
    %v8077 = vpop.f32.mrf.mxu0
    %8078 = vmatprep.mubr.f32.mxu0 0.0
    %8079 = vmatmul.mubr.f32.gmra.mxu0 %v7996
    %v8080 = vpop.f32.mrf.mxu0
    %v8081 = vadd.f32 %v7961, %v8080
    %v8082 = vpop.f32.mrf.mxu0
    %8083 = vmatprep.mubr.f32.mxu0 0.0
    %8084 = vmatmul.mubr.f32.gmra.mxu0 %v7998
    %v8085 = vpop.f32.mrf.mxu0
    %v8086 = vadd.f32 %v7966, %v8085
    %v8087 = vpop.f32.mrf.mxu0
    %8088 = vmatprep.mubr.f32.mxu0 0.0
    %8089 = vmatmul.mubr.f32.gmra.mxu0 %v8000
    %v8090 = vpop.f32.mrf.mxu0
    %v8091 = vadd.f32 %v7971, %v8090
    %v8092 = vpop.f32.mrf.mxu0
    %8093 = vmatprep.mubr.f32.mxu0 0.0
    %8094 = vmatmul.mubr.f32.gmra.mxu0 %v8002
    %v8095 = vpop.f32.mrf.mxu0
    %v8096 = vadd.f32 %v7976, %v8095
    %v8097 = vpop.f32.mrf.mxu0
    %8098 = vdwg.mxu0
    %s8099 = scalar_lea.vmem [#allocation32], 32
    %v8100 = vld [vmem:[%s8099] sm:$0xff]
    %v8101 = vld [vmem:[%s8099 + $0x8] sm:$0xff]
    %v8102 = vrot.slane %v7850, 4
    %v8103 = vrot.slane %v7839, 4
    %v8104 = vsel %vm446, %v8102, %v8103
    %v8105 = vrot.slane %v7841, 4
    %v8106 = vsel %vm446, %v8103, %v8105
    %v8107 = vrot.slane %v7843, 4
    %v8108 = vsel %vm446, %v8105, %v8107
    %v8109 = vrot.slane %v7845, 4
    %v8110 = vsel %vm446, %v8107, %v8109
    %v8111 = vrot.slane %v7847, 4
    %v8112 = vsel %vm446, %v8109, %v8111
    %v8113 = vrot.slane %v7851, 4
    %v8114 = vsel %vm446, %v8111, %v8113
    %v8115 = vsel %vm1542, %v8104, 0
    %v8117 = vsel %vm1542, %v8106, 0
    %v8119 = vsel %vm1542, %v8108, 0
    %v8121 = vsel %vm1542, %v8110, 0
    %v8123 = vsel %vm1542, %v8112, 0
    %v8125 = vsel %vm1542, %v8114, 0
    %8127 = vmatprep.subr.mxu0 0.0
    %8128 = vmatpush1.msra.mxu0 0.0
    %8129 = vmatprep.subr.mxu0 0.0
    %8130 = vmatpush1.msra.mxu0 0.0
    %8131 = vmatprep.subr.mxu0 0.0
    %8132 = vmatpush1.msra.mxu0 0.0
    %8133 = vmatprep.subr.mxu0 0.0
    %8134 = vmatpush1.msra.mxu0 0.0
    %8135 = vmatprep.subr.mxu0 0.0
    %8136 = vmatpush1.msra.mxu0 0.0
    %8137 = vmatprep.subr.mxu0 0.0
    %8138 = vmatpush1.msra.mxu0 0.0
    %8139 = vmatprep.subr.mxu0 0.0
    %8140 = vmatpush1.msra.mxu0 0.0
    %8141 = vmatprep.subr.mxu0 0.0
    %8142 = vmatpush1.msra.mxu0 0.0
    %8143 = vmatprep.subr.mxu0 0.0
    %8144 = vmatpush1.msra.mxu0 0.0
    %8145 = vmatprep.subr.mxu0 0.0
    %8146 = vmatpush1.msra.mxu0 0.0
    %8147 = vmatprep.subr.mxu0 0.0
    %8148 = vmatpush1.msra.mxu0 0.0
    %8149 = vmatprep.subr.mxu0 0.0
    %8150 = vmatpush1.msra.mxu0 0.0
    %8151 = vmatprep.subr.mxu0 0.0
    %8152 = vmatpush1.msra.mxu0 0.0
    %8153 = vmatprep.subr.mxu0 0.0
    %8154 = vmatpush1.msra.mxu0 0.0
    %8155 = vmatprep.subr.mxu0 0.0
    %8156 = vmatpush1.msra.mxu0 %v8101
    %8157 = vmatprep.subr.mxu0 0.0
    %8158 = vmatpush1.msra.mxu0 %v8100
    %8159 = vmatprep.subr.mxu0 0.0
    %8160 = vmatpush2.msra.mxu0 0.0
    %8161 = vmatprep.subr.mxu0 0.0
    %8162 = vmatpush2.msra.mxu0 0.0
    %8163 = vmatprep.subr.mxu0 0.0
    %8164 = vmatpush2.msra.mxu0 0.0
    %8165 = vmatprep.subr.mxu0 0.0
    %8166 = vmatpush2.msra.mxu0 0.0
    %8167 = vmatprep.subr.mxu0 0.0
    %8168 = vmatpush2.msra.mxu0 0.0
    %8169 = vmatprep.subr.mxu0 0.0
    %8170 = vmatpush2.msra.mxu0 0.0
    %8171 = vmatprep.subr.mxu0 0.0
    %8172 = vmatpush2.msra.mxu0 0.0
    %8173 = vmatprep.subr.mxu0 0.0
    %8174 = vmatpush2.msra.mxu0 0.0
    %8175 = vmatprep.subr.mxu0 0.0
    %8176 = vmatpush2.msra.mxu0 0.0
    %8177 = vmatprep.subr.mxu0 0.0
    %8178 = vmatpush2.msra.mxu0 0.0
    %8179 = vmatprep.subr.mxu0 0.0
    %8180 = vmatpush2.msra.mxu0 0.0
    %8181 = vmatprep.subr.mxu0 0.0
    %8182 = vmatpush2.msra.mxu0 0.0
    %8183 = vmatprep.subr.mxu0 0.0
    %8184 = vmatpush2.msra.mxu0 0.0
    %8185 = vmatprep.subr.mxu0 0.0
    %8186 = vmatpush2.msra.mxu0 0.0
    %8187 = vmatprep.subr.mxu0 0.0
    %8188 = vmatpush2.msra.mxu0 0.0
    %8189 = vmatprep.subr.mxu0 0.0
    %8190 = vmatpush2.msra.mxu0 0.0
    %8191 = vmatprep.mubr.f32.mxu0 0.0
    %8192 = vmatmul.mubr.f32.gmra.mxu0 %v8115
    %v8193 = vpop.f32.mrf.mxu0
    %v8194 = vadd.f32 0.0, %v8193
    %v8195 = vpop.f32.mrf.mxu0
    %8196 = vmatprep.mubr.f32.mxu0 0.0
    %8197 = vmatmul.mubr.f32.gmra.mxu0 %v8117
    %v8198 = vpop.f32.mrf.mxu0
    %v8199 = vadd.f32 0.0, %v8198
    %v8200 = vpop.f32.mrf.mxu0
    %8201 = vmatprep.mubr.f32.mxu0 0.0
    %8202 = vmatmul.mubr.f32.gmra.mxu0 %v8119
    %v8203 = vpop.f32.mrf.mxu0
    %v8204 = vadd.f32 0.0, %v8203
    %v8205 = vpop.f32.mrf.mxu0
    %8206 = vmatprep.mubr.f32.mxu0 0.0
    %8207 = vmatmul.mubr.f32.gmra.mxu0 %v8121
    %v8208 = vpop.f32.mrf.mxu0
    %v8209 = vadd.f32 0.0, %v8208
    %v8210 = vpop.f32.mrf.mxu0
    %8211 = vmatprep.mubr.f32.mxu0 0.0
    %8212 = vmatmul.mubr.f32.gmra.mxu0 %v8123
    %v8213 = vpop.f32.mrf.mxu0
    %v8214 = vadd.f32 0.0, %v8213
    %v8215 = vpop.f32.mrf.mxu0
    %8216 = vmatprep.mubr.f32.mxu0 0.0
    %8217 = vmatmul.mubr.f32.gmra.mxu0 %v8125
    %v8218 = vpop.f32.mrf.mxu0
    %v8219 = vadd.f32 0.0, %v8218
    %v8220 = vpop.f32.mrf.mxu0
    %8221 = vdwg.mxu0
    %v8222 = vadd.f32 %v8071, %v8194
    %v8223 = vadd.f32 %v8076, %v8199
    %v8224 = vadd.f32 %v8081, %v8204
    %v8225 = vadd.f32 %v8086, %v8209
    %v8226 = vadd.f32 %v8091, %v8214
    %v8227 = vadd.f32 %v8096, %v8219
    %s8228 = scalar_lea.vmem [#allocation32], 48
    %v8229 = vld [vmem:[%s8228] sm:$0xff]
    %v8230 = vld [vmem:[%s8228 + $0x8] sm:$0xff]
    %v8231 = vrot.slane %v7850, 5
    %v8232 = vrot.slane %v7839, 5
    %v8233 = vsel %vm981, %v8231, %v8232
    %v8234 = vrot.slane %v7841, 5
    %v8235 = vsel %vm981, %v8232, %v8234
    %v8236 = vrot.slane %v7843, 5
    %v8237 = vsel %vm981, %v8234, %v8236
    %v8238 = vrot.slane %v7845, 5
    %v8239 = vsel %vm981, %v8236, %v8238
    %v8240 = vrot.slane %v7847, 5
    %v8241 = vsel %vm981, %v8238, %v8240
    %v8242 = vrot.slane %v7851, 5
    %v8243 = vsel %vm981, %v8240, %v8242
    %v8244 = vsel %vm1542, %v8233, 0
    %v8246 = vsel %vm1542, %v8235, 0
    %v8248 = vsel %vm1542, %v8237, 0
    %v8250 = vsel %vm1542, %v8239, 0
    %v8252 = vsel %vm1542, %v8241, 0
    %v8254 = vsel %vm1542, %v8243, 0
    %8256 = vmatprep.subr.mxu0 0.0
    %8257 = vmatpush1.msra.mxu0 0.0
    %8258 = vmatprep.subr.mxu0 0.0
    %8259 = vmatpush1.msra.mxu0 0.0
    %8260 = vmatprep.subr.mxu0 0.0
    %8261 = vmatpush1.msra.mxu0 0.0
    %8262 = vmatprep.subr.mxu0 0.0
    %8263 = vmatpush1.msra.mxu0 0.0
    %8264 = vmatprep.subr.mxu0 0.0
    %8265 = vmatpush1.msra.mxu0 0.0
    %8266 = vmatprep.subr.mxu0 0.0
    %8267 = vmatpush1.msra.mxu0 0.0
    %8268 = vmatprep.subr.mxu0 0.0
    %8269 = vmatpush1.msra.mxu0 0.0
    %8270 = vmatprep.subr.mxu0 0.0
    %8271 = vmatpush1.msra.mxu0 0.0
    %8272 = vmatprep.subr.mxu0 0.0
    %8273 = vmatpush1.msra.mxu0 0.0
    %8274 = vmatprep.subr.mxu0 0.0
    %8275 = vmatpush1.msra.mxu0 0.0
    %8276 = vmatprep.subr.mxu0 0.0
    %8277 = vmatpush1.msra.mxu0 0.0
    %8278 = vmatprep.subr.mxu0 0.0
    %8279 = vmatpush1.msra.mxu0 0.0
    %8280 = vmatprep.subr.mxu0 0.0
    %8281 = vmatpush1.msra.mxu0 0.0
    %8282 = vmatprep.subr.mxu0 0.0
    %8283 = vmatpush1.msra.mxu0 0.0
    %8284 = vmatprep.subr.mxu0 0.0
    %8285 = vmatpush1.msra.mxu0 %v8230
    %8286 = vmatprep.subr.mxu0 0.0
    %8287 = vmatpush1.msra.mxu0 %v8229
    %8288 = vmatprep.subr.mxu0 0.0
    %8289 = vmatpush2.msra.mxu0 0.0
    %8290 = vmatprep.subr.mxu0 0.0
    %8291 = vmatpush2.msra.mxu0 0.0
    %8292 = vmatprep.subr.mxu0 0.0
    %8293 = vmatpush2.msra.mxu0 0.0
    %8294 = vmatprep.subr.mxu0 0.0
    %8295 = vmatpush2.msra.mxu0 0.0
    %8296 = vmatprep.subr.mxu0 0.0
    %8297 = vmatpush2.msra.mxu0 0.0
    %8298 = vmatprep.subr.mxu0 0.0
    %8299 = vmatpush2.msra.mxu0 0.0
    %8300 = vmatprep.subr.mxu0 0.0
    %8301 = vmatpush2.msra.mxu0 0.0
    %8302 = vmatprep.subr.mxu0 0.0
    %8303 = vmatpush2.msra.mxu0 0.0
    %8304 = vmatprep.subr.mxu0 0.0
    %8305 = vmatpush2.msra.mxu0 0.0
    %8306 = vmatprep.subr.mxu0 0.0
    %8307 = vmatpush2.msra.mxu0 0.0
    %8308 = vmatprep.subr.mxu0 0.0
    %8309 = vmatpush2.msra.mxu0 0.0
    %8310 = vmatprep.subr.mxu0 0.0
    %8311 = vmatpush2.msra.mxu0 0.0
    %8312 = vmatprep.subr.mxu0 0.0
    %8313 = vmatpush2.msra.mxu0 0.0
    %8314 = vmatprep.subr.mxu0 0.0
    %8315 = vmatpush2.msra.mxu0 0.0
    %8316 = vmatprep.subr.mxu0 0.0
    %8317 = vmatpush2.msra.mxu0 0.0
    %8318 = vmatprep.subr.mxu0 0.0
    %8319 = vmatpush2.msra.mxu0 0.0
    %8320 = vmatprep.mubr.f32.mxu0 0.0
    %8321 = vmatmul.mubr.f32.gmra.mxu0 %v8244
    %v8322 = vpop.f32.mrf.mxu0
    %v8323 = vadd.f32 0.0, %v8322
    %v8324 = vpop.f32.mrf.mxu0
    %8325 = vmatprep.mubr.f32.mxu0 0.0
    %8326 = vmatmul.mubr.f32.gmra.mxu0 %v8246
    %v8327 = vpop.f32.mrf.mxu0
    %v8328 = vadd.f32 0.0, %v8327
    %v8329 = vpop.f32.mrf.mxu0
    %8330 = vmatprep.mubr.f32.mxu0 0.0
    %8331 = vmatmul.mubr.f32.gmra.mxu0 %v8248
    %v8332 = vpop.f32.mrf.mxu0
    %v8333 = vadd.f32 0.0, %v8332
    %v8334 = vpop.f32.mrf.mxu0
    %8335 = vmatprep.mubr.f32.mxu0 0.0
    %8336 = vmatmul.mubr.f32.gmra.mxu0 %v8250
    %v8337 = vpop.f32.mrf.mxu0
    %v8338 = vadd.f32 0.0, %v8337
    %v8339 = vpop.f32.mrf.mxu0
    %8340 = vmatprep.mubr.f32.mxu0 0.0
    %8341 = vmatmul.mubr.f32.gmra.mxu0 %v8252
    %v8342 = vpop.f32.mrf.mxu0
    %v8343 = vadd.f32 0.0, %v8342
    %v8344 = vpop.f32.mrf.mxu0
    %8345 = vmatprep.mubr.f32.mxu0 0.0
    %8346 = vmatmul.mubr.f32.gmra.mxu0 %v8254
    %v8347 = vpop.f32.mrf.mxu0
    %v8348 = vadd.f32 0.0, %v8347
    %v8349 = vpop.f32.mrf.mxu0
    %8350 = vdwg.mxu0
    %v8351 = vadd.f32 %v8222, %v8323
    %v8352 = vadd.f32 %v8223, %v8328
    %v8353 = vadd.f32 %v8224, %v8333
    %v8354 = vadd.f32 %v8225, %v8338
    %v8355 = vadd.f32 %v8226, %v8343
    %v8356 = vadd.f32 %v8227, %v8348
    %s8357 = scalar_lea.vmem [#allocation32], 64
    %v8358 = vld [vmem:[%s8357] sm:$0xff]
    %v8359 = vld [vmem:[%s8357 + $0x8] sm:$0xff]
    %v8360 = vrot.slane %v7850, 6
    %v8361 = vrot.slane %v7839, 6
    %v8362 = vsel %vm1113, %v8360, %v8361
    %v8363 = vrot.slane %v7841, 6
    %v8364 = vsel %vm1113, %v8361, %v8363
    %v8365 = vrot.slane %v7843, 6
    %v8366 = vsel %vm1113, %v8363, %v8365
    %v8367 = vrot.slane %v7845, 6
    %v8368 = vsel %vm1113, %v8365, %v8367
    %v8369 = vrot.slane %v7847, 6
    %v8370 = vsel %vm1113, %v8367, %v8369
    %v8371 = vrot.slane %v7851, 6
    %v8372 = vsel %vm1113, %v8369, %v8371
    %v8373 = vsel %vm1542, %v8362, 0
    %v8375 = vsel %vm1542, %v8364, 0
    %v8377 = vsel %vm1542, %v8366, 0
    %v8379 = vsel %vm1542, %v8368, 0
    %v8381 = vsel %vm1542, %v8370, 0
    %v8383 = vsel %vm1542, %v8372, 0
    %8385 = vmatprep.subr.mxu0 0.0
    %8386 = vmatpush1.msra.mxu0 0.0
    %8387 = vmatprep.subr.mxu0 0.0
    %8388 = vmatpush1.msra.mxu0 0.0
    %8389 = vmatprep.subr.mxu0 0.0
    %8390 = vmatpush1.msra.mxu0 0.0
    %8391 = vmatprep.subr.mxu0 0.0
    %8392 = vmatpush1.msra.mxu0 0.0
    %8393 = vmatprep.subr.mxu0 0.0
    %8394 = vmatpush1.msra.mxu0 0.0
    %8395 = vmatprep.subr.mxu0 0.0
    %8396 = vmatpush1.msra.mxu0 0.0
    %8397 = vmatprep.subr.mxu0 0.0
    %8398 = vmatpush1.msra.mxu0 0.0
    %8399 = vmatprep.subr.mxu0 0.0
    %8400 = vmatpush1.msra.mxu0 0.0
    %8401 = vmatprep.subr.mxu0 0.0
    %8402 = vmatpush1.msra.mxu0 0.0
    %8403 = vmatprep.subr.mxu0 0.0
    %8404 = vmatpush1.msra.mxu0 0.0
    %8405 = vmatprep.subr.mxu0 0.0
    %8406 = vmatpush1.msra.mxu0 0.0
    %8407 = vmatprep.subr.mxu0 0.0
    %8408 = vmatpush1.msra.mxu0 0.0
    %8409 = vmatprep.subr.mxu0 0.0
    %8410 = vmatpush1.msra.mxu0 0.0
    %8411 = vmatprep.subr.mxu0 0.0
    %8412 = vmatpush1.msra.mxu0 0.0
    %8413 = vmatprep.subr.mxu0 0.0
    %8414 = vmatpush1.msra.mxu0 %v8359
    %8415 = vmatprep.subr.mxu0 0.0
    %8416 = vmatpush1.msra.mxu0 %v8358
    %8417 = vmatprep.subr.mxu0 0.0
    %8418 = vmatpush2.msra.mxu0 0.0
    %8419 = vmatprep.subr.mxu0 0.0
    %8420 = vmatpush2.msra.mxu0 0.0
    %8421 = vmatprep.subr.mxu0 0.0
    %8422 = vmatpush2.msra.mxu0 0.0
    %8423 = vmatprep.subr.mxu0 0.0
    %8424 = vmatpush2.msra.mxu0 0.0
    %8425 = vmatprep.subr.mxu0 0.0
    %8426 = vmatpush2.msra.mxu0 0.0
    %8427 = vmatprep.subr.mxu0 0.0
    %8428 = vmatpush2.msra.mxu0 0.0
    %8429 = vmatprep.subr.mxu0 0.0
    %8430 = vmatpush2.msra.mxu0 0.0
    %8431 = vmatprep.subr.mxu0 0.0
    %8432 = vmatpush2.msra.mxu0 0.0
    %8433 = vmatprep.subr.mxu0 0.0
    %8434 = vmatpush2.msra.mxu0 0.0
    %8435 = vmatprep.subr.mxu0 0.0
    %8436 = vmatpush2.msra.mxu0 0.0
    %8437 = vmatprep.subr.mxu0 0.0
    %8438 = vmatpush2.msra.mxu0 0.0
    %8439 = vmatprep.subr.mxu0 0.0
    %8440 = vmatpush2.msra.mxu0 0.0
    %8441 = vmatprep.subr.mxu0 0.0
    %8442 = vmatpush2.msra.mxu0 0.0
    %8443 = vmatprep.subr.mxu0 0.0
    %8444 = vmatpush2.msra.mxu0 0.0
    %8445 = vmatprep.subr.mxu0 0.0
    %8446 = vmatpush2.msra.mxu0 0.0
    %8447 = vmatprep.subr.mxu0 0.0
    %8448 = vmatpush2.msra.mxu0 0.0
    %8449 = vmatprep.mubr.f32.mxu0 0.0
    %8450 = vmatmul.mubr.f32.gmra.mxu0 %v8373
    %v8451 = vpop.f32.mrf.mxu0
    %v8452 = vadd.f32 0.0, %v8451
    %v8453 = vpop.f32.mrf.mxu0
    %8454 = vmatprep.mubr.f32.mxu0 0.0
    %8455 = vmatmul.mubr.f32.gmra.mxu0 %v8375
    %v8456 = vpop.f32.mrf.mxu0
    %v8457 = vadd.f32 0.0, %v8456
    %v8458 = vpop.f32.mrf.mxu0
    %8459 = vmatprep.mubr.f32.mxu0 0.0
    %8460 = vmatmul.mubr.f32.gmra.mxu0 %v8377
    %v8461 = vpop.f32.mrf.mxu0
    %v8462 = vadd.f32 0.0, %v8461
    %v8463 = vpop.f32.mrf.mxu0
    %8464 = vmatprep.mubr.f32.mxu0 0.0
    %8465 = vmatmul.mubr.f32.gmra.mxu0 %v8379
    %v8466 = vpop.f32.mrf.mxu0
    %v8467 = vadd.f32 0.0, %v8466
    %v8468 = vpop.f32.mrf.mxu0
    %8469 = vmatprep.mubr.f32.mxu0 0.0
    %8470 = vmatmul.mubr.f32.gmra.mxu0 %v8381
    %v8471 = vpop.f32.mrf.mxu0
    %v8472 = vadd.f32 0.0, %v8471
    %v8473 = vpop.f32.mrf.mxu0
    %8474 = vmatprep.mubr.f32.mxu0 0.0
    %8475 = vmatmul.mubr.f32.gmra.mxu0 %v8383
    %v8476 = vpop.f32.mrf.mxu0
    %v8477 = vadd.f32 0.0, %v8476
    %v8478 = vpop.f32.mrf.mxu0
    %8479 = vdwg.mxu0
    %v8480 = vadd.f32 %v8351, %v8452
    %v8481 = vadd.f32 %v8352, %v8457
    %v8482 = vadd.f32 %v8353, %v8462
    %v8483 = vadd.f32 %v8354, %v8467
    %v8484 = vadd.f32 %v8355, %v8472
    %v8485 = vadd.f32 %v8356, %v8477
    %v8486 = vld [vmem:[%s65] sm:$0x1]
    %v8488 = vlaneseq
    %v8489 = vshrl.u32 %v8488, 7
    %v8490 = vsub.s32 0, %v8489
    %v8491 = vrot.slane %v8486, %v8490
    %v8493 = vadd.f32 %v8480, %v8491
    %v8494 = vadd.f32 %v8481, %v8491
    %v8495 = vadd.f32 %v8482, %v8491
    %v8496 = vadd.f32 %v8483, %v8491
    %v8497 = vadd.f32 %v8484, %v8491
    %v8498 = vadd.f32 %v8485, %v8491
    %v8499 = vmul.f32 %v8493, %v1509
    %v8500 = vmul.f32 %v8494, %v1514
    %v8501 = vmul.f32 %v8495, %v1519
    %v8502 = vmul.f32 %v8496, %v1524
    %v8503 = vmul.f32 %v8497, %v1529
    %v8504 = vmul.f32 %v8498, %v1534
    %v8505 = vsel %vm1542, %v8499, 0.0
    %v8506 = vsel %vm1542, %v8500, 0.0
    %v8507 = vadd.f32 %v8505, %v8506
    %v8508 = vsel %vm1542, %v8501, 0.0
    %v8509 = vadd.f32 %v8507, %v8508
    %v8510 = vsel %vm1542, %v8502, 0.0
    %v8511 = vadd.f32 %v8509, %v8510
    %v8512 = vsel %vm1542, %v8503, 0.0
    %v8513 = vadd.f32 %v8511, %v8512
    %v8514 = vsel %vm1542, %v8504, 0.0
    %v8515 = vadd.f32 %v8513, %v8514
    %v8516 = vrot.slane %v8515, 4
    %v8517 = vadd.f32 %v8515, %v8516
    %v8518 = vrot.slane %v8517, 2
    %v8519 = vadd.f32 %v8517, %v8518
    %v8520 = vrot.slane %v8519, 1
    %v8521 = vadd.f32 %v8519, %v8520
    %v8522 = vmul.f32 %v8521, 0.03125
    %v8523 = vsub.f32 %v8493, %v8522
    %v8524 = vsub.f32 %v8494, %v8522
    %v8525 = vsub.f32 %v8495, %v8522
    %v8526 = vsub.f32 %v8496, %v8522
    %v8527 = vsub.f32 %v8497, %v8522
    %v8528 = vsub.f32 %v8498, %v8522
    %v8529 = vmul.f32 %v8523, %v1509
    %v8530 = vmul.f32 %v8524, %v1514
    %v8531 = vmul.f32 %v8525, %v1519
    %v8532 = vmul.f32 %v8526, %v1524
    %v8533 = vmul.f32 %v8527, %v1529
    %v8534 = vmul.f32 %v8528, %v1534
    %v8535 = vmul.f32 %v8529, %v8529
    %v8536 = vmul.f32 %v8530, %v8530
    %v8537 = vmul.f32 %v8531, %v8531
    %v8538 = vmul.f32 %v8532, %v8532
    %v8539 = vmul.f32 %v8533, %v8533
    %v8540 = vmul.f32 %v8534, %v8534
    %v8541 = vsel %vm1542, %v8535, 0.0
    %v8542 = vsel %vm1542, %v8536, 0.0
    %v8543 = vadd.f32 %v8541, %v8542
    %v8544 = vsel %vm1542, %v8537, 0.0
    %v8545 = vadd.f32 %v8543, %v8544
    %v8546 = vsel %vm1542, %v8538, 0.0
    %v8547 = vadd.f32 %v8545, %v8546
    %v8548 = vsel %vm1542, %v8539, 0.0
    %v8549 = vadd.f32 %v8547, %v8548
    %v8550 = vsel %vm1542, %v8540, 0.0
    %v8551 = vadd.f32 %v8549, %v8550
    %v8552 = vrot.slane %v8551, 4
    %v8553 = vadd.f32 %v8551, %v8552
    %v8554 = vrot.slane %v8553, 2
    %v8555 = vadd.f32 %v8553, %v8554
    %v8556 = vrot.slane %v8555, 1
    %v8557 = vadd.f32 %v8555, %v8556
    %v8558 = vmul.f32 %v8557, 0.03125
    %v8559 = vld [vmem:[%s67] sm:$0x1]
    %v8560 = vadd.f32 %v8558, 1e-05
    %v8561 = vrsqrt.pop %v8560
    %v8562 = vmul.f32 %v8559, %v8561
    %v8563 = vld [vmem:[%s69] sm:$0x1]
    %v8564 = vmul.f32 %v8522, %v8562
    %v8565 = vsub.f32 %v8563, %v8564
    %v8567 = vlaneseq
    %v8568 = vshrl.u32 %v8567, 7
    %v8569 = vsub.s32 0, %v8568
    %v8570 = vrot.slane %v8562, %v8569
    %v8572 = vmul.f32 %v8493, %v8570
    %v8573 = vmul.f32 %v8494, %v8570
    %v8574 = vmul.f32 %v8495, %v8570
    %v8575 = vmul.f32 %v8496, %v8570
    %v8576 = vmul.f32 %v8497, %v8570
    %v8577 = vmul.f32 %v8498, %v8570
    %v8579 = vlaneseq
    %v8580 = vshrl.u32 %v8579, 7
    %v8581 = vsub.s32 0, %v8580
    %v8582 = vrot.slane %v8565, %v8581
    %v8584 = vadd.f32 %v8572, %v8582
    %v8585 = vadd.f32 %v8573, %v8582
    %v8586 = vadd.f32 %v8574, %v8582
    %v8587 = vadd.f32 %v8575, %v8582
    %v8588 = vadd.f32 %v8576, %v8582
    %v8589 = vadd.f32 %v8577, %v8582
    %v8590 = vmul.f32 %v8584, %v1509
    %v8591 = vmul.f32 %v8585, %v1514
    %v8592 = vmul.f32 %v8586, %v1519
    %v8593 = vmul.f32 %v8587, %v1524
    %v8594 = vmul.f32 %v8588, %v1529
    %v8595 = vmul.f32 %v8589, %v1534
    %v8596 = vmax.f32 %v8590, 0.0
    %v8597 = vmax.f32 %v8591, 0.0
    %v8598 = vmax.f32 %v8592, 0.0
    %v8599 = vmax.f32 %v8593, 0.0
    %v8600 = vmax.f32 %v8594, 0.0
    %v8601 = vmax.f32 %v8595, 0.0
    %v8608 = vrot.slane %v8596, 4
    %v8609 = vrot.slane %v8597, 4
    %v8610 = vsel %vm446, %v8608, %v8609
    %v8611 = vrot.slane %v8598, 4
    %v8612 = vsel %vm446, %v8609, %v8611
    %v8613 = vrot.slane %v8599, 4
    %v8614 = vsel %vm446, %v8611, %v8613
    %v8615 = vrot.slane %v8600, 4
    %v8616 = vsel %vm446, %v8613, %v8615
    %v8617 = vrot.slane %v8601, 4
    %v8618 = vsel %vm446, %v8615, %v8617
    %v8621 = vsel %vm446, 0.0, %v8608
    %v8622 = vsel %vm446, %v8617, 0.0
    %v8623 = vld [vmem:[#allocation34] sm:$0xff]
    %v8624 = vld [vmem:[#allocation34 + $0x8] sm:$0xff]
    %s8625 = scalar_lea.vmem [#allocation34], 16
    %v8626 = vld [vmem:[%s8625] sm:$0xff]
    %v8627 = vld [vmem:[%s8625 + $0x8] sm:$0xff]
    %v8630 = vrot.slane %v8621, 2
    %v8631 = vrot.slane %v8610, 2
    %v8632 = vsel %vm467, %v8630, %v8631
    %v8633 = vrot.slane %v8612, 2
    %v8634 = vsel %vm467, %v8631, %v8633
    %v8635 = vrot.slane %v8614, 2
    %v8636 = vsel %vm467, %v8633, %v8635
    %v8637 = vrot.slane %v8616, 2
    %v8638 = vsel %vm467, %v8635, %v8637
    %v8639 = vrot.slane %v8618, 2
    %v8640 = vsel %vm467, %v8637, %v8639
    %v8641 = vrot.slane %v8622, 2
    %v8642 = vsel %vm467, %v8639, %v8641
    %v8643 = vsel %vm1542, %v8632, 0
    %v8645 = vsel %vm1542, %v8634, 0
    %v8647 = vsel %vm1542, %v8636, 0
    %v8649 = vsel %vm1542, %v8638, 0
    %v8651 = vsel %vm1542, %v8640, 0
    %v8653 = vsel %vm1542, %v8642, 0
    %8655 = vmatprep.subr.mxu0 0.0
    %8656 = vmatpush1.msra.mxu0 0.0
    %8657 = vmatprep.subr.mxu0 0.0
    %8658 = vmatpush1.msra.mxu0 0.0
    %8659 = vmatprep.subr.mxu0 0.0
    %8660 = vmatpush1.msra.mxu0 0.0
    %8661 = vmatprep.subr.mxu0 0.0
    %8662 = vmatpush1.msra.mxu0 0.0
    %8663 = vmatprep.subr.mxu0 0.0
    %8664 = vmatpush1.msra.mxu0 0.0
    %8665 = vmatprep.subr.mxu0 0.0
    %8666 = vmatpush1.msra.mxu0 0.0
    %8667 = vmatprep.subr.mxu0 0.0
    %8668 = vmatpush1.msra.mxu0 0.0
    %8669 = vmatprep.subr.mxu0 0.0
    %8670 = vmatpush1.msra.mxu0 0.0
    %8671 = vmatprep.subr.mxu0 0.0
    %8672 = vmatpush1.msra.mxu0 0.0
    %8673 = vmatprep.subr.mxu0 0.0
    %8674 = vmatpush1.msra.mxu0 0.0
    %8675 = vmatprep.subr.mxu0 0.0
    %8676 = vmatpush1.msra.mxu0 0.0
    %8677 = vmatprep.subr.mxu0 0.0
    %8678 = vmatpush1.msra.mxu0 0.0
    %8679 = vmatprep.subr.mxu0 0.0
    %8680 = vmatpush1.msra.mxu0 0.0
    %8681 = vmatprep.subr.mxu0 0.0
    %8682 = vmatpush1.msra.mxu0 0.0
    %8683 = vmatprep.subr.mxu0 0.0
    %8684 = vmatpush1.msra.mxu0 %v8627
    %8685 = vmatprep.subr.mxu0 0.0
    %8686 = vmatpush1.msra.mxu0 %v8626
    %8687 = vmatprep.subr.mxu0 0.0
    %8688 = vmatpush2.msra.mxu0 0.0
    %8689 = vmatprep.subr.mxu0 0.0
    %8690 = vmatpush2.msra.mxu0 0.0
    %8691 = vmatprep.subr.mxu0 0.0
    %8692 = vmatpush2.msra.mxu0 0.0
    %8693 = vmatprep.subr.mxu0 0.0
    %8694 = vmatpush2.msra.mxu0 0.0
    %8695 = vmatprep.subr.mxu0 0.0
    %8696 = vmatpush2.msra.mxu0 0.0
    %8697 = vmatprep.subr.mxu0 0.0
    %8698 = vmatpush2.msra.mxu0 0.0
    %8699 = vmatprep.subr.mxu0 0.0
    %8700 = vmatpush2.msra.mxu0 0.0
    %8701 = vmatprep.subr.mxu0 0.0
    %8702 = vmatpush2.msra.mxu0 0.0
    %8703 = vmatprep.subr.mxu0 0.0
    %8704 = vmatpush2.msra.mxu0 0.0
    %8705 = vmatprep.subr.mxu0 0.0
    %8706 = vmatpush2.msra.mxu0 0.0
    %8707 = vmatprep.subr.mxu0 0.0
    %8708 = vmatpush2.msra.mxu0 0.0
    %8709 = vmatprep.subr.mxu0 0.0
    %8710 = vmatpush2.msra.mxu0 0.0
    %8711 = vmatprep.subr.mxu0 0.0
    %8712 = vmatpush2.msra.mxu0 0.0
    %8713 = vmatprep.subr.mxu0 0.0
    %8714 = vmatpush2.msra.mxu0 0.0
    %8715 = vmatprep.subr.mxu0 0.0
    %8716 = vmatpush2.msra.mxu0 0.0
    %8717 = vmatprep.subr.mxu0 0.0
    %8718 = vmatpush2.msra.mxu0 0.0
    %8719 = vmatprep.mubr.f32.mxu0 0.0
    %8720 = vmatmul.mubr.f32.gmra.mxu0 %v8643
    %v8721 = vpop.f32.mrf.mxu0
    %v8722 = vadd.f32 0.0, %v8721
    %v8723 = vpop.f32.mrf.mxu0
    %8724 = vmatprep.mubr.f32.mxu0 0.0
    %8725 = vmatmul.mubr.f32.gmra.mxu0 %v8645
    %v8726 = vpop.f32.mrf.mxu0
    %v8727 = vadd.f32 0.0, %v8726
    %v8728 = vpop.f32.mrf.mxu0
    %8729 = vmatprep.mubr.f32.mxu0 0.0
    %8730 = vmatmul.mubr.f32.gmra.mxu0 %v8647
    %v8731 = vpop.f32.mrf.mxu0
    %v8732 = vadd.f32 0.0, %v8731
    %v8733 = vpop.f32.mrf.mxu0
    %8734 = vmatprep.mubr.f32.mxu0 0.0
    %8735 = vmatmul.mubr.f32.gmra.mxu0 %v8649
    %v8736 = vpop.f32.mrf.mxu0
    %v8737 = vadd.f32 0.0, %v8736
    %v8738 = vpop.f32.mrf.mxu0
    %8739 = vmatprep.mubr.f32.mxu0 0.0
    %8740 = vmatmul.mubr.f32.gmra.mxu0 %v8651
    %v8741 = vpop.f32.mrf.mxu0
    %v8742 = vadd.f32 0.0, %v8741
    %v8743 = vpop.f32.mrf.mxu0
    %8744 = vmatprep.mubr.f32.mxu0 0.0
    %8745 = vmatmul.mubr.f32.gmra.mxu0 %v8653
    %v8746 = vpop.f32.mrf.mxu0
    %v8747 = vadd.f32 0.0, %v8746
    %v8748 = vpop.f32.mrf.mxu0
    %8749 = vdwg.mxu0
    %v8750 = vrot.slane %v8621, 1
    %v8751 = vrot.slane %v8610, 1
    %v8752 = vsel %vm592, %v8750, %v8751
    %v8753 = vrot.slane %v8612, 1
    %v8754 = vsel %vm592, %v8751, %v8753
    %v8755 = vrot.slane %v8614, 1
    %v8756 = vsel %vm592, %v8753, %v8755
    %v8757 = vrot.slane %v8616, 1
    %v8758 = vsel %vm592, %v8755, %v8757
    %v8759 = vrot.slane %v8618, 1
    %v8760 = vsel %vm592, %v8757, %v8759
    %v8761 = vrot.slane %v8622, 1
    %v8762 = vsel %vm592, %v8759, %v8761
    %v8763 = vsel %vm1542, %v8752, 0
    %v8765 = vsel %vm1542, %v8754, 0
    %v8767 = vsel %vm1542, %v8756, 0
    %v8769 = vsel %vm1542, %v8758, 0
    %v8771 = vsel %vm1542, %v8760, 0
    %v8773 = vsel %vm1542, %v8762, 0
    %8775 = vmatprep.subr.mxu0 0.0
    %8776 = vmatpush1.msra.mxu0 0.0
    %8777 = vmatprep.subr.mxu0 0.0
    %8778 = vmatpush1.msra.mxu0 0.0
    %8779 = vmatprep.subr.mxu0 0.0
    %8780 = vmatpush1.msra.mxu0 0.0
    %8781 = vmatprep.subr.mxu0 0.0
    %8782 = vmatpush1.msra.mxu0 0.0
    %8783 = vmatprep.subr.mxu0 0.0
    %8784 = vmatpush1.msra.mxu0 0.0
    %8785 = vmatprep.subr.mxu0 0.0
    %8786 = vmatpush1.msra.mxu0 0.0
    %8787 = vmatprep.subr.mxu0 0.0
    %8788 = vmatpush1.msra.mxu0 0.0
    %8789 = vmatprep.subr.mxu0 0.0
    %8790 = vmatpush1.msra.mxu0 0.0
    %8791 = vmatprep.subr.mxu0 0.0
    %8792 = vmatpush1.msra.mxu0 0.0
    %8793 = vmatprep.subr.mxu0 0.0
    %8794 = vmatpush1.msra.mxu0 0.0
    %8795 = vmatprep.subr.mxu0 0.0
    %8796 = vmatpush1.msra.mxu0 0.0
    %8797 = vmatprep.subr.mxu0 0.0
    %8798 = vmatpush1.msra.mxu0 0.0
    %8799 = vmatprep.subr.mxu0 0.0
    %8800 = vmatpush1.msra.mxu0 0.0
    %8801 = vmatprep.subr.mxu0 0.0
    %8802 = vmatpush1.msra.mxu0 0.0
    %8803 = vmatprep.subr.mxu0 0.0
    %8804 = vmatpush1.msra.mxu0 %v8624
    %8805 = vmatprep.subr.mxu0 0.0
    %8806 = vmatpush1.msra.mxu0 %v8623
    %8807 = vmatprep.subr.mxu0 0.0
    %8808 = vmatpush2.msra.mxu0 0.0
    %8809 = vmatprep.subr.mxu0 0.0
    %8810 = vmatpush2.msra.mxu0 0.0
    %8811 = vmatprep.subr.mxu0 0.0
    %8812 = vmatpush2.msra.mxu0 0.0
    %8813 = vmatprep.subr.mxu0 0.0
    %8814 = vmatpush2.msra.mxu0 0.0
    %8815 = vmatprep.subr.mxu0 0.0
    %8816 = vmatpush2.msra.mxu0 0.0
    %8817 = vmatprep.subr.mxu0 0.0
    %8818 = vmatpush2.msra.mxu0 0.0
    %8819 = vmatprep.subr.mxu0 0.0
    %8820 = vmatpush2.msra.mxu0 0.0
    %8821 = vmatprep.subr.mxu0 0.0
    %8822 = vmatpush2.msra.mxu0 0.0
    %8823 = vmatprep.subr.mxu0 0.0
    %8824 = vmatpush2.msra.mxu0 0.0
    %8825 = vmatprep.subr.mxu0 0.0
    %8826 = vmatpush2.msra.mxu0 0.0
    %8827 = vmatprep.subr.mxu0 0.0
    %8828 = vmatpush2.msra.mxu0 0.0
    %8829 = vmatprep.subr.mxu0 0.0
    %8830 = vmatpush2.msra.mxu0 0.0
    %8831 = vmatprep.subr.mxu0 0.0
    %8832 = vmatpush2.msra.mxu0 0.0
    %8833 = vmatprep.subr.mxu0 0.0
    %8834 = vmatpush2.msra.mxu0 0.0
    %8835 = vmatprep.subr.mxu0 0.0
    %8836 = vmatpush2.msra.mxu0 0.0
    %8837 = vmatprep.subr.mxu0 0.0
    %8838 = vmatpush2.msra.mxu0 0.0
    %8839 = vmatprep.mubr.f32.mxu0 0.0
    %8840 = vmatmul.mubr.f32.gmra.mxu0 %v8763
    %v8841 = vpop.f32.mrf.mxu0
    %v8842 = vadd.f32 %v8722, %v8841
    %v8843 = vpop.f32.mrf.mxu0
    %8844 = vmatprep.mubr.f32.mxu0 0.0
    %8845 = vmatmul.mubr.f32.gmra.mxu0 %v8765
    %v8846 = vpop.f32.mrf.mxu0
    %v8847 = vadd.f32 %v8727, %v8846
    %v8848 = vpop.f32.mrf.mxu0
    %8849 = vmatprep.mubr.f32.mxu0 0.0
    %8850 = vmatmul.mubr.f32.gmra.mxu0 %v8767
    %v8851 = vpop.f32.mrf.mxu0
    %v8852 = vadd.f32 %v8732, %v8851
    %v8853 = vpop.f32.mrf.mxu0
    %8854 = vmatprep.mubr.f32.mxu0 0.0
    %8855 = vmatmul.mubr.f32.gmra.mxu0 %v8769
    %v8856 = vpop.f32.mrf.mxu0
    %v8857 = vadd.f32 %v8737, %v8856
    %v8858 = vpop.f32.mrf.mxu0
    %8859 = vmatprep.mubr.f32.mxu0 0.0
    %8860 = vmatmul.mubr.f32.gmra.mxu0 %v8771
    %v8861 = vpop.f32.mrf.mxu0
    %v8862 = vadd.f32 %v8742, %v8861
    %v8863 = vpop.f32.mrf.mxu0
    %8864 = vmatprep.mubr.f32.mxu0 0.0
    %8865 = vmatmul.mubr.f32.gmra.mxu0 %v8773
    %v8866 = vpop.f32.mrf.mxu0
    %v8867 = vadd.f32 %v8747, %v8866
    %v8868 = vpop.f32.mrf.mxu0
    %8869 = vdwg.mxu0
    %s8870 = scalar_lea.vmem [#allocation34], 32
    %v8871 = vld [vmem:[%s8870] sm:$0xff]
    %v8872 = vld [vmem:[%s8870 + $0x8] sm:$0xff]
    %v8873 = vrot.slane %v8621, 3
    %v8874 = vrot.slane %v8610, 3
    %v8875 = vsel %vm718, %v8873, %v8874
    %v8876 = vrot.slane %v8612, 3
    %v8877 = vsel %vm718, %v8874, %v8876
    %v8878 = vrot.slane %v8614, 3
    %v8879 = vsel %vm718, %v8876, %v8878
    %v8880 = vrot.slane %v8616, 3
    %v8881 = vsel %vm718, %v8878, %v8880
    %v8882 = vrot.slane %v8618, 3
    %v8883 = vsel %vm718, %v8880, %v8882
    %v8884 = vrot.slane %v8622, 3
    %v8885 = vsel %vm718, %v8882, %v8884
    %v8886 = vsel %vm1542, %v8875, 0
    %v8888 = vsel %vm1542, %v8877, 0
    %v8890 = vsel %vm1542, %v8879, 0
    %v8892 = vsel %vm1542, %v8881, 0
    %v8894 = vsel %vm1542, %v8883, 0
    %v8896 = vsel %vm1542, %v8885, 0
    %8898 = vmatprep.subr.mxu0 0.0
    %8899 = vmatpush1.msra.mxu0 0.0
    %8900 = vmatprep.subr.mxu0 0.0
    %8901 = vmatpush1.msra.mxu0 0.0
    %8902 = vmatprep.subr.mxu0 0.0
    %8903 = vmatpush1.msra.mxu0 0.0
    %8904 = vmatprep.subr.mxu0 0.0
    %8905 = vmatpush1.msra.mxu0 0.0
    %8906 = vmatprep.subr.mxu0 0.0
    %8907 = vmatpush1.msra.mxu0 0.0
    %8908 = vmatprep.subr.mxu0 0.0
    %8909 = vmatpush1.msra.mxu0 0.0
    %8910 = vmatprep.subr.mxu0 0.0
    %8911 = vmatpush1.msra.mxu0 0.0
    %8912 = vmatprep.subr.mxu0 0.0
    %8913 = vmatpush1.msra.mxu0 0.0
    %8914 = vmatprep.subr.mxu0 0.0
    %8915 = vmatpush1.msra.mxu0 0.0
    %8916 = vmatprep.subr.mxu0 0.0
    %8917 = vmatpush1.msra.mxu0 0.0
    %8918 = vmatprep.subr.mxu0 0.0
    %8919 = vmatpush1.msra.mxu0 0.0
    %8920 = vmatprep.subr.mxu0 0.0
    %8921 = vmatpush1.msra.mxu0 0.0
    %8922 = vmatprep.subr.mxu0 0.0
    %8923 = vmatpush1.msra.mxu0 0.0
    %8924 = vmatprep.subr.mxu0 0.0
    %8925 = vmatpush1.msra.mxu0 0.0
    %8926 = vmatprep.subr.mxu0 0.0
    %8927 = vmatpush1.msra.mxu0 %v8872
    %8928 = vmatprep.subr.mxu0 0.0
    %8929 = vmatpush1.msra.mxu0 %v8871
    %8930 = vmatprep.subr.mxu0 0.0
    %8931 = vmatpush2.msra.mxu0 0.0
    %8932 = vmatprep.subr.mxu0 0.0
    %8933 = vmatpush2.msra.mxu0 0.0
    %8934 = vmatprep.subr.mxu0 0.0
    %8935 = vmatpush2.msra.mxu0 0.0
    %8936 = vmatprep.subr.mxu0 0.0
    %8937 = vmatpush2.msra.mxu0 0.0
    %8938 = vmatprep.subr.mxu0 0.0
    %8939 = vmatpush2.msra.mxu0 0.0
    %8940 = vmatprep.subr.mxu0 0.0
    %8941 = vmatpush2.msra.mxu0 0.0
    %8942 = vmatprep.subr.mxu0 0.0
    %8943 = vmatpush2.msra.mxu0 0.0
    %8944 = vmatprep.subr.mxu0 0.0
    %8945 = vmatpush2.msra.mxu0 0.0
    %8946 = vmatprep.subr.mxu0 0.0
    %8947 = vmatpush2.msra.mxu0 0.0
    %8948 = vmatprep.subr.mxu0 0.0
    %8949 = vmatpush2.msra.mxu0 0.0
    %8950 = vmatprep.subr.mxu0 0.0
    %8951 = vmatpush2.msra.mxu0 0.0
    %8952 = vmatprep.subr.mxu0 0.0
    %8953 = vmatpush2.msra.mxu0 0.0
    %8954 = vmatprep.subr.mxu0 0.0
    %8955 = vmatpush2.msra.mxu0 0.0
    %8956 = vmatprep.subr.mxu0 0.0
    %8957 = vmatpush2.msra.mxu0 0.0
    %8958 = vmatprep.subr.mxu0 0.0
    %8959 = vmatpush2.msra.mxu0 0.0
    %8960 = vmatprep.subr.mxu0 0.0
    %8961 = vmatpush2.msra.mxu0 0.0
    %8962 = vmatprep.mubr.f32.mxu0 0.0
    %8963 = vmatmul.mubr.f32.gmra.mxu0 %v8886
    %v8964 = vpop.f32.mrf.mxu0
    %v8965 = vadd.f32 0.0, %v8964
    %v8966 = vpop.f32.mrf.mxu0
    %8967 = vmatprep.mubr.f32.mxu0 0.0
    %8968 = vmatmul.mubr.f32.gmra.mxu0 %v8888
    %v8969 = vpop.f32.mrf.mxu0
    %v8970 = vadd.f32 0.0, %v8969
    %v8971 = vpop.f32.mrf.mxu0
    %8972 = vmatprep.mubr.f32.mxu0 0.0
    %8973 = vmatmul.mubr.f32.gmra.mxu0 %v8890
    %v8974 = vpop.f32.mrf.mxu0
    %v8975 = vadd.f32 0.0, %v8974
    %v8976 = vpop.f32.mrf.mxu0
    %8977 = vmatprep.mubr.f32.mxu0 0.0
    %8978 = vmatmul.mubr.f32.gmra.mxu0 %v8892
    %v8979 = vpop.f32.mrf.mxu0
    %v8980 = vadd.f32 0.0, %v8979
    %v8981 = vpop.f32.mrf.mxu0
    %8982 = vmatprep.mubr.f32.mxu0 0.0
    %8983 = vmatmul.mubr.f32.gmra.mxu0 %v8894
    %v8984 = vpop.f32.mrf.mxu0
    %v8985 = vadd.f32 0.0, %v8984
    %v8986 = vpop.f32.mrf.mxu0
    %8987 = vmatprep.mubr.f32.mxu0 0.0
    %8988 = vmatmul.mubr.f32.gmra.mxu0 %v8896
    %v8989 = vpop.f32.mrf.mxu0
    %v8990 = vadd.f32 0.0, %v8989
    %v8991 = vpop.f32.mrf.mxu0
    %8992 = vdwg.mxu0
    %v8993 = vadd.f32 %v8842, %v8965
    %v8994 = vadd.f32 %v8847, %v8970
    %v8995 = vadd.f32 %v8852, %v8975
    %v8996 = vadd.f32 %v8857, %v8980
    %v8997 = vadd.f32 %v8862, %v8985
    %v8998 = vadd.f32 %v8867, %v8990
    %s8999 = scalar_lea.vmem [#allocation34], 48
    %v9000 = vld [vmem:[%s8999] sm:$0xff]
    %v9001 = vld [vmem:[%s8999 + $0x8] sm:$0xff]
    %v9002 = vrot.slane %v8621, 4
    %v9003 = vrot.slane %v8610, 4
    %v9004 = vsel %vm446, %v9002, %v9003
    %v9005 = vrot.slane %v8612, 4
    %v9006 = vsel %vm446, %v9003, %v9005
    %v9007 = vrot.slane %v8614, 4
    %v9008 = vsel %vm446, %v9005, %v9007
    %v9009 = vrot.slane %v8616, 4
    %v9010 = vsel %vm446, %v9007, %v9009
    %v9011 = vrot.slane %v8618, 4
    %v9012 = vsel %vm446, %v9009, %v9011
    %v9013 = vrot.slane %v8622, 4
    %v9014 = vsel %vm446, %v9011, %v9013
    %v9015 = vsel %vm1542, %v9004, 0
    %v9017 = vsel %vm1542, %v9006, 0
    %v9019 = vsel %vm1542, %v9008, 0
    %v9021 = vsel %vm1542, %v9010, 0
    %v9023 = vsel %vm1542, %v9012, 0
    %v9025 = vsel %vm1542, %v9014, 0
    %9027 = vmatprep.subr.mxu0 0.0
    %9028 = vmatpush1.msra.mxu0 0.0
    %9029 = vmatprep.subr.mxu0 0.0
    %9030 = vmatpush1.msra.mxu0 0.0
    %9031 = vmatprep.subr.mxu0 0.0
    %9032 = vmatpush1.msra.mxu0 0.0
    %9033 = vmatprep.subr.mxu0 0.0
    %9034 = vmatpush1.msra.mxu0 0.0
    %9035 = vmatprep.subr.mxu0 0.0
    %9036 = vmatpush1.msra.mxu0 0.0
    %9037 = vmatprep.subr.mxu0 0.0
    %9038 = vmatpush1.msra.mxu0 0.0
    %9039 = vmatprep.subr.mxu0 0.0
    %9040 = vmatpush1.msra.mxu0 0.0
    %9041 = vmatprep.subr.mxu0 0.0
    %9042 = vmatpush1.msra.mxu0 0.0
    %9043 = vmatprep.subr.mxu0 0.0
    %9044 = vmatpush1.msra.mxu0 0.0
    %9045 = vmatprep.subr.mxu0 0.0
    %9046 = vmatpush1.msra.mxu0 0.0
    %9047 = vmatprep.subr.mxu0 0.0
    %9048 = vmatpush1.msra.mxu0 0.0
    %9049 = vmatprep.subr.mxu0 0.0
    %9050 = vmatpush1.msra.mxu0 0.0
    %9051 = vmatprep.subr.mxu0 0.0
    %9052 = vmatpush1.msra.mxu0 0.0
    %9053 = vmatprep.subr.mxu0 0.0
    %9054 = vmatpush1.msra.mxu0 0.0
    %9055 = vmatprep.subr.mxu0 0.0
    %9056 = vmatpush1.msra.mxu0 %v9001
    %9057 = vmatprep.subr.mxu0 0.0
    %9058 = vmatpush1.msra.mxu0 %v9000
    %9059 = vmatprep.subr.mxu0 0.0
    %9060 = vmatpush2.msra.mxu0 0.0
    %9061 = vmatprep.subr.mxu0 0.0
    %9062 = vmatpush2.msra.mxu0 0.0
    %9063 = vmatprep.subr.mxu0 0.0
    %9064 = vmatpush2.msra.mxu0 0.0
    %9065 = vmatprep.subr.mxu0 0.0
    %9066 = vmatpush2.msra.mxu0 0.0
    %9067 = vmatprep.subr.mxu0 0.0
    %9068 = vmatpush2.msra.mxu0 0.0
    %9069 = vmatprep.subr.mxu0 0.0
    %9070 = vmatpush2.msra.mxu0 0.0
    %9071 = vmatprep.subr.mxu0 0.0
    %9072 = vmatpush2.msra.mxu0 0.0
    %9073 = vmatprep.subr.mxu0 0.0
    %9074 = vmatpush2.msra.mxu0 0.0
    %9075 = vmatprep.subr.mxu0 0.0
    %9076 = vmatpush2.msra.mxu0 0.0
    %9077 = vmatprep.subr.mxu0 0.0
    %9078 = vmatpush2.msra.mxu0 0.0
    %9079 = vmatprep.subr.mxu0 0.0
    %9080 = vmatpush2.msra.mxu0 0.0
    %9081 = vmatprep.subr.mxu0 0.0
    %9082 = vmatpush2.msra.mxu0 0.0
    %9083 = vmatprep.subr.mxu0 0.0
    %9084 = vmatpush2.msra.mxu0 0.0
    %9085 = vmatprep.subr.mxu0 0.0
    %9086 = vmatpush2.msra.mxu0 0.0
    %9087 = vmatprep.subr.mxu0 0.0
    %9088 = vmatpush2.msra.mxu0 0.0
    %9089 = vmatprep.subr.mxu0 0.0
    %9090 = vmatpush2.msra.mxu0 0.0
    %9091 = vmatprep.mubr.f32.mxu0 0.0
    %9092 = vmatmul.mubr.f32.gmra.mxu0 %v9015
    %v9093 = vpop.f32.mrf.mxu0
    %v9094 = vadd.f32 0.0, %v9093
    %v9095 = vpop.f32.mrf.mxu0
    %9096 = vmatprep.mubr.f32.mxu0 0.0
    %9097 = vmatmul.mubr.f32.gmra.mxu0 %v9017
    %v9098 = vpop.f32.mrf.mxu0
    %v9099 = vadd.f32 0.0, %v9098
    %v9100 = vpop.f32.mrf.mxu0
    %9101 = vmatprep.mubr.f32.mxu0 0.0
    %9102 = vmatmul.mubr.f32.gmra.mxu0 %v9019
    %v9103 = vpop.f32.mrf.mxu0
    %v9104 = vadd.f32 0.0, %v9103
    %v9105 = vpop.f32.mrf.mxu0
    %9106 = vmatprep.mubr.f32.mxu0 0.0
    %9107 = vmatmul.mubr.f32.gmra.mxu0 %v9021
    %v9108 = vpop.f32.mrf.mxu0
    %v9109 = vadd.f32 0.0, %v9108
    %v9110 = vpop.f32.mrf.mxu0
    %9111 = vmatprep.mubr.f32.mxu0 0.0
    %9112 = vmatmul.mubr.f32.gmra.mxu0 %v9023
    %v9113 = vpop.f32.mrf.mxu0
    %v9114 = vadd.f32 0.0, %v9113
    %v9115 = vpop.f32.mrf.mxu0
    %9116 = vmatprep.mubr.f32.mxu0 0.0
    %9117 = vmatmul.mubr.f32.gmra.mxu0 %v9025
    %v9118 = vpop.f32.mrf.mxu0
    %v9119 = vadd.f32 0.0, %v9118
    %v9120 = vpop.f32.mrf.mxu0
    %9121 = vdwg.mxu0
    %v9122 = vadd.f32 %v8993, %v9094
    %v9123 = vadd.f32 %v8994, %v9099
    %v9124 = vadd.f32 %v8995, %v9104
    %v9125 = vadd.f32 %v8996, %v9109
    %v9126 = vadd.f32 %v8997, %v9114
    %v9127 = vadd.f32 %v8998, %v9119
    %s9128 = scalar_lea.vmem [#allocation34], 64
    %v9129 = vld [vmem:[%s9128] sm:$0xff]
    %v9130 = vld [vmem:[%s9128 + $0x8] sm:$0xff]
    %v9131 = vrot.slane %v8621, 5
    %v9132 = vrot.slane %v8610, 5
    %v9133 = vsel %vm981, %v9131, %v9132
    %v9134 = vrot.slane %v8612, 5
    %v9135 = vsel %vm981, %v9132, %v9134
    %v9136 = vrot.slane %v8614, 5
    %v9137 = vsel %vm981, %v9134, %v9136
    %v9138 = vrot.slane %v8616, 5
    %v9139 = vsel %vm981, %v9136, %v9138
    %v9140 = vrot.slane %v8618, 5
    %v9141 = vsel %vm981, %v9138, %v9140
    %v9142 = vrot.slane %v8622, 5
    %v9143 = vsel %vm981, %v9140, %v9142
    %v9144 = vsel %vm1542, %v9133, 0
    %v9146 = vsel %vm1542, %v9135, 0
    %v9148 = vsel %vm1542, %v9137, 0
    %v9150 = vsel %vm1542, %v9139, 0
    %v9152 = vsel %vm1542, %v9141, 0
    %v9154 = vsel %vm1542, %v9143, 0
    %9156 = vmatprep.subr.mxu0 0.0
    %9157 = vmatpush1.msra.mxu0 0.0
    %9158 = vmatprep.subr.mxu0 0.0
    %9159 = vmatpush1.msra.mxu0 0.0
    %9160 = vmatprep.subr.mxu0 0.0
    %9161 = vmatpush1.msra.mxu0 0.0
    %9162 = vmatprep.subr.mxu0 0.0
    %9163 = vmatpush1.msra.mxu0 0.0
    %9164 = vmatprep.subr.mxu0 0.0
    %9165 = vmatpush1.msra.mxu0 0.0
    %9166 = vmatprep.subr.mxu0 0.0
    %9167 = vmatpush1.msra.mxu0 0.0
    %9168 = vmatprep.subr.mxu0 0.0
    %9169 = vmatpush1.msra.mxu0 0.0
    %9170 = vmatprep.subr.mxu0 0.0
    %9171 = vmatpush1.msra.mxu0 0.0
    %9172 = vmatprep.subr.mxu0 0.0
    %9173 = vmatpush1.msra.mxu0 0.0
    %9174 = vmatprep.subr.mxu0 0.0
    %9175 = vmatpush1.msra.mxu0 0.0
    %9176 = vmatprep.subr.mxu0 0.0
    %9177 = vmatpush1.msra.mxu0 0.0
    %9178 = vmatprep.subr.mxu0 0.0
    %9179 = vmatpush1.msra.mxu0 0.0
    %9180 = vmatprep.subr.mxu0 0.0
    %9181 = vmatpush1.msra.mxu0 0.0
    %9182 = vmatprep.subr.mxu0 0.0
    %9183 = vmatpush1.msra.mxu0 0.0
    %9184 = vmatprep.subr.mxu0 0.0
    %9185 = vmatpush1.msra.mxu0 %v9130
    %9186 = vmatprep.subr.mxu0 0.0
    %9187 = vmatpush1.msra.mxu0 %v9129
    %9188 = vmatprep.subr.mxu0 0.0
    %9189 = vmatpush2.msra.mxu0 0.0
    %9190 = vmatprep.subr.mxu0 0.0
    %9191 = vmatpush2.msra.mxu0 0.0
    %9192 = vmatprep.subr.mxu0 0.0
    %9193 = vmatpush2.msra.mxu0 0.0
    %9194 = vmatprep.subr.mxu0 0.0
    %9195 = vmatpush2.msra.mxu0 0.0
    %9196 = vmatprep.subr.mxu0 0.0
    %9197 = vmatpush2.msra.mxu0 0.0
    %9198 = vmatprep.subr.mxu0 0.0
    %9199 = vmatpush2.msra.mxu0 0.0
    %9200 = vmatprep.subr.mxu0 0.0
    %9201 = vmatpush2.msra.mxu0 0.0
    %9202 = vmatprep.subr.mxu0 0.0
    %9203 = vmatpush2.msra.mxu0 0.0
    %9204 = vmatprep.subr.mxu0 0.0
    %9205 = vmatpush2.msra.mxu0 0.0
    %9206 = vmatprep.subr.mxu0 0.0
    %9207 = vmatpush2.msra.mxu0 0.0
    %9208 = vmatprep.subr.mxu0 0.0
    %9209 = vmatpush2.msra.mxu0 0.0
    %9210 = vmatprep.subr.mxu0 0.0
    %9211 = vmatpush2.msra.mxu0 0.0
    %9212 = vmatprep.subr.mxu0 0.0
    %9213 = vmatpush2.msra.mxu0 0.0
    %9214 = vmatprep.subr.mxu0 0.0
    %9215 = vmatpush2.msra.mxu0 0.0
    %9216 = vmatprep.subr.mxu0 0.0
    %9217 = vmatpush2.msra.mxu0 0.0
    %9218 = vmatprep.subr.mxu0 0.0
    %9219 = vmatpush2.msra.mxu0 0.0
    %9220 = vmatprep.mubr.f32.mxu0 0.0
    %9221 = vmatmul.mubr.f32.gmra.mxu0 %v9144
    %v9222 = vpop.f32.mrf.mxu0
    %v9223 = vadd.f32 0.0, %v9222
    %v9224 = vpop.f32.mrf.mxu0
    %9225 = vmatprep.mubr.f32.mxu0 0.0
    %9226 = vmatmul.mubr.f32.gmra.mxu0 %v9146
    %v9227 = vpop.f32.mrf.mxu0
    %v9228 = vadd.f32 0.0, %v9227
    %v9229 = vpop.f32.mrf.mxu0
    %9230 = vmatprep.mubr.f32.mxu0 0.0
    %9231 = vmatmul.mubr.f32.gmra.mxu0 %v9148
    %v9232 = vpop.f32.mrf.mxu0
    %v9233 = vadd.f32 0.0, %v9232
    %v9234 = vpop.f32.mrf.mxu0
    %9235 = vmatprep.mubr.f32.mxu0 0.0
    %9236 = vmatmul.mubr.f32.gmra.mxu0 %v9150
    %v9237 = vpop.f32.mrf.mxu0
    %v9238 = vadd.f32 0.0, %v9237
    %v9239 = vpop.f32.mrf.mxu0
    %9240 = vmatprep.mubr.f32.mxu0 0.0
    %9241 = vmatmul.mubr.f32.gmra.mxu0 %v9152
    %v9242 = vpop.f32.mrf.mxu0
    %v9243 = vadd.f32 0.0, %v9242
    %v9244 = vpop.f32.mrf.mxu0
    %9245 = vmatprep.mubr.f32.mxu0 0.0
    %9246 = vmatmul.mubr.f32.gmra.mxu0 %v9154
    %v9247 = vpop.f32.mrf.mxu0
    %v9248 = vadd.f32 0.0, %v9247
    %v9249 = vpop.f32.mrf.mxu0
    %9250 = vdwg.mxu0
    %v9251 = vadd.f32 %v9122, %v9223
    %v9252 = vadd.f32 %v9123, %v9228
    %v9253 = vadd.f32 %v9124, %v9233
    %v9254 = vadd.f32 %v9125, %v9238
    %v9255 = vadd.f32 %v9126, %v9243
    %v9256 = vadd.f32 %v9127, %v9248
    %s9257 = scalar_lea.vmem [#allocation34], 80
    %v9258 = vld [vmem:[%s9257] sm:$0xff]
    %v9259 = vld [vmem:[%s9257 + $0x8] sm:$0xff]
    %v9260 = vrot.slane %v8621, 6
    %v9261 = vrot.slane %v8610, 6
    %v9262 = vsel %vm1113, %v9260, %v9261
    %v9263 = vrot.slane %v8612, 6
    %v9264 = vsel %vm1113, %v9261, %v9263
    %v9265 = vrot.slane %v8614, 6
    %v9266 = vsel %vm1113, %v9263, %v9265
    %v9267 = vrot.slane %v8616, 6
    %v9268 = vsel %vm1113, %v9265, %v9267
    %v9269 = vrot.slane %v8618, 6
    %v9270 = vsel %vm1113, %v9267, %v9269
    %v9271 = vrot.slane %v8622, 6
    %v9272 = vsel %vm1113, %v9269, %v9271
    %v9273 = vsel %vm1542, %v9262, 0
    %v9275 = vsel %vm1542, %v9264, 0
    %v9277 = vsel %vm1542, %v9266, 0
    %v9279 = vsel %vm1542, %v9268, 0
    %v9281 = vsel %vm1542, %v9270, 0
    %v9283 = vsel %vm1542, %v9272, 0
    %9285 = vmatprep.subr.mxu0 0.0
    %9286 = vmatpush1.msra.mxu0 0.0
    %9287 = vmatprep.subr.mxu0 0.0
    %9288 = vmatpush1.msra.mxu0 0.0
    %9289 = vmatprep.subr.mxu0 0.0
    %9290 = vmatpush1.msra.mxu0 0.0
    %9291 = vmatprep.subr.mxu0 0.0
    %9292 = vmatpush1.msra.mxu0 0.0
    %9293 = vmatprep.subr.mxu0 0.0
    %9294 = vmatpush1.msra.mxu0 0.0
    %9295 = vmatprep.subr.mxu0 0.0
    %9296 = vmatpush1.msra.mxu0 0.0
    %9297 = vmatprep.subr.mxu0 0.0
    %9298 = vmatpush1.msra.mxu0 0.0
    %9299 = vmatprep.subr.mxu0 0.0
    %9300 = vmatpush1.msra.mxu0 0.0
    %9301 = vmatprep.subr.mxu0 0.0
    %9302 = vmatpush1.msra.mxu0 0.0
    %9303 = vmatprep.subr.mxu0 0.0
    %9304 = vmatpush1.msra.mxu0 0.0
    %9305 = vmatprep.subr.mxu0 0.0
    %9306 = vmatpush1.msra.mxu0 0.0
    %9307 = vmatprep.subr.mxu0 0.0
    %9308 = vmatpush1.msra.mxu0 0.0
    %9309 = vmatprep.subr.mxu0 0.0
    %9310 = vmatpush1.msra.mxu0 0.0
    %9311 = vmatprep.subr.mxu0 0.0
    %9312 = vmatpush1.msra.mxu0 0.0
    %9313 = vmatprep.subr.mxu0 0.0
    %9314 = vmatpush1.msra.mxu0 %v9259
    %9315 = vmatprep.subr.mxu0 0.0
    %9316 = vmatpush1.msra.mxu0 %v9258
    %9317 = vmatprep.subr.mxu0 0.0
    %9318 = vmatpush2.msra.mxu0 0.0
    %9319 = vmatprep.subr.mxu0 0.0
    %9320 = vmatpush2.msra.mxu0 0.0
    %9321 = vmatprep.subr.mxu0 0.0
    %9322 = vmatpush2.msra.mxu0 0.0
    %9323 = vmatprep.subr.mxu0 0.0
    %9324 = vmatpush2.msra.mxu0 0.0
    %9325 = vmatprep.subr.mxu0 0.0
    %9326 = vmatpush2.msra.mxu0 0.0
    %9327 = vmatprep.subr.mxu0 0.0
    %9328 = vmatpush2.msra.mxu0 0.0
    %9329 = vmatprep.subr.mxu0 0.0
    %9330 = vmatpush2.msra.mxu0 0.0
    %9331 = vmatprep.subr.mxu0 0.0
    %9332 = vmatpush2.msra.mxu0 0.0
    %9333 = vmatprep.subr.mxu0 0.0
    %9334 = vmatpush2.msra.mxu0 0.0
    %9335 = vmatprep.subr.mxu0 0.0
    %9336 = vmatpush2.msra.mxu0 0.0
    %9337 = vmatprep.subr.mxu0 0.0
    %9338 = vmatpush2.msra.mxu0 0.0
    %9339 = vmatprep.subr.mxu0 0.0
    %9340 = vmatpush2.msra.mxu0 0.0
    %9341 = vmatprep.subr.mxu0 0.0
    %9342 = vmatpush2.msra.mxu0 0.0
    %9343 = vmatprep.subr.mxu0 0.0
    %9344 = vmatpush2.msra.mxu0 0.0
    %9345 = vmatprep.subr.mxu0 0.0
    %9346 = vmatpush2.msra.mxu0 0.0
    %9347 = vmatprep.subr.mxu0 0.0
    %9348 = vmatpush2.msra.mxu0 0.0
    %9349 = vmatprep.mubr.f32.mxu0 0.0
    %9350 = vmatmul.mubr.f32.gmra.mxu0 %v9273
    %v9351 = vpop.f32.mrf.mxu0
    %v9352 = vadd.f32 0.0, %v9351
    %v9353 = vpop.f32.mrf.mxu0
    %9354 = vmatprep.mubr.f32.mxu0 0.0
    %9355 = vmatmul.mubr.f32.gmra.mxu0 %v9275
    %v9356 = vpop.f32.mrf.mxu0
    %v9357 = vadd.f32 0.0, %v9356
    %v9358 = vpop.f32.mrf.mxu0
    %9359 = vmatprep.mubr.f32.mxu0 0.0
    %9360 = vmatmul.mubr.f32.gmra.mxu0 %v9277
    %v9361 = vpop.f32.mrf.mxu0
    %v9362 = vadd.f32 0.0, %v9361
    %v9363 = vpop.f32.mrf.mxu0
    %9364 = vmatprep.mubr.f32.mxu0 0.0
    %9365 = vmatmul.mubr.f32.gmra.mxu0 %v9279
    %v9366 = vpop.f32.mrf.mxu0
    %v9367 = vadd.f32 0.0, %v9366
    %v9368 = vpop.f32.mrf.mxu0
    %9369 = vmatprep.mubr.f32.mxu0 0.0
    %9370 = vmatmul.mubr.f32.gmra.mxu0 %v9281
    %v9371 = vpop.f32.mrf.mxu0
    %v9372 = vadd.f32 0.0, %v9371
    %v9373 = vpop.f32.mrf.mxu0
    %9374 = vmatprep.mubr.f32.mxu0 0.0
    %9375 = vmatmul.mubr.f32.gmra.mxu0 %v9283
    %v9376 = vpop.f32.mrf.mxu0
    %v9377 = vadd.f32 0.0, %v9376
    %v9378 = vpop.f32.mrf.mxu0
    %9379 = vdwg.mxu0
    %v9380 = vadd.f32 %v9251, %v9352
    %v9381 = vadd.f32 %v9252, %v9357
    %v9382 = vadd.f32 %v9253, %v9362
    %v9383 = vadd.f32 %v9254, %v9367
    %v9384 = vadd.f32 %v9255, %v9372
    %v9385 = vadd.f32 %v9256, %v9377
    %s9386 = scalar_lea.vmem [#allocation34], 96
    %v9387 = vld [vmem:[%s9386] sm:$0xff]
    %v9388 = vld [vmem:[%s9386 + $0x8] sm:$0xff]
    %v9389 = vrot.slane %v8621, 7
    %v9390 = vrot.slane %v8610, 7
    %v9391 = vsel %vm1245, %v9389, %v9390
    %v9392 = vrot.slane %v8612, 7
    %v9393 = vsel %vm1245, %v9390, %v9392
    %v9394 = vrot.slane %v8614, 7
    %v9395 = vsel %vm1245, %v9392, %v9394
    %v9396 = vrot.slane %v8616, 7
    %v9397 = vsel %vm1245, %v9394, %v9396
    %v9398 = vrot.slane %v8618, 7
    %v9399 = vsel %vm1245, %v9396, %v9398
    %v9400 = vrot.slane %v8622, 7
    %v9401 = vsel %vm1245, %v9398, %v9400
    %v9402 = vsel %vm1542, %v9391, 0
    %v9404 = vsel %vm1542, %v9393, 0
    %v9406 = vsel %vm1542, %v9395, 0
    %v9408 = vsel %vm1542, %v9397, 0
    %v9410 = vsel %vm1542, %v9399, 0
    %v9412 = vsel %vm1542, %v9401, 0
    %9414 = vmatprep.subr.mxu0 0.0
    %9415 = vmatpush1.msra.mxu0 0.0
    %9416 = vmatprep.subr.mxu0 0.0
    %9417 = vmatpush1.msra.mxu0 0.0
    %9418 = vmatprep.subr.mxu0 0.0
    %9419 = vmatpush1.msra.mxu0 0.0
    %9420 = vmatprep.subr.mxu0 0.0
    %9421 = vmatpush1.msra.mxu0 0.0
    %9422 = vmatprep.subr.mxu0 0.0
    %9423 = vmatpush1.msra.mxu0 0.0
    %9424 = vmatprep.subr.mxu0 0.0
    %9425 = vmatpush1.msra.mxu0 0.0
    %9426 = vmatprep.subr.mxu0 0.0
    %9427 = vmatpush1.msra.mxu0 0.0
    %9428 = vmatprep.subr.mxu0 0.0
    %9429 = vmatpush1.msra.mxu0 0.0
    %9430 = vmatprep.subr.mxu0 0.0
    %9431 = vmatpush1.msra.mxu0 0.0
    %9432 = vmatprep.subr.mxu0 0.0
    %9433 = vmatpush1.msra.mxu0 0.0
    %9434 = vmatprep.subr.mxu0 0.0
    %9435 = vmatpush1.msra.mxu0 0.0
    %9436 = vmatprep.subr.mxu0 0.0
    %9437 = vmatpush1.msra.mxu0 0.0
    %9438 = vmatprep.subr.mxu0 0.0
    %9439 = vmatpush1.msra.mxu0 0.0
    %9440 = vmatprep.subr.mxu0 0.0
    %9441 = vmatpush1.msra.mxu0 0.0
    %9442 = vmatprep.subr.mxu0 0.0
    %9443 = vmatpush1.msra.mxu0 %v9388
    %9444 = vmatprep.subr.mxu0 0.0
    %9445 = vmatpush1.msra.mxu0 %v9387
    %9446 = vmatprep.subr.mxu0 0.0
    %9447 = vmatpush2.msra.mxu0 0.0
    %9448 = vmatprep.subr.mxu0 0.0
    %9449 = vmatpush2.msra.mxu0 0.0
    %9450 = vmatprep.subr.mxu0 0.0
    %9451 = vmatpush2.msra.mxu0 0.0
    %9452 = vmatprep.subr.mxu0 0.0
    %9453 = vmatpush2.msra.mxu0 0.0
    %9454 = vmatprep.subr.mxu0 0.0
    %9455 = vmatpush2.msra.mxu0 0.0
    %9456 = vmatprep.subr.mxu0 0.0
    %9457 = vmatpush2.msra.mxu0 0.0
    %9458 = vmatprep.subr.mxu0 0.0
    %9459 = vmatpush2.msra.mxu0 0.0
    %9460 = vmatprep.subr.mxu0 0.0
    %9461 = vmatpush2.msra.mxu0 0.0
    %9462 = vmatprep.subr.mxu0 0.0
    %9463 = vmatpush2.msra.mxu0 0.0
    %9464 = vmatprep.subr.mxu0 0.0
    %9465 = vmatpush2.msra.mxu0 0.0
    %9466 = vmatprep.subr.mxu0 0.0
    %9467 = vmatpush2.msra.mxu0 0.0
    %9468 = vmatprep.subr.mxu0 0.0
    %9469 = vmatpush2.msra.mxu0 0.0
    %9470 = vmatprep.subr.mxu0 0.0
    %9471 = vmatpush2.msra.mxu0 0.0
    %9472 = vmatprep.subr.mxu0 0.0
    %9473 = vmatpush2.msra.mxu0 0.0
    %9474 = vmatprep.subr.mxu0 0.0
    %9475 = vmatpush2.msra.mxu0 0.0
    %9476 = vmatprep.subr.mxu0 0.0
    %9477 = vmatpush2.msra.mxu0 0.0
    %9478 = vmatprep.mubr.f32.mxu0 0.0
    %9479 = vmatmul.mubr.f32.gmra.mxu0 %v9402
    %v9480 = vpop.f32.mrf.mxu0
    %v9481 = vadd.f32 0.0, %v9480
    %v9482 = vpop.f32.mrf.mxu0
    %9483 = vmatprep.mubr.f32.mxu0 0.0
    %9484 = vmatmul.mubr.f32.gmra.mxu0 %v9404
    %v9485 = vpop.f32.mrf.mxu0
    %v9486 = vadd.f32 0.0, %v9485
    %v9487 = vpop.f32.mrf.mxu0
    %9488 = vmatprep.mubr.f32.mxu0 0.0
    %9489 = vmatmul.mubr.f32.gmra.mxu0 %v9406
    %v9490 = vpop.f32.mrf.mxu0
    %v9491 = vadd.f32 0.0, %v9490
    %v9492 = vpop.f32.mrf.mxu0
    %9493 = vmatprep.mubr.f32.mxu0 0.0
    %9494 = vmatmul.mubr.f32.gmra.mxu0 %v9408
    %v9495 = vpop.f32.mrf.mxu0
    %v9496 = vadd.f32 0.0, %v9495
    %v9497 = vpop.f32.mrf.mxu0
    %9498 = vmatprep.mubr.f32.mxu0 0.0
    %9499 = vmatmul.mubr.f32.gmra.mxu0 %v9410
    %v9500 = vpop.f32.mrf.mxu0
    %v9501 = vadd.f32 0.0, %v9500
    %v9502 = vpop.f32.mrf.mxu0
    %9503 = vmatprep.mubr.f32.mxu0 0.0
    %9504 = vmatmul.mubr.f32.gmra.mxu0 %v9412
    %v9505 = vpop.f32.mrf.mxu0
    %v9506 = vadd.f32 0.0, %v9505
    %v9507 = vpop.f32.mrf.mxu0
    %9508 = vdwg.mxu0
    %v9509 = vadd.f32 %v9380, %v9481
    %v9510 = vadd.f32 %v9381, %v9486
    %v9511 = vadd.f32 %v9382, %v9491
    %v9512 = vadd.f32 %v9383, %v9496
    %v9513 = vadd.f32 %v9384, %v9501
    %v9514 = vadd.f32 %v9385, %v9506
    %s9515 = scalar_lea.vmem [#allocation34], 112
    %v9516 = vld [vmem:[%s9515] sm:$0xff]
    %v9517 = vld [vmem:[%s9515 + $0x8] sm:$0xff]
    %v9518 = vsel %vm1542, %v8610, 0
    %v9520 = vsel %vm1542, %v8612, 0
    %v9522 = vsel %vm1542, %v8614, 0
    %v9524 = vsel %vm1542, %v8616, 0
    %v9526 = vsel %vm1542, %v8618, 0
    %v9528 = vsel %vm1542, %v8622, 0
    %9530 = vmatprep.subr.mxu0 0.0
    %9531 = vmatpush1.msra.mxu0 0.0
    %9532 = vmatprep.subr.mxu0 0.0
    %9533 = vmatpush1.msra.mxu0 0.0
    %9534 = vmatprep.subr.mxu0 0.0
    %9535 = vmatpush1.msra.mxu0 0.0
    %9536 = vmatprep.subr.mxu0 0.0
    %9537 = vmatpush1.msra.mxu0 0.0
    %9538 = vmatprep.subr.mxu0 0.0
    %9539 = vmatpush1.msra.mxu0 0.0
    %9540 = vmatprep.subr.mxu0 0.0
    %9541 = vmatpush1.msra.mxu0 0.0
    %9542 = vmatprep.subr.mxu0 0.0
    %9543 = vmatpush1.msra.mxu0 0.0
    %9544 = vmatprep.subr.mxu0 0.0
    %9545 = vmatpush1.msra.mxu0 0.0
    %9546 = vmatprep.subr.mxu0 0.0
    %9547 = vmatpush1.msra.mxu0 0.0
    %9548 = vmatprep.subr.mxu0 0.0
    %9549 = vmatpush1.msra.mxu0 0.0
    %9550 = vmatprep.subr.mxu0 0.0
    %9551 = vmatpush1.msra.mxu0 0.0
    %9552 = vmatprep.subr.mxu0 0.0
    %9553 = vmatpush1.msra.mxu0 0.0
    %9554 = vmatprep.subr.mxu0 0.0
    %9555 = vmatpush1.msra.mxu0 0.0
    %9556 = vmatprep.subr.mxu0 0.0
    %9557 = vmatpush1.msra.mxu0 0.0
    %9558 = vmatprep.subr.mxu0 0.0
    %9559 = vmatpush1.msra.mxu0 %v9517
    %9560 = vmatprep.subr.mxu0 0.0
    %9561 = vmatpush1.msra.mxu0 %v9516
    %9562 = vmatprep.subr.mxu0 0.0
    %9563 = vmatpush2.msra.mxu0 0.0
    %9564 = vmatprep.subr.mxu0 0.0
    %9565 = vmatpush2.msra.mxu0 0.0
    %9566 = vmatprep.subr.mxu0 0.0
    %9567 = vmatpush2.msra.mxu0 0.0
    %9568 = vmatprep.subr.mxu0 0.0
    %9569 = vmatpush2.msra.mxu0 0.0
    %9570 = vmatprep.subr.mxu0 0.0
    %9571 = vmatpush2.msra.mxu0 0.0
    %9572 = vmatprep.subr.mxu0 0.0
    %9573 = vmatpush2.msra.mxu0 0.0
    %9574 = vmatprep.subr.mxu0 0.0
    %9575 = vmatpush2.msra.mxu0 0.0
    %9576 = vmatprep.subr.mxu0 0.0
    %9577 = vmatpush2.msra.mxu0 0.0
    %9578 = vmatprep.subr.mxu0 0.0
    %9579 = vmatpush2.msra.mxu0 0.0
    %9580 = vmatprep.subr.mxu0 0.0
    %9581 = vmatpush2.msra.mxu0 0.0
    %9582 = vmatprep.subr.mxu0 0.0
    %9583 = vmatpush2.msra.mxu0 0.0
    %9584 = vmatprep.subr.mxu0 0.0
    %9585 = vmatpush2.msra.mxu0 0.0
    %9586 = vmatprep.subr.mxu0 0.0
    %9587 = vmatpush2.msra.mxu0 0.0
    %9588 = vmatprep.subr.mxu0 0.0
    %9589 = vmatpush2.msra.mxu0 0.0
    %9590 = vmatprep.subr.mxu0 0.0
    %9591 = vmatpush2.msra.mxu0 0.0
    %9592 = vmatprep.subr.mxu0 0.0
    %9593 = vmatpush2.msra.mxu0 0.0
    %9594 = vmatprep.mubr.f32.mxu0 0.0
    %9595 = vmatmul.mubr.f32.gmra.mxu0 %v9518
    %v9596 = vpop.f32.mrf.mxu0
    %v9597 = vadd.f32 0.0, %v9596
    %v9598 = vpop.f32.mrf.mxu0
    %9599 = vmatprep.mubr.f32.mxu0 0.0
    %9600 = vmatmul.mubr.f32.gmra.mxu0 %v9520
    %v9601 = vpop.f32.mrf.mxu0
    %v9602 = vadd.f32 0.0, %v9601
    %v9603 = vpop.f32.mrf.mxu0
    %9604 = vmatprep.mubr.f32.mxu0 0.0
    %9605 = vmatmul.mubr.f32.gmra.mxu0 %v9522
    %v9606 = vpop.f32.mrf.mxu0
    %v9607 = vadd.f32 0.0, %v9606
    %v9608 = vpop.f32.mrf.mxu0
    %9609 = vmatprep.mubr.f32.mxu0 0.0
    %9610 = vmatmul.mubr.f32.gmra.mxu0 %v9524
    %v9611 = vpop.f32.mrf.mxu0
    %v9612 = vadd.f32 0.0, %v9611
    %v9613 = vpop.f32.mrf.mxu0
    %9614 = vmatprep.mubr.f32.mxu0 0.0
    %9615 = vmatmul.mubr.f32.gmra.mxu0 %v9526
    %v9616 = vpop.f32.mrf.mxu0
    %v9617 = vadd.f32 0.0, %v9616
    %v9618 = vpop.f32.mrf.mxu0
    %9619 = vmatprep.mubr.f32.mxu0 0.0
    %9620 = vmatmul.mubr.f32.gmra.mxu0 %v9528
    %v9621 = vpop.f32.mrf.mxu0
    %v9622 = vadd.f32 0.0, %v9621
    %v9623 = vpop.f32.mrf.mxu0
    %9624 = vdwg.mxu0
    %v9625 = vadd.f32 %v9509, %v9597
    %v9626 = vadd.f32 %v9510, %v9602
    %v9627 = vadd.f32 %v9511, %v9607
    %v9628 = vadd.f32 %v9512, %v9612
    %v9629 = vadd.f32 %v9513, %v9617
    %v9630 = vadd.f32 %v9514, %v9622
    %v9631 = vld [vmem:[%s73] sm:$0x1]
    %v9633 = vlaneseq
    %v9634 = vshrl.u32 %v9633, 7
    %v9635 = vsub.s32 0, %v9634
    %v9636 = vrot.slane %v9631, %v9635
    %v9638 = vadd.f32 %v9625, %v9636
    %v9639 = vadd.f32 %v9626, %v9636
    %v9640 = vadd.f32 %v9627, %v9636
    %v9641 = vadd.f32 %v9628, %v9636
    %v9642 = vadd.f32 %v9629, %v9636
    %v9643 = vadd.f32 %v9630, %v9636
    %v9644 = vmul.f32 %v9638, %v1509
    %v9645 = vmul.f32 %v9639, %v1514
    %v9646 = vmul.f32 %v9640, %v1519
    %v9647 = vmul.f32 %v9641, %v1524
    %v9648 = vmul.f32 %v9642, %v1529
    %v9649 = vmul.f32 %v9643, %v1534
    %v9650 = vsel %vm1542, %v9644, 0.0
    %v9651 = vsel %vm1542, %v9645, 0.0
    %v9652 = vadd.f32 %v9650, %v9651
    %v9653 = vsel %vm1542, %v9646, 0.0
    %v9654 = vadd.f32 %v9652, %v9653
    %v9655 = vsel %vm1542, %v9647, 0.0
    %v9656 = vadd.f32 %v9654, %v9655
    %v9657 = vsel %vm1542, %v9648, 0.0
    %v9658 = vadd.f32 %v9656, %v9657
    %v9659 = vsel %vm1542, %v9649, 0.0
    %v9660 = vadd.f32 %v9658, %v9659
    %v9661 = vrot.slane %v9660, 4
    %v9662 = vadd.f32 %v9660, %v9661
    %v9663 = vrot.slane %v9662, 2
    %v9664 = vadd.f32 %v9662, %v9663
    %v9665 = vrot.slane %v9664, 1
    %v9666 = vadd.f32 %v9664, %v9665
    %v9667 = vmul.f32 %v9666, 0.03125
    %v9668 = vsub.f32 %v9638, %v9667
    %v9669 = vsub.f32 %v9639, %v9667
    %v9670 = vsub.f32 %v9640, %v9667
    %v9671 = vsub.f32 %v9641, %v9667
    %v9672 = vsub.f32 %v9642, %v9667
    %v9673 = vsub.f32 %v9643, %v9667
    %v9674 = vmul.f32 %v9668, %v1509
    %v9675 = vmul.f32 %v9669, %v1514
    %v9676 = vmul.f32 %v9670, %v1519
    %v9677 = vmul.f32 %v9671, %v1524
    %v9678 = vmul.f32 %v9672, %v1529
    %v9679 = vmul.f32 %v9673, %v1534
    %v9680 = vmul.f32 %v9674, %v9674
    %v9681 = vmul.f32 %v9675, %v9675
    %v9682 = vmul.f32 %v9676, %v9676
    %v9683 = vmul.f32 %v9677, %v9677
    %v9684 = vmul.f32 %v9678, %v9678
    %v9685 = vmul.f32 %v9679, %v9679
    %v9686 = vsel %vm1542, %v9680, 0.0
    %v9687 = vsel %vm1542, %v9681, 0.0
    %v9688 = vadd.f32 %v9686, %v9687
    %v9689 = vsel %vm1542, %v9682, 0.0
    %v9690 = vadd.f32 %v9688, %v9689
    %v9691 = vsel %vm1542, %v9683, 0.0
    %v9692 = vadd.f32 %v9690, %v9691
    %v9693 = vsel %vm1542, %v9684, 0.0
    %v9694 = vadd.f32 %v9692, %v9693
    %v9695 = vsel %vm1542, %v9685, 0.0
    %v9696 = vadd.f32 %v9694, %v9695
    %v9697 = vrot.slane %v9696, 4
    %v9698 = vadd.f32 %v9696, %v9697
    %v9699 = vrot.slane %v9698, 2
    %v9700 = vadd.f32 %v9698, %v9699
    %v9701 = vrot.slane %v9700, 1
    %v9702 = vadd.f32 %v9700, %v9701
    %v9703 = vmul.f32 %v9702, 0.03125
    %v9704 = vld [vmem:[%s75] sm:$0x1]
    %v9705 = vadd.f32 %v9703, 1e-05
    %v9706 = vrsqrt.pop %v9705
    %v9707 = vmul.f32 %v9704, %v9706
    %v9708 = vld [vmem:[%s77] sm:$0x1]
    %v9709 = vmul.f32 %v9667, %v9707
    %v9710 = vsub.f32 %v9708, %v9709
    %v9712 = vlaneseq
    %v9713 = vshrl.u32 %v9712, 7
    %v9714 = vsub.s32 0, %v9713
    %v9715 = vrot.slane %v9707, %v9714
    %v9717 = vmul.f32 %v9638, %v9715
    %v9718 = vmul.f32 %v9639, %v9715
    %v9719 = vmul.f32 %v9640, %v9715
    %v9720 = vmul.f32 %v9641, %v9715
    %v9721 = vmul.f32 %v9642, %v9715
    %v9722 = vmul.f32 %v9643, %v9715
    %v9724 = vlaneseq
    %v9725 = vshrl.u32 %v9724, 7
    %v9726 = vsub.s32 0, %v9725
    %v9727 = vrot.slane %v9710, %v9726
    %v9729 = vadd.f32 %v9717, %v9727
    %v9730 = vadd.f32 %v9718, %v9727
    %v9731 = vadd.f32 %v9719, %v9727
    %v9732 = vadd.f32 %v9720, %v9727
    %v9733 = vadd.f32 %v9721, %v9727
    %v9734 = vadd.f32 %v9722, %v9727
    %v9735 = vmul.f32 %v9729, %v1509
    %v9736 = vmul.f32 %v9730, %v1514
    %v9737 = vmul.f32 %v9731, %v1519
    %v9738 = vmul.f32 %v9732, %v1524
    %v9739 = vmul.f32 %v9733, %v1529
    %v9740 = vmul.f32 %v9734, %v1534
    %9747 = vrot.lane.b32.xlu0 %v9735, 16
    %v9748 = vpop.permute.xlu0 %9747
    %9749 = vrot.lane.b32.xlu0 %v9736, 16
    %v9750 = vpop.permute.xlu0 %9749
    %9751 = vrot.lane.b32.xlu0 %v9737, 16
    %v9752 = vpop.permute.xlu0 %9751
    %9753 = vrot.lane.b32.xlu0 %v9738, 16
    %v9754 = vpop.permute.xlu0 %9753
    %9755 = vrot.lane.b32.xlu0 %v9739, 16
    %v9756 = vpop.permute.xlu0 %9755
    %9757 = vrot.lane.b32.xlu0 %v9740, 16
    %v9758 = vpop.permute.xlu0 %9757
    %v9765 = vadd.f32 %v7819, %v9748
    %v9766 = vadd.f32 %v7820, %v9750
    %v9767 = vadd.f32 %v7821, %v9752
    %v9768 = vadd.f32 %v7822, %v9754
    %v9769 = vadd.f32 %v7823, %v9756
    %v9770 = vadd.f32 %v7824, %v9758
    %v9771 = vmax.f32 %v9765, 0.0
    %v9772 = vmax.f32 %v9766, 0.0
    %v9773 = vmax.f32 %v9767, 0.0
    %v9774 = vmax.f32 %v9768, 0.0
    %v9775 = vmax.f32 %v9769, 0.0
    %v9776 = vmax.f32 %v9770, 0.0
    %v9777 = vld [vmem:[%s5] sm:$0x3]
    %9784 = vrot.lane.b32.xlu0 %v9771, 112
    %v9785 = vpop.permute.xlu0 %9784
    %9786 = vrot.lane.b32.xlu0 %v9772, 112
    %v9787 = vpop.permute.xlu0 %9786
    %9788 = vrot.lane.b32.xlu0 %v9773, 112
    %v9789 = vpop.permute.xlu0 %9788
    %9790 = vrot.lane.b32.xlu0 %v9774, 112
    %v9791 = vpop.permute.xlu0 %9790
    %9792 = vrot.lane.b32.xlu0 %v9775, 112
    %v9793 = vpop.permute.xlu0 %9792
    %9794 = vrot.lane.b32.xlu0 %v9776, 112
    %v9795 = vpop.permute.xlu0 %9794
    %vm9802 = vcmask 392192
    %v9804 = vsel %vm9802, %v9777, 0
    %9806 = vmatprep.subr.mxu0 0.0
    %9807 = vmatpush1.msra.mxu0 0.0
    %9808 = vmatprep.subr.mxu0 0.0
    %9809 = vmatpush1.msra.mxu0 0.0
    %9810 = vmatprep.subr.mxu0 0.0
    %9811 = vmatpush1.msra.mxu0 0.0
    %9812 = vmatprep.subr.mxu0 0.0
    %9813 = vmatpush1.msra.mxu0 0.0
    %9814 = vmatprep.subr.mxu0 0.0
    %9815 = vmatpush1.msra.mxu0 0.0
    %9816 = vmatprep.subr.mxu0 0.0
    %9817 = vmatpush1.msra.mxu0 0.0
    %9818 = vmatprep.subr.mxu0 0.0
    %9819 = vmatpush1.msra.mxu0 0.0
    %9820 = vmatprep.subr.mxu0 0.0
    %9821 = vmatpush1.msra.mxu0 0.0
    %9822 = vmatprep.subr.mxu0 0.0
    %9823 = vmatpush1.msra.mxu0 0.0
    %9824 = vmatprep.subr.mxu0 0.0
    %9825 = vmatpush1.msra.mxu0 0.0
    %9826 = vmatprep.subr.mxu0 0.0
    %9827 = vmatpush1.msra.mxu0 %v9795
    %9828 = vmatprep.subr.mxu0 0.0
    %9829 = vmatpush1.msra.mxu0 %v9793
    %9830 = vmatprep.subr.mxu0 0.0
    %9831 = vmatpush1.msra.mxu0 %v9791
    %9832 = vmatprep.subr.mxu0 0.0
    %9833 = vmatpush1.msra.mxu0 %v9789
    %9834 = vmatprep.subr.mxu0 0.0
    %9835 = vmatpush1.msra.mxu0 %v9787
    %9836 = vmatprep.subr.mxu0 0.0
    %9837 = vmatpush1.msra.mxu0 %v9785
    %9838 = vmatprep.subr.mxu0 0.0
    %9839 = vmatpush2.msra.mxu0 0.0
    %9840 = vmatprep.subr.mxu0 0.0
    %9841 = vmatpush2.msra.mxu0 0.0
    %9842 = vmatprep.subr.mxu0 0.0
    %9843 = vmatpush2.msra.mxu0 0.0
    %9844 = vmatprep.subr.mxu0 0.0
    %9845 = vmatpush2.msra.mxu0 0.0
    %9846 = vmatprep.subr.mxu0 0.0
    %9847 = vmatpush2.msra.mxu0 0.0
    %9848 = vmatprep.subr.mxu0 0.0
    %9849 = vmatpush2.msra.mxu0 0.0
    %9850 = vmatprep.subr.mxu0 0.0
    %9851 = vmatpush2.msra.mxu0 0.0
    %9852 = vmatprep.subr.mxu0 0.0
    %9853 = vmatpush2.msra.mxu0 0.0
    %9854 = vmatprep.subr.mxu0 0.0
    %9855 = vmatpush2.msra.mxu0 0.0
    %9856 = vmatprep.subr.mxu0 0.0
    %9857 = vmatpush2.msra.mxu0 0.0
    %9858 = vmatprep.subr.mxu0 0.0
    %9859 = vmatpush2.msra.mxu0 0.0
    %9860 = vmatprep.subr.mxu0 0.0
    %9861 = vmatpush2.msra.mxu0 0.0
    %9862 = vmatprep.subr.mxu0 0.0
    %9863 = vmatpush2.msra.mxu0 0.0
    %9864 = vmatprep.subr.mxu0 0.0
    %9865 = vmatpush2.msra.mxu0 0.0
    %9866 = vmatprep.subr.mxu0 0.0
    %9867 = vmatpush2.msra.mxu0 0.0
    %9868 = vmatprep.subr.mxu0 0.0
    %9869 = vmatpush2.msra.mxu0 0.0
    %9870 = vmatprep.mubr.f32.mxu0 0.0
    %9871 = vmatmul.mubr.f32.gmra.mxu0 %v9804
    %v9872 = vpop.f32.mrf.mxu0
    %v9873 = vadd.f32 0.0, %v9872
    %v9874 = vpop.f32.mrf.mxu0
    %9875 = vdwg.mxu0
    %v9876 = vld [vmem:[%s79] sm:$0xff]
    %v9877 = vld [vmem:[%s79 + $0x8] sm:$0xff]
    %v9878 = vld [vmem:[#allocation2] sm:$0x1]
    %v9880 = vlaneseq
    %v9881 = vshrl.u32 %v9880, 7
    %v9882 = vsub.s32 0, %v9881
    %v9883 = vrot.slane %v9878, %v9882
    %v9886 = vsel %vm1542, %v9873, 0
    %9888 = vmatprep.subr.mxu0 0.0
    %9889 = vmatpush1.msra.mxu0 0.0
    %9890 = vmatprep.subr.mxu0 0.0
    %9891 = vmatpush1.msra.mxu0 0.0
    %9892 = vmatprep.subr.mxu0 0.0
    %9893 = vmatpush1.msra.mxu0 0.0
    %9894 = vmatprep.subr.mxu0 0.0
    %9895 = vmatpush1.msra.mxu0 0.0
    %9896 = vmatprep.subr.mxu0 0.0
    %9897 = vmatpush1.msra.mxu0 0.0
    %9898 = vmatprep.subr.mxu0 0.0
    %9899 = vmatpush1.msra.mxu0 0.0
    %9900 = vmatprep.subr.mxu0 0.0
    %9901 = vmatpush1.msra.mxu0 0.0
    %9902 = vmatprep.subr.mxu0 0.0
    %9903 = vmatpush1.msra.mxu0 0.0
    %9904 = vmatprep.subr.mxu0 0.0
    %9905 = vmatpush1.msra.mxu0 0.0
    %9906 = vmatprep.subr.mxu0 0.0
    %9907 = vmatpush1.msra.mxu0 0.0
    %9908 = vmatprep.subr.mxu0 0.0
    %9909 = vmatpush1.msra.mxu0 0.0
    %9910 = vmatprep.subr.mxu0 0.0
    %9911 = vmatpush1.msra.mxu0 0.0
    %9912 = vmatprep.subr.mxu0 0.0
    %9913 = vmatpush1.msra.mxu0 0.0
    %9914 = vmatprep.subr.mxu0 0.0
    %9915 = vmatpush1.msra.mxu0 0.0
    %9916 = vmatprep.subr.mxu0 0.0
    %9917 = vmatpush1.msra.mxu0 %v9877
    %9918 = vmatprep.subr.mxu0 0.0
    %9919 = vmatpush1.msra.mxu0 %v9876
    %9920 = vmatprep.subr.mxu0 0.0
    %9921 = vmatpush2.msra.mxu0 0.0
    %9922 = vmatprep.subr.mxu0 0.0
    %9923 = vmatpush2.msra.mxu0 0.0
    %9924 = vmatprep.subr.mxu0 0.0
    %9925 = vmatpush2.msra.mxu0 0.0
    %9926 = vmatprep.subr.mxu0 0.0
    %9927 = vmatpush2.msra.mxu0 0.0
    %9928 = vmatprep.subr.mxu0 0.0
    %9929 = vmatpush2.msra.mxu0 0.0
    %9930 = vmatprep.subr.mxu0 0.0
    %9931 = vmatpush2.msra.mxu0 0.0
    %9932 = vmatprep.subr.mxu0 0.0
    %9933 = vmatpush2.msra.mxu0 0.0
    %9934 = vmatprep.subr.mxu0 0.0
    %9935 = vmatpush2.msra.mxu0 0.0
    %9936 = vmatprep.subr.mxu0 0.0
    %9937 = vmatpush2.msra.mxu0 0.0
    %9938 = vmatprep.subr.mxu0 0.0
    %9939 = vmatpush2.msra.mxu0 0.0
    %9940 = vmatprep.subr.mxu0 0.0
    %9941 = vmatpush2.msra.mxu0 0.0
    %9942 = vmatprep.subr.mxu0 0.0
    %9943 = vmatpush2.msra.mxu0 0.0
    %9944 = vmatprep.subr.mxu0 0.0
    %9945 = vmatpush2.msra.mxu0 0.0
    %9946 = vmatprep.subr.mxu0 0.0
    %9947 = vmatpush2.msra.mxu0 0.0
    %9948 = vmatprep.subr.mxu0 0.0
    %9949 = vmatpush2.msra.mxu0 0.0
    %9950 = vmatprep.subr.mxu0 0.0
    %9951 = vmatpush2.msra.mxu0 0.0
    %9952 = vmatprep.mubr.f32.mxu0 0.0
    %9953 = vmatmul.mubr.f32.gmra.mxu0 %v9886
    %v9954 = vpop.f32.mrf.mxu0
    %v9955 = vadd.f32 %v9883, %v9954
    %v9956 = vpop.f32.mrf.mxu0
    %9957 = vdwg.mxu0
    %vm9958 = vcmask 1024
    %9959 = vst.msk [vmem:[%s83] sm:$0x3] %vm9958, %v9955
    // Predicated region
    $region250: #{resnet_forward.1} parent=1 // pred_check
      _
    $region251: #{resnet_forward.1} parent=1 // pred_check_branch
      %9961 = sbr.rel (0) target = $region253
    $region252: #{resnet_forward.1} parent=1 // pred_region
      _
    $region253: #{resnet_forward.1} parent=1 // pred_fallthru
      _
    // Predicated region
    $region254: #{resnet_forward.1} parent=1 // pred_check
      _
    $region255: #{resnet_forward.1} parent=1 // pred_check_branch
      %9963 = sbr.rel (0) target = $region257
    $region256: #{resnet_forward.1} parent=1 // pred_region
      _
    $region257: #{resnet_forward.1} parent=1 // pred_fallthru
      _
    %9964 = vsyncpa [#allocation4], 1
    %9965 = vsyncpa [#allocation6], 1
    %9966 = vsyncpa [#allocation9], 1
    %9967 = vsyncpa [#allocation12], 1
    %9968 = vsyncpa [#allocation15], 1
    %9969 = vsyncpa [#allocation18], 1
    %9970 = vsyncpa [#allocation21], 1
    %9971 = vsyncpa [#allocation24], 1
    %9972 = vsyncpa [#allocation27], 1
    %9973 = vsyncpa [#allocation30], 1
    %9974 = vsyncpa [#allocation33], 1

</llo_original>
